<compile_context>
chip_gen: v7x
topology: tpu7x:2x2x1
jax: 0.10.0
libtpu: 0.0.40
codegen_flags: <defaults>
</compile_context>

<pallas_src>
import functools

import jax
import jax.numpy as jnp
import numpy as np
from jax.experimental import pallas as pl
from jax.experimental.pallas import tpu as pltpu

LANES = 128
SUBLANES = 8


def _round_up(x, m):
    return ((x + m - 1) // m) * m


def _residual_kernel(x_ref, wa_ref, b1_ref, w2_ref, b2_ref, w3_ref, bf_ref,
                     mask_ref, o_ref, h1ext_ref,
                     *, wp, m, guard, cout_p, need_skip):
    """One group of images per grid step, flattened into a single M = m row slab."""
    cp = h1ext_ref.shape[1]

    # Guard rows of the shift scratch only need zeroing once: the scratch persists
    # across grid steps and the guards are never written afterwards.
    @pl.when(pl.program_id(0) == 0)
    def _zero_guards():
        h1ext_ref[0:guard, :] = jnp.zeros((guard, cp), jnp.float32)
        h1ext_ref[guard + m:guard + m + guard, :] = jnp.zeros((guard, cp), jnp.float32)

    x = x_ref[...].astype(jnp.float32)              # (m, cin_p)
    r = jnp.maximum(x, 0.0)                         # relu(x)

    if need_skip:
        # Fused skip(1x1) + conv1(1x1): a single K=2*cin_p, 256-lane-output MXU
        # pass with the block-diagonal weight [[w_skip, 0], [0, w1]].
        lhs = jnp.concatenate([x, r], axis=-1).astype(jnp.bfloat16)
        both = jax.lax.dot_general(
            lhs, wa_ref[...], (((1,), (0,)), ((), ())),
            preferred_element_type=jnp.float32)      # (m, cout_p + ch_p)
        skip = both[:, :cout_p]                      # w_skip @ x (bias folded in bf)
        h1 = both[:, cout_p:] + b1_ref[...]          # w1 @ relu(x) + b1
    else:
        # Identity residual: x is already padded to cout_p lanes -> direct add.
        skip = x
        h1 = jax.lax.dot_general(
            r.astype(jnp.bfloat16), wa_ref[...], (((1,), (0,)), ((), ())),
            preferred_element_type=jnp.float32) + b1_ref[...]

    # relu, then zero the spatial-padding rows/columns so the 3x3 conv sees true
    # zero padding (not relu(bias)).
    h1 = jnp.maximum(h1, 0.0) * mask_ref[...]        # (m, ch_p)

    # Stage h1 into the guard-padded scratch: every 3x3 tap is a flat row shift.
    # wp is a multiple of 8, so the +/-wp (kh) shifts stay sublane-aligned.
    h1ext_ref[guard:guard + m, :] = h1

    # 3x3 conv = 9 accumulating matmuls (no materialized im2col patch).
    h2 = jnp.zeros((m, cp), jnp.float32)
    for kh in range(3):
        for kw in range(3):
            d = (kh - 1) * wp + (kw - 1)
            tap = h1ext_ref[guard + d:guard + d + m, :].astype(jnp.bfloat16)
            h2 = h2 + jax.lax.dot_general(
                tap, w2_ref[kh * 3 + kw], (((1,), (0,)), ((), ())),
                preferred_element_type=jnp.float32)
    h2 = jnp.maximum(h2 + b2_ref[...], 0.0)

    h3 = jax.lax.dot_general(
        h2.astype(jnp.bfloat16), w3_ref[...], (((1,), (0,)), ((), ())),
        preferred_element_type=jnp.float32)

    # Single epilogue bias (b3 + bskip), lane-dense unmasked store.
    o_ref[...] = (h3 + skip + bf_ref[...]).astype(o_ref.dtype)


def _w_1x1(w, cin_p, cout_p):
    """PyTorch [O, I, 1, 1] conv weight -> padded [cin_p, cout_p] f32 matrix."""
    o, i = w.shape[0], w.shape[1]
    wio = jnp.transpose(w[:, :, 0, 0], (1, 0)).astype(jnp.float32)
    return jnp.pad(wio, ((0, cin_p - i), (0, cout_p - o)))


def _w_3x3(w, c_p):
    """PyTorch [O, I, 3, 3] -> (9, c_p, c_p) bf16, tap-major (kh, kw)."""
    o, i = w.shape[0], w.shape[1]
    wk = jnp.transpose(w, (2, 3, 1, 0)).astype(jnp.float32)     # (3, 3, I, O)
    wk = jnp.pad(wk, ((0, 0), (0, 0), (0, c_p - i), (0, c_p - o)))
    return wk.reshape(9, c_p, c_p).astype(jnp.bfloat16)


def _bias(b, c_p):
    return jnp.pad(b.astype(jnp.float32), (0, c_p - b.shape[0])).reshape(1, c_p)


def residual_forward(x_nchw, params, inp_dim, out_dim):
    """Pallas equivalent of the PyTorch Residual module forward (NCHW in/out)."""
    N, cin, H, W = x_nchw.shape
    assert cin == inp_dim, f"{cin} {inp_dim}"
    half = out_dim // 2
    need_skip = inp_dim != out_dim

    ch_p = _round_up(half, LANES)          # hidden channels -> lane-dense (MXU width)
    cout_p = _round_up(out_dim, LANES)     # output channels -> lane-dense store
    # With a real skip conv the HBM input stays narrow; for the identity residual we
    # pad x to cout_p lanes so the skip add is a direct VPU add (no identity matmul).
    cin_p = _round_up(inp_dim, SUBLANES) if need_skip else cout_p

    pad = 1                                # 3x3 "same" padding
    hp_ = H + 2 * pad
    wp_ = _round_up(W + 2 * pad, SUBLANES)       # sublane-aligned flat row stride
    hwp = hp_ * wp_                              # multiple of 8
    guard = _round_up(wp_ + 1, SUBLANES)         # >= max |flat tap shift|, aligned

    # ---- layout plumbing: NCHW -> (N*hwp, cin_p); zero borders + channel tail.
    x_nhwc = jnp.transpose(x_nchw, (0, 2, 3, 1))
    x_pad = jnp.pad(
        x_nhwc,
        ((0, 0), (pad, pad), (pad, wp_ - W - pad), (0, cin_p - inp_dim)))
    x_flat = x_pad.reshape(N * hwp, cin_p).astype(jnp.float32)

    # ---- fold the batch into the matmul M dimension under a VMEM budget.
    per_img = 4 * hwp * (2 * cin_p + 2 * cout_p + ch_p + 4 * (cout_p + ch_p))
    g = max(1, min(N, (20 << 20) // max(per_img, 1)))
    while N % g:
        g -= 1
    grid = N // g
    m = g * hwp

    # ---- weights (bf16 for the MXU), biases (f32), border mask.
    w1 = _w_1x1(params["w1"], cin_p, ch_p)
    b1 = _bias(params["b1"], ch_p)
    w2 = _w_3x3(params["w2"], ch_p)
    b2 = _bias(params["b2"], ch_p)
    w3 = _w_1x1(params["w3"], ch_p, cout_p).astype(jnp.bfloat16)
    bf = _bias(params["b3"], cout_p)
    if need_skip:
        wsk = _w_1x1(params["wskip"], cin_p, cout_p)
        wa = jnp.zeros((2 * cin_p, cout_p + ch_p), jnp.float32)
        wa = wa.at[:cin_p, :cout_p].set(wsk).at[cin_p:, cout_p:].set(w1)
        wa = wa.astype(jnp.bfloat16)
        bf = bf + _bias(params["bskip"], cout_p)   # fold skip bias into the epilogue
    else:
        wa = w1.astype(jnp.bfloat16)

    # Interior mask: 1.0 on real pixels, 0.0 on spatial-padding rows/columns.
    mask2d = jnp.zeros((hp_, wp_), jnp.float32)
    mask2d = mask2d.at[pad:pad + H, pad:pad + W].set(1.0)
    mask = jnp.tile(mask2d.reshape(hwp, 1), (g, 1))        # (m, 1)

    kernel = functools.partial(_residual_kernel, wp=wp_, m=m, guard=guard,
                               cout_p=cout_p, need_skip=need_skip)

    flops = 2 * N * hwp * (2 * cin_p * (cout_p + ch_p)
                           + 9 * ch_p * ch_p + ch_p * cout_p)
    bytes_accessed = (4 * (x_flat.size + mask.size + N * hwp * cout_p)
                      + 2 * (wa.size + w2.size + w3.size)
                      + 4 * (b1.size + b2.size + bf.size))

    out_flat = pl.pallas_call(
        kernel,
        out_shape=jax.ShapeDtypeStruct((N * hwp, cout_p), x_nchw.dtype),
        grid_spec=pltpu.PrefetchScalarGridSpec(
            num_scalar_prefetch=0,
            grid=(grid,),
            in_specs=[
                pl.BlockSpec((m, cin_p), lambda i: (i, 0)),           # x (narrow in HBM)
                pl.BlockSpec(wa.shape, lambda i: (0, 0)),             # fused skip|conv1 w
                pl.BlockSpec((1, ch_p), lambda i: (0, 0)),            # b1
                pl.BlockSpec((9, ch_p, ch_p), lambda i: (0, 0, 0)),   # conv2 tap weights
                pl.BlockSpec((1, ch_p), lambda i: (0, 0)),            # b2
                pl.BlockSpec((ch_p, cout_p), lambda i: (0, 0)),       # w3
                pl.BlockSpec((1, cout_p), lambda i: (0, 0)),          # b3 (+ bskip)
                pl.BlockSpec((m, 1), lambda i: (0, 0)),               # border mask
            ],
            out_specs=pl.BlockSpec((m, cout_p), lambda i: (i, 0)),
            scratch_shapes=[pltpu.VMEM((m + 2 * guard, ch_p), jnp.float32)],
        ),
        compiler_params=pltpu.CompilerParams(
            dimension_semantics=("parallel",),
            vmem_limit_bytes=48 * 1024 * 1024),
        cost_estimate=pl.CostEstimate(
            flops=int(flops), transcendentals=0, bytes_accessed=int(bytes_accessed)),
    )(x_flat, wa, b1, w2, b2, w3, bf, mask)

    # ---- layout plumbing back: interior pixels + real channels, to NCHW.
    out = out_flat.reshape(N, hp_, wp_, cout_p)[:, pad:pad + H, pad:pad + W, :out_dim]
    return jnp.transpose(out, (0, 3, 1, 2)).astype(x_nchw.dtype)


# ----------------------------- reference (pure JAX) -----------------------------
def _conv2d_nchw(x, w, b, pad):
    out = jax.lax.conv_general_dilated(
        x.astype(jnp.float32), w.astype(jnp.float32),
        window_strides=(1, 1), padding=[(pad, pad), (pad, pad)],
        dimension_numbers=("NCHW", "OIHW", "NCHW"))
    return out + b[None, :, None, None]


def _reference_residual(x, p, inp_dim, out_dim):
    if inp_dim != out_dim:
        residual = _conv2d_nchw(x, p["wskip"], p["bskip"], 0)
    else:
        residual = x
    out = jnp.maximum(x, 0.0)
    out = _conv2d_nchw(out, p["w1"], p["b1"], 0)
    out = jnp.maximum(out, 0.0)
    out = _conv2d_nchw(out, p["w2"], p["b2"], 1)
    out = jnp.maximum(out, 0.0)
    out = _conv2d_nchw(out, p["w3"], p["b3"], 0)
    return out + residual


def _make_params(key, inp_dim, out_dim, need_skip):
    half = out_dim // 2
    ks = jax.random.split(key, 8)
    p = {
        "w1": jax.random.normal(ks[0], (half, inp_dim, 1, 1), jnp.float32) * 0.2,
        "b1": jax.random.normal(ks[1], (half,), jnp.float32) * 0.1,
        "w2": jax.random.normal(ks[2], (half, half, 3, 3), jnp.float32) * 0.2,
        "b2": jax.random.normal(ks[3], (half,), jnp.float32) * 0.1,
        "w3": jax.random.normal(ks[4], (out_dim, half, 1, 1), jnp.float32) * 0.2,
        "b3": jax.random.normal(ks[5], (out_dim,), jnp.float32) * 0.1,
    }
    if need_skip:
        p["wskip"] = jax.random.normal(ks[6], (out_dim, inp_dim, 1, 1), jnp.float32) * 0.2
        p["bskip"] = jax.random.normal(ks[7], (out_dim,), jnp.float32) * 0.1
    return p


if __name__ == "__main__":
    key = jax.random.PRNGKey(0)
    k_x1, k_p1, k_x2, k_p2 = jax.random.split(key, 4)

    # 1) Residual(4, 8) on (2, 4, 16, 16): need_skip=True (fused skip+conv1 path).
    N, inp_dim, out_dim, H, W = 2, 4, 8, 16, 16
    x1 = jax.random.normal(k_x1, (N, inp_dim, H, W), jnp.float32)
    p1 = _make_params(k_p1, inp_dim, out_dim, need_skip=True)
    out1 = jax.block_until_ready(residual_forward(x1, p1, inp_dim, out_dim))
    ref1 = jax.block_until_ready(_reference_residual(x1, p1, inp_dim, out_dim))
    # bf16 MXU operands with f32 accumulation -> slightly looser tolerance than f32.
    np.testing.assert_allclose(np.asarray(out1), np.asarray(ref1), rtol=2e-2, atol=2e-2)

    # 2) Residual(8, 8) on (2, 8, 16, 16): need_skip=False (identity residual path).
    inp_dim2 = out_dim2 = 8
    x2 = jax.random.normal(k_x2, (N, inp_dim2, H, W), jnp.float32)
    p2 = _make_params(k_p2, inp_dim2, out_dim2, need_skip=False)
    out2 = jax.block_until_ready(residual_forward(x2, p2, inp_dim2, out_dim2))
    ref2 = jax.block_until_ready(_reference_residual(x2, p2, inp_dim2, out_dim2))
    np.testing.assert_allclose(np.asarray(out2), np.asarray(ref2), rtol=2e-2, atol=2e-2)

    print("KERNEL_OK")
</pallas_src>

<mosaic_0001>
module attributes {stable_mosaic.version = 11 : i64} {
  func.func @_residual_kernel(%arg0: i32, %arg1: memref<864x8xf32, #tpu.memory_space<vmem>>, %arg2: memref<16x256xbf16, #tpu.memory_space<vmem>>, %arg3: memref<1x128xf32, #tpu.memory_space<vmem>>, %arg4: memref<9x128x128xbf16, #tpu.memory_space<vmem>>, %arg5: memref<1x128xf32, #tpu.memory_space<vmem>>, %arg6: memref<128x128xbf16, #tpu.memory_space<vmem>>, %arg7: memref<1x128xf32, #tpu.memory_space<vmem>>, %arg8: memref<864x1xf32, #tpu.memory_space<vmem>>, %arg9: memref<864x128xf32, #tpu.memory_space<vmem>>, %arg10: memref<928x128xf32, #tpu.memory_space<vmem>>) attributes {dimension_semantics = [#tpu.dimension_semantics<parallel>], iteration_bounds = array<i64: 1>, scalar_prefetch = 0 : i64, scratch_operands = 1 : i64, tpu.core_type = #tpu.core_type<tc>, window_params = [{transform_indices = @transform_0, window_bounds = array<i64: 864, 8>}, {pipeline_mode = #tpu.pipeline_mode<synchronous>, transform_indices = @transform_1, window_bounds = array<i64: 16, 256>}, {pipeline_mode = #tpu.pipeline_mode<synchronous>, transform_indices = @transform_2, window_bounds = array<i64: 1, 128>}, {pipeline_mode = #tpu.pipeline_mode<synchronous>, transform_indices = @transform_3, window_bounds = array<i64: 9, 128, 128>}, {pipeline_mode = #tpu.pipeline_mode<synchronous>, transform_indices = @transform_4, window_bounds = array<i64: 1, 128>}, {pipeline_mode = #tpu.pipeline_mode<synchronous>, transform_indices = @transform_5, window_bounds = array<i64: 128, 128>}, {pipeline_mode = #tpu.pipeline_mode<synchronous>, transform_indices = @transform_6, window_bounds = array<i64: 1, 128>}, {pipeline_mode = #tpu.pipeline_mode<synchronous>, transform_indices = @transform_7, window_bounds = array<i64: 864, 1>}, {transform_indices = @transform_8, window_bounds = array<i64: 864, 128>}]} {
    %c0_i32 = arith.constant 0 : i32
    %0 = arith.cmpi eq, %arg0, %c0_i32 : i32
    %1 = arith.extui %0 : i1 to i32
    %c0_i32_0 = arith.constant 0 : i32
    %2 = arith.cmpi ne, %1, %c0_i32_0 : i32
    scf.if %2 {
      %cst_62 = arith.constant 0.000000e+00 : f32
      %89 = vector.broadcast %cst_62 : f32 to vector<32x128xf32>
      %c0_63 = arith.constant 0 : index
      %c0_64 = arith.constant 0 : index
      %90 = vector.load %arg10[%c0_63, %c0_64] : memref<928x128xf32, #tpu.memory_space<vmem>>, vector<32x128xf32>
      tpu.vector_store %arg10[%c0_63, %c0_64], %89 {strides = array<i32>} : memref<928x128xf32, #tpu.memory_space<vmem>>, vector<32x128xf32>,
      %cst_65 = arith.constant 0.000000e+00 : f32
      %91 = vector.broadcast %cst_65 : f32 to vector<32x128xf32>
      %c896 = arith.constant 896 : index
      %c0_66 = arith.constant 0 : index
      %92 = vector.load %arg10[%c896, %c0_66] : memref<928x128xf32, #tpu.memory_space<vmem>>, vector<32x128xf32>
      tpu.vector_store %arg10[%c896, %c0_66], %91 {strides = array<i32>} : memref<928x128xf32, #tpu.memory_space<vmem>>, vector<32x128xf32>,
    } else {
    }
    %c0 = arith.constant 0 : index
    %c0_1 = arith.constant 0 : index
    %3 = vector.load %arg1[%c0, %c0_1] : memref<864x8xf32, #tpu.memory_space<vmem>>, vector<864x8xf32>
    %cst = arith.constant 0.000000e+00 : f32
    %4 = vector.broadcast %cst : f32 to vector<864x8xf32>
    %5 = arith.maximumf %3, %4 : vector<864x8xf32>
    %6 = tpu.concatenate %3, %5 in 1 : vector<864x8xf32>, vector<864x8xf32> -> vector<864x16xf32>
    %7 = arith.truncf %6 : vector<864x16xf32> to vector<864x16xbf16>
    %c0_2 = arith.constant 0 : index
    %c0_3 = arith.constant 0 : index
    %8 = vector.load %arg2[%c0_2, %c0_3] : memref<16x256xbf16, #tpu.memory_space<vmem>>, vector<16x256xbf16>
    %cst_4 = arith.constant dense<0.000000e+00> : vector<864x256xf32>
    %9 = tpu.matmul %7, %8, %cst_4 {dimension_numbers = #tpu.dot_dimension_numbers<[1], [0], [0], [1], [0, 0, 1, 1], [], []>} : vector<864x16xbf16>, vector<16x256xbf16>, vector<864x256xf32> -> vector<864x256xf32>
    %10 = vector.extract_strided_slice %9 {offsets = [0, 0], sizes = [864, 128], strides = [1, 1]} : vector<864x256xf32> to vector<864x128xf32>
    %11 = vector.extract_strided_slice %9 {offsets = [0, 128], sizes = [864, 128], strides = [1, 1]} : vector<864x256xf32> to vector<864x128xf32>
    %c0_5 = arith.constant 0 : index
    %c0_6 = arith.constant 0 : index
    %12 = vector.load %arg3[%c0_5, %c0_6] : memref<1x128xf32, #tpu.memory_space<vmem>>, vector<1x128xf32>
    %13 = vector.broadcast %12 : vector<1x128xf32> to vector<864x128xf32>
    %14 = arith.addf %11, %13 : vector<864x128xf32>
    %cst_7 = arith.constant 0.000000e+00 : f32
    %15 = vector.broadcast %cst_7 : f32 to vector<864x128xf32>
    %16 = arith.maximumf %14, %15 : vector<864x128xf32>
    %c0_8 = arith.constant 0 : index
    %c0_9 = arith.constant 0 : index
    %17 = vector.load %arg8[%c0_8, %c0_9] : memref<864x1xf32, #tpu.memory_space<vmem>>, vector<864x1xf32>
    %18 = vector.broadcast %17 : vector<864x1xf32> to vector<864x128xf32>
    %19 = arith.mulf %16, %18 : vector<864x128xf32>
    %c32 = arith.constant 32 : index
    %c0_10 = arith.constant 0 : index
    %20 = vector.load %arg10[%c32, %c0_10] : memref<928x128xf32, #tpu.memory_space<vmem>>, vector<864x128xf32>
    tpu.vector_store %arg10[%c32, %c0_10], %19 {strides = array<i32>} : memref<928x128xf32, #tpu.memory_space<vmem>>, vector<864x128xf32>,
    %cst_11 = arith.constant 0.000000e+00 : f32
    %21 = vector.broadcast %cst_11 : f32 to vector<864x128xf32>
    %c7 = arith.constant 7 : index
    %c0_12 = arith.constant 0 : index
    %22 = vector.load %arg10[%c7, %c0_12] : memref<928x128xf32, #tpu.memory_space<vmem>>, vector<864x128xf32>
    %23 = arith.truncf %22 : vector<864x128xf32> to vector<864x128xbf16>
    %c0_13 = arith.constant 0 : index
    %c0_14 = arith.constant 0 : index
    %c0_15 = arith.constant 0 : index
    %24 = vector.load %arg4[%c0_13, %c0_14, %c0_15] : memref<9x128x128xbf16, #tpu.memory_space<vmem>>, vector<1x128x128xbf16>
    %25 = vector.shape_cast %24 : vector<1x128x128xbf16> to vector<128x128xbf16>
    %cst_16 = arith.constant dense<0.000000e+00> : vector<864x128xf32>
    %26 = tpu.matmul %23, %25, %cst_16 {dimension_numbers = #tpu.dot_dimension_numbers<[1], [0], [0], [1], [0, 0, 1, 1], [], []>} : vector<864x128xbf16>, vector<128x128xbf16>, vector<864x128xf32> -> vector<864x128xf32>
    %27 = arith.addf %21, %26 : vector<864x128xf32>
    %c8 = arith.constant 8 : index
    %c0_17 = arith.constant 0 : index
    %28 = vector.load %arg10[%c8, %c0_17] : memref<928x128xf32, #tpu.memory_space<vmem>>, vector<864x128xf32>
    %29 = arith.truncf %28 : vector<864x128xf32> to vector<864x128xbf16>
    %c1 = arith.constant 1 : index
    %c0_18 = arith.constant 0 : index
    %c0_19 = arith.constant 0 : index
    %30 = vector.load %arg4[%c1, %c0_18, %c0_19] : memref<9x128x128xbf16, #tpu.memory_space<vmem>>, vector<1x128x128xbf16>
    %31 = vector.shape_cast %30 : vector<1x128x128xbf16> to vector<128x128xbf16>
    %cst_20 = arith.constant dense<0.000000e+00> : vector<864x128xf32>
    %32 = tpu.matmul %29, %31, %cst_20 {dimension_numbers = #tpu.dot_dimension_numbers<[1], [0], [0], [1], [0, 0, 1, 1], [], []>} : vector<864x128xbf16>, vector<128x128xbf16>, vector<864x128xf32> -> vector<864x128xf32>
    %33 = arith.addf %27, %32 : vector<864x128xf32>
    %c9 = arith.constant 9 : index
    %c0_21 = arith.constant 0 : index
    %34 = vector.load %arg10[%c9, %c0_21] : memref<928x128xf32, #tpu.memory_space<vmem>>, vector<864x128xf32>
    %35 = arith.truncf %34 : vector<864x128xf32> to vector<864x128xbf16>
    %c2 = arith.constant 2 : index
    %c0_22 = arith.constant 0 : index
    %c0_23 = arith.constant 0 : index
    %36 = vector.load %arg4[%c2, %c0_22, %c0_23] : memref<9x128x128xbf16, #tpu.memory_space<vmem>>, vector<1x128x128xbf16>
    %37 = vector.shape_cast %36 : vector<1x128x128xbf16> to vector<128x128xbf16>
    %cst_24 = arith.constant dense<0.000000e+00> : vector<864x128xf32>
    %38 = tpu.matmul %35, %37, %cst_24 {dimension_numbers = #tpu.dot_dimension_numbers<[1], [0], [0], [1], [0, 0, 1, 1], [], []>} : vector<864x128xbf16>, vector<128x128xbf16>, vector<864x128xf32> -> vector<864x128xf32>
    %39 = arith.addf %33, %38 : vector<864x128xf32>
    %c31 = arith.constant 31 : index
    %c0_25 = arith.constant 0 : index
    %40 = vector.load %arg10[%c31, %c0_25] : memref<928x128xf32, #tpu.memory_space<vmem>>, vector<864x128xf32>
    %41 = arith.truncf %40 : vector<864x128xf32> to vector<864x128xbf16>
    %c3 = arith.constant 3 : index
    %c0_26 = arith.constant 0 : index
    %c0_27 = arith.constant 0 : index
    %42 = vector.load %arg4[%c3, %c0_26, %c0_27] : memref<9x128x128xbf16, #tpu.memory_space<vmem>>, vector<1x128x128xbf16>
    %43 = vector.shape_cast %42 : vector<1x128x128xbf16> to vector<128x128xbf16>
    %cst_28 = arith.constant dense<0.000000e+00> : vector<864x128xf32>
    %44 = tpu.matmul %41, %43, %cst_28 {dimension_numbers = #tpu.dot_dimension_numbers<[1], [0], [0], [1], [0, 0, 1, 1], [], []>} : vector<864x128xbf16>, vector<128x128xbf16>, vector<864x128xf32> -> vector<864x128xf32>
    %45 = arith.addf %39, %44 : vector<864x128xf32>
    %c32_29 = arith.constant 32 : index
    %c0_30 = arith.constant 0 : index
    %46 = vector.load %arg10[%c32_29, %c0_30] : memref<928x128xf32, #tpu.memory_space<vmem>>, vector<864x128xf32>
    %47 = arith.truncf %46 : vector<864x128xf32> to vector<864x128xbf16>
    %c4 = arith.constant 4 : index
    %c0_31 = arith.constant 0 : index
    %c0_32 = arith.constant 0 : index
    %48 = vector.load %arg4[%c4, %c0_31, %c0_32] : memref<9x128x128xbf16, #tpu.memory_space<vmem>>, vector<1x128x128xbf16>
    %49 = vector.shape_cast %48 : vector<1x128x128xbf16> to vector<128x128xbf16>
    %cst_33 = arith.constant dense<0.000000e+00> : vector<864x128xf32>
    %50 = tpu.matmul %47, %49, %cst_33 {dimension_numbers = #tpu.dot_dimension_numbers<[1], [0], [0], [1], [0, 0, 1, 1], [], []>} : vector<864x128xbf16>, vector<128x128xbf16>, vector<864x128xf32> -> vector<864x128xf32>
    %51 = arith.addf %45, %50 : vector<864x128xf32>
    %c33 = arith.constant 33 : index
    %c0_34 = arith.constant 0 : index
    %52 = vector.load %arg10[%c33, %c0_34] : memref<928x128xf32, #tpu.memory_space<vmem>>, vector<864x128xf32>
    %53 = arith.truncf %52 : vector<864x128xf32> to vector<864x128xbf16>
    %c5 = arith.constant 5 : index
    %c0_35 = arith.constant 0 : index
    %c0_36 = arith.constant 0 : index
    %54 = vector.load %arg4[%c5, %c0_35, %c0_36] : memref<9x128x128xbf16, #tpu.memory_space<vmem>>, vector<1x128x128xbf16>
    %55 = vector.shape_cast %54 : vector<1x128x128xbf16> to vector<128x128xbf16>
    %cst_37 = arith.constant dense<0.000000e+00> : vector<864x128xf32>
    %56 = tpu.matmul %53, %55, %cst_37 {dimension_numbers = #tpu.dot_dimension_numbers<[1], [0], [0], [1], [0, 0, 1, 1], [], []>} : vector<864x128xbf16>, vector<128x128xbf16>, vector<864x128xf32> -> vector<864x128xf32>
    %57 = arith.addf %51, %56 : vector<864x128xf32>
    %c55 = arith.constant 55 : index
    %c0_38 = arith.constant 0 : index
    %58 = vector.load %arg10[%c55, %c0_38] : memref<928x128xf32, #tpu.memory_space<vmem>>, vector<864x128xf32>
    %59 = arith.truncf %58 : vector<864x128xf32> to vector<864x128xbf16>
    %c6 = arith.constant 6 : index
    %c0_39 = arith.constant 0 : index
    %c0_40 = arith.constant 0 : index
    %60 = vector.load %arg4[%c6, %c0_39, %c0_40] : memref<9x128x128xbf16, #tpu.memory_space<vmem>>, vector<1x128x128xbf16>
    %61 = vector.shape_cast %60 : vector<1x128x128xbf16> to vector<128x128xbf16>
    %cst_41 = arith.constant dense<0.000000e+00> : vector<864x128xf32>
    %62 = tpu.matmul %59, %61, %cst_41 {dimension_numbers = #tpu.dot_dimension_numbers<[1], [0], [0], [1], [0, 0, 1, 1], [], []>} : vector<864x128xbf16>, vector<128x128xbf16>, vector<864x128xf32> -> vector<864x128xf32>
    %63 = arith.addf %57, %62 : vector<864x128xf32>
    %c56 = arith.constant 56 : index
    %c0_42 = arith.constant 0 : index
    %64 = vector.load %arg10[%c56, %c0_42] : memref<928x128xf32, #tpu.memory_space<vmem>>, vector<864x128xf32>
    %65 = arith.truncf %64 : vector<864x128xf32> to vector<864x128xbf16>
    %c7_43 = arith.constant 7 : index
    %c0_44 = arith.constant 0 : index
    %c0_45 = arith.constant 0 : index
    %66 = vector.load %arg4[%c7_43, %c0_44, %c0_45] : memref<9x128x128xbf16, #tpu.memory_space<vmem>>, vector<1x128x128xbf16>
    %67 = vector.shape_cast %66 : vector<1x128x128xbf16> to vector<128x128xbf16>
    %cst_46 = arith.constant dense<0.000000e+00> : vector<864x128xf32>
    %68 = tpu.matmul %65, %67, %cst_46 {dimension_numbers = #tpu.dot_dimension_numbers<[1], [0], [0], [1], [0, 0, 1, 1], [], []>} : vector<864x128xbf16>, vector<128x128xbf16>, vector<864x128xf32> -> vector<864x128xf32>
    %69 = arith.addf %63, %68 : vector<864x128xf32>
    %c57 = arith.constant 57 : index
    %c0_47 = arith.constant 0 : index
    %70 = vector.load %arg10[%c57, %c0_47] : memref<928x128xf32, #tpu.memory_space<vmem>>, vector<864x128xf32>
    %71 = arith.truncf %70 : vector<864x128xf32> to vector<864x128xbf16>
    %c8_48 = arith.constant 8 : index
    %c0_49 = arith.constant 0 : index
    %c0_50 = arith.constant 0 : index
    %72 = vector.load %arg4[%c8_48, %c0_49, %c0_50] : memref<9x128x128xbf16, #tpu.memory_space<vmem>>, vector<1x128x128xbf16>
    %73 = vector.shape_cast %72 : vector<1x128x128xbf16> to vector<128x128xbf16>
    %cst_51 = arith.constant dense<0.000000e+00> : vector<864x128xf32>
    %74 = tpu.matmul %71, %73, %cst_51 {dimension_numbers = #tpu.dot_dimension_numbers<[1], [0], [0], [1], [0, 0, 1, 1], [], []>} : vector<864x128xbf16>, vector<128x128xbf16>, vector<864x128xf32> -> vector<864x128xf32>
    %75 = arith.addf %69, %74 : vector<864x128xf32>
    %c0_52 = arith.constant 0 : index
    %c0_53 = arith.constant 0 : index
    %76 = vector.load %arg5[%c0_52, %c0_53] : memref<1x128xf32, #tpu.memory_space<vmem>>, vector<1x128xf32>
    %77 = vector.broadcast %76 : vector<1x128xf32> to vector<864x128xf32>
    %78 = arith.addf %75, %77 : vector<864x128xf32>
    %cst_54 = arith.constant 0.000000e+00 : f32
    %79 = vector.broadcast %cst_54 : f32 to vector<864x128xf32>
    %80 = arith.maximumf %78, %79 : vector<864x128xf32>
    %81 = arith.truncf %80 : vector<864x128xf32> to vector<864x128xbf16>
    %c0_55 = arith.constant 0 : index
    %c0_56 = arith.constant 0 : index
    %82 = vector.load %arg6[%c0_55, %c0_56] : memref<128x128xbf16, #tpu.memory_space<vmem>>, vector<128x128xbf16>
    %cst_57 = arith.constant dense<0.000000e+00> : vector<864x128xf32>
    %83 = tpu.matmul %81, %82, %cst_57 {dimension_numbers = #tpu.dot_dimension_numbers<[1], [0], [0], [1], [0, 0, 1, 1], [], []>} : vector<864x128xbf16>, vector<128x128xbf16>, vector<864x128xf32> -> vector<864x128xf32>
    %84 = arith.addf %83, %10 : vector<864x128xf32>
    %c0_58 = arith.constant 0 : index
    %c0_59 = arith.constant 0 : index
    %85 = vector.load %arg7[%c0_58, %c0_59] : memref<1x128xf32, #tpu.memory_space<vmem>>, vector<1x128xf32>
    %86 = vector.broadcast %85 : vector<1x128xf32> to vector<864x128xf32>
    %87 = arith.addf %84, %86 : vector<864x128xf32>
    %c0_60 = arith.constant 0 : index
    %c0_61 = arith.constant 0 : index
    %88 = vector.load %arg9[%c0_60, %c0_61] : memref<864x128xf32, #tpu.memory_space<vmem>>, vector<864x128xf32>
    tpu.vector_store %arg9[%c0_60, %c0_61], %87 {strides = array<i32>} : memref<864x128xf32, #tpu.memory_space<vmem>>, vector<864x128xf32>,
    return
  }
  func.func @transform_0(%arg0: i32) -> (i32, i32) {
    %c0_i32 = arith.constant 0 : i32
    %c0_i32_0 = arith.constant 0 : i32
    return %arg0, %c0_i32 : i32, i32
  }
  func.func @transform_1(%arg0: i32) -> (i32, i32) {
    %c0_i32 = arith.constant 0 : i32
    %c0_i32_0 = arith.constant 0 : i32
    %c0_i32_1 = arith.constant 0 : i32
    return %c0_i32, %c0_i32_0 : i32, i32
  }
  func.func @transform_2(%arg0: i32) -> (i32, i32) {
    %c0_i32 = arith.constant 0 : i32
    %c0_i32_0 = arith.constant 0 : i32
    %c0_i32_1 = arith.constant 0 : i32
    return %c0_i32, %c0_i32_0 : i32, i32
  }
  func.func @transform_3(%arg0: i32) -> (i32, i32, i32) {
    %c0_i32 = arith.constant 0 : i32
    %c0_i32_0 = arith.constant 0 : i32
    %c0_i32_1 = arith.constant 0 : i32
    %c0_i32_2 = arith.constant 0 : i32
    return %c0_i32, %c0_i32_0, %c0_i32_1 : i32, i32, i32
  }
  func.func @transform_4(%arg0: i32) -> (i32, i32) {
    %c0_i32 = arith.constant 0 : i32
    %c0_i32_0 = arith.constant 0 : i32
    %c0_i32_1 = arith.constant 0 : i32
    return %c0_i32, %c0_i32_0 : i32, i32
  }
  func.func @transform_5(%arg0: i32) -> (i32, i32) {
    %c0_i32 = arith.constant 0 : i32
    %c0_i32_0 = arith.constant 0 : i32
    %c0_i32_1 = arith.constant 0 : i32
    return %c0_i32, %c0_i32_0 : i32, i32
  }
  func.func @transform_6(%arg0: i32) -> (i32, i32) {
    %c0_i32 = arith.constant 0 : i32
    %c0_i32_0 = arith.constant 0 : i32
    %c0_i32_1 = arith.constant 0 : i32
    return %c0_i32, %c0_i32_0 : i32, i32
  }
  func.func @transform_7(%arg0: i32) -> (i32, i32) {
    %c0_i32 = arith.constant 0 : i32
    %c0_i32_0 = arith.constant 0 : i32
    %c0_i32_1 = arith.constant 0 : i32
    return %c0_i32, %c0_i32_0 : i32, i32
  }
  func.func @transform_8(%arg0: i32) -> (i32, i32) {
    %c0_i32 = arith.constant 0 : i32
    %c0_i32_0 = arith.constant 0 : i32
    return %arg0, %c0_i32 : i32, i32
  }
}

</mosaic_0001>

<llo_original>
// kernel: tpu_custom_call.1
$region0: #{tpu_custom_call.1}
  #allocation0 [shape = 'u32[]', space=smem, size = 0x4, offset = 0x4, fixed_abs, tag = 'smem constant byte address 0x4 - core index']
  #allocation1 [shape = 'u32[144,128]{1,0:T(1,128)}', space=vmem, size = 0x12000, scoped, tag = 'internal scratch']
  #allocation2 [shape = 'f32[928,128]{1,0:T(8,128)}', space=vmem, size = 0x74000, scoped, tag = 'scratch operand']
  %s0 = inlined_call_operand.vmem [shape: f32[864,8], index: 0, kind: input, shape index: {}]
  %s1 = inlined_call_operand.vmem [shape: bf16[16,256], index: 1, kind: input, shape index: {}]
  %s2 = inlined_call_operand.vmem [shape: f32[1,128], index: 2, kind: input, shape index: {}]
  %s3 = inlined_call_operand.vmem [shape: bf16[9,128,128], index: 3, kind: input, shape index: {}]
  %s4 = inlined_call_operand.vmem [shape: f32[1,128], index: 4, kind: input, shape index: {}]
  %s5 = inlined_call_operand.vmem [shape: bf16[128,128], index: 5, kind: input, shape index: {}]
  %s6 = inlined_call_operand.vmem [shape: f32[1,128], index: 6, kind: input, shape index: {}]
  %s7 = inlined_call_operand.vmem [shape: f32[864,1], index: 7, kind: input, shape index: {}]
  %s8 = inlined_call_operand.hbm [shape: f32[864,128], index: 8, kind: output, shape index: {}]
  %s9 = sld [smem:[#allocation0]]
  $region46: #{tpu_custom_call.1} parent=0
    _
  %s11 = ssub.s32 1, %s9
  %s12 = scalar_select 0, %s11, %s9
  $region1: #{tpu_custom_call.1} parent=0
    #allocation3 [shape = 'u8[442368]{0}', space=vmem, size = 0x6c000, scoped, tag = 'output window, operand 0, single buffered']
    #allocation4 [shape = 's32[1]{0}', space=sflag, size = 0x4, scoped, tag = 'scoped memory for tpu_custom_call.1']
    %13 = vsyncpa [#allocation4], 0
    // Predicated region
    $region2: #{tpu_custom_call.1} parent=1 // pred_check
      _
    $region3: #{tpu_custom_call.1} parent=1 // pred_check_branch
      %15 = sbr.rel (0) target = $region5
    $region4: #{tpu_custom_call.1} parent=1 // pred_region
      _
    $region5: #{tpu_custom_call.1} parent=1 // pred_fallthru
      _
    // Predicated region
    $region6: #{tpu_custom_call.1} parent=1 // pred_check
      _
    $region7: #{tpu_custom_call.1} parent=1 // pred_check_branch
      %17 = sbr.rel (0) target = $region9
    $region8: #{tpu_custom_call.1} parent=1 // pred_region
      _
    $region9: #{tpu_custom_call.1} parent=1 // pred_fallthru
      _
    // Predicated region
    $region10: #{tpu_custom_call.1} parent=1 // pred_check
      _
    $region11: #{tpu_custom_call.1} parent=1 // pred_check_branch
      %19 = sbr.rel (0) target = $region13
    $region12: #{tpu_custom_call.1} parent=1 // pred_region
      _
    $region13: #{tpu_custom_call.1} parent=1 // pred_fallthru
      _
    // Predicated region
    $region14: #{tpu_custom_call.1} parent=1 // pred_check
      _
    $region15: #{tpu_custom_call.1} parent=1 // pred_check_branch
      %21 = sbr.rel (0) target = $region17
    $region16: #{tpu_custom_call.1} parent=1 // pred_region
      _
    $region17: #{tpu_custom_call.1} parent=1 // pred_fallthru
      _
    // Predicated region
    $region18: #{tpu_custom_call.1} parent=1 // pred_check
      _
    $region19: #{tpu_custom_call.1} parent=1 // pred_check_branch
      %23 = sbr.rel (0) target = $region21
    $region20: #{tpu_custom_call.1} parent=1 // pred_region
      _
    $region21: #{tpu_custom_call.1} parent=1 // pred_fallthru
      _
    // Predicated region
    $region22: #{tpu_custom_call.1} parent=1 // pred_check
      _
    $region23: #{tpu_custom_call.1} parent=1 // pred_check_branch
      %25 = sbr.rel (0) target = $region25
    $region24: #{tpu_custom_call.1} parent=1 // pred_region
      _
    $region25: #{tpu_custom_call.1} parent=1 // pred_fallthru
      _
    // Predicated region
    $region26: #{tpu_custom_call.1} parent=1 // pred_check
      _
    $region27: #{tpu_custom_call.1} parent=1 // pred_check_branch
      %27 = sbr.rel (0) target = $region29
    $region28: #{tpu_custom_call.1} parent=1 // pred_region
      _
    $region29: #{tpu_custom_call.1} parent=1 // pred_fallthru
      _
    // Predicated region
    $region30: #{tpu_custom_call.1} parent=1 // pred_check
      _
    $region31: #{tpu_custom_call.1} parent=1 // pred_check_branch
      %29 = sbr.rel (0) target = $region33
    $region32: #{tpu_custom_call.1} parent=1 // pred_region
      _
    $region33: #{tpu_custom_call.1} parent=1 // pred_fallthru
      _
    %p31 = scmp.eq.s32.totalorder 0, 0
    // Predicated region
    $region34: #{tpu_custom_call.1} parent=1 // pred_check
      %p32 = pneg %p31
    $region35: #{tpu_custom_call.1} parent=1 // pred_check_branch
      %34 = sbr.rel (%p32) target = $region37
    $region36: #{tpu_custom_call.1} parent=1 // pred_region
      %35 = vst [vmem:[#allocation2] sm:$0xff] 0.0
      %36 = vst [vmem:[#allocation2 + $0x8] sm:$0xff] 0.0
      %37 = vst [vmem:[#allocation2 + $0x10] sm:$0xff] 0.0
      %38 = vst [vmem:[#allocation2 + $0x18] sm:$0xff] 0.0
      %39 = vst [vmem:[#allocation2 + $0x380] sm:$0xff] 0.0
      %40 = vst [vmem:[#allocation2 + $0x388] sm:$0xff] 0.0
      %41 = vst [vmem:[#allocation2 + $0x390] sm:$0xff] 0.0
      %42 = vst [vmem:[#allocation2 + $0x398] sm:$0xff] 0.0
    $region37: #{tpu_custom_call.1} parent=1 // pred_fallthru
      _
    %v43 = vld [vmem:[%s0] sm:$0xff]
    %v44 = vld [vmem:[%s0 + $0x8] sm:$0xff]
    %v45 = vld [vmem:[%s0 + $0x10] sm:$0xff]
    %v46 = vld [vmem:[%s0 + $0x18] sm:$0xff]
    %v47 = vld [vmem:[%s0 + $0x20] sm:$0xff]
    %v48 = vld [vmem:[%s0 + $0x28] sm:$0xff]
    %v49 = vld [vmem:[%s0 + $0x30] sm:$0xff]
    %v50 = vld [vmem:[%s0 + $0x38] sm:$0xff]
    %v51 = vld [vmem:[%s0 + $0x40] sm:$0xff]
    %v52 = vld [vmem:[%s0 + $0x48] sm:$0xff]
    %v53 = vld [vmem:[%s0 + $0x50] sm:$0xff]
    %v54 = vld [vmem:[%s0 + $0x58] sm:$0xff]
    %v55 = vld [vmem:[%s0 + $0x60] sm:$0xff]
    %v56 = vld [vmem:[%s0 + $0x68] sm:$0xff]
    %v57 = vld [vmem:[%s0 + $0x70] sm:$0xff]
    %v58 = vld [vmem:[%s0 + $0x78] sm:$0xff]
    %v59 = vld [vmem:[%s0 + $0x80] sm:$0xff]
    %v60 = vld [vmem:[%s0 + $0x88] sm:$0xff]
    %v61 = vld [vmem:[%s0 + $0x90] sm:$0xff]
    %v62 = vld [vmem:[%s0 + $0x98] sm:$0xff]
    %v63 = vld [vmem:[%s0 + $0xa0] sm:$0xff]
    %v64 = vld [vmem:[%s0 + $0xa8] sm:$0xff]
    %v65 = vld [vmem:[%s0 + $0xb0] sm:$0xff]
    %v66 = vld [vmem:[%s0 + $0xb8] sm:$0xff]
    %v67 = vld [vmem:[%s0 + $0xc0] sm:$0xff]
    %v68 = vld [vmem:[%s0 + $0xc8] sm:$0xff]
    %v69 = vld [vmem:[%s0 + $0xd0] sm:$0xff]
    %v70 = vld [vmem:[%s0 + $0xd8] sm:$0xff]
    %v71 = vld [vmem:[%s0 + $0xe0] sm:$0xff]
    %v72 = vld [vmem:[%s0 + $0xe8] sm:$0xff]
    %v73 = vld [vmem:[%s0 + $0xf0] sm:$0xff]
    %v74 = vld [vmem:[%s0 + $0xf8] sm:$0xff]
    %v75 = vld [vmem:[%s0 + $0x100] sm:$0xff]
    %v76 = vld [vmem:[%s0 + $0x108] sm:$0xff]
    %v77 = vld [vmem:[%s0 + $0x110] sm:$0xff]
    %v78 = vld [vmem:[%s0 + $0x118] sm:$0xff]
    %v79 = vld [vmem:[%s0 + $0x120] sm:$0xff]
    %v80 = vld [vmem:[%s0 + $0x128] sm:$0xff]
    %v81 = vld [vmem:[%s0 + $0x130] sm:$0xff]
    %v82 = vld [vmem:[%s0 + $0x138] sm:$0xff]
    %v83 = vld [vmem:[%s0 + $0x140] sm:$0xff]
    %v84 = vld [vmem:[%s0 + $0x148] sm:$0xff]
    %v85 = vld [vmem:[%s0 + $0x150] sm:$0xff]
    %v86 = vld [vmem:[%s0 + $0x158] sm:$0xff]
    %v87 = vld [vmem:[%s0 + $0x160] sm:$0xff]
    %v88 = vld [vmem:[%s0 + $0x168] sm:$0xff]
    %v89 = vld [vmem:[%s0 + $0x170] sm:$0xff]
    %v90 = vld [vmem:[%s0 + $0x178] sm:$0xff]
    %v91 = vld [vmem:[%s0 + $0x180] sm:$0xff]
    %v92 = vld [vmem:[%s0 + $0x188] sm:$0xff]
    %v93 = vld [vmem:[%s0 + $0x190] sm:$0xff]
    %v94 = vld [vmem:[%s0 + $0x198] sm:$0xff]
    %v95 = vld [vmem:[%s0 + $0x1a0] sm:$0xff]
    %v96 = vld [vmem:[%s0 + $0x1a8] sm:$0xff]
    %v97 = vld [vmem:[%s0 + $0x1b0] sm:$0xff]
    %v98 = vld [vmem:[%s0 + $0x1b8] sm:$0xff]
    %v99 = vld [vmem:[%s0 + $0x1c0] sm:$0xff]
    %v100 = vld [vmem:[%s0 + $0x1c8] sm:$0xff]
    %v101 = vld [vmem:[%s0 + $0x1d0] sm:$0xff]
    %v102 = vld [vmem:[%s0 + $0x1d8] sm:$0xff]
    %v103 = vld [vmem:[%s0 + $0x1e0] sm:$0xff]
    %v104 = vld [vmem:[%s0 + $0x1e8] sm:$0xff]
    %v105 = vld [vmem:[%s0 + $0x1f0] sm:$0xff]
    %v106 = vld [vmem:[%s0 + $0x1f8] sm:$0xff]
    %v107 = vld [vmem:[%s0 + $0x200] sm:$0xff]
    %v108 = vld [vmem:[%s0 + $0x208] sm:$0xff]
    %v109 = vld [vmem:[%s0 + $0x210] sm:$0xff]
    %v110 = vld [vmem:[%s0 + $0x218] sm:$0xff]
    %v111 = vld [vmem:[%s0 + $0x220] sm:$0xff]
    %v112 = vld [vmem:[%s0 + $0x228] sm:$0xff]
    %v113 = vld [vmem:[%s0 + $0x230] sm:$0xff]
    %v114 = vld [vmem:[%s0 + $0x238] sm:$0xff]
    %v115 = vld [vmem:[%s0 + $0x240] sm:$0xff]
    %v116 = vld [vmem:[%s0 + $0x248] sm:$0xff]
    %v117 = vld [vmem:[%s0 + $0x250] sm:$0xff]
    %v118 = vld [vmem:[%s0 + $0x258] sm:$0xff]
    %v119 = vld [vmem:[%s0 + $0x260] sm:$0xff]
    %v120 = vld [vmem:[%s0 + $0x268] sm:$0xff]
    %v121 = vld [vmem:[%s0 + $0x270] sm:$0xff]
    %v122 = vld [vmem:[%s0 + $0x278] sm:$0xff]
    %v123 = vld [vmem:[%s0 + $0x280] sm:$0xff]
    %v124 = vld [vmem:[%s0 + $0x288] sm:$0xff]
    %v125 = vld [vmem:[%s0 + $0x290] sm:$0xff]
    %v126 = vld [vmem:[%s0 + $0x298] sm:$0xff]
    %v127 = vld [vmem:[%s0 + $0x2a0] sm:$0xff]
    %v128 = vld [vmem:[%s0 + $0x2a8] sm:$0xff]
    %v129 = vld [vmem:[%s0 + $0x2b0] sm:$0xff]
    %v130 = vld [vmem:[%s0 + $0x2b8] sm:$0xff]
    %v131 = vld [vmem:[%s0 + $0x2c0] sm:$0xff]
    %v132 = vld [vmem:[%s0 + $0x2c8] sm:$0xff]
    %v133 = vld [vmem:[%s0 + $0x2d0] sm:$0xff]
    %v134 = vld [vmem:[%s0 + $0x2d8] sm:$0xff]
    %v135 = vld [vmem:[%s0 + $0x2e0] sm:$0xff]
    %v136 = vld [vmem:[%s0 + $0x2e8] sm:$0xff]
    %v137 = vld [vmem:[%s0 + $0x2f0] sm:$0xff]
    %v138 = vld [vmem:[%s0 + $0x2f8] sm:$0xff]
    %v139 = vld [vmem:[%s0 + $0x300] sm:$0xff]
    %v140 = vld [vmem:[%s0 + $0x308] sm:$0xff]
    %v141 = vld [vmem:[%s0 + $0x310] sm:$0xff]
    %v142 = vld [vmem:[%s0 + $0x318] sm:$0xff]
    %v143 = vld [vmem:[%s0 + $0x320] sm:$0xff]
    %v144 = vld [vmem:[%s0 + $0x328] sm:$0xff]
    %v145 = vld [vmem:[%s0 + $0x330] sm:$0xff]
    %v146 = vld [vmem:[%s0 + $0x338] sm:$0xff]
    %v147 = vld [vmem:[%s0 + $0x340] sm:$0xff]
    %v148 = vld [vmem:[%s0 + $0x348] sm:$0xff]
    %v149 = vld [vmem:[%s0 + $0x350] sm:$0xff]
    %v150 = vld [vmem:[%s0 + $0x358] sm:$0xff]
    %v151 = vmax.f32 %v43, 0.0
    %v152 = vmax.f32 %v44, 0.0
    %v153 = vmax.f32 %v45, 0.0
    %v154 = vmax.f32 %v46, 0.0
    %v155 = vmax.f32 %v47, 0.0
    %v156 = vmax.f32 %v48, 0.0
    %v157 = vmax.f32 %v49, 0.0
    %v158 = vmax.f32 %v50, 0.0
    %v159 = vmax.f32 %v51, 0.0
    %v160 = vmax.f32 %v52, 0.0
    %v161 = vmax.f32 %v53, 0.0
    %v162 = vmax.f32 %v54, 0.0
    %v163 = vmax.f32 %v55, 0.0
    %v164 = vmax.f32 %v56, 0.0
    %v165 = vmax.f32 %v57, 0.0
    %v166 = vmax.f32 %v58, 0.0
    %v167 = vmax.f32 %v59, 0.0
    %v168 = vmax.f32 %v60, 0.0
    %v169 = vmax.f32 %v61, 0.0
    %v170 = vmax.f32 %v62, 0.0
    %v171 = vmax.f32 %v63, 0.0
    %v172 = vmax.f32 %v64, 0.0
    %v173 = vmax.f32 %v65, 0.0
    %v174 = vmax.f32 %v66, 0.0
    %v175 = vmax.f32 %v67, 0.0
    %v176 = vmax.f32 %v68, 0.0
    %v177 = vmax.f32 %v69, 0.0
    %v178 = vmax.f32 %v70, 0.0
    %v179 = vmax.f32 %v71, 0.0
    %v180 = vmax.f32 %v72, 0.0
    %v181 = vmax.f32 %v73, 0.0
    %v182 = vmax.f32 %v74, 0.0
    %v183 = vmax.f32 %v75, 0.0
    %v184 = vmax.f32 %v76, 0.0
    %v185 = vmax.f32 %v77, 0.0
    %v186 = vmax.f32 %v78, 0.0
    %v187 = vmax.f32 %v79, 0.0
    %v188 = vmax.f32 %v80, 0.0
    %v189 = vmax.f32 %v81, 0.0
    %v190 = vmax.f32 %v82, 0.0
    %v191 = vmax.f32 %v83, 0.0
    %v192 = vmax.f32 %v84, 0.0
    %v193 = vmax.f32 %v85, 0.0
    %v194 = vmax.f32 %v86, 0.0
    %v195 = vmax.f32 %v87, 0.0
    %v196 = vmax.f32 %v88, 0.0
    %v197 = vmax.f32 %v89, 0.0
    %v198 = vmax.f32 %v90, 0.0
    %v199 = vmax.f32 %v91, 0.0
    %v200 = vmax.f32 %v92, 0.0
    %v201 = vmax.f32 %v93, 0.0
    %v202 = vmax.f32 %v94, 0.0
    %v203 = vmax.f32 %v95, 0.0
    %v204 = vmax.f32 %v96, 0.0
    %v205 = vmax.f32 %v97, 0.0
    %v206 = vmax.f32 %v98, 0.0
    %v207 = vmax.f32 %v99, 0.0
    %v208 = vmax.f32 %v100, 0.0
    %v209 = vmax.f32 %v101, 0.0
    %v210 = vmax.f32 %v102, 0.0
    %v211 = vmax.f32 %v103, 0.0
    %v212 = vmax.f32 %v104, 0.0
    %v213 = vmax.f32 %v105, 0.0
    %v214 = vmax.f32 %v106, 0.0
    %v215 = vmax.f32 %v107, 0.0
    %v216 = vmax.f32 %v108, 0.0
    %v217 = vmax.f32 %v109, 0.0
    %v218 = vmax.f32 %v110, 0.0
    %v219 = vmax.f32 %v111, 0.0
    %v220 = vmax.f32 %v112, 0.0
    %v221 = vmax.f32 %v113, 0.0
    %v222 = vmax.f32 %v114, 0.0
    %v223 = vmax.f32 %v115, 0.0
    %v224 = vmax.f32 %v116, 0.0
    %v225 = vmax.f32 %v117, 0.0
    %v226 = vmax.f32 %v118, 0.0
    %v227 = vmax.f32 %v119, 0.0
    %v228 = vmax.f32 %v120, 0.0
    %v229 = vmax.f32 %v121, 0.0
    %v230 = vmax.f32 %v122, 0.0
    %v231 = vmax.f32 %v123, 0.0
    %v232 = vmax.f32 %v124, 0.0
    %v233 = vmax.f32 %v125, 0.0
    %v234 = vmax.f32 %v126, 0.0
    %v235 = vmax.f32 %v127, 0.0
    %v236 = vmax.f32 %v128, 0.0
    %v237 = vmax.f32 %v129, 0.0
    %v238 = vmax.f32 %v130, 0.0
    %v239 = vmax.f32 %v131, 0.0
    %v240 = vmax.f32 %v132, 0.0
    %v241 = vmax.f32 %v133, 0.0
    %v242 = vmax.f32 %v134, 0.0
    %v243 = vmax.f32 %v135, 0.0
    %v244 = vmax.f32 %v136, 0.0
    %v245 = vmax.f32 %v137, 0.0
    %v246 = vmax.f32 %v138, 0.0
    %v247 = vmax.f32 %v139, 0.0
    %v248 = vmax.f32 %v140, 0.0
    %v249 = vmax.f32 %v141, 0.0
    %v250 = vmax.f32 %v142, 0.0
    %v251 = vmax.f32 %v143, 0.0
    %v252 = vmax.f32 %v144, 0.0
    %v253 = vmax.f32 %v145, 0.0
    %v254 = vmax.f32 %v146, 0.0
    %v255 = vmax.f32 %v147, 0.0
    %v256 = vmax.f32 %v148, 0.0
    %v257 = vmax.f32 %v149, 0.0
    %v258 = vmax.f32 %v150, 0.0
    %367 = vrot.lane.b32.xlu0 %v151, 8
    %v368 = vpop.permute.xlu0 %367
    %369 = vrot.lane.b32.xlu0 %v152, 8
    %v370 = vpop.permute.xlu0 %369
    %371 = vrot.lane.b32.xlu0 %v153, 8
    %v372 = vpop.permute.xlu0 %371
    %373 = vrot.lane.b32.xlu0 %v154, 8
    %v374 = vpop.permute.xlu0 %373
    %375 = vrot.lane.b32.xlu0 %v155, 8
    %v376 = vpop.permute.xlu0 %375
    %377 = vrot.lane.b32.xlu0 %v156, 8
    %v378 = vpop.permute.xlu0 %377
    %379 = vrot.lane.b32.xlu0 %v157, 8
    %v380 = vpop.permute.xlu0 %379
    %381 = vrot.lane.b32.xlu0 %v158, 8
    %v382 = vpop.permute.xlu0 %381
    %383 = vrot.lane.b32.xlu0 %v159, 8
    %v384 = vpop.permute.xlu0 %383
    %385 = vrot.lane.b32.xlu0 %v160, 8
    %v386 = vpop.permute.xlu0 %385
    %387 = vrot.lane.b32.xlu0 %v161, 8
    %v388 = vpop.permute.xlu0 %387
    %389 = vrot.lane.b32.xlu0 %v162, 8
    %v390 = vpop.permute.xlu0 %389
    %391 = vrot.lane.b32.xlu0 %v163, 8
    %v392 = vpop.permute.xlu0 %391
    %393 = vrot.lane.b32.xlu0 %v164, 8
    %v394 = vpop.permute.xlu0 %393
    %395 = vrot.lane.b32.xlu0 %v165, 8
    %v396 = vpop.permute.xlu0 %395
    %397 = vrot.lane.b32.xlu0 %v166, 8
    %v398 = vpop.permute.xlu0 %397
    %399 = vrot.lane.b32.xlu0 %v167, 8
    %v400 = vpop.permute.xlu0 %399
    %401 = vrot.lane.b32.xlu0 %v168, 8
    %v402 = vpop.permute.xlu0 %401
    %403 = vrot.lane.b32.xlu0 %v169, 8
    %v404 = vpop.permute.xlu0 %403
    %405 = vrot.lane.b32.xlu0 %v170, 8
    %v406 = vpop.permute.xlu0 %405
    %407 = vrot.lane.b32.xlu0 %v171, 8
    %v408 = vpop.permute.xlu0 %407
    %409 = vrot.lane.b32.xlu0 %v172, 8
    %v410 = vpop.permute.xlu0 %409
    %411 = vrot.lane.b32.xlu0 %v173, 8
    %v412 = vpop.permute.xlu0 %411
    %413 = vrot.lane.b32.xlu0 %v174, 8
    %v414 = vpop.permute.xlu0 %413
    %415 = vrot.lane.b32.xlu0 %v175, 8
    %v416 = vpop.permute.xlu0 %415
    %417 = vrot.lane.b32.xlu0 %v176, 8
    %v418 = vpop.permute.xlu0 %417
    %419 = vrot.lane.b32.xlu0 %v177, 8
    %v420 = vpop.permute.xlu0 %419
    %421 = vrot.lane.b32.xlu0 %v178, 8
    %v422 = vpop.permute.xlu0 %421
    %423 = vrot.lane.b32.xlu0 %v179, 8
    %v424 = vpop.permute.xlu0 %423
    %425 = vrot.lane.b32.xlu0 %v180, 8
    %v426 = vpop.permute.xlu0 %425
    %427 = vrot.lane.b32.xlu0 %v181, 8
    %v428 = vpop.permute.xlu0 %427
    %429 = vrot.lane.b32.xlu0 %v182, 8
    %v430 = vpop.permute.xlu0 %429
    %431 = vrot.lane.b32.xlu0 %v183, 8
    %v432 = vpop.permute.xlu0 %431
    %433 = vrot.lane.b32.xlu0 %v184, 8
    %v434 = vpop.permute.xlu0 %433
    %435 = vrot.lane.b32.xlu0 %v185, 8
    %v436 = vpop.permute.xlu0 %435
    %437 = vrot.lane.b32.xlu0 %v186, 8
    %v438 = vpop.permute.xlu0 %437
    %439 = vrot.lane.b32.xlu0 %v187, 8
    %v440 = vpop.permute.xlu0 %439
    %441 = vrot.lane.b32.xlu0 %v188, 8
    %v442 = vpop.permute.xlu0 %441
    %443 = vrot.lane.b32.xlu0 %v189, 8
    %v444 = vpop.permute.xlu0 %443
    %445 = vrot.lane.b32.xlu0 %v190, 8
    %v446 = vpop.permute.xlu0 %445
    %447 = vrot.lane.b32.xlu0 %v191, 8
    %v448 = vpop.permute.xlu0 %447
    %449 = vrot.lane.b32.xlu0 %v192, 8
    %v450 = vpop.permute.xlu0 %449
    %451 = vrot.lane.b32.xlu0 %v193, 8
    %v452 = vpop.permute.xlu0 %451
    %453 = vrot.lane.b32.xlu0 %v194, 8
    %v454 = vpop.permute.xlu0 %453
    %455 = vrot.lane.b32.xlu0 %v195, 8
    %v456 = vpop.permute.xlu0 %455
    %457 = vrot.lane.b32.xlu0 %v196, 8
    %v458 = vpop.permute.xlu0 %457
    %459 = vrot.lane.b32.xlu0 %v197, 8
    %v460 = vpop.permute.xlu0 %459
    %461 = vrot.lane.b32.xlu0 %v198, 8
    %v462 = vpop.permute.xlu0 %461
    %463 = vrot.lane.b32.xlu0 %v199, 8
    %v464 = vpop.permute.xlu0 %463
    %465 = vrot.lane.b32.xlu0 %v200, 8
    %v466 = vpop.permute.xlu0 %465
    %467 = vrot.lane.b32.xlu0 %v201, 8
    %v468 = vpop.permute.xlu0 %467
    %469 = vrot.lane.b32.xlu0 %v202, 8
    %v470 = vpop.permute.xlu0 %469
    %471 = vrot.lane.b32.xlu0 %v203, 8
    %v472 = vpop.permute.xlu0 %471
    %473 = vrot.lane.b32.xlu0 %v204, 8
    %v474 = vpop.permute.xlu0 %473
    %475 = vrot.lane.b32.xlu0 %v205, 8
    %v476 = vpop.permute.xlu0 %475
    %477 = vrot.lane.b32.xlu0 %v206, 8
    %v478 = vpop.permute.xlu0 %477
    %479 = vrot.lane.b32.xlu0 %v207, 8
    %v480 = vpop.permute.xlu0 %479
    %481 = vrot.lane.b32.xlu0 %v208, 8
    %v482 = vpop.permute.xlu0 %481
    %483 = vrot.lane.b32.xlu0 %v209, 8
    %v484 = vpop.permute.xlu0 %483
    %485 = vrot.lane.b32.xlu0 %v210, 8
    %v486 = vpop.permute.xlu0 %485
    %487 = vrot.lane.b32.xlu0 %v211, 8
    %v488 = vpop.permute.xlu0 %487
    %489 = vrot.lane.b32.xlu0 %v212, 8
    %v490 = vpop.permute.xlu0 %489
    %491 = vrot.lane.b32.xlu0 %v213, 8
    %v492 = vpop.permute.xlu0 %491
    %493 = vrot.lane.b32.xlu0 %v214, 8
    %v494 = vpop.permute.xlu0 %493
    %495 = vrot.lane.b32.xlu0 %v215, 8
    %v496 = vpop.permute.xlu0 %495
    %497 = vrot.lane.b32.xlu0 %v216, 8
    %v498 = vpop.permute.xlu0 %497
    %499 = vrot.lane.b32.xlu0 %v217, 8
    %v500 = vpop.permute.xlu0 %499
    %501 = vrot.lane.b32.xlu0 %v218, 8
    %v502 = vpop.permute.xlu0 %501
    %503 = vrot.lane.b32.xlu0 %v219, 8
    %v504 = vpop.permute.xlu0 %503
    %505 = vrot.lane.b32.xlu0 %v220, 8
    %v506 = vpop.permute.xlu0 %505
    %507 = vrot.lane.b32.xlu0 %v221, 8
    %v508 = vpop.permute.xlu0 %507
    %509 = vrot.lane.b32.xlu0 %v222, 8
    %v510 = vpop.permute.xlu0 %509
    %511 = vrot.lane.b32.xlu0 %v223, 8
    %v512 = vpop.permute.xlu0 %511
    %513 = vrot.lane.b32.xlu0 %v224, 8
    %v514 = vpop.permute.xlu0 %513
    %515 = vrot.lane.b32.xlu0 %v225, 8
    %v516 = vpop.permute.xlu0 %515
    %517 = vrot.lane.b32.xlu0 %v226, 8
    %v518 = vpop.permute.xlu0 %517
    %519 = vrot.lane.b32.xlu0 %v227, 8
    %v520 = vpop.permute.xlu0 %519
    %521 = vrot.lane.b32.xlu0 %v228, 8
    %v522 = vpop.permute.xlu0 %521
    %523 = vrot.lane.b32.xlu0 %v229, 8
    %v524 = vpop.permute.xlu0 %523
    %525 = vrot.lane.b32.xlu0 %v230, 8
    %v526 = vpop.permute.xlu0 %525
    %527 = vrot.lane.b32.xlu0 %v231, 8
    %v528 = vpop.permute.xlu0 %527
    %529 = vrot.lane.b32.xlu0 %v232, 8
    %v530 = vpop.permute.xlu0 %529
    %531 = vrot.lane.b32.xlu0 %v233, 8
    %v532 = vpop.permute.xlu0 %531
    %533 = vrot.lane.b32.xlu0 %v234, 8
    %v534 = vpop.permute.xlu0 %533
    %535 = vrot.lane.b32.xlu0 %v235, 8
    %v536 = vpop.permute.xlu0 %535
    %537 = vrot.lane.b32.xlu0 %v236, 8
    %v538 = vpop.permute.xlu0 %537
    %539 = vrot.lane.b32.xlu0 %v237, 8
    %v540 = vpop.permute.xlu0 %539
    %541 = vrot.lane.b32.xlu0 %v238, 8
    %v542 = vpop.permute.xlu0 %541
    %543 = vrot.lane.b32.xlu0 %v239, 8
    %v544 = vpop.permute.xlu0 %543
    %545 = vrot.lane.b32.xlu0 %v240, 8
    %v546 = vpop.permute.xlu0 %545
    %547 = vrot.lane.b32.xlu0 %v241, 8
    %v548 = vpop.permute.xlu0 %547
    %549 = vrot.lane.b32.xlu0 %v242, 8
    %v550 = vpop.permute.xlu0 %549
    %551 = vrot.lane.b32.xlu0 %v243, 8
    %v552 = vpop.permute.xlu0 %551
    %553 = vrot.lane.b32.xlu0 %v244, 8
    %v554 = vpop.permute.xlu0 %553
    %555 = vrot.lane.b32.xlu0 %v245, 8
    %v556 = vpop.permute.xlu0 %555
    %557 = vrot.lane.b32.xlu0 %v246, 8
    %v558 = vpop.permute.xlu0 %557
    %559 = vrot.lane.b32.xlu0 %v247, 8
    %v560 = vpop.permute.xlu0 %559
    %561 = vrot.lane.b32.xlu0 %v248, 8
    %v562 = vpop.permute.xlu0 %561
    %563 = vrot.lane.b32.xlu0 %v249, 8
    %v564 = vpop.permute.xlu0 %563
    %565 = vrot.lane.b32.xlu0 %v250, 8
    %v566 = vpop.permute.xlu0 %565
    %567 = vrot.lane.b32.xlu0 %v251, 8
    %v568 = vpop.permute.xlu0 %567
    %569 = vrot.lane.b32.xlu0 %v252, 8
    %v570 = vpop.permute.xlu0 %569
    %571 = vrot.lane.b32.xlu0 %v253, 8
    %v572 = vpop.permute.xlu0 %571
    %573 = vrot.lane.b32.xlu0 %v254, 8
    %v574 = vpop.permute.xlu0 %573
    %575 = vrot.lane.b32.xlu0 %v255, 8
    %v576 = vpop.permute.xlu0 %575
    %577 = vrot.lane.b32.xlu0 %v256, 8
    %v578 = vpop.permute.xlu0 %577
    %579 = vrot.lane.b32.xlu0 %v257, 8
    %v580 = vpop.permute.xlu0 %579
    %581 = vrot.lane.b32.xlu0 %v258, 8
    %v582 = vpop.permute.xlu0 %581
    %vm691 = vcmask 64512
    %v692 = vsel %vm691, %v43, %v368
    %v693 = vsel %vm691, %v44, %v370
    %v694 = vsel %vm691, %v45, %v372
    %v695 = vsel %vm691, %v46, %v374
    %v696 = vsel %vm691, %v47, %v376
    %v697 = vsel %vm691, %v48, %v378
    %v698 = vsel %vm691, %v49, %v380
    %v699 = vsel %vm691, %v50, %v382
    %v700 = vsel %vm691, %v51, %v384
    %v701 = vsel %vm691, %v52, %v386
    %v702 = vsel %vm691, %v53, %v388
    %v703 = vsel %vm691, %v54, %v390
    %v704 = vsel %vm691, %v55, %v392
    %v705 = vsel %vm691, %v56, %v394
    %v706 = vsel %vm691, %v57, %v396
    %v707 = vsel %vm691, %v58, %v398
    %v708 = vsel %vm691, %v59, %v400
    %v709 = vsel %vm691, %v60, %v402
    %v710 = vsel %vm691, %v61, %v404
    %v711 = vsel %vm691, %v62, %v406
    %v712 = vsel %vm691, %v63, %v408
    %v713 = vsel %vm691, %v64, %v410
    %v714 = vsel %vm691, %v65, %v412
    %v715 = vsel %vm691, %v66, %v414
    %v716 = vsel %vm691, %v67, %v416
    %v717 = vsel %vm691, %v68, %v418
    %v718 = vsel %vm691, %v69, %v420
    %v719 = vsel %vm691, %v70, %v422
    %v720 = vsel %vm691, %v71, %v424
    %v721 = vsel %vm691, %v72, %v426
    %v722 = vsel %vm691, %v73, %v428
    %v723 = vsel %vm691, %v74, %v430
    %v724 = vsel %vm691, %v75, %v432
    %v725 = vsel %vm691, %v76, %v434
    %v726 = vsel %vm691, %v77, %v436
    %v727 = vsel %vm691, %v78, %v438
    %v728 = vsel %vm691, %v79, %v440
    %v729 = vsel %vm691, %v80, %v442
    %v730 = vsel %vm691, %v81, %v444
    %v731 = vsel %vm691, %v82, %v446
    %v732 = vsel %vm691, %v83, %v448
    %v733 = vsel %vm691, %v84, %v450
    %v734 = vsel %vm691, %v85, %v452
    %v735 = vsel %vm691, %v86, %v454
    %v736 = vsel %vm691, %v87, %v456
    %v737 = vsel %vm691, %v88, %v458
    %v738 = vsel %vm691, %v89, %v460
    %v739 = vsel %vm691, %v90, %v462
    %v740 = vsel %vm691, %v91, %v464
    %v741 = vsel %vm691, %v92, %v466
    %v742 = vsel %vm691, %v93, %v468
    %v743 = vsel %vm691, %v94, %v470
    %v744 = vsel %vm691, %v95, %v472
    %v745 = vsel %vm691, %v96, %v474
    %v746 = vsel %vm691, %v97, %v476
    %v747 = vsel %vm691, %v98, %v478
    %v748 = vsel %vm691, %v99, %v480
    %v749 = vsel %vm691, %v100, %v482
    %v750 = vsel %vm691, %v101, %v484
    %v751 = vsel %vm691, %v102, %v486
    %v752 = vsel %vm691, %v103, %v488
    %v753 = vsel %vm691, %v104, %v490
    %v754 = vsel %vm691, %v105, %v492
    %v755 = vsel %vm691, %v106, %v494
    %v756 = vsel %vm691, %v107, %v496
    %v757 = vsel %vm691, %v108, %v498
    %v758 = vsel %vm691, %v109, %v500
    %v759 = vsel %vm691, %v110, %v502
    %v760 = vsel %vm691, %v111, %v504
    %v761 = vsel %vm691, %v112, %v506
    %v762 = vsel %vm691, %v113, %v508
    %v763 = vsel %vm691, %v114, %v510
    %v764 = vsel %vm691, %v115, %v512
    %v765 = vsel %vm691, %v116, %v514
    %v766 = vsel %vm691, %v117, %v516
    %v767 = vsel %vm691, %v118, %v518
    %v768 = vsel %vm691, %v119, %v520
    %v769 = vsel %vm691, %v120, %v522
    %v770 = vsel %vm691, %v121, %v524
    %v771 = vsel %vm691, %v122, %v526
    %v772 = vsel %vm691, %v123, %v528
    %v773 = vsel %vm691, %v124, %v530
    %v774 = vsel %vm691, %v125, %v532
    %v775 = vsel %vm691, %v126, %v534
    %v776 = vsel %vm691, %v127, %v536
    %v777 = vsel %vm691, %v128, %v538
    %v778 = vsel %vm691, %v129, %v540
    %v779 = vsel %vm691, %v130, %v542
    %v780 = vsel %vm691, %v131, %v544
    %v781 = vsel %vm691, %v132, %v546
    %v782 = vsel %vm691, %v133, %v548
    %v783 = vsel %vm691, %v134, %v550
    %v784 = vsel %vm691, %v135, %v552
    %v785 = vsel %vm691, %v136, %v554
    %v786 = vsel %vm691, %v137, %v556
    %v787 = vsel %vm691, %v138, %v558
    %v788 = vsel %vm691, %v139, %v560
    %v789 = vsel %vm691, %v140, %v562
    %v790 = vsel %vm691, %v141, %v564
    %v791 = vsel %vm691, %v142, %v566
    %v792 = vsel %vm691, %v143, %v568
    %v793 = vsel %vm691, %v144, %v570
    %v794 = vsel %vm691, %v145, %v572
    %v795 = vsel %vm691, %v146, %v574
    %v796 = vsel %vm691, %v147, %v576
    %v797 = vsel %vm691, %v148, %v578
    %v798 = vsel %vm691, %v149, %v580
    %v799 = vsel %vm691, %v150, %v582
    %v800 = vpack.c.bf16 %v693, %v692
    %v801 = vpack.c.bf16 %v695, %v694
    %v802 = vpack.c.bf16 %v697, %v696
    %v803 = vpack.c.bf16 %v699, %v698
    %v804 = vpack.c.bf16 %v701, %v700
    %v805 = vpack.c.bf16 %v703, %v702
    %v806 = vpack.c.bf16 %v705, %v704
    %v807 = vpack.c.bf16 %v707, %v706
    %v808 = vpack.c.bf16 %v709, %v708
    %v809 = vpack.c.bf16 %v711, %v710
    %v810 = vpack.c.bf16 %v713, %v712
    %v811 = vpack.c.bf16 %v715, %v714
    %v812 = vpack.c.bf16 %v717, %v716
    %v813 = vpack.c.bf16 %v719, %v718
    %v814 = vpack.c.bf16 %v721, %v720
    %v815 = vpack.c.bf16 %v723, %v722
    %v816 = vpack.c.bf16 %v725, %v724
    %v817 = vpack.c.bf16 %v727, %v726
    %v818 = vpack.c.bf16 %v729, %v728
    %v819 = vpack.c.bf16 %v731, %v730
    %v820 = vpack.c.bf16 %v733, %v732
    %v821 = vpack.c.bf16 %v735, %v734
    %v822 = vpack.c.bf16 %v737, %v736
    %v823 = vpack.c.bf16 %v739, %v738
    %v824 = vpack.c.bf16 %v741, %v740
    %v825 = vpack.c.bf16 %v743, %v742
    %v826 = vpack.c.bf16 %v745, %v744
    %v827 = vpack.c.bf16 %v747, %v746
    %v828 = vpack.c.bf16 %v749, %v748
    %v829 = vpack.c.bf16 %v751, %v750
    %v830 = vpack.c.bf16 %v753, %v752
    %v831 = vpack.c.bf16 %v755, %v754
    %v832 = vpack.c.bf16 %v757, %v756
    %v833 = vpack.c.bf16 %v759, %v758
    %v834 = vpack.c.bf16 %v761, %v760
    %v835 = vpack.c.bf16 %v763, %v762
    %v836 = vpack.c.bf16 %v765, %v764
    %v837 = vpack.c.bf16 %v767, %v766
    %v838 = vpack.c.bf16 %v769, %v768
    %v839 = vpack.c.bf16 %v771, %v770
    %v840 = vpack.c.bf16 %v773, %v772
    %v841 = vpack.c.bf16 %v775, %v774
    %v842 = vpack.c.bf16 %v777, %v776
    %v843 = vpack.c.bf16 %v779, %v778
    %v844 = vpack.c.bf16 %v781, %v780
    %v845 = vpack.c.bf16 %v783, %v782
    %v846 = vpack.c.bf16 %v785, %v784
    %v847 = vpack.c.bf16 %v787, %v786
    %v848 = vpack.c.bf16 %v789, %v788
    %v849 = vpack.c.bf16 %v791, %v790
    %v850 = vpack.c.bf16 %v793, %v792
    %v851 = vpack.c.bf16 %v795, %v794
    %v852 = vpack.c.bf16 %v797, %v796
    %v853 = vpack.c.bf16 %v799, %v798
    %v854 = vld [vmem:[%s1] sm:$0xff]
    %v855 = vld [vmem:[%s1 + $0x8] sm:$0xff]
    %v858 = vunpack.c.l.b16 %v854
    %v859 = vunpack.c.h.b16 %v854
    %v860 = vunpack.c.l.b16 %v855
    %v861 = vunpack.c.h.b16 %v855
    %v862 = vpack.c.b16 %v860, %v858
    %v863 = vpack.c.b16 %v861, %v859
    %vm866 = vcmask 130048
    %v868 = vsel %vm866, %v800, 0
    %v871 = vsel %vm866, %v801, 0
    %v874 = vsel %vm866, %v802, 0
    %v877 = vsel %vm866, %v803, 0
    %v880 = vsel %vm866, %v804, 0
    %v883 = vsel %vm866, %v805, 0
    %v886 = vsel %vm866, %v806, 0
    %v889 = vsel %vm866, %v807, 0
    %v892 = vsel %vm866, %v808, 0
    %v895 = vsel %vm866, %v809, 0
    %v898 = vsel %vm866, %v810, 0
    %v901 = vsel %vm866, %v811, 0
    %v904 = vsel %vm866, %v812, 0
    %v907 = vsel %vm866, %v813, 0
    %v910 = vsel %vm866, %v814, 0
    %v913 = vsel %vm866, %v815, 0
    %v916 = vsel %vm866, %v816, 0
    %v919 = vsel %vm866, %v817, 0
    %v922 = vsel %vm866, %v818, 0
    %v925 = vsel %vm866, %v819, 0
    %v928 = vsel %vm866, %v820, 0
    %v931 = vsel %vm866, %v821, 0
    %v934 = vsel %vm866, %v822, 0
    %v937 = vsel %vm866, %v823, 0
    %v940 = vsel %vm866, %v824, 0
    %v943 = vsel %vm866, %v825, 0
    %v946 = vsel %vm866, %v826, 0
    %v949 = vsel %vm866, %v827, 0
    %v952 = vsel %vm866, %v828, 0
    %v955 = vsel %vm866, %v829, 0
    %v958 = vsel %vm866, %v830, 0
    %v961 = vsel %vm866, %v831, 0
    %v964 = vsel %vm866, %v832, 0
    %v967 = vsel %vm866, %v833, 0
    %v970 = vsel %vm866, %v834, 0
    %v973 = vsel %vm866, %v835, 0
    %v976 = vsel %vm866, %v836, 0
    %v979 = vsel %vm866, %v837, 0
    %v982 = vsel %vm866, %v838, 0
    %v985 = vsel %vm866, %v839, 0
    %v988 = vsel %vm866, %v840, 0
    %v991 = vsel %vm866, %v841, 0
    %v994 = vsel %vm866, %v842, 0
    %v997 = vsel %vm866, %v843, 0
    %v1000 = vsel %vm866, %v844, 0
    %v1003 = vsel %vm866, %v845, 0
    %v1006 = vsel %vm866, %v846, 0
    %v1009 = vsel %vm866, %v847, 0
    %v1012 = vsel %vm866, %v848, 0
    %v1015 = vsel %vm866, %v849, 0
    %v1018 = vsel %vm866, %v850, 0
    %v1021 = vsel %vm866, %v851, 0
    %v1024 = vsel %vm866, %v852, 0
    %v1027 = vsel %vm866, %v853, 0
    %1029 = vmatprep.subr.bf16.mxu0 %v863
    %1030 = vmatpush1.bf16.msra.mxu0 %v862
    %1031 = vmatprep.subr.bf16.mxu0 0
    %1032 = vmatpush1.bf16.msra.mxu0 0
    %1033 = vmatprep.subr.bf16.mxu0 0
    %1034 = vmatpush1.bf16.msra.mxu0 0
    %1035 = vmatprep.subr.bf16.mxu0 0
    %1036 = vmatpush1.bf16.msra.mxu0 0
    %1037 = vmatprep.subr.bf16.mxu0 0
    %1038 = vmatpush1.bf16.msra.mxu0 0
    %1039 = vmatprep.subr.bf16.mxu0 0
    %1040 = vmatpush1.bf16.msra.mxu0 0
    %1041 = vmatprep.subr.bf16.mxu0 0
    %1042 = vmatpush1.bf16.msra.mxu0 0
    %1043 = vmatprep.subr.bf16.mxu0 0
    %1044 = vmatpush1.bf16.msra.mxu0 0
    %1045 = vmatprep.subr.bf16.mxu0 0
    %1046 = vmatpush1.bf16.msra.mxu0 0
    %1047 = vmatprep.subr.bf16.mxu0 0
    %1048 = vmatpush1.bf16.msra.mxu0 0
    %1049 = vmatprep.subr.bf16.mxu0 0
    %1050 = vmatpush1.bf16.msra.mxu0 0
    %1051 = vmatprep.subr.bf16.mxu0 0
    %1052 = vmatpush1.bf16.msra.mxu0 0
    %1053 = vmatprep.subr.bf16.mxu0 0
    %1054 = vmatpush1.bf16.msra.mxu0 0
    %1055 = vmatprep.subr.bf16.mxu0 0
    %1056 = vmatpush1.bf16.msra.mxu0 0
    %1057 = vmatprep.subr.bf16.mxu0 0
    %1058 = vmatpush1.bf16.msra.mxu0 0
    %1059 = vmatprep.subr.bf16.mxu0 0
    %1060 = vmatpush1.bf16.msra.mxu0 0
    %1061 = vmatprep.mubr.bf16.mxu0 0
    %1062 = vmatmul.mubr.bf16.gmra.mrb[0].mxu0 %v868
    %v1063 = vpop.f32.mrb[0].mxu0
    %v1064 = vadd.f32 0.0, %v1063
    %v1065 = vpop.f32.mrb[0].mxu0
    %v1066 = vadd.f32 0.0, %v1065
    %v1067 = vpop.f32.mrb[0].mxu0
    %v1068 = vadd.f32 0.0, %v1067
    %v1069 = vpop.f32.mrb[0].mxu0
    %v1070 = vadd.f32 0.0, %v1069
    %1071 = vmatprep.mubr.bf16.mxu0 0
    %1072 = vmatmul.mubr.bf16.gmra.mrb[0].mxu0 %v871
    %v1073 = vpop.f32.mrb[0].mxu0
    %v1074 = vadd.f32 0.0, %v1073
    %v1075 = vpop.f32.mrb[0].mxu0
    %v1076 = vadd.f32 0.0, %v1075
    %v1077 = vpop.f32.mrb[0].mxu0
    %v1078 = vadd.f32 0.0, %v1077
    %v1079 = vpop.f32.mrb[0].mxu0
    %v1080 = vadd.f32 0.0, %v1079
    %1081 = vmatprep.mubr.bf16.mxu0 0
    %1082 = vmatmul.mubr.bf16.gmra.mrb[0].mxu0 %v874
    %v1083 = vpop.f32.mrb[0].mxu0
    %v1084 = vadd.f32 0.0, %v1083
    %v1085 = vpop.f32.mrb[0].mxu0
    %v1086 = vadd.f32 0.0, %v1085
    %v1087 = vpop.f32.mrb[0].mxu0
    %v1088 = vadd.f32 0.0, %v1087
    %v1089 = vpop.f32.mrb[0].mxu0
    %v1090 = vadd.f32 0.0, %v1089
    %1091 = vmatprep.mubr.bf16.mxu0 0
    %1092 = vmatmul.mubr.bf16.gmra.mrb[0].mxu0 %v877
    %v1093 = vpop.f32.mrb[0].mxu0
    %v1094 = vadd.f32 0.0, %v1093
    %v1095 = vpop.f32.mrb[0].mxu0
    %v1096 = vadd.f32 0.0, %v1095
    %v1097 = vpop.f32.mrb[0].mxu0
    %v1098 = vadd.f32 0.0, %v1097
    %v1099 = vpop.f32.mrb[0].mxu0
    %v1100 = vadd.f32 0.0, %v1099
    %1101 = vmatprep.mubr.bf16.mxu0 0
    %1102 = vmatmul.mubr.bf16.gmra.mrb[0].mxu0 %v880
    %v1103 = vpop.f32.mrb[0].mxu0
    %v1104 = vadd.f32 0.0, %v1103
    %v1105 = vpop.f32.mrb[0].mxu0
    %v1106 = vadd.f32 0.0, %v1105
    %v1107 = vpop.f32.mrb[0].mxu0
    %v1108 = vadd.f32 0.0, %v1107
    %v1109 = vpop.f32.mrb[0].mxu0
    %v1110 = vadd.f32 0.0, %v1109
    %1111 = vmatprep.mubr.bf16.mxu0 0
    %1112 = vmatmul.mubr.bf16.gmra.mrb[0].mxu0 %v883
    %v1113 = vpop.f32.mrb[0].mxu0
    %v1114 = vadd.f32 0.0, %v1113
    %v1115 = vpop.f32.mrb[0].mxu0
    %v1116 = vadd.f32 0.0, %v1115
    %v1117 = vpop.f32.mrb[0].mxu0
    %v1118 = vadd.f32 0.0, %v1117
    %v1119 = vpop.f32.mrb[0].mxu0
    %v1120 = vadd.f32 0.0, %v1119
    %1121 = vmatprep.mubr.bf16.mxu0 0
    %1122 = vmatmul.mubr.bf16.gmra.mrb[0].mxu0 %v886
    %v1123 = vpop.f32.mrb[0].mxu0
    %v1124 = vadd.f32 0.0, %v1123
    %v1125 = vpop.f32.mrb[0].mxu0
    %v1126 = vadd.f32 0.0, %v1125
    %v1127 = vpop.f32.mrb[0].mxu0
    %v1128 = vadd.f32 0.0, %v1127
    %v1129 = vpop.f32.mrb[0].mxu0
    %v1130 = vadd.f32 0.0, %v1129
    %1131 = vmatprep.mubr.bf16.mxu0 0
    %1132 = vmatmul.mubr.bf16.gmra.mrb[0].mxu0 %v889
    %v1133 = vpop.f32.mrb[0].mxu0
    %v1134 = vadd.f32 0.0, %v1133
    %v1135 = vpop.f32.mrb[0].mxu0
    %v1136 = vadd.f32 0.0, %v1135
    %v1137 = vpop.f32.mrb[0].mxu0
    %v1138 = vadd.f32 0.0, %v1137
    %v1139 = vpop.f32.mrb[0].mxu0
    %v1140 = vadd.f32 0.0, %v1139
    %1141 = vmatprep.mubr.bf16.mxu0 0
    %1142 = vmatmul.mubr.bf16.gmra.mrb[0].mxu0 %v892
    %v1143 = vpop.f32.mrb[0].mxu0
    %v1144 = vadd.f32 0.0, %v1143
    %v1145 = vpop.f32.mrb[0].mxu0
    %v1146 = vadd.f32 0.0, %v1145
    %v1147 = vpop.f32.mrb[0].mxu0
    %v1148 = vadd.f32 0.0, %v1147
    %v1149 = vpop.f32.mrb[0].mxu0
    %v1150 = vadd.f32 0.0, %v1149
    %1151 = vmatprep.mubr.bf16.mxu0 0
    %1152 = vmatmul.mubr.bf16.gmra.mrb[0].mxu0 %v895
    %v1153 = vpop.f32.mrb[0].mxu0
    %v1154 = vadd.f32 0.0, %v1153
    %v1155 = vpop.f32.mrb[0].mxu0
    %v1156 = vadd.f32 0.0, %v1155
    %v1157 = vpop.f32.mrb[0].mxu0
    %v1158 = vadd.f32 0.0, %v1157
    %v1159 = vpop.f32.mrb[0].mxu0
    %v1160 = vadd.f32 0.0, %v1159
    %1161 = vmatprep.mubr.bf16.mxu0 0
    %1162 = vmatmul.mubr.bf16.gmra.mrb[0].mxu0 %v898
    %v1163 = vpop.f32.mrb[0].mxu0
    %v1164 = vadd.f32 0.0, %v1163
    %v1165 = vpop.f32.mrb[0].mxu0
    %v1166 = vadd.f32 0.0, %v1165
    %v1167 = vpop.f32.mrb[0].mxu0
    %v1168 = vadd.f32 0.0, %v1167
    %v1169 = vpop.f32.mrb[0].mxu0
    %v1170 = vadd.f32 0.0, %v1169
    %1171 = vmatprep.mubr.bf16.mxu0 0
    %1172 = vmatmul.mubr.bf16.gmra.mrb[0].mxu0 %v901
    %v1173 = vpop.f32.mrb[0].mxu0
    %v1174 = vadd.f32 0.0, %v1173
    %v1175 = vpop.f32.mrb[0].mxu0
    %v1176 = vadd.f32 0.0, %v1175
    %v1177 = vpop.f32.mrb[0].mxu0
    %v1178 = vadd.f32 0.0, %v1177
    %v1179 = vpop.f32.mrb[0].mxu0
    %v1180 = vadd.f32 0.0, %v1179
    %1181 = vmatprep.mubr.bf16.mxu0 0
    %1182 = vmatmul.mubr.bf16.gmra.mrb[0].mxu0 %v904
    %v1183 = vpop.f32.mrb[0].mxu0
    %v1184 = vadd.f32 0.0, %v1183
    %v1185 = vpop.f32.mrb[0].mxu0
    %v1186 = vadd.f32 0.0, %v1185
    %v1187 = vpop.f32.mrb[0].mxu0
    %v1188 = vadd.f32 0.0, %v1187
    %v1189 = vpop.f32.mrb[0].mxu0
    %v1190 = vadd.f32 0.0, %v1189
    %1191 = vmatprep.mubr.bf16.mxu0 0
    %1192 = vmatmul.mubr.bf16.gmra.mrb[0].mxu0 %v907
    %v1193 = vpop.f32.mrb[0].mxu0
    %v1194 = vadd.f32 0.0, %v1193
    %v1195 = vpop.f32.mrb[0].mxu0
    %v1196 = vadd.f32 0.0, %v1195
    %v1197 = vpop.f32.mrb[0].mxu0
    %v1198 = vadd.f32 0.0, %v1197
    %v1199 = vpop.f32.mrb[0].mxu0
    %v1200 = vadd.f32 0.0, %v1199
    %1201 = vmatprep.mubr.bf16.mxu0 0
    %1202 = vmatmul.mubr.bf16.gmra.mrb[0].mxu0 %v910
    %v1203 = vpop.f32.mrb[0].mxu0
    %v1204 = vadd.f32 0.0, %v1203
    %v1205 = vpop.f32.mrb[0].mxu0
    %v1206 = vadd.f32 0.0, %v1205
    %v1207 = vpop.f32.mrb[0].mxu0
    %v1208 = vadd.f32 0.0, %v1207
    %v1209 = vpop.f32.mrb[0].mxu0
    %v1210 = vadd.f32 0.0, %v1209
    %1211 = vmatprep.mubr.bf16.mxu0 0
    %1212 = vmatmul.mubr.bf16.gmra.mrb[0].mxu0 %v913
    %v1213 = vpop.f32.mrb[0].mxu0
    %v1214 = vadd.f32 0.0, %v1213
    %v1215 = vpop.f32.mrb[0].mxu0
    %v1216 = vadd.f32 0.0, %v1215
    %v1217 = vpop.f32.mrb[0].mxu0
    %v1218 = vadd.f32 0.0, %v1217
    %v1219 = vpop.f32.mrb[0].mxu0
    %v1220 = vadd.f32 0.0, %v1219
    %1221 = vmatprep.mubr.bf16.mxu0 0
    %1222 = vmatmul.mubr.bf16.gmra.mrb[0].mxu0 %v916
    %v1223 = vpop.f32.mrb[0].mxu0
    %v1224 = vadd.f32 0.0, %v1223
    %v1225 = vpop.f32.mrb[0].mxu0
    %v1226 = vadd.f32 0.0, %v1225
    %v1227 = vpop.f32.mrb[0].mxu0
    %v1228 = vadd.f32 0.0, %v1227
    %v1229 = vpop.f32.mrb[0].mxu0
    %v1230 = vadd.f32 0.0, %v1229
    %1231 = vmatprep.mubr.bf16.mxu0 0
    %1232 = vmatmul.mubr.bf16.gmra.mrb[0].mxu0 %v919
    %v1233 = vpop.f32.mrb[0].mxu0
    %v1234 = vadd.f32 0.0, %v1233
    %v1235 = vpop.f32.mrb[0].mxu0
    %v1236 = vadd.f32 0.0, %v1235
    %v1237 = vpop.f32.mrb[0].mxu0
    %v1238 = vadd.f32 0.0, %v1237
    %v1239 = vpop.f32.mrb[0].mxu0
    %v1240 = vadd.f32 0.0, %v1239
    %1241 = vmatprep.mubr.bf16.mxu0 0
    %1242 = vmatmul.mubr.bf16.gmra.mrb[0].mxu0 %v922
    %v1243 = vpop.f32.mrb[0].mxu0
    %v1244 = vadd.f32 0.0, %v1243
    %v1245 = vpop.f32.mrb[0].mxu0
    %v1246 = vadd.f32 0.0, %v1245
    %v1247 = vpop.f32.mrb[0].mxu0
    %v1248 = vadd.f32 0.0, %v1247
    %v1249 = vpop.f32.mrb[0].mxu0
    %v1250 = vadd.f32 0.0, %v1249
    %1251 = vmatprep.mubr.bf16.mxu0 0
    %1252 = vmatmul.mubr.bf16.gmra.mrb[0].mxu0 %v925
    %v1253 = vpop.f32.mrb[0].mxu0
    %v1254 = vadd.f32 0.0, %v1253
    %v1255 = vpop.f32.mrb[0].mxu0
    %v1256 = vadd.f32 0.0, %v1255
    %v1257 = vpop.f32.mrb[0].mxu0
    %v1258 = vadd.f32 0.0, %v1257
    %v1259 = vpop.f32.mrb[0].mxu0
    %v1260 = vadd.f32 0.0, %v1259
    %1261 = vmatprep.mubr.bf16.mxu0 0
    %1262 = vmatmul.mubr.bf16.gmra.mrb[0].mxu0 %v928
    %v1263 = vpop.f32.mrb[0].mxu0
    %v1264 = vadd.f32 0.0, %v1263
    %v1265 = vpop.f32.mrb[0].mxu0
    %v1266 = vadd.f32 0.0, %v1265
    %v1267 = vpop.f32.mrb[0].mxu0
    %v1268 = vadd.f32 0.0, %v1267
    %v1269 = vpop.f32.mrb[0].mxu0
    %v1270 = vadd.f32 0.0, %v1269
    %1271 = vmatprep.mubr.bf16.mxu0 0
    %1272 = vmatmul.mubr.bf16.gmra.mrb[0].mxu0 %v931
    %v1273 = vpop.f32.mrb[0].mxu0
    %v1274 = vadd.f32 0.0, %v1273
    %v1275 = vpop.f32.mrb[0].mxu0
    %v1276 = vadd.f32 0.0, %v1275
    %v1277 = vpop.f32.mrb[0].mxu0
    %v1278 = vadd.f32 0.0, %v1277
    %v1279 = vpop.f32.mrb[0].mxu0
    %v1280 = vadd.f32 0.0, %v1279
    %1281 = vmatprep.mubr.bf16.mxu0 0
    %1282 = vmatmul.mubr.bf16.gmra.mrb[0].mxu0 %v934
    %v1283 = vpop.f32.mrb[0].mxu0
    %v1284 = vadd.f32 0.0, %v1283
    %v1285 = vpop.f32.mrb[0].mxu0
    %v1286 = vadd.f32 0.0, %v1285
    %v1287 = vpop.f32.mrb[0].mxu0
    %v1288 = vadd.f32 0.0, %v1287
    %v1289 = vpop.f32.mrb[0].mxu0
    %v1290 = vadd.f32 0.0, %v1289
    %1291 = vmatprep.mubr.bf16.mxu0 0
    %1292 = vmatmul.mubr.bf16.gmra.mrb[0].mxu0 %v937
    %v1293 = vpop.f32.mrb[0].mxu0
    %v1294 = vadd.f32 0.0, %v1293
    %v1295 = vpop.f32.mrb[0].mxu0
    %v1296 = vadd.f32 0.0, %v1295
    %v1297 = vpop.f32.mrb[0].mxu0
    %v1298 = vadd.f32 0.0, %v1297
    %v1299 = vpop.f32.mrb[0].mxu0
    %v1300 = vadd.f32 0.0, %v1299
    %1301 = vmatprep.mubr.bf16.mxu0 0
    %1302 = vmatmul.mubr.bf16.gmra.mrb[0].mxu0 %v940
    %v1303 = vpop.f32.mrb[0].mxu0
    %v1304 = vadd.f32 0.0, %v1303
    %v1305 = vpop.f32.mrb[0].mxu0
    %v1306 = vadd.f32 0.0, %v1305
    %v1307 = vpop.f32.mrb[0].mxu0
    %v1308 = vadd.f32 0.0, %v1307
    %v1309 = vpop.f32.mrb[0].mxu0
    %v1310 = vadd.f32 0.0, %v1309
    %1311 = vmatprep.mubr.bf16.mxu0 0
    %1312 = vmatmul.mubr.bf16.gmra.mrb[0].mxu0 %v943
    %v1313 = vpop.f32.mrb[0].mxu0
    %v1314 = vadd.f32 0.0, %v1313
    %v1315 = vpop.f32.mrb[0].mxu0
    %v1316 = vadd.f32 0.0, %v1315
    %v1317 = vpop.f32.mrb[0].mxu0
    %v1318 = vadd.f32 0.0, %v1317
    %v1319 = vpop.f32.mrb[0].mxu0
    %v1320 = vadd.f32 0.0, %v1319
    %1321 = vmatprep.mubr.bf16.mxu0 0
    %1322 = vmatmul.mubr.bf16.gmra.mrb[0].mxu0 %v946
    %v1323 = vpop.f32.mrb[0].mxu0
    %v1324 = vadd.f32 0.0, %v1323
    %v1325 = vpop.f32.mrb[0].mxu0
    %v1326 = vadd.f32 0.0, %v1325
    %v1327 = vpop.f32.mrb[0].mxu0
    %v1328 = vadd.f32 0.0, %v1327
    %v1329 = vpop.f32.mrb[0].mxu0
    %v1330 = vadd.f32 0.0, %v1329
    %1331 = vmatprep.mubr.bf16.mxu0 0
    %1332 = vmatmul.mubr.bf16.gmra.mrb[0].mxu0 %v949
    %v1333 = vpop.f32.mrb[0].mxu0
    %v1334 = vadd.f32 0.0, %v1333
    %v1335 = vpop.f32.mrb[0].mxu0
    %v1336 = vadd.f32 0.0, %v1335
    %v1337 = vpop.f32.mrb[0].mxu0
    %v1338 = vadd.f32 0.0, %v1337
    %v1339 = vpop.f32.mrb[0].mxu0
    %v1340 = vadd.f32 0.0, %v1339
    %1341 = vmatprep.mubr.bf16.mxu0 0
    %1342 = vmatmul.mubr.bf16.gmra.mrb[0].mxu0 %v952
    %v1343 = vpop.f32.mrb[0].mxu0
    %v1344 = vadd.f32 0.0, %v1343
    %v1345 = vpop.f32.mrb[0].mxu0
    %v1346 = vadd.f32 0.0, %v1345
    %v1347 = vpop.f32.mrb[0].mxu0
    %v1348 = vadd.f32 0.0, %v1347
    %v1349 = vpop.f32.mrb[0].mxu0
    %v1350 = vadd.f32 0.0, %v1349
    %1351 = vmatprep.mubr.bf16.mxu0 0
    %1352 = vmatmul.mubr.bf16.gmra.mrb[0].mxu0 %v955
    %v1353 = vpop.f32.mrb[0].mxu0
    %v1354 = vadd.f32 0.0, %v1353
    %v1355 = vpop.f32.mrb[0].mxu0
    %v1356 = vadd.f32 0.0, %v1355
    %v1357 = vpop.f32.mrb[0].mxu0
    %v1358 = vadd.f32 0.0, %v1357
    %v1359 = vpop.f32.mrb[0].mxu0
    %v1360 = vadd.f32 0.0, %v1359
    %1361 = vmatprep.mubr.bf16.mxu0 0
    %1362 = vmatmul.mubr.bf16.gmra.mrb[0].mxu0 %v958
    %v1363 = vpop.f32.mrb[0].mxu0
    %v1364 = vadd.f32 0.0, %v1363
    %v1365 = vpop.f32.mrb[0].mxu0
    %v1366 = vadd.f32 0.0, %v1365
    %v1367 = vpop.f32.mrb[0].mxu0
    %v1368 = vadd.f32 0.0, %v1367
    %v1369 = vpop.f32.mrb[0].mxu0
    %v1370 = vadd.f32 0.0, %v1369
    %1371 = vmatprep.mubr.bf16.mxu0 0
    %1372 = vmatmul.mubr.bf16.gmra.mrb[0].mxu0 %v961
    %v1373 = vpop.f32.mrb[0].mxu0
    %v1374 = vadd.f32 0.0, %v1373
    %v1375 = vpop.f32.mrb[0].mxu0
    %v1376 = vadd.f32 0.0, %v1375
    %v1377 = vpop.f32.mrb[0].mxu0
    %v1378 = vadd.f32 0.0, %v1377
    %v1379 = vpop.f32.mrb[0].mxu0
    %v1380 = vadd.f32 0.0, %v1379
    %1381 = vmatprep.mubr.bf16.mxu0 0
    %1382 = vmatmul.mubr.bf16.gmra.mrb[0].mxu0 %v964
    %v1383 = vpop.f32.mrb[0].mxu0
    %v1384 = vadd.f32 0.0, %v1383
    %v1385 = vpop.f32.mrb[0].mxu0
    %v1386 = vadd.f32 0.0, %v1385
    %v1387 = vpop.f32.mrb[0].mxu0
    %v1388 = vadd.f32 0.0, %v1387
    %v1389 = vpop.f32.mrb[0].mxu0
    %v1390 = vadd.f32 0.0, %v1389
    %1391 = vmatprep.mubr.bf16.mxu0 0
    %1392 = vmatmul.mubr.bf16.gmra.mrb[0].mxu0 %v967
    %v1393 = vpop.f32.mrb[0].mxu0
    %v1394 = vadd.f32 0.0, %v1393
    %v1395 = vpop.f32.mrb[0].mxu0
    %v1396 = vadd.f32 0.0, %v1395
    %v1397 = vpop.f32.mrb[0].mxu0
    %v1398 = vadd.f32 0.0, %v1397
    %v1399 = vpop.f32.mrb[0].mxu0
    %v1400 = vadd.f32 0.0, %v1399
    %1401 = vmatprep.mubr.bf16.mxu0 0
    %1402 = vmatmul.mubr.bf16.gmra.mrb[0].mxu0 %v970
    %v1403 = vpop.f32.mrb[0].mxu0
    %v1404 = vadd.f32 0.0, %v1403
    %v1405 = vpop.f32.mrb[0].mxu0
    %v1406 = vadd.f32 0.0, %v1405
    %v1407 = vpop.f32.mrb[0].mxu0
    %v1408 = vadd.f32 0.0, %v1407
    %v1409 = vpop.f32.mrb[0].mxu0
    %v1410 = vadd.f32 0.0, %v1409
    %1411 = vmatprep.mubr.bf16.mxu0 0
    %1412 = vmatmul.mubr.bf16.gmra.mrb[0].mxu0 %v973
    %v1413 = vpop.f32.mrb[0].mxu0
    %v1414 = vadd.f32 0.0, %v1413
    %v1415 = vpop.f32.mrb[0].mxu0
    %v1416 = vadd.f32 0.0, %v1415
    %v1417 = vpop.f32.mrb[0].mxu0
    %v1418 = vadd.f32 0.0, %v1417
    %v1419 = vpop.f32.mrb[0].mxu0
    %v1420 = vadd.f32 0.0, %v1419
    %1421 = vmatprep.mubr.bf16.mxu0 0
    %1422 = vmatmul.mubr.bf16.gmra.mrb[0].mxu0 %v976
    %v1423 = vpop.f32.mrb[0].mxu0
    %v1424 = vadd.f32 0.0, %v1423
    %v1425 = vpop.f32.mrb[0].mxu0
    %v1426 = vadd.f32 0.0, %v1425
    %v1427 = vpop.f32.mrb[0].mxu0
    %v1428 = vadd.f32 0.0, %v1427
    %v1429 = vpop.f32.mrb[0].mxu0
    %v1430 = vadd.f32 0.0, %v1429
    %1431 = vmatprep.mubr.bf16.mxu0 0
    %1432 = vmatmul.mubr.bf16.gmra.mrb[0].mxu0 %v979
    %v1433 = vpop.f32.mrb[0].mxu0
    %v1434 = vadd.f32 0.0, %v1433
    %v1435 = vpop.f32.mrb[0].mxu0
    %v1436 = vadd.f32 0.0, %v1435
    %v1437 = vpop.f32.mrb[0].mxu0
    %v1438 = vadd.f32 0.0, %v1437
    %v1439 = vpop.f32.mrb[0].mxu0
    %v1440 = vadd.f32 0.0, %v1439
    %1441 = vmatprep.mubr.bf16.mxu0 0
    %1442 = vmatmul.mubr.bf16.gmra.mrb[0].mxu0 %v982
    %v1443 = vpop.f32.mrb[0].mxu0
    %v1444 = vadd.f32 0.0, %v1443
    %v1445 = vpop.f32.mrb[0].mxu0
    %v1446 = vadd.f32 0.0, %v1445
    %v1447 = vpop.f32.mrb[0].mxu0
    %v1448 = vadd.f32 0.0, %v1447
    %v1449 = vpop.f32.mrb[0].mxu0
    %v1450 = vadd.f32 0.0, %v1449
    %1451 = vmatprep.mubr.bf16.mxu0 0
    %1452 = vmatmul.mubr.bf16.gmra.mrb[0].mxu0 %v985
    %v1453 = vpop.f32.mrb[0].mxu0
    %v1454 = vadd.f32 0.0, %v1453
    %v1455 = vpop.f32.mrb[0].mxu0
    %v1456 = vadd.f32 0.0, %v1455
    %v1457 = vpop.f32.mrb[0].mxu0
    %v1458 = vadd.f32 0.0, %v1457
    %v1459 = vpop.f32.mrb[0].mxu0
    %v1460 = vadd.f32 0.0, %v1459
    %1461 = vmatprep.mubr.bf16.mxu0 0
    %1462 = vmatmul.mubr.bf16.gmra.mrb[0].mxu0 %v988
    %v1463 = vpop.f32.mrb[0].mxu0
    %v1464 = vadd.f32 0.0, %v1463
    %v1465 = vpop.f32.mrb[0].mxu0
    %v1466 = vadd.f32 0.0, %v1465
    %v1467 = vpop.f32.mrb[0].mxu0
    %v1468 = vadd.f32 0.0, %v1467
    %v1469 = vpop.f32.mrb[0].mxu0
    %v1470 = vadd.f32 0.0, %v1469
    %1471 = vmatprep.mubr.bf16.mxu0 0
    %1472 = vmatmul.mubr.bf16.gmra.mrb[0].mxu0 %v991
    %v1473 = vpop.f32.mrb[0].mxu0
    %v1474 = vadd.f32 0.0, %v1473
    %v1475 = vpop.f32.mrb[0].mxu0
    %v1476 = vadd.f32 0.0, %v1475
    %v1477 = vpop.f32.mrb[0].mxu0
    %v1478 = vadd.f32 0.0, %v1477
    %v1479 = vpop.f32.mrb[0].mxu0
    %v1480 = vadd.f32 0.0, %v1479
    %1481 = vmatprep.mubr.bf16.mxu0 0
    %1482 = vmatmul.mubr.bf16.gmra.mrb[0].mxu0 %v994
    %v1483 = vpop.f32.mrb[0].mxu0
    %v1484 = vadd.f32 0.0, %v1483
    %v1485 = vpop.f32.mrb[0].mxu0
    %v1486 = vadd.f32 0.0, %v1485
    %v1487 = vpop.f32.mrb[0].mxu0
    %v1488 = vadd.f32 0.0, %v1487
    %v1489 = vpop.f32.mrb[0].mxu0
    %v1490 = vadd.f32 0.0, %v1489
    %1491 = vmatprep.mubr.bf16.mxu0 0
    %1492 = vmatmul.mubr.bf16.gmra.mrb[0].mxu0 %v997
    %v1493 = vpop.f32.mrb[0].mxu0
    %v1494 = vadd.f32 0.0, %v1493
    %v1495 = vpop.f32.mrb[0].mxu0
    %v1496 = vadd.f32 0.0, %v1495
    %v1497 = vpop.f32.mrb[0].mxu0
    %v1498 = vadd.f32 0.0, %v1497
    %v1499 = vpop.f32.mrb[0].mxu0
    %v1500 = vadd.f32 0.0, %v1499
    %1501 = vmatprep.mubr.bf16.mxu0 0
    %1502 = vmatmul.mubr.bf16.gmra.mrb[0].mxu0 %v1000
    %v1503 = vpop.f32.mrb[0].mxu0
    %v1504 = vadd.f32 0.0, %v1503
    %v1505 = vpop.f32.mrb[0].mxu0
    %v1506 = vadd.f32 0.0, %v1505
    %v1507 = vpop.f32.mrb[0].mxu0
    %v1508 = vadd.f32 0.0, %v1507
    %v1509 = vpop.f32.mrb[0].mxu0
    %v1510 = vadd.f32 0.0, %v1509
    %1511 = vmatprep.mubr.bf16.mxu0 0
    %1512 = vmatmul.mubr.bf16.gmra.mrb[0].mxu0 %v1003
    %v1513 = vpop.f32.mrb[0].mxu0
    %v1514 = vadd.f32 0.0, %v1513
    %v1515 = vpop.f32.mrb[0].mxu0
    %v1516 = vadd.f32 0.0, %v1515
    %v1517 = vpop.f32.mrb[0].mxu0
    %v1518 = vadd.f32 0.0, %v1517
    %v1519 = vpop.f32.mrb[0].mxu0
    %v1520 = vadd.f32 0.0, %v1519
    %1521 = vmatprep.mubr.bf16.mxu0 0
    %1522 = vmatmul.mubr.bf16.gmra.mrb[0].mxu0 %v1006
    %v1523 = vpop.f32.mrb[0].mxu0
    %v1524 = vadd.f32 0.0, %v1523
    %v1525 = vpop.f32.mrb[0].mxu0
    %v1526 = vadd.f32 0.0, %v1525
    %v1527 = vpop.f32.mrb[0].mxu0
    %v1528 = vadd.f32 0.0, %v1527
    %v1529 = vpop.f32.mrb[0].mxu0
    %v1530 = vadd.f32 0.0, %v1529
    %1531 = vmatprep.mubr.bf16.mxu0 0
    %1532 = vmatmul.mubr.bf16.gmra.mrb[0].mxu0 %v1009
    %v1533 = vpop.f32.mrb[0].mxu0
    %v1534 = vadd.f32 0.0, %v1533
    %v1535 = vpop.f32.mrb[0].mxu0
    %v1536 = vadd.f32 0.0, %v1535
    %v1537 = vpop.f32.mrb[0].mxu0
    %v1538 = vadd.f32 0.0, %v1537
    %v1539 = vpop.f32.mrb[0].mxu0
    %v1540 = vadd.f32 0.0, %v1539
    %1541 = vmatprep.mubr.bf16.mxu0 0
    %1542 = vmatmul.mubr.bf16.gmra.mrb[0].mxu0 %v1012
    %v1543 = vpop.f32.mrb[0].mxu0
    %v1544 = vadd.f32 0.0, %v1543
    %v1545 = vpop.f32.mrb[0].mxu0
    %v1546 = vadd.f32 0.0, %v1545
    %v1547 = vpop.f32.mrb[0].mxu0
    %v1548 = vadd.f32 0.0, %v1547
    %v1549 = vpop.f32.mrb[0].mxu0
    %v1550 = vadd.f32 0.0, %v1549
    %1551 = vmatprep.mubr.bf16.mxu0 0
    %1552 = vmatmul.mubr.bf16.gmra.mrb[0].mxu0 %v1015
    %v1553 = vpop.f32.mrb[0].mxu0
    %v1554 = vadd.f32 0.0, %v1553
    %v1555 = vpop.f32.mrb[0].mxu0
    %v1556 = vadd.f32 0.0, %v1555
    %v1557 = vpop.f32.mrb[0].mxu0
    %v1558 = vadd.f32 0.0, %v1557
    %v1559 = vpop.f32.mrb[0].mxu0
    %v1560 = vadd.f32 0.0, %v1559
    %1561 = vmatprep.mubr.bf16.mxu0 0
    %1562 = vmatmul.mubr.bf16.gmra.mrb[0].mxu0 %v1018
    %v1563 = vpop.f32.mrb[0].mxu0
    %v1564 = vadd.f32 0.0, %v1563
    %v1565 = vpop.f32.mrb[0].mxu0
    %v1566 = vadd.f32 0.0, %v1565
    %v1567 = vpop.f32.mrb[0].mxu0
    %v1568 = vadd.f32 0.0, %v1567
    %v1569 = vpop.f32.mrb[0].mxu0
    %v1570 = vadd.f32 0.0, %v1569
    %1571 = vmatprep.mubr.bf16.mxu0 0
    %1572 = vmatmul.mubr.bf16.gmra.mrb[0].mxu0 %v1021
    %v1573 = vpop.f32.mrb[0].mxu0
    %v1574 = vadd.f32 0.0, %v1573
    %v1575 = vpop.f32.mrb[0].mxu0
    %v1576 = vadd.f32 0.0, %v1575
    %v1577 = vpop.f32.mrb[0].mxu0
    %v1578 = vadd.f32 0.0, %v1577
    %v1579 = vpop.f32.mrb[0].mxu0
    %v1580 = vadd.f32 0.0, %v1579
    %1581 = vmatprep.mubr.bf16.mxu0 0
    %1582 = vmatmul.mubr.bf16.gmra.mrb[0].mxu0 %v1024
    %v1583 = vpop.f32.mrb[0].mxu0
    %v1584 = vadd.f32 0.0, %v1583
    %v1585 = vpop.f32.mrb[0].mxu0
    %v1586 = vadd.f32 0.0, %v1585
    %v1587 = vpop.f32.mrb[0].mxu0
    %v1588 = vadd.f32 0.0, %v1587
    %v1589 = vpop.f32.mrb[0].mxu0
    %v1590 = vadd.f32 0.0, %v1589
    %1591 = vmatprep.mubr.bf16.mxu0 0
    %1592 = vmatmul.mubr.bf16.gmra.mrb[0].mxu0 %v1027
    %v1593 = vpop.f32.mrb[0].mxu0
    %v1594 = vadd.f32 0.0, %v1593
    %v1595 = vpop.f32.mrb[0].mxu0
    %v1596 = vadd.f32 0.0, %v1595
    %v1597 = vpop.f32.mrb[0].mxu0
    %v1598 = vadd.f32 0.0, %v1597
    %v1599 = vpop.f32.mrb[0].mxu0
    %v1600 = vadd.f32 0.0, %v1599
    %1601 = vdwg.mxu0
    %v1602 = vld [vmem:[%s2] sm:$0x1]
    %v1604 = vlaneseq
    %v1605 = vshrl.u32 %v1604, 7
    %v1606 = vsub.s32 0, %v1605
    %v1607 = vrot.slane %v1602, %v1606
    %v1609 = vadd.f32 %v1066, %v1607
    %v1610 = vadd.f32 %v1070, %v1607
    %v1611 = vadd.f32 %v1076, %v1607
    %v1612 = vadd.f32 %v1080, %v1607
    %v1613 = vadd.f32 %v1086, %v1607
    %v1614 = vadd.f32 %v1090, %v1607
    %v1615 = vadd.f32 %v1096, %v1607
    %v1616 = vadd.f32 %v1100, %v1607
    %v1617 = vadd.f32 %v1106, %v1607
    %v1618 = vadd.f32 %v1110, %v1607
    %v1619 = vadd.f32 %v1116, %v1607
    %v1620 = vadd.f32 %v1120, %v1607
    %v1621 = vadd.f32 %v1126, %v1607
    %v1622 = vadd.f32 %v1130, %v1607
    %v1623 = vadd.f32 %v1136, %v1607
    %v1624 = vadd.f32 %v1140, %v1607
    %v1625 = vadd.f32 %v1146, %v1607
    %v1626 = vadd.f32 %v1150, %v1607
    %v1627 = vadd.f32 %v1156, %v1607
    %v1628 = vadd.f32 %v1160, %v1607
    %v1629 = vadd.f32 %v1166, %v1607
    %v1630 = vadd.f32 %v1170, %v1607
    %v1631 = vadd.f32 %v1176, %v1607
    %v1632 = vadd.f32 %v1180, %v1607
    %v1633 = vadd.f32 %v1186, %v1607
    %v1634 = vadd.f32 %v1190, %v1607
    %v1635 = vadd.f32 %v1196, %v1607
    %v1636 = vadd.f32 %v1200, %v1607
    %v1637 = vadd.f32 %v1206, %v1607
    %v1638 = vadd.f32 %v1210, %v1607
    %v1639 = vadd.f32 %v1216, %v1607
    %v1640 = vadd.f32 %v1220, %v1607
    %v1641 = vadd.f32 %v1226, %v1607
    %v1642 = vadd.f32 %v1230, %v1607
    %v1643 = vadd.f32 %v1236, %v1607
    %v1644 = vadd.f32 %v1240, %v1607
    %v1645 = vadd.f32 %v1246, %v1607
    %v1646 = vadd.f32 %v1250, %v1607
    %v1647 = vadd.f32 %v1256, %v1607
    %v1648 = vadd.f32 %v1260, %v1607
    %v1649 = vadd.f32 %v1266, %v1607
    %v1650 = vadd.f32 %v1270, %v1607
    %v1651 = vadd.f32 %v1276, %v1607
    %v1652 = vadd.f32 %v1280, %v1607
    %v1653 = vadd.f32 %v1286, %v1607
    %v1654 = vadd.f32 %v1290, %v1607
    %v1655 = vadd.f32 %v1296, %v1607
    %v1656 = vadd.f32 %v1300, %v1607
    %v1657 = vadd.f32 %v1306, %v1607
    %v1658 = vadd.f32 %v1310, %v1607
    %v1659 = vadd.f32 %v1316, %v1607
    %v1660 = vadd.f32 %v1320, %v1607
    %v1661 = vadd.f32 %v1326, %v1607
    %v1662 = vadd.f32 %v1330, %v1607
    %v1663 = vadd.f32 %v1336, %v1607
    %v1664 = vadd.f32 %v1340, %v1607
    %v1665 = vadd.f32 %v1346, %v1607
    %v1666 = vadd.f32 %v1350, %v1607
    %v1667 = vadd.f32 %v1356, %v1607
    %v1668 = vadd.f32 %v1360, %v1607
    %v1669 = vadd.f32 %v1366, %v1607
    %v1670 = vadd.f32 %v1370, %v1607
    %v1671 = vadd.f32 %v1376, %v1607
    %v1672 = vadd.f32 %v1380, %v1607
    %v1673 = vadd.f32 %v1386, %v1607
    %v1674 = vadd.f32 %v1390, %v1607
    %v1675 = vadd.f32 %v1396, %v1607
    %v1676 = vadd.f32 %v1400, %v1607
    %v1677 = vadd.f32 %v1406, %v1607
    %v1678 = vadd.f32 %v1410, %v1607
    %v1679 = vadd.f32 %v1416, %v1607
    %v1680 = vadd.f32 %v1420, %v1607
    %v1681 = vadd.f32 %v1426, %v1607
    %v1682 = vadd.f32 %v1430, %v1607
    %v1683 = vadd.f32 %v1436, %v1607
    %v1684 = vadd.f32 %v1440, %v1607
    %v1685 = vadd.f32 %v1446, %v1607
    %v1686 = vadd.f32 %v1450, %v1607
    %v1687 = vadd.f32 %v1456, %v1607
    %v1688 = vadd.f32 %v1460, %v1607
    %v1689 = vadd.f32 %v1466, %v1607
    %v1690 = vadd.f32 %v1470, %v1607
    %v1691 = vadd.f32 %v1476, %v1607
    %v1692 = vadd.f32 %v1480, %v1607
    %v1693 = vadd.f32 %v1486, %v1607
    %v1694 = vadd.f32 %v1490, %v1607
    %v1695 = vadd.f32 %v1496, %v1607
    %v1696 = vadd.f32 %v1500, %v1607
    %v1697 = vadd.f32 %v1506, %v1607
    %v1698 = vadd.f32 %v1510, %v1607
    %v1699 = vadd.f32 %v1516, %v1607
    %v1700 = vadd.f32 %v1520, %v1607
    %v1701 = vadd.f32 %v1526, %v1607
    %v1702 = vadd.f32 %v1530, %v1607
    %v1703 = vadd.f32 %v1536, %v1607
    %v1704 = vadd.f32 %v1540, %v1607
    %v1705 = vadd.f32 %v1546, %v1607
    %v1706 = vadd.f32 %v1550, %v1607
    %v1707 = vadd.f32 %v1556, %v1607
    %v1708 = vadd.f32 %v1560, %v1607
    %v1709 = vadd.f32 %v1566, %v1607
    %v1710 = vadd.f32 %v1570, %v1607
    %v1711 = vadd.f32 %v1576, %v1607
    %v1712 = vadd.f32 %v1580, %v1607
    %v1713 = vadd.f32 %v1586, %v1607
    %v1714 = vadd.f32 %v1590, %v1607
    %v1715 = vadd.f32 %v1596, %v1607
    %v1716 = vadd.f32 %v1600, %v1607
    %v1717 = vmax.f32 %v1609, 0.0
    %v1718 = vmax.f32 %v1610, 0.0
    %v1719 = vmax.f32 %v1611, 0.0
    %v1720 = vmax.f32 %v1612, 0.0
    %v1721 = vmax.f32 %v1613, 0.0
    %v1722 = vmax.f32 %v1614, 0.0
    %v1723 = vmax.f32 %v1615, 0.0
    %v1724 = vmax.f32 %v1616, 0.0
    %v1725 = vmax.f32 %v1617, 0.0
    %v1726 = vmax.f32 %v1618, 0.0
    %v1727 = vmax.f32 %v1619, 0.0
    %v1728 = vmax.f32 %v1620, 0.0
    %v1729 = vmax.f32 %v1621, 0.0
    %v1730 = vmax.f32 %v1622, 0.0
    %v1731 = vmax.f32 %v1623, 0.0
    %v1732 = vmax.f32 %v1624, 0.0
    %v1733 = vmax.f32 %v1625, 0.0
    %v1734 = vmax.f32 %v1626, 0.0
    %v1735 = vmax.f32 %v1627, 0.0
    %v1736 = vmax.f32 %v1628, 0.0
    %v1737 = vmax.f32 %v1629, 0.0
    %v1738 = vmax.f32 %v1630, 0.0
    %v1739 = vmax.f32 %v1631, 0.0
    %v1740 = vmax.f32 %v1632, 0.0
    %v1741 = vmax.f32 %v1633, 0.0
    %v1742 = vmax.f32 %v1634, 0.0
    %v1743 = vmax.f32 %v1635, 0.0
    %v1744 = vmax.f32 %v1636, 0.0
    %v1745 = vmax.f32 %v1637, 0.0
    %v1746 = vmax.f32 %v1638, 0.0
    %v1747 = vmax.f32 %v1639, 0.0
    %v1748 = vmax.f32 %v1640, 0.0
    %v1749 = vmax.f32 %v1641, 0.0
    %v1750 = vmax.f32 %v1642, 0.0
    %v1751 = vmax.f32 %v1643, 0.0
    %v1752 = vmax.f32 %v1644, 0.0
    %v1753 = vmax.f32 %v1645, 0.0
    %v1754 = vmax.f32 %v1646, 0.0
    %v1755 = vmax.f32 %v1647, 0.0
    %v1756 = vmax.f32 %v1648, 0.0
    %v1757 = vmax.f32 %v1649, 0.0
    %v1758 = vmax.f32 %v1650, 0.0
    %v1759 = vmax.f32 %v1651, 0.0
    %v1760 = vmax.f32 %v1652, 0.0
    %v1761 = vmax.f32 %v1653, 0.0
    %v1762 = vmax.f32 %v1654, 0.0
    %v1763 = vmax.f32 %v1655, 0.0
    %v1764 = vmax.f32 %v1656, 0.0
    %v1765 = vmax.f32 %v1657, 0.0
    %v1766 = vmax.f32 %v1658, 0.0
    %v1767 = vmax.f32 %v1659, 0.0
    %v1768 = vmax.f32 %v1660, 0.0
    %v1769 = vmax.f32 %v1661, 0.0
    %v1770 = vmax.f32 %v1662, 0.0
    %v1771 = vmax.f32 %v1663, 0.0
    %v1772 = vmax.f32 %v1664, 0.0
    %v1773 = vmax.f32 %v1665, 0.0
    %v1774 = vmax.f32 %v1666, 0.0
    %v1775 = vmax.f32 %v1667, 0.0
    %v1776 = vmax.f32 %v1668, 0.0
    %v1777 = vmax.f32 %v1669, 0.0
    %v1778 = vmax.f32 %v1670, 0.0
    %v1779 = vmax.f32 %v1671, 0.0
    %v1780 = vmax.f32 %v1672, 0.0
    %v1781 = vmax.f32 %v1673, 0.0
    %v1782 = vmax.f32 %v1674, 0.0
    %v1783 = vmax.f32 %v1675, 0.0
    %v1784 = vmax.f32 %v1676, 0.0
    %v1785 = vmax.f32 %v1677, 0.0
    %v1786 = vmax.f32 %v1678, 0.0
    %v1787 = vmax.f32 %v1679, 0.0
    %v1788 = vmax.f32 %v1680, 0.0
    %v1789 = vmax.f32 %v1681, 0.0
    %v1790 = vmax.f32 %v1682, 0.0
    %v1791 = vmax.f32 %v1683, 0.0
    %v1792 = vmax.f32 %v1684, 0.0
    %v1793 = vmax.f32 %v1685, 0.0
    %v1794 = vmax.f32 %v1686, 0.0
    %v1795 = vmax.f32 %v1687, 0.0
    %v1796 = vmax.f32 %v1688, 0.0
    %v1797 = vmax.f32 %v1689, 0.0
    %v1798 = vmax.f32 %v1690, 0.0
    %v1799 = vmax.f32 %v1691, 0.0
    %v1800 = vmax.f32 %v1692, 0.0
    %v1801 = vmax.f32 %v1693, 0.0
    %v1802 = vmax.f32 %v1694, 0.0
    %v1803 = vmax.f32 %v1695, 0.0
    %v1804 = vmax.f32 %v1696, 0.0
    %v1805 = vmax.f32 %v1697, 0.0
    %v1806 = vmax.f32 %v1698, 0.0
    %v1807 = vmax.f32 %v1699, 0.0
    %v1808 = vmax.f32 %v1700, 0.0
    %v1809 = vmax.f32 %v1701, 0.0
    %v1810 = vmax.f32 %v1702, 0.0
    %v1811 = vmax.f32 %v1703, 0.0
    %v1812 = vmax.f32 %v1704, 0.0
    %v1813 = vmax.f32 %v1705, 0.0
    %v1814 = vmax.f32 %v1706, 0.0
    %v1815 = vmax.f32 %v1707, 0.0
    %v1816 = vmax.f32 %v1708, 0.0
    %v1817 = vmax.f32 %v1709, 0.0
    %v1818 = vmax.f32 %v1710, 0.0
    %v1819 = vmax.f32 %v1711, 0.0
    %v1820 = vmax.f32 %v1712, 0.0
    %v1821 = vmax.f32 %v1713, 0.0
    %v1822 = vmax.f32 %v1714, 0.0
    %v1823 = vmax.f32 %v1715, 0.0
    %v1824 = vmax.f32 %v1716, 0.0
    %v1825 = vld [vmem:[%s7] sm:$0xff]
    %v1826 = vld [vmem:[%s7 + $0x8] sm:$0xff]
    %v1827 = vld [vmem:[%s7 + $0x10] sm:$0xff]
    %v1828 = vld [vmem:[%s7 + $0x18] sm:$0xff]
    %v1829 = vld [vmem:[%s7 + $0x20] sm:$0xff]
    %v1830 = vld [vmem:[%s7 + $0x28] sm:$0xff]
    %v1831 = vld [vmem:[%s7 + $0x30] sm:$0xff]
    %v1832 = vld [vmem:[%s7 + $0x38] sm:$0xff]
    %v1833 = vld [vmem:[%s7 + $0x40] sm:$0xff]
    %v1834 = vld [vmem:[%s7 + $0x48] sm:$0xff]
    %v1835 = vld [vmem:[%s7 + $0x50] sm:$0xff]
    %v1836 = vld [vmem:[%s7 + $0x58] sm:$0xff]
    %v1837 = vld [vmem:[%s7 + $0x60] sm:$0xff]
    %v1838 = vld [vmem:[%s7 + $0x68] sm:$0xff]
    %v1839 = vld [vmem:[%s7 + $0x70] sm:$0xff]
    %v1840 = vld [vmem:[%s7 + $0x78] sm:$0xff]
    %v1841 = vld [vmem:[%s7 + $0x80] sm:$0xff]
    %v1842 = vld [vmem:[%s7 + $0x88] sm:$0xff]
    %v1843 = vld [vmem:[%s7 + $0x90] sm:$0xff]
    %v1844 = vld [vmem:[%s7 + $0x98] sm:$0xff]
    %v1845 = vld [vmem:[%s7 + $0xa0] sm:$0xff]
    %v1846 = vld [vmem:[%s7 + $0xa8] sm:$0xff]
    %v1847 = vld [vmem:[%s7 + $0xb0] sm:$0xff]
    %v1848 = vld [vmem:[%s7 + $0xb8] sm:$0xff]
    %v1849 = vld [vmem:[%s7 + $0xc0] sm:$0xff]
    %v1850 = vld [vmem:[%s7 + $0xc8] sm:$0xff]
    %v1851 = vld [vmem:[%s7 + $0xd0] sm:$0xff]
    %v1852 = vld [vmem:[%s7 + $0xd8] sm:$0xff]
    %v1853 = vld [vmem:[%s7 + $0xe0] sm:$0xff]
    %v1854 = vld [vmem:[%s7 + $0xe8] sm:$0xff]
    %v1855 = vld [vmem:[%s7 + $0xf0] sm:$0xff]
    %v1856 = vld [vmem:[%s7 + $0xf8] sm:$0xff]
    %v1857 = vld [vmem:[%s7 + $0x100] sm:$0xff]
    %v1858 = vld [vmem:[%s7 + $0x108] sm:$0xff]
    %v1859 = vld [vmem:[%s7 + $0x110] sm:$0xff]
    %v1860 = vld [vmem:[%s7 + $0x118] sm:$0xff]
    %v1861 = vld [vmem:[%s7 + $0x120] sm:$0xff]
    %v1862 = vld [vmem:[%s7 + $0x128] sm:$0xff]
    %v1863 = vld [vmem:[%s7 + $0x130] sm:$0xff]
    %v1864 = vld [vmem:[%s7 + $0x138] sm:$0xff]
    %v1865 = vld [vmem:[%s7 + $0x140] sm:$0xff]
    %v1866 = vld [vmem:[%s7 + $0x148] sm:$0xff]
    %v1867 = vld [vmem:[%s7 + $0x150] sm:$0xff]
    %v1868 = vld [vmem:[%s7 + $0x158] sm:$0xff]
    %v1869 = vld [vmem:[%s7 + $0x160] sm:$0xff]
    %v1870 = vld [vmem:[%s7 + $0x168] sm:$0xff]
    %v1871 = vld [vmem:[%s7 + $0x170] sm:$0xff]
    %v1872 = vld [vmem:[%s7 + $0x178] sm:$0xff]
    %v1873 = vld [vmem:[%s7 + $0x180] sm:$0xff]
    %v1874 = vld [vmem:[%s7 + $0x188] sm:$0xff]
    %v1875 = vld [vmem:[%s7 + $0x190] sm:$0xff]
    %v1876 = vld [vmem:[%s7 + $0x198] sm:$0xff]
    %v1877 = vld [vmem:[%s7 + $0x1a0] sm:$0xff]
    %v1878 = vld [vmem:[%s7 + $0x1a8] sm:$0xff]
    %v1879 = vld [vmem:[%s7 + $0x1b0] sm:$0xff]
    %v1880 = vld [vmem:[%s7 + $0x1b8] sm:$0xff]
    %v1881 = vld [vmem:[%s7 + $0x1c0] sm:$0xff]
    %v1882 = vld [vmem:[%s7 + $0x1c8] sm:$0xff]
    %v1883 = vld [vmem:[%s7 + $0x1d0] sm:$0xff]
    %v1884 = vld [vmem:[%s7 + $0x1d8] sm:$0xff]
    %v1885 = vld [vmem:[%s7 + $0x1e0] sm:$0xff]
    %v1886 = vld [vmem:[%s7 + $0x1e8] sm:$0xff]
    %v1887 = vld [vmem:[%s7 + $0x1f0] sm:$0xff]
    %v1888 = vld [vmem:[%s7 + $0x1f8] sm:$0xff]
    %v1889 = vld [vmem:[%s7 + $0x200] sm:$0xff]
    %v1890 = vld [vmem:[%s7 + $0x208] sm:$0xff]
    %v1891 = vld [vmem:[%s7 + $0x210] sm:$0xff]
    %v1892 = vld [vmem:[%s7 + $0x218] sm:$0xff]
    %v1893 = vld [vmem:[%s7 + $0x220] sm:$0xff]
    %v1894 = vld [vmem:[%s7 + $0x228] sm:$0xff]
    %v1895 = vld [vmem:[%s7 + $0x230] sm:$0xff]
    %v1896 = vld [vmem:[%s7 + $0x238] sm:$0xff]
    %v1897 = vld [vmem:[%s7 + $0x240] sm:$0xff]
    %v1898 = vld [vmem:[%s7 + $0x248] sm:$0xff]
    %v1899 = vld [vmem:[%s7 + $0x250] sm:$0xff]
    %v1900 = vld [vmem:[%s7 + $0x258] sm:$0xff]
    %v1901 = vld [vmem:[%s7 + $0x260] sm:$0xff]
    %v1902 = vld [vmem:[%s7 + $0x268] sm:$0xff]
    %v1903 = vld [vmem:[%s7 + $0x270] sm:$0xff]
    %v1904 = vld [vmem:[%s7 + $0x278] sm:$0xff]
    %v1905 = vld [vmem:[%s7 + $0x280] sm:$0xff]
    %v1906 = vld [vmem:[%s7 + $0x288] sm:$0xff]
    %v1907 = vld [vmem:[%s7 + $0x290] sm:$0xff]
    %v1908 = vld [vmem:[%s7 + $0x298] sm:$0xff]
    %v1909 = vld [vmem:[%s7 + $0x2a0] sm:$0xff]
    %v1910 = vld [vmem:[%s7 + $0x2a8] sm:$0xff]
    %v1911 = vld [vmem:[%s7 + $0x2b0] sm:$0xff]
    %v1912 = vld [vmem:[%s7 + $0x2b8] sm:$0xff]
    %v1913 = vld [vmem:[%s7 + $0x2c0] sm:$0xff]
    %v1914 = vld [vmem:[%s7 + $0x2c8] sm:$0xff]
    %v1915 = vld [vmem:[%s7 + $0x2d0] sm:$0xff]
    %v1916 = vld [vmem:[%s7 + $0x2d8] sm:$0xff]
    %v1917 = vld [vmem:[%s7 + $0x2e0] sm:$0xff]
    %v1918 = vld [vmem:[%s7 + $0x2e8] sm:$0xff]
    %v1919 = vld [vmem:[%s7 + $0x2f0] sm:$0xff]
    %v1920 = vld [vmem:[%s7 + $0x2f8] sm:$0xff]
    %v1921 = vld [vmem:[%s7 + $0x300] sm:$0xff]
    %v1922 = vld [vmem:[%s7 + $0x308] sm:$0xff]
    %v1923 = vld [vmem:[%s7 + $0x310] sm:$0xff]
    %v1924 = vld [vmem:[%s7 + $0x318] sm:$0xff]
    %v1925 = vld [vmem:[%s7 + $0x320] sm:$0xff]
    %v1926 = vld [vmem:[%s7 + $0x328] sm:$0xff]
    %v1927 = vld [vmem:[%s7 + $0x330] sm:$0xff]
    %v1928 = vld [vmem:[%s7 + $0x338] sm:$0xff]
    %v1929 = vld [vmem:[%s7 + $0x340] sm:$0xff]
    %v1930 = vld [vmem:[%s7 + $0x348] sm:$0xff]
    %v1931 = vld [vmem:[%s7 + $0x350] sm:$0xff]
    %v1932 = vld [vmem:[%s7 + $0x358] sm:$0xff]
    %1934 = vset.pattern.permute.xlu0 0
    %1935 = vperm.xlu0 %1934, %v1825
    %v1936 = vpop.permute.xlu0 %1935
    %1939 = vset.pattern.permute.xlu0 0
    %1940 = vperm.xlu0 %1939, %v1826
    %v1941 = vpop.permute.xlu0 %1940
    %1944 = vset.pattern.permute.xlu0 0
    %1945 = vperm.xlu0 %1944, %v1827
    %v1946 = vpop.permute.xlu0 %1945
    %1949 = vset.pattern.permute.xlu0 0
    %1950 = vperm.xlu0 %1949, %v1828
    %v1951 = vpop.permute.xlu0 %1950
    %1954 = vset.pattern.permute.xlu0 0
    %1955 = vperm.xlu0 %1954, %v1829
    %v1956 = vpop.permute.xlu0 %1955
    %1959 = vset.pattern.permute.xlu0 0
    %1960 = vperm.xlu0 %1959, %v1830
    %v1961 = vpop.permute.xlu0 %1960
    %1964 = vset.pattern.permute.xlu0 0
    %1965 = vperm.xlu0 %1964, %v1831
    %v1966 = vpop.permute.xlu0 %1965
    %1969 = vset.pattern.permute.xlu0 0
    %1970 = vperm.xlu0 %1969, %v1832
    %v1971 = vpop.permute.xlu0 %1970
    %1974 = vset.pattern.permute.xlu0 0
    %1975 = vperm.xlu0 %1974, %v1833
    %v1976 = vpop.permute.xlu0 %1975
    %1979 = vset.pattern.permute.xlu0 0
    %1980 = vperm.xlu0 %1979, %v1834
    %v1981 = vpop.permute.xlu0 %1980
    %1984 = vset.pattern.permute.xlu0 0
    %1985 = vperm.xlu0 %1984, %v1835
    %v1986 = vpop.permute.xlu0 %1985
    %1989 = vset.pattern.permute.xlu0 0
    %1990 = vperm.xlu0 %1989, %v1836
    %v1991 = vpop.permute.xlu0 %1990
    %1994 = vset.pattern.permute.xlu0 0
    %1995 = vperm.xlu0 %1994, %v1837
    %v1996 = vpop.permute.xlu0 %1995
    %1999 = vset.pattern.permute.xlu0 0
    %2000 = vperm.xlu0 %1999, %v1838
    %v2001 = vpop.permute.xlu0 %2000
    %2004 = vset.pattern.permute.xlu0 0
    %2005 = vperm.xlu0 %2004, %v1839
    %v2006 = vpop.permute.xlu0 %2005
    %2009 = vset.pattern.permute.xlu0 0
    %2010 = vperm.xlu0 %2009, %v1840
    %v2011 = vpop.permute.xlu0 %2010
    %2014 = vset.pattern.permute.xlu0 0
    %2015 = vperm.xlu0 %2014, %v1841
    %v2016 = vpop.permute.xlu0 %2015
    %2019 = vset.pattern.permute.xlu0 0
    %2020 = vperm.xlu0 %2019, %v1842
    %v2021 = vpop.permute.xlu0 %2020
    %2024 = vset.pattern.permute.xlu0 0
    %2025 = vperm.xlu0 %2024, %v1843
    %v2026 = vpop.permute.xlu0 %2025
    %2029 = vset.pattern.permute.xlu0 0
    %2030 = vperm.xlu0 %2029, %v1844
    %v2031 = vpop.permute.xlu0 %2030
    %2034 = vset.pattern.permute.xlu0 0
    %2035 = vperm.xlu0 %2034, %v1845
    %v2036 = vpop.permute.xlu0 %2035
    %2039 = vset.pattern.permute.xlu0 0
    %2040 = vperm.xlu0 %2039, %v1846
    %v2041 = vpop.permute.xlu0 %2040
    %2044 = vset.pattern.permute.xlu0 0
    %2045 = vperm.xlu0 %2044, %v1847
    %v2046 = vpop.permute.xlu0 %2045
    %2049 = vset.pattern.permute.xlu0 0
    %2050 = vperm.xlu0 %2049, %v1848
    %v2051 = vpop.permute.xlu0 %2050
    %2054 = vset.pattern.permute.xlu0 0
    %2055 = vperm.xlu0 %2054, %v1849
    %v2056 = vpop.permute.xlu0 %2055
    %2059 = vset.pattern.permute.xlu0 0
    %2060 = vperm.xlu0 %2059, %v1850
    %v2061 = vpop.permute.xlu0 %2060
    %2064 = vset.pattern.permute.xlu0 0
    %2065 = vperm.xlu0 %2064, %v1851
    %v2066 = vpop.permute.xlu0 %2065
    %2069 = vset.pattern.permute.xlu0 0
    %2070 = vperm.xlu0 %2069, %v1852
    %v2071 = vpop.permute.xlu0 %2070
    %2074 = vset.pattern.permute.xlu0 0
    %2075 = vperm.xlu0 %2074, %v1853
    %v2076 = vpop.permute.xlu0 %2075
    %2079 = vset.pattern.permute.xlu0 0
    %2080 = vperm.xlu0 %2079, %v1854
    %v2081 = vpop.permute.xlu0 %2080
    %2084 = vset.pattern.permute.xlu0 0
    %2085 = vperm.xlu0 %2084, %v1855
    %v2086 = vpop.permute.xlu0 %2085
    %2089 = vset.pattern.permute.xlu0 0
    %2090 = vperm.xlu0 %2089, %v1856
    %v2091 = vpop.permute.xlu0 %2090
    %2094 = vset.pattern.permute.xlu0 0
    %2095 = vperm.xlu0 %2094, %v1857
    %v2096 = vpop.permute.xlu0 %2095
    %2099 = vset.pattern.permute.xlu0 0
    %2100 = vperm.xlu0 %2099, %v1858
    %v2101 = vpop.permute.xlu0 %2100
    %2104 = vset.pattern.permute.xlu0 0
    %2105 = vperm.xlu0 %2104, %v1859
    %v2106 = vpop.permute.xlu0 %2105
    %2109 = vset.pattern.permute.xlu0 0
    %2110 = vperm.xlu0 %2109, %v1860
    %v2111 = vpop.permute.xlu0 %2110
    %2114 = vset.pattern.permute.xlu0 0
    %2115 = vperm.xlu0 %2114, %v1861
    %v2116 = vpop.permute.xlu0 %2115
    %2119 = vset.pattern.permute.xlu0 0
    %2120 = vperm.xlu0 %2119, %v1862
    %v2121 = vpop.permute.xlu0 %2120
    %2124 = vset.pattern.permute.xlu0 0
    %2125 = vperm.xlu0 %2124, %v1863
    %v2126 = vpop.permute.xlu0 %2125
    %2129 = vset.pattern.permute.xlu0 0
    %2130 = vperm.xlu0 %2129, %v1864
    %v2131 = vpop.permute.xlu0 %2130
    %2134 = vset.pattern.permute.xlu0 0
    %2135 = vperm.xlu0 %2134, %v1865
    %v2136 = vpop.permute.xlu0 %2135
    %2139 = vset.pattern.permute.xlu0 0
    %2140 = vperm.xlu0 %2139, %v1866
    %v2141 = vpop.permute.xlu0 %2140
    %2144 = vset.pattern.permute.xlu0 0
    %2145 = vperm.xlu0 %2144, %v1867
    %v2146 = vpop.permute.xlu0 %2145
    %2149 = vset.pattern.permute.xlu0 0
    %2150 = vperm.xlu0 %2149, %v1868
    %v2151 = vpop.permute.xlu0 %2150
    %2154 = vset.pattern.permute.xlu0 0
    %2155 = vperm.xlu0 %2154, %v1869
    %v2156 = vpop.permute.xlu0 %2155
    %2159 = vset.pattern.permute.xlu0 0
    %2160 = vperm.xlu0 %2159, %v1870
    %v2161 = vpop.permute.xlu0 %2160
    %2164 = vset.pattern.permute.xlu0 0
    %2165 = vperm.xlu0 %2164, %v1871
    %v2166 = vpop.permute.xlu0 %2165
    %2169 = vset.pattern.permute.xlu0 0
    %2170 = vperm.xlu0 %2169, %v1872
    %v2171 = vpop.permute.xlu0 %2170
    %2174 = vset.pattern.permute.xlu0 0
    %2175 = vperm.xlu0 %2174, %v1873
    %v2176 = vpop.permute.xlu0 %2175
    %2179 = vset.pattern.permute.xlu0 0
    %2180 = vperm.xlu0 %2179, %v1874
    %v2181 = vpop.permute.xlu0 %2180
    %2184 = vset.pattern.permute.xlu0 0
    %2185 = vperm.xlu0 %2184, %v1875
    %v2186 = vpop.permute.xlu0 %2185
    %2189 = vset.pattern.permute.xlu0 0
    %2190 = vperm.xlu0 %2189, %v1876
    %v2191 = vpop.permute.xlu0 %2190
    %2194 = vset.pattern.permute.xlu0 0
    %2195 = vperm.xlu0 %2194, %v1877
    %v2196 = vpop.permute.xlu0 %2195
    %2199 = vset.pattern.permute.xlu0 0
    %2200 = vperm.xlu0 %2199, %v1878
    %v2201 = vpop.permute.xlu0 %2200
    %2204 = vset.pattern.permute.xlu0 0
    %2205 = vperm.xlu0 %2204, %v1879
    %v2206 = vpop.permute.xlu0 %2205
    %2209 = vset.pattern.permute.xlu0 0
    %2210 = vperm.xlu0 %2209, %v1880
    %v2211 = vpop.permute.xlu0 %2210
    %2214 = vset.pattern.permute.xlu0 0
    %2215 = vperm.xlu0 %2214, %v1881
    %v2216 = vpop.permute.xlu0 %2215
    %2219 = vset.pattern.permute.xlu0 0
    %2220 = vperm.xlu0 %2219, %v1882
    %v2221 = vpop.permute.xlu0 %2220
    %2224 = vset.pattern.permute.xlu0 0
    %2225 = vperm.xlu0 %2224, %v1883
    %v2226 = vpop.permute.xlu0 %2225
    %2229 = vset.pattern.permute.xlu0 0
    %2230 = vperm.xlu0 %2229, %v1884
    %v2231 = vpop.permute.xlu0 %2230
    %2234 = vset.pattern.permute.xlu0 0
    %2235 = vperm.xlu0 %2234, %v1885
    %v2236 = vpop.permute.xlu0 %2235
    %2239 = vset.pattern.permute.xlu0 0
    %2240 = vperm.xlu0 %2239, %v1886
    %v2241 = vpop.permute.xlu0 %2240
    %2244 = vset.pattern.permute.xlu0 0
    %2245 = vperm.xlu0 %2244, %v1887
    %v2246 = vpop.permute.xlu0 %2245
    %2249 = vset.pattern.permute.xlu0 0
    %2250 = vperm.xlu0 %2249, %v1888
    %v2251 = vpop.permute.xlu0 %2250
    %2254 = vset.pattern.permute.xlu0 0
    %2255 = vperm.xlu0 %2254, %v1889
    %v2256 = vpop.permute.xlu0 %2255
    %2259 = vset.pattern.permute.xlu0 0
    %2260 = vperm.xlu0 %2259, %v1890
    %v2261 = vpop.permute.xlu0 %2260
    %2264 = vset.pattern.permute.xlu0 0
    %2265 = vperm.xlu0 %2264, %v1891
    %v2266 = vpop.permute.xlu0 %2265
    %2269 = vset.pattern.permute.xlu0 0
    %2270 = vperm.xlu0 %2269, %v1892
    %v2271 = vpop.permute.xlu0 %2270
    %2274 = vset.pattern.permute.xlu0 0
    %2275 = vperm.xlu0 %2274, %v1893
    %v2276 = vpop.permute.xlu0 %2275
    %2279 = vset.pattern.permute.xlu0 0
    %2280 = vperm.xlu0 %2279, %v1894
    %v2281 = vpop.permute.xlu0 %2280
    %2284 = vset.pattern.permute.xlu0 0
    %2285 = vperm.xlu0 %2284, %v1895
    %v2286 = vpop.permute.xlu0 %2285
    %2289 = vset.pattern.permute.xlu0 0
    %2290 = vperm.xlu0 %2289, %v1896
    %v2291 = vpop.permute.xlu0 %2290
    %2294 = vset.pattern.permute.xlu0 0
    %2295 = vperm.xlu0 %2294, %v1897
    %v2296 = vpop.permute.xlu0 %2295
    %2299 = vset.pattern.permute.xlu0 0
    %2300 = vperm.xlu0 %2299, %v1898
    %v2301 = vpop.permute.xlu0 %2300
    %2304 = vset.pattern.permute.xlu0 0
    %2305 = vperm.xlu0 %2304, %v1899
    %v2306 = vpop.permute.xlu0 %2305
    %2309 = vset.pattern.permute.xlu0 0
    %2310 = vperm.xlu0 %2309, %v1900
    %v2311 = vpop.permute.xlu0 %2310
    %2314 = vset.pattern.permute.xlu0 0
    %2315 = vperm.xlu0 %2314, %v1901
    %v2316 = vpop.permute.xlu0 %2315
    %2319 = vset.pattern.permute.xlu0 0
    %2320 = vperm.xlu0 %2319, %v1902
    %v2321 = vpop.permute.xlu0 %2320
    %2324 = vset.pattern.permute.xlu0 0
    %2325 = vperm.xlu0 %2324, %v1903
    %v2326 = vpop.permute.xlu0 %2325
    %2329 = vset.pattern.permute.xlu0 0
    %2330 = vperm.xlu0 %2329, %v1904
    %v2331 = vpop.permute.xlu0 %2330
    %2334 = vset.pattern.permute.xlu0 0
    %2335 = vperm.xlu0 %2334, %v1905
    %v2336 = vpop.permute.xlu0 %2335
    %2339 = vset.pattern.permute.xlu0 0
    %2340 = vperm.xlu0 %2339, %v1906
    %v2341 = vpop.permute.xlu0 %2340
    %2344 = vset.pattern.permute.xlu0 0
    %2345 = vperm.xlu0 %2344, %v1907
    %v2346 = vpop.permute.xlu0 %2345
    %2349 = vset.pattern.permute.xlu0 0
    %2350 = vperm.xlu0 %2349, %v1908
    %v2351 = vpop.permute.xlu0 %2350
    %2354 = vset.pattern.permute.xlu0 0
    %2355 = vperm.xlu0 %2354, %v1909
    %v2356 = vpop.permute.xlu0 %2355
    %2359 = vset.pattern.permute.xlu0 0
    %2360 = vperm.xlu0 %2359, %v1910
    %v2361 = vpop.permute.xlu0 %2360
    %2364 = vset.pattern.permute.xlu0 0
    %2365 = vperm.xlu0 %2364, %v1911
    %v2366 = vpop.permute.xlu0 %2365
    %2369 = vset.pattern.permute.xlu0 0
    %2370 = vperm.xlu0 %2369, %v1912
    %v2371 = vpop.permute.xlu0 %2370
    %2374 = vset.pattern.permute.xlu0 0
    %2375 = vperm.xlu0 %2374, %v1913
    %v2376 = vpop.permute.xlu0 %2375
    %2379 = vset.pattern.permute.xlu0 0
    %2380 = vperm.xlu0 %2379, %v1914
    %v2381 = vpop.permute.xlu0 %2380
    %2384 = vset.pattern.permute.xlu0 0
    %2385 = vperm.xlu0 %2384, %v1915
    %v2386 = vpop.permute.xlu0 %2385
    %2389 = vset.pattern.permute.xlu0 0
    %2390 = vperm.xlu0 %2389, %v1916
    %v2391 = vpop.permute.xlu0 %2390
    %2394 = vset.pattern.permute.xlu0 0
    %2395 = vperm.xlu0 %2394, %v1917
    %v2396 = vpop.permute.xlu0 %2395
    %2399 = vset.pattern.permute.xlu0 0
    %2400 = vperm.xlu0 %2399, %v1918
    %v2401 = vpop.permute.xlu0 %2400
    %2404 = vset.pattern.permute.xlu0 0
    %2405 = vperm.xlu0 %2404, %v1919
    %v2406 = vpop.permute.xlu0 %2405
    %2409 = vset.pattern.permute.xlu0 0
    %2410 = vperm.xlu0 %2409, %v1920
    %v2411 = vpop.permute.xlu0 %2410
    %2414 = vset.pattern.permute.xlu0 0
    %2415 = vperm.xlu0 %2414, %v1921
    %v2416 = vpop.permute.xlu0 %2415
    %2419 = vset.pattern.permute.xlu0 0
    %2420 = vperm.xlu0 %2419, %v1922
    %v2421 = vpop.permute.xlu0 %2420
    %2424 = vset.pattern.permute.xlu0 0
    %2425 = vperm.xlu0 %2424, %v1923
    %v2426 = vpop.permute.xlu0 %2425
    %2429 = vset.pattern.permute.xlu0 0
    %2430 = vperm.xlu0 %2429, %v1924
    %v2431 = vpop.permute.xlu0 %2430
    %2434 = vset.pattern.permute.xlu0 0
    %2435 = vperm.xlu0 %2434, %v1925
    %v2436 = vpop.permute.xlu0 %2435
    %2439 = vset.pattern.permute.xlu0 0
    %2440 = vperm.xlu0 %2439, %v1926
    %v2441 = vpop.permute.xlu0 %2440
    %2444 = vset.pattern.permute.xlu0 0
    %2445 = vperm.xlu0 %2444, %v1927
    %v2446 = vpop.permute.xlu0 %2445
    %2449 = vset.pattern.permute.xlu0 0
    %2450 = vperm.xlu0 %2449, %v1928
    %v2451 = vpop.permute.xlu0 %2450
    %2454 = vset.pattern.permute.xlu0 0
    %2455 = vperm.xlu0 %2454, %v1929
    %v2456 = vpop.permute.xlu0 %2455
    %2459 = vset.pattern.permute.xlu0 0
    %2460 = vperm.xlu0 %2459, %v1930
    %v2461 = vpop.permute.xlu0 %2460
    %2464 = vset.pattern.permute.xlu0 0
    %2465 = vperm.xlu0 %2464, %v1931
    %v2466 = vpop.permute.xlu0 %2465
    %2469 = vset.pattern.permute.xlu0 0
    %2470 = vperm.xlu0 %2469, %v1932
    %v2471 = vpop.permute.xlu0 %2470
    %v2473 = vmul.f32 %v1717, %v1936
    %v2474 = vmul.f32 %v1718, %v1941
    %v2475 = vmul.f32 %v1719, %v1946
    %v2476 = vmul.f32 %v1720, %v1951
    %v2477 = vmul.f32 %v1721, %v1956
    %v2478 = vmul.f32 %v1722, %v1961
    %v2479 = vmul.f32 %v1723, %v1966
    %v2480 = vmul.f32 %v1724, %v1971
    %v2481 = vmul.f32 %v1725, %v1976
    %v2482 = vmul.f32 %v1726, %v1981
    %v2483 = vmul.f32 %v1727, %v1986
    %v2484 = vmul.f32 %v1728, %v1991
    %v2485 = vmul.f32 %v1729, %v1996
    %v2486 = vmul.f32 %v1730, %v2001
    %v2487 = vmul.f32 %v1731, %v2006
    %v2488 = vmul.f32 %v1732, %v2011
    %v2489 = vmul.f32 %v1733, %v2016
    %v2490 = vmul.f32 %v1734, %v2021
    %v2491 = vmul.f32 %v1735, %v2026
    %v2492 = vmul.f32 %v1736, %v2031
    %v2493 = vmul.f32 %v1737, %v2036
    %v2494 = vmul.f32 %v1738, %v2041
    %v2495 = vmul.f32 %v1739, %v2046
    %v2496 = vmul.f32 %v1740, %v2051
    %v2497 = vmul.f32 %v1741, %v2056
    %v2498 = vmul.f32 %v1742, %v2061
    %v2499 = vmul.f32 %v1743, %v2066
    %v2500 = vmul.f32 %v1744, %v2071
    %v2501 = vmul.f32 %v1745, %v2076
    %v2502 = vmul.f32 %v1746, %v2081
    %v2503 = vmul.f32 %v1747, %v2086
    %v2504 = vmul.f32 %v1748, %v2091
    %v2505 = vmul.f32 %v1749, %v2096
    %v2506 = vmul.f32 %v1750, %v2101
    %v2507 = vmul.f32 %v1751, %v2106
    %v2508 = vmul.f32 %v1752, %v2111
    %v2509 = vmul.f32 %v1753, %v2116
    %v2510 = vmul.f32 %v1754, %v2121
    %v2511 = vmul.f32 %v1755, %v2126
    %v2512 = vmul.f32 %v1756, %v2131
    %v2513 = vmul.f32 %v1757, %v2136
    %v2514 = vmul.f32 %v1758, %v2141
    %v2515 = vmul.f32 %v1759, %v2146
    %v2516 = vmul.f32 %v1760, %v2151
    %v2517 = vmul.f32 %v1761, %v2156
    %v2518 = vmul.f32 %v1762, %v2161
    %v2519 = vmul.f32 %v1763, %v2166
    %v2520 = vmul.f32 %v1764, %v2171
    %v2521 = vmul.f32 %v1765, %v2176
    %v2522 = vmul.f32 %v1766, %v2181
    %v2523 = vmul.f32 %v1767, %v2186
    %v2524 = vmul.f32 %v1768, %v2191
    %v2525 = vmul.f32 %v1769, %v2196
    %v2526 = vmul.f32 %v1770, %v2201
    %v2527 = vmul.f32 %v1771, %v2206
    %v2528 = vmul.f32 %v1772, %v2211
    %v2529 = vmul.f32 %v1773, %v2216
    %v2530 = vmul.f32 %v1774, %v2221
    %v2531 = vmul.f32 %v1775, %v2226
    %v2532 = vmul.f32 %v1776, %v2231
    %v2533 = vmul.f32 %v1777, %v2236
    %v2534 = vmul.f32 %v1778, %v2241
    %v2535 = vmul.f32 %v1779, %v2246
    %v2536 = vmul.f32 %v1780, %v2251
    %v2537 = vmul.f32 %v1781, %v2256
    %v2538 = vmul.f32 %v1782, %v2261
    %v2539 = vmul.f32 %v1783, %v2266
    %v2540 = vmul.f32 %v1784, %v2271
    %v2541 = vmul.f32 %v1785, %v2276
    %v2542 = vmul.f32 %v1786, %v2281
    %v2543 = vmul.f32 %v1787, %v2286
    %v2544 = vmul.f32 %v1788, %v2291
    %v2545 = vmul.f32 %v1789, %v2296
    %v2546 = vmul.f32 %v1790, %v2301
    %v2547 = vmul.f32 %v1791, %v2306
    %v2548 = vmul.f32 %v1792, %v2311
    %v2549 = vmul.f32 %v1793, %v2316
    %v2550 = vmul.f32 %v1794, %v2321
    %v2551 = vmul.f32 %v1795, %v2326
    %v2552 = vmul.f32 %v1796, %v2331
    %v2553 = vmul.f32 %v1797, %v2336
    %v2554 = vmul.f32 %v1798, %v2341
    %v2555 = vmul.f32 %v1799, %v2346
    %v2556 = vmul.f32 %v1800, %v2351
    %v2557 = vmul.f32 %v1801, %v2356
    %v2558 = vmul.f32 %v1802, %v2361
    %v2559 = vmul.f32 %v1803, %v2366
    %v2560 = vmul.f32 %v1804, %v2371
    %v2561 = vmul.f32 %v1805, %v2376
    %v2562 = vmul.f32 %v1806, %v2381
    %v2563 = vmul.f32 %v1807, %v2386
    %v2564 = vmul.f32 %v1808, %v2391
    %v2565 = vmul.f32 %v1809, %v2396
    %v2566 = vmul.f32 %v1810, %v2401
    %v2567 = vmul.f32 %v1811, %v2406
    %v2568 = vmul.f32 %v1812, %v2411
    %v2569 = vmul.f32 %v1813, %v2416
    %v2570 = vmul.f32 %v1814, %v2421
    %v2571 = vmul.f32 %v1815, %v2426
    %v2572 = vmul.f32 %v1816, %v2431
    %v2573 = vmul.f32 %v1817, %v2436
    %v2574 = vmul.f32 %v1818, %v2441
    %v2575 = vmul.f32 %v1819, %v2446
    %v2576 = vmul.f32 %v1820, %v2451
    %v2577 = vmul.f32 %v1821, %v2456
    %v2578 = vmul.f32 %v1822, %v2461
    %v2579 = vmul.f32 %v1823, %v2466
    %v2580 = vmul.f32 %v1824, %v2471
    %2581 = vst [vmem:[#allocation2 + $0x20] sm:$0xff] %v2473
    %2582 = vst [vmem:[#allocation2 + $0x28] sm:$0xff] %v2474
    %2583 = vst [vmem:[#allocation2 + $0x30] sm:$0xff] %v2475
    %2584 = vst [vmem:[#allocation2 + $0x38] sm:$0xff] %v2476
    %2585 = vst [vmem:[#allocation2 + $0x40] sm:$0xff] %v2477
    %2586 = vst [vmem:[#allocation2 + $0x48] sm:$0xff] %v2478
    %2587 = vst [vmem:[#allocation2 + $0x50] sm:$0xff] %v2479
    %2588 = vst [vmem:[#allocation2 + $0x58] sm:$0xff] %v2480
    %2589 = vst [vmem:[#allocation2 + $0x60] sm:$0xff] %v2481
    %2590 = vst [vmem:[#allocation2 + $0x68] sm:$0xff] %v2482
    %2591 = vst [vmem:[#allocation2 + $0x70] sm:$0xff] %v2483
    %2592 = vst [vmem:[#allocation2 + $0x78] sm:$0xff] %v2484
    %2593 = vst [vmem:[#allocation2 + $0x80] sm:$0xff] %v2485
    %2594 = vst [vmem:[#allocation2 + $0x88] sm:$0xff] %v2486
    %2595 = vst [vmem:[#allocation2 + $0x90] sm:$0xff] %v2487
    %2596 = vst [vmem:[#allocation2 + $0x98] sm:$0xff] %v2488
    %2597 = vst [vmem:[#allocation2 + $0xa0] sm:$0xff] %v2489
    %2598 = vst [vmem:[#allocation2 + $0xa8] sm:$0xff] %v2490
    %2599 = vst [vmem:[#allocation2 + $0xb0] sm:$0xff] %v2491
    %2600 = vst [vmem:[#allocation2 + $0xb8] sm:$0xff] %v2492
    %2601 = vst [vmem:[#allocation2 + $0xc0] sm:$0xff] %v2493
    %2602 = vst [vmem:[#allocation2 + $0xc8] sm:$0xff] %v2494
    %2603 = vst [vmem:[#allocation2 + $0xd0] sm:$0xff] %v2495
    %2604 = vst [vmem:[#allocation2 + $0xd8] sm:$0xff] %v2496
    %2605 = vst [vmem:[#allocation2 + $0xe0] sm:$0xff] %v2497
    %2606 = vst [vmem:[#allocation2 + $0xe8] sm:$0xff] %v2498
    %2607 = vst [vmem:[#allocation2 + $0xf0] sm:$0xff] %v2499
    %2608 = vst [vmem:[#allocation2 + $0xf8] sm:$0xff] %v2500
    %2609 = vst [vmem:[#allocation2 + $0x100] sm:$0xff] %v2501
    %2610 = vst [vmem:[#allocation2 + $0x108] sm:$0xff] %v2502
    %2611 = vst [vmem:[#allocation2 + $0x110] sm:$0xff] %v2503
    %2612 = vst [vmem:[#allocation2 + $0x118] sm:$0xff] %v2504
    %2613 = vst [vmem:[#allocation2 + $0x120] sm:$0xff] %v2505
    %2614 = vst [vmem:[#allocation2 + $0x128] sm:$0xff] %v2506
    %2615 = vst [vmem:[#allocation2 + $0x130] sm:$0xff] %v2507
    %2616 = vst [vmem:[#allocation2 + $0x138] sm:$0xff] %v2508
    %2617 = vst [vmem:[#allocation2 + $0x140] sm:$0xff] %v2509
    %2618 = vst [vmem:[#allocation2 + $0x148] sm:$0xff] %v2510
    %2619 = vst [vmem:[#allocation2 + $0x150] sm:$0xff] %v2511
    %2620 = vst [vmem:[#allocation2 + $0x158] sm:$0xff] %v2512
    %2621 = vst [vmem:[#allocation2 + $0x160] sm:$0xff] %v2513
    %2622 = vst [vmem:[#allocation2 + $0x168] sm:$0xff] %v2514
    %2623 = vst [vmem:[#allocation2 + $0x170] sm:$0xff] %v2515
    %2624 = vst [vmem:[#allocation2 + $0x178] sm:$0xff] %v2516
    %2625 = vst [vmem:[#allocation2 + $0x180] sm:$0xff] %v2517
    %2626 = vst [vmem:[#allocation2 + $0x188] sm:$0xff] %v2518
    %2627 = vst [vmem:[#allocation2 + $0x190] sm:$0xff] %v2519
    %2628 = vst [vmem:[#allocation2 + $0x198] sm:$0xff] %v2520
    %2629 = vst [vmem:[#allocation2 + $0x1a0] sm:$0xff] %v2521
    %2630 = vst [vmem:[#allocation2 + $0x1a8] sm:$0xff] %v2522
    %2631 = vst [vmem:[#allocation2 + $0x1b0] sm:$0xff] %v2523
    %2632 = vst [vmem:[#allocation2 + $0x1b8] sm:$0xff] %v2524
    %2633 = vst [vmem:[#allocation2 + $0x1c0] sm:$0xff] %v2525
    %2634 = vst [vmem:[#allocation2 + $0x1c8] sm:$0xff] %v2526
    %2635 = vst [vmem:[#allocation2 + $0x1d0] sm:$0xff] %v2527
    %2636 = vst [vmem:[#allocation2 + $0x1d8] sm:$0xff] %v2528
    %2637 = vst [vmem:[#allocation2 + $0x1e0] sm:$0xff] %v2529
    %2638 = vst [vmem:[#allocation2 + $0x1e8] sm:$0xff] %v2530
    %2639 = vst [vmem:[#allocation2 + $0x1f0] sm:$0xff] %v2531
    %2640 = vst [vmem:[#allocation2 + $0x1f8] sm:$0xff] %v2532
    %2641 = vst [vmem:[#allocation2 + $0x200] sm:$0xff] %v2533
    %2642 = vst [vmem:[#allocation2 + $0x208] sm:$0xff] %v2534
    %2643 = vst [vmem:[#allocation2 + $0x210] sm:$0xff] %v2535
    %2644 = vst [vmem:[#allocation2 + $0x218] sm:$0xff] %v2536
    %2645 = vst [vmem:[#allocation2 + $0x220] sm:$0xff] %v2537
    %2646 = vst [vmem:[#allocation2 + $0x228] sm:$0xff] %v2538
    %2647 = vst [vmem:[#allocation2 + $0x230] sm:$0xff] %v2539
    %2648 = vst [vmem:[#allocation2 + $0x238] sm:$0xff] %v2540
    %2649 = vst [vmem:[#allocation2 + $0x240] sm:$0xff] %v2541
    %2650 = vst [vmem:[#allocation2 + $0x248] sm:$0xff] %v2542
    %2651 = vst [vmem:[#allocation2 + $0x250] sm:$0xff] %v2543
    %2652 = vst [vmem:[#allocation2 + $0x258] sm:$0xff] %v2544
    %2653 = vst [vmem:[#allocation2 + $0x260] sm:$0xff] %v2545
    %2654 = vst [vmem:[#allocation2 + $0x268] sm:$0xff] %v2546
    %2655 = vst [vmem:[#allocation2 + $0x270] sm:$0xff] %v2547
    %2656 = vst [vmem:[#allocation2 + $0x278] sm:$0xff] %v2548
    %2657 = vst [vmem:[#allocation2 + $0x280] sm:$0xff] %v2549
    %2658 = vst [vmem:[#allocation2 + $0x288] sm:$0xff] %v2550
    %2659 = vst [vmem:[#allocation2 + $0x290] sm:$0xff] %v2551
    %2660 = vst [vmem:[#allocation2 + $0x298] sm:$0xff] %v2552
    %2661 = vst [vmem:[#allocation2 + $0x2a0] sm:$0xff] %v2553
    %2662 = vst [vmem:[#allocation2 + $0x2a8] sm:$0xff] %v2554
    %2663 = vst [vmem:[#allocation2 + $0x2b0] sm:$0xff] %v2555
    %2664 = vst [vmem:[#allocation2 + $0x2b8] sm:$0xff] %v2556
    %2665 = vst [vmem:[#allocation2 + $0x2c0] sm:$0xff] %v2557
    %2666 = vst [vmem:[#allocation2 + $0x2c8] sm:$0xff] %v2558
    %2667 = vst [vmem:[#allocation2 + $0x2d0] sm:$0xff] %v2559
    %2668 = vst [vmem:[#allocation2 + $0x2d8] sm:$0xff] %v2560
    %2669 = vst [vmem:[#allocation2 + $0x2e0] sm:$0xff] %v2561
    %2670 = vst [vmem:[#allocation2 + $0x2e8] sm:$0xff] %v2562
    %2671 = vst [vmem:[#allocation2 + $0x2f0] sm:$0xff] %v2563
    %2672 = vst [vmem:[#allocation2 + $0x2f8] sm:$0xff] %v2564
    %2673 = vst [vmem:[#allocation2 + $0x300] sm:$0xff] %v2565
    %2674 = vst [vmem:[#allocation2 + $0x308] sm:$0xff] %v2566
    %2675 = vst [vmem:[#allocation2 + $0x310] sm:$0xff] %v2567
    %2676 = vst [vmem:[#allocation2 + $0x318] sm:$0xff] %v2568
    %2677 = vst [vmem:[#allocation2 + $0x320] sm:$0xff] %v2569
    %2678 = vst [vmem:[#allocation2 + $0x328] sm:$0xff] %v2570
    %2679 = vst [vmem:[#allocation2 + $0x330] sm:$0xff] %v2571
    %2680 = vst [vmem:[#allocation2 + $0x338] sm:$0xff] %v2572
    %2681 = vst [vmem:[#allocation2 + $0x340] sm:$0xff] %v2573
    %2682 = vst [vmem:[#allocation2 + $0x348] sm:$0xff] %v2574
    %2683 = vst [vmem:[#allocation2 + $0x350] sm:$0xff] %v2575
    %2684 = vst [vmem:[#allocation2 + $0x358] sm:$0xff] %v2576
    %2685 = vst [vmem:[#allocation2 + $0x360] sm:$0xff] %v2577
    %2686 = vst [vmem:[#allocation2 + $0x368] sm:$0xff] %v2578
    %2687 = vst [vmem:[#allocation2 + $0x370] sm:$0xff] %v2579
    %2688 = vst [vmem:[#allocation2 + $0x378] sm:$0xff] %v2580
    %v2689 = vld [vmem:[#allocation2 + $0x7] sm:$0xff]
    %v2690 = vld [vmem:[#allocation2 + $0xf] sm:$0xff]
    %v2691 = vld [vmem:[#allocation2 + $0x17] sm:$0xff]
    %v2692 = vld [vmem:[#allocation2 + $0x1f] sm:$0xff]
    %v2693 = vld [vmem:[#allocation2 + $0x27] sm:$0xff]
    %v2694 = vld [vmem:[#allocation2 + $0x2f] sm:$0xff]
    %v2695 = vld [vmem:[#allocation2 + $0x37] sm:$0xff]
    %v2696 = vld [vmem:[#allocation2 + $0x3f] sm:$0xff]
    %v2697 = vld [vmem:[#allocation2 + $0x47] sm:$0xff]
    %v2698 = vld [vmem:[#allocation2 + $0x4f] sm:$0xff]
    %v2699 = vld [vmem:[#allocation2 + $0x57] sm:$0xff]
    %v2700 = vld [vmem:[#allocation2 + $0x5f] sm:$0xff]
    %v2701 = vld [vmem:[#allocation2 + $0x67] sm:$0xff]
    %v2702 = vld [vmem:[#allocation2 + $0x6f] sm:$0xff]
    %v2703 = vld [vmem:[#allocation2 + $0x77] sm:$0xff]
    %v2704 = vld [vmem:[#allocation2 + $0x7f] sm:$0xff]
    %v2705 = vld [vmem:[#allocation2 + $0x87] sm:$0xff]
    %v2706 = vld [vmem:[#allocation2 + $0x8f] sm:$0xff]
    %v2707 = vld [vmem:[#allocation2 + $0x97] sm:$0xff]
    %v2708 = vld [vmem:[#allocation2 + $0x9f] sm:$0xff]
    %v2709 = vld [vmem:[#allocation2 + $0xa7] sm:$0xff]
    %v2710 = vld [vmem:[#allocation2 + $0xaf] sm:$0xff]
    %v2711 = vld [vmem:[#allocation2 + $0xb7] sm:$0xff]
    %v2712 = vld [vmem:[#allocation2 + $0xbf] sm:$0xff]
    %v2713 = vld [vmem:[#allocation2 + $0xc7] sm:$0xff]
    %v2714 = vld [vmem:[#allocation2 + $0xcf] sm:$0xff]
    %v2715 = vld [vmem:[#allocation2 + $0xd7] sm:$0xff]
    %v2716 = vld [vmem:[#allocation2 + $0xdf] sm:$0xff]
    %v2717 = vld [vmem:[#allocation2 + $0xe7] sm:$0xff]
    %v2718 = vld [vmem:[#allocation2 + $0xef] sm:$0xff]
    %v2719 = vld [vmem:[#allocation2 + $0xf7] sm:$0xff]
    %v2720 = vld [vmem:[#allocation2 + $0xff] sm:$0xff]
    %v2721 = vld [vmem:[#allocation2 + $0x107] sm:$0xff]
    %v2722 = vld [vmem:[#allocation2 + $0x10f] sm:$0xff]
    %v2723 = vld [vmem:[#allocation2 + $0x117] sm:$0xff]
    %v2724 = vld [vmem:[#allocation2 + $0x11f] sm:$0xff]
    %v2725 = vld [vmem:[#allocation2 + $0x127] sm:$0xff]
    %v2726 = vld [vmem:[#allocation2 + $0x12f] sm:$0xff]
    %v2727 = vld [vmem:[#allocation2 + $0x137] sm:$0xff]
    %v2728 = vld [vmem:[#allocation2 + $0x13f] sm:$0xff]
    %v2729 = vld [vmem:[#allocation2 + $0x147] sm:$0xff]
    %v2730 = vld [vmem:[#allocation2 + $0x14f] sm:$0xff]
    %v2731 = vld [vmem:[#allocation2 + $0x157] sm:$0xff]
    %v2732 = vld [vmem:[#allocation2 + $0x15f] sm:$0xff]
    %v2733 = vld [vmem:[#allocation2 + $0x167] sm:$0xff]
    %v2734 = vld [vmem:[#allocation2 + $0x16f] sm:$0xff]
    %v2735 = vld [vmem:[#allocation2 + $0x177] sm:$0xff]
    %v2736 = vld [vmem:[#allocation2 + $0x17f] sm:$0xff]
    %v2737 = vld [vmem:[#allocation2 + $0x187] sm:$0xff]
    %v2738 = vld [vmem:[#allocation2 + $0x18f] sm:$0xff]
    %v2739 = vld [vmem:[#allocation2 + $0x197] sm:$0xff]
    %v2740 = vld [vmem:[#allocation2 + $0x19f] sm:$0xff]
    %v2741 = vld [vmem:[#allocation2 + $0x1a7] sm:$0xff]
    %v2742 = vld [vmem:[#allocation2 + $0x1af] sm:$0xff]
    %v2743 = vld [vmem:[#allocation2 + $0x1b7] sm:$0xff]
    %v2744 = vld [vmem:[#allocation2 + $0x1bf] sm:$0xff]
    %v2745 = vld [vmem:[#allocation2 + $0x1c7] sm:$0xff]
    %v2746 = vld [vmem:[#allocation2 + $0x1cf] sm:$0xff]
    %v2747 = vld [vmem:[#allocation2 + $0x1d7] sm:$0xff]
    %v2748 = vld [vmem:[#allocation2 + $0x1df] sm:$0xff]
    %v2749 = vld [vmem:[#allocation2 + $0x1e7] sm:$0xff]
    %v2750 = vld [vmem:[#allocation2 + $0x1ef] sm:$0xff]
    %v2751 = vld [vmem:[#allocation2 + $0x1f7] sm:$0xff]
    %v2752 = vld [vmem:[#allocation2 + $0x1ff] sm:$0xff]
    %v2753 = vld [vmem:[#allocation2 + $0x207] sm:$0xff]
    %v2754 = vld [vmem:[#allocation2 + $0x20f] sm:$0xff]
    %v2755 = vld [vmem:[#allocation2 + $0x217] sm:$0xff]
    %v2756 = vld [vmem:[#allocation2 + $0x21f] sm:$0xff]
    %v2757 = vld [vmem:[#allocation2 + $0x227] sm:$0xff]
    %v2758 = vld [vmem:[#allocation2 + $0x22f] sm:$0xff]
    %v2759 = vld [vmem:[#allocation2 + $0x237] sm:$0xff]
    %v2760 = vld [vmem:[#allocation2 + $0x23f] sm:$0xff]
    %v2761 = vld [vmem:[#allocation2 + $0x247] sm:$0xff]
    %v2762 = vld [vmem:[#allocation2 + $0x24f] sm:$0xff]
    %v2763 = vld [vmem:[#allocation2 + $0x257] sm:$0xff]
    %v2764 = vld [vmem:[#allocation2 + $0x25f] sm:$0xff]
    %v2765 = vld [vmem:[#allocation2 + $0x267] sm:$0xff]
    %v2766 = vld [vmem:[#allocation2 + $0x26f] sm:$0xff]
    %v2767 = vld [vmem:[#allocation2 + $0x277] sm:$0xff]
    %v2768 = vld [vmem:[#allocation2 + $0x27f] sm:$0xff]
    %v2769 = vld [vmem:[#allocation2 + $0x287] sm:$0xff]
    %v2770 = vld [vmem:[#allocation2 + $0x28f] sm:$0xff]
    %v2771 = vld [vmem:[#allocation2 + $0x297] sm:$0xff]
    %v2772 = vld [vmem:[#allocation2 + $0x29f] sm:$0xff]
    %v2773 = vld [vmem:[#allocation2 + $0x2a7] sm:$0xff]
    %v2774 = vld [vmem:[#allocation2 + $0x2af] sm:$0xff]
    %v2775 = vld [vmem:[#allocation2 + $0x2b7] sm:$0xff]
    %v2776 = vld [vmem:[#allocation2 + $0x2bf] sm:$0xff]
    %v2777 = vld [vmem:[#allocation2 + $0x2c7] sm:$0xff]
    %v2778 = vld [vmem:[#allocation2 + $0x2cf] sm:$0xff]
    %v2779 = vld [vmem:[#allocation2 + $0x2d7] sm:$0xff]
    %v2780 = vld [vmem:[#allocation2 + $0x2df] sm:$0xff]
    %v2781 = vld [vmem:[#allocation2 + $0x2e7] sm:$0xff]
    %v2782 = vld [vmem:[#allocation2 + $0x2ef] sm:$0xff]
    %v2783 = vld [vmem:[#allocation2 + $0x2f7] sm:$0xff]
    %v2784 = vld [vmem:[#allocation2 + $0x2ff] sm:$0xff]
    %v2785 = vld [vmem:[#allocation2 + $0x307] sm:$0xff]
    %v2786 = vld [vmem:[#allocation2 + $0x30f] sm:$0xff]
    %v2787 = vld [vmem:[#allocation2 + $0x317] sm:$0xff]
    %v2788 = vld [vmem:[#allocation2 + $0x31f] sm:$0xff]
    %v2789 = vld [vmem:[#allocation2 + $0x327] sm:$0xff]
    %v2790 = vld [vmem:[#allocation2 + $0x32f] sm:$0xff]
    %v2791 = vld [vmem:[#allocation2 + $0x337] sm:$0xff]
    %v2792 = vld [vmem:[#allocation2 + $0x33f] sm:$0xff]
    %v2793 = vld [vmem:[#allocation2 + $0x347] sm:$0xff]
    %v2794 = vld [vmem:[#allocation2 + $0x34f] sm:$0xff]
    %v2795 = vld [vmem:[#allocation2 + $0x357] sm:$0xff]
    %v2796 = vld [vmem:[#allocation2 + $0x35f] sm:$0xff]
    %v2797 = vpack.c.bf16 %v2690, %v2689
    %v2798 = vpack.c.bf16 %v2692, %v2691
    %v2799 = vpack.c.bf16 %v2694, %v2693
    %v2800 = vpack.c.bf16 %v2696, %v2695
    %v2801 = vpack.c.bf16 %v2698, %v2697
    %v2802 = vpack.c.bf16 %v2700, %v2699
    %v2803 = vpack.c.bf16 %v2702, %v2701
    %v2804 = vpack.c.bf16 %v2704, %v2703
    %v2805 = vpack.c.bf16 %v2706, %v2705
    %v2806 = vpack.c.bf16 %v2708, %v2707
    %v2807 = vpack.c.bf16 %v2710, %v2709
    %v2808 = vpack.c.bf16 %v2712, %v2711
    %v2809 = vpack.c.bf16 %v2714, %v2713
    %v2810 = vpack.c.bf16 %v2716, %v2715
    %v2811 = vpack.c.bf16 %v2718, %v2717
    %v2812 = vpack.c.bf16 %v2720, %v2719
    %v2813 = vpack.c.bf16 %v2722, %v2721
    %v2814 = vpack.c.bf16 %v2724, %v2723
    %v2815 = vpack.c.bf16 %v2726, %v2725
    %v2816 = vpack.c.bf16 %v2728, %v2727
    %v2817 = vpack.c.bf16 %v2730, %v2729
    %v2818 = vpack.c.bf16 %v2732, %v2731
    %v2819 = vpack.c.bf16 %v2734, %v2733
    %v2820 = vpack.c.bf16 %v2736, %v2735
    %v2821 = vpack.c.bf16 %v2738, %v2737
    %v2822 = vpack.c.bf16 %v2740, %v2739
    %v2823 = vpack.c.bf16 %v2742, %v2741
    %v2824 = vpack.c.bf16 %v2744, %v2743
    %v2825 = vpack.c.bf16 %v2746, %v2745
    %v2826 = vpack.c.bf16 %v2748, %v2747
    %v2827 = vpack.c.bf16 %v2750, %v2749
    %v2828 = vpack.c.bf16 %v2752, %v2751
    %v2829 = vpack.c.bf16 %v2754, %v2753
    %v2830 = vpack.c.bf16 %v2756, %v2755
    %v2831 = vpack.c.bf16 %v2758, %v2757
    %v2832 = vpack.c.bf16 %v2760, %v2759
    %v2833 = vpack.c.bf16 %v2762, %v2761
    %v2834 = vpack.c.bf16 %v2764, %v2763
    %v2835 = vpack.c.bf16 %v2766, %v2765
    %v2836 = vpack.c.bf16 %v2768, %v2767
    %v2837 = vpack.c.bf16 %v2770, %v2769
    %v2838 = vpack.c.bf16 %v2772, %v2771
    %v2839 = vpack.c.bf16 %v2774, %v2773
    %v2840 = vpack.c.bf16 %v2776, %v2775
    %v2841 = vpack.c.bf16 %v2778, %v2777
    %v2842 = vpack.c.bf16 %v2780, %v2779
    %v2843 = vpack.c.bf16 %v2782, %v2781
    %v2844 = vpack.c.bf16 %v2784, %v2783
    %v2845 = vpack.c.bf16 %v2786, %v2785
    %v2846 = vpack.c.bf16 %v2788, %v2787
    %v2847 = vpack.c.bf16 %v2790, %v2789
    %v2848 = vpack.c.bf16 %v2792, %v2791
    %v2849 = vpack.c.bf16 %v2794, %v2793
    %v2850 = vpack.c.bf16 %v2796, %v2795
    %v2851 = vld [vmem:[%s3] sm:$0xf]
    %v2852 = vld [vmem:[%s3 + $0x4] sm:$0xf]
    %v2853 = vld [vmem:[%s3 + $0x8] sm:$0xf]
    %v2854 = vld [vmem:[%s3 + $0xc] sm:$0xf]
    %v2855 = vld [vmem:[%s3 + $0x10] sm:$0xf]
    %v2856 = vld [vmem:[%s3 + $0x14] sm:$0xf]
    %v2857 = vld [vmem:[%s3 + $0x18] sm:$0xf]
    %v2858 = vld [vmem:[%s3 + $0x1c] sm:$0xf]
    %v2859 = vld [vmem:[%s3 + $0x20] sm:$0xf]
    %v2860 = vld [vmem:[%s3 + $0x24] sm:$0xf]
    %v2861 = vld [vmem:[%s3 + $0x28] sm:$0xf]
    %v2862 = vld [vmem:[%s3 + $0x2c] sm:$0xf]
    %v2863 = vld [vmem:[%s3 + $0x30] sm:$0xf]
    %v2864 = vld [vmem:[%s3 + $0x34] sm:$0xf]
    %v2865 = vld [vmem:[%s3 + $0x38] sm:$0xf]
    %v2866 = vld [vmem:[%s3 + $0x3c] sm:$0xf]
    %v2867 = vld [vmem:[#allocation2 + $0x8] sm:$0xff]
    %v2868 = vld [vmem:[#allocation2 + $0x10] sm:$0xff]
    %v2869 = vld [vmem:[#allocation2 + $0x18] sm:$0xff]
    %v2870 = vld [vmem:[#allocation2 + $0x20] sm:$0xff]
    %v2871 = vld [vmem:[#allocation2 + $0x28] sm:$0xff]
    %v2872 = vld [vmem:[#allocation2 + $0x30] sm:$0xff]
    %v2873 = vld [vmem:[#allocation2 + $0x38] sm:$0xff]
    %v2874 = vld [vmem:[#allocation2 + $0x40] sm:$0xff]
    %v2875 = vld [vmem:[#allocation2 + $0x48] sm:$0xff]
    %v2876 = vld [vmem:[#allocation2 + $0x50] sm:$0xff]
    %v2877 = vld [vmem:[#allocation2 + $0x58] sm:$0xff]
    %v2878 = vld [vmem:[#allocation2 + $0x60] sm:$0xff]
    %v2879 = vld [vmem:[#allocation2 + $0x68] sm:$0xff]
    %v2880 = vld [vmem:[#allocation2 + $0x70] sm:$0xff]
    %v2881 = vld [vmem:[#allocation2 + $0x78] sm:$0xff]
    %v2882 = vld [vmem:[#allocation2 + $0x80] sm:$0xff]
    %v2883 = vld [vmem:[#allocation2 + $0x88] sm:$0xff]
    %v2884 = vld [vmem:[#allocation2 + $0x90] sm:$0xff]
    %v2885 = vld [vmem:[#allocation2 + $0x98] sm:$0xff]
    %v2886 = vld [vmem:[#allocation2 + $0xa0] sm:$0xff]
    %v2887 = vld [vmem:[#allocation2 + $0xa8] sm:$0xff]
    %v2888 = vld [vmem:[#allocation2 + $0xb0] sm:$0xff]
    %v2889 = vld [vmem:[#allocation2 + $0xb8] sm:$0xff]
    %v2890 = vld [vmem:[#allocation2 + $0xc0] sm:$0xff]
    %v2891 = vld [vmem:[#allocation2 + $0xc8] sm:$0xff]
    %v2892 = vld [vmem:[#allocation2 + $0xd0] sm:$0xff]
    %v2893 = vld [vmem:[#allocation2 + $0xd8] sm:$0xff]
    %v2894 = vld [vmem:[#allocation2 + $0xe0] sm:$0xff]
    %v2895 = vld [vmem:[#allocation2 + $0xe8] sm:$0xff]
    %v2896 = vld [vmem:[#allocation2 + $0xf0] sm:$0xff]
    %v2897 = vld [vmem:[#allocation2 + $0xf8] sm:$0xff]
    %v2898 = vld [vmem:[#allocation2 + $0x100] sm:$0xff]
    %v2899 = vld [vmem:[#allocation2 + $0x108] sm:$0xff]
    %v2900 = vld [vmem:[#allocation2 + $0x110] sm:$0xff]
    %v2901 = vld [vmem:[#allocation2 + $0x118] sm:$0xff]
    %v2902 = vld [vmem:[#allocation2 + $0x120] sm:$0xff]
    %v2903 = vld [vmem:[#allocation2 + $0x128] sm:$0xff]
    %v2904 = vld [vmem:[#allocation2 + $0x130] sm:$0xff]
    %v2905 = vld [vmem:[#allocation2 + $0x138] sm:$0xff]
    %v2906 = vld [vmem:[#allocation2 + $0x140] sm:$0xff]
    %v2907 = vld [vmem:[#allocation2 + $0x148] sm:$0xff]
    %v2908 = vld [vmem:[#allocation2 + $0x150] sm:$0xff]
    %v2909 = vld [vmem:[#allocation2 + $0x158] sm:$0xff]
    %v2910 = vld [vmem:[#allocation2 + $0x160] sm:$0xff]
    %v2911 = vld [vmem:[#allocation2 + $0x168] sm:$0xff]
    %v2912 = vld [vmem:[#allocation2 + $0x170] sm:$0xff]
    %v2913 = vld [vmem:[#allocation2 + $0x178] sm:$0xff]
    %v2914 = vld [vmem:[#allocation2 + $0x180] sm:$0xff]
    %v2915 = vld [vmem:[#allocation2 + $0x188] sm:$0xff]
    %v2916 = vld [vmem:[#allocation2 + $0x190] sm:$0xff]
    %v2917 = vld [vmem:[#allocation2 + $0x198] sm:$0xff]
    %v2918 = vld [vmem:[#allocation2 + $0x1a0] sm:$0xff]
    %v2919 = vld [vmem:[#allocation2 + $0x1a8] sm:$0xff]
    %v2920 = vld [vmem:[#allocation2 + $0x1b0] sm:$0xff]
    %v2921 = vld [vmem:[#allocation2 + $0x1b8] sm:$0xff]
    %v2922 = vld [vmem:[#allocation2 + $0x1c0] sm:$0xff]
    %v2923 = vld [vmem:[#allocation2 + $0x1c8] sm:$0xff]
    %v2924 = vld [vmem:[#allocation2 + $0x1d0] sm:$0xff]
    %v2925 = vld [vmem:[#allocation2 + $0x1d8] sm:$0xff]
    %v2926 = vld [vmem:[#allocation2 + $0x1e0] sm:$0xff]
    %v2927 = vld [vmem:[#allocation2 + $0x1e8] sm:$0xff]
    %v2928 = vld [vmem:[#allocation2 + $0x1f0] sm:$0xff]
    %v2929 = vld [vmem:[#allocation2 + $0x1f8] sm:$0xff]
    %v2930 = vld [vmem:[#allocation2 + $0x200] sm:$0xff]
    %v2931 = vld [vmem:[#allocation2 + $0x208] sm:$0xff]
    %v2932 = vld [vmem:[#allocation2 + $0x210] sm:$0xff]
    %v2933 = vld [vmem:[#allocation2 + $0x218] sm:$0xff]
    %v2934 = vld [vmem:[#allocation2 + $0x220] sm:$0xff]
    %v2935 = vld [vmem:[#allocation2 + $0x228] sm:$0xff]
    %v2936 = vld [vmem:[#allocation2 + $0x230] sm:$0xff]
    %v2937 = vld [vmem:[#allocation2 + $0x238] sm:$0xff]
    %v2938 = vld [vmem:[#allocation2 + $0x240] sm:$0xff]
    %v2939 = vld [vmem:[#allocation2 + $0x248] sm:$0xff]
    %v2940 = vld [vmem:[#allocation2 + $0x250] sm:$0xff]
    %v2941 = vld [vmem:[#allocation2 + $0x258] sm:$0xff]
    %v2942 = vld [vmem:[#allocation2 + $0x260] sm:$0xff]
    %v2943 = vld [vmem:[#allocation2 + $0x268] sm:$0xff]
    %v2944 = vld [vmem:[#allocation2 + $0x270] sm:$0xff]
    %v2945 = vld [vmem:[#allocation2 + $0x278] sm:$0xff]
    %v2946 = vld [vmem:[#allocation2 + $0x280] sm:$0xff]
    %v2947 = vld [vmem:[#allocation2 + $0x288] sm:$0xff]
    %v2948 = vld [vmem:[#allocation2 + $0x290] sm:$0xff]
    %v2949 = vld [vmem:[#allocation2 + $0x298] sm:$0xff]
    %v2950 = vld [vmem:[#allocation2 + $0x2a0] sm:$0xff]
    %v2951 = vld [vmem:[#allocation2 + $0x2a8] sm:$0xff]
    %v2952 = vld [vmem:[#allocation2 + $0x2b0] sm:$0xff]
    %v2953 = vld [vmem:[#allocation2 + $0x2b8] sm:$0xff]
    %v2954 = vld [vmem:[#allocation2 + $0x2c0] sm:$0xff]
    %v2955 = vld [vmem:[#allocation2 + $0x2c8] sm:$0xff]
    %v2956 = vld [vmem:[#allocation2 + $0x2d0] sm:$0xff]
    %v2957 = vld [vmem:[#allocation2 + $0x2d8] sm:$0xff]
    %v2958 = vld [vmem:[#allocation2 + $0x2e0] sm:$0xff]
    %v2959 = vld [vmem:[#allocation2 + $0x2e8] sm:$0xff]
    %v2960 = vld [vmem:[#allocation2 + $0x2f0] sm:$0xff]
    %v2961 = vld [vmem:[#allocation2 + $0x2f8] sm:$0xff]
    %v2962 = vld [vmem:[#allocation2 + $0x300] sm:$0xff]
    %v2963 = vld [vmem:[#allocation2 + $0x308] sm:$0xff]
    %v2964 = vld [vmem:[#allocation2 + $0x310] sm:$0xff]
    %v2965 = vld [vmem:[#allocation2 + $0x318] sm:$0xff]
    %v2966 = vld [vmem:[#allocation2 + $0x320] sm:$0xff]
    %v2967 = vld [vmem:[#allocation2 + $0x328] sm:$0xff]
    %v2968 = vld [vmem:[#allocation2 + $0x330] sm:$0xff]
    %v2969 = vld [vmem:[#allocation2 + $0x338] sm:$0xff]
    %v2970 = vld [vmem:[#allocation2 + $0x340] sm:$0xff]
    %v2971 = vld [vmem:[#allocation2 + $0x348] sm:$0xff]
    %v2972 = vld [vmem:[#allocation2 + $0x350] sm:$0xff]
    %v2973 = vld [vmem:[#allocation2 + $0x358] sm:$0xff]
    %v2974 = vld [vmem:[#allocation2 + $0x360] sm:$0xff]
    %v2975 = vpack.c.bf16 %v2868, %v2867
    %v2976 = vpack.c.bf16 %v2870, %v2869
    %v2977 = vpack.c.bf16 %v2872, %v2871
    %v2978 = vpack.c.bf16 %v2874, %v2873
    %v2979 = vpack.c.bf16 %v2876, %v2875
    %v2980 = vpack.c.bf16 %v2878, %v2877
    %v2981 = vpack.c.bf16 %v2880, %v2879
    %v2982 = vpack.c.bf16 %v2882, %v2881
    %v2983 = vpack.c.bf16 %v2884, %v2883
    %v2984 = vpack.c.bf16 %v2886, %v2885
    %v2985 = vpack.c.bf16 %v2888, %v2887
    %v2986 = vpack.c.bf16 %v2890, %v2889
    %v2987 = vpack.c.bf16 %v2892, %v2891
    %v2988 = vpack.c.bf16 %v2894, %v2893
    %v2989 = vpack.c.bf16 %v2896, %v2895
    %v2990 = vpack.c.bf16 %v2898, %v2897
    %v2991 = vpack.c.bf16 %v2900, %v2899
    %v2992 = vpack.c.bf16 %v2902, %v2901
    %v2993 = vpack.c.bf16 %v2904, %v2903
    %v2994 = vpack.c.bf16 %v2906, %v2905
    %v2995 = vpack.c.bf16 %v2908, %v2907
    %v2996 = vpack.c.bf16 %v2910, %v2909
    %v2997 = vpack.c.bf16 %v2912, %v2911
    %v2998 = vpack.c.bf16 %v2914, %v2913
    %v2999 = vpack.c.bf16 %v2916, %v2915
    %v3000 = vpack.c.bf16 %v2918, %v2917
    %v3001 = vpack.c.bf16 %v2920, %v2919
    %v3002 = vpack.c.bf16 %v2922, %v2921
    %v3003 = vpack.c.bf16 %v2924, %v2923
    %v3004 = vpack.c.bf16 %v2926, %v2925
    %v3005 = vpack.c.bf16 %v2928, %v2927
    %v3006 = vpack.c.bf16 %v2930, %v2929
    %v3007 = vpack.c.bf16 %v2932, %v2931
    %v3008 = vpack.c.bf16 %v2934, %v2933
    %v3009 = vpack.c.bf16 %v2936, %v2935
    %v3010 = vpack.c.bf16 %v2938, %v2937
    %v3011 = vpack.c.bf16 %v2940, %v2939
    %v3012 = vpack.c.bf16 %v2942, %v2941
    %v3013 = vpack.c.bf16 %v2944, %v2943
    %v3014 = vpack.c.bf16 %v2946, %v2945
    %v3015 = vpack.c.bf16 %v2948, %v2947
    %v3016 = vpack.c.bf16 %v2950, %v2949
    %v3017 = vpack.c.bf16 %v2952, %v2951
    %v3018 = vpack.c.bf16 %v2954, %v2953
    %v3019 = vpack.c.bf16 %v2956, %v2955
    %v3020 = vpack.c.bf16 %v2958, %v2957
    %v3021 = vpack.c.bf16 %v2960, %v2959
    %v3022 = vpack.c.bf16 %v2962, %v2961
    %v3023 = vpack.c.bf16 %v2964, %v2963
    %v3024 = vpack.c.bf16 %v2966, %v2965
    %v3025 = vpack.c.bf16 %v2968, %v2967
    %v3026 = vpack.c.bf16 %v2970, %v2969
    %v3027 = vpack.c.bf16 %v2972, %v2971
    %v3028 = vpack.c.bf16 %v2974, %v2973
    %s3029 = scalar_lea.vmem %s3, 64
    %v3030 = vld [vmem:[%s3029] sm:$0xf]
    %v3031 = vld [vmem:[%s3029 + $0x4] sm:$0xf]
    %v3032 = vld [vmem:[%s3029 + $0x8] sm:$0xf]
    %v3033 = vld [vmem:[%s3029 + $0xc] sm:$0xf]
    %v3034 = vld [vmem:[%s3029 + $0x10] sm:$0xf]
    %v3035 = vld [vmem:[%s3029 + $0x14] sm:$0xf]
    %v3036 = vld [vmem:[%s3029 + $0x18] sm:$0xf]
    %v3037 = vld [vmem:[%s3029 + $0x1c] sm:$0xf]
    %v3038 = vld [vmem:[%s3029 + $0x20] sm:$0xf]
    %v3039 = vld [vmem:[%s3029 + $0x24] sm:$0xf]
    %v3040 = vld [vmem:[%s3029 + $0x28] sm:$0xf]
    %v3041 = vld [vmem:[%s3029 + $0x2c] sm:$0xf]
    %v3042 = vld [vmem:[%s3029 + $0x30] sm:$0xf]
    %v3043 = vld [vmem:[%s3029 + $0x34] sm:$0xf]
    %v3044 = vld [vmem:[%s3029 + $0x38] sm:$0xf]
    %v3045 = vld [vmem:[%s3029 + $0x3c] sm:$0xf]
    %v3062 = vunpack.c.l.b16 %v3030
    %v3063 = vunpack.c.l.b16 %v3031
    %v3064 = vunpack.c.l.b16 %v3032
    %v3065 = vunpack.c.l.b16 %v3033
    %v3066 = vunpack.c.l.b16 %v3034
    %v3067 = vunpack.c.l.b16 %v3035
    %v3068 = vunpack.c.l.b16 %v3036
    %v3069 = vunpack.c.l.b16 %v3037
    %v3070 = vunpack.c.l.b16 %v3038
    %v3071 = vunpack.c.l.b16 %v3039
    %v3072 = vunpack.c.l.b16 %v3040
    %v3073 = vunpack.c.l.b16 %v3041
    %v3074 = vunpack.c.l.b16 %v3042
    %v3075 = vunpack.c.l.b16 %v3043
    %v3076 = vunpack.c.l.b16 %v3044
    %v3077 = vunpack.c.l.b16 %v3045
    %v3078 = vpack.c.b16 %v3063, %v3062
    %v3079 = vpack.c.b16 %v3065, %v3064
    %v3080 = vpack.c.b16 %v3067, %v3066
    %v3081 = vpack.c.b16 %v3069, %v3068
    %v3082 = vpack.c.b16 %v3071, %v3070
    %v3083 = vpack.c.b16 %v3073, %v3072
    %v3084 = vpack.c.b16 %v3075, %v3074
    %v3085 = vpack.c.b16 %v3077, %v3076
    %3094 = vmatprep.subr.bf16.mxu0 0
    %3095 = vmatpush1.bf16.msra.mxu0 %v3078
    %3096 = vmatprep.subr.bf16.mxu0 0
    %3097 = vmatpush1.bf16.msra.mxu0 %v3079
    %3098 = vmatprep.subr.bf16.mxu0 0
    %3099 = vmatpush1.bf16.msra.mxu0 %v3080
    %3100 = vmatprep.subr.bf16.mxu0 0
    %3101 = vmatpush1.bf16.msra.mxu0 %v3081
    %3102 = vmatprep.subr.bf16.mxu0 0
    %3103 = vmatpush1.bf16.msra.mxu0 %v3082
    %3104 = vmatprep.subr.bf16.mxu0 0
    %3105 = vmatpush1.bf16.msra.mxu0 %v3083
    %3106 = vmatprep.subr.bf16.mxu0 0
    %3107 = vmatpush1.bf16.msra.mxu0 %v3084
    %3108 = vmatprep.subr.bf16.mxu0 0
    %3109 = vmatpush1.bf16.msra.mxu0 %v3085
    %3110 = vmatprep.subr.bf16.mxu0 0
    %3111 = vmatpush1.bf16.msra.mxu0 0
    %3112 = vmatprep.subr.bf16.mxu0 0
    %3113 = vmatpush1.bf16.msra.mxu0 0
    %3114 = vmatprep.subr.bf16.mxu0 0
    %3115 = vmatpush1.bf16.msra.mxu0 0
    %3116 = vmatprep.subr.bf16.mxu0 0
    %3117 = vmatpush1.bf16.msra.mxu0 0
    %3118 = vmatprep.subr.bf16.mxu0 0
    %3119 = vmatpush1.bf16.msra.mxu0 0
    %3120 = vmatprep.subr.bf16.mxu0 0
    %3121 = vmatpush1.bf16.msra.mxu0 0
    %3122 = vmatprep.subr.bf16.mxu0 0
    %3123 = vmatpush1.bf16.msra.mxu0 0
    %3124 = vmatprep.subr.bf16.mxu0 0
    %3125 = vmatpush1.bf16.msra.mxu0 0
    %3126 = vmatprep.mubr.bf16.mxu0 0
    %3127 = vmatmul.mubr.bf16.gmra.mrb[0].mxu0 %v2975
    %v3128 = vpop.f32.mrb[0].mxu0
    %v3129 = vadd.f32 0.0, %v3128
    %v3130 = vpop.f32.mrb[0].mxu0
    %v3131 = vpop.f32.mrb[0].mxu0
    %v3132 = vadd.f32 0.0, %v3131
    %v3133 = vpop.f32.mrb[0].mxu0
    %3134 = vmatprep.mubr.bf16.mxu0 0
    %3135 = vmatmul.mubr.bf16.gmra.mrb[0].mxu0 %v2976
    %v3136 = vpop.f32.mrb[0].mxu0
    %v3137 = vadd.f32 0.0, %v3136
    %v3138 = vpop.f32.mrb[0].mxu0
    %v3139 = vpop.f32.mrb[0].mxu0
    %v3140 = vadd.f32 0.0, %v3139
    %v3141 = vpop.f32.mrb[0].mxu0
    %3142 = vmatprep.mubr.bf16.mxu0 0
    %3143 = vmatmul.mubr.bf16.gmra.mrb[0].mxu0 %v2977
    %v3144 = vpop.f32.mrb[0].mxu0
    %v3145 = vadd.f32 0.0, %v3144
    %v3146 = vpop.f32.mrb[0].mxu0
    %v3147 = vpop.f32.mrb[0].mxu0
    %v3148 = vadd.f32 0.0, %v3147
    %v3149 = vpop.f32.mrb[0].mxu0
    %3150 = vmatprep.mubr.bf16.mxu0 0
    %3151 = vmatmul.mubr.bf16.gmra.mrb[0].mxu0 %v2978
    %v3152 = vpop.f32.mrb[0].mxu0
    %v3153 = vadd.f32 0.0, %v3152
    %v3154 = vpop.f32.mrb[0].mxu0
    %v3155 = vpop.f32.mrb[0].mxu0
    %v3156 = vadd.f32 0.0, %v3155
    %v3157 = vpop.f32.mrb[0].mxu0
    %3158 = vmatprep.mubr.bf16.mxu0 0
    %3159 = vmatmul.mubr.bf16.gmra.mrb[0].mxu0 %v2979
    %v3160 = vpop.f32.mrb[0].mxu0
    %v3161 = vadd.f32 0.0, %v3160
    %v3162 = vpop.f32.mrb[0].mxu0
    %v3163 = vpop.f32.mrb[0].mxu0
    %v3164 = vadd.f32 0.0, %v3163
    %v3165 = vpop.f32.mrb[0].mxu0
    %3166 = vmatprep.mubr.bf16.mxu0 0
    %3167 = vmatmul.mubr.bf16.gmra.mrb[0].mxu0 %v2980
    %v3168 = vpop.f32.mrb[0].mxu0
    %v3169 = vadd.f32 0.0, %v3168
    %v3170 = vpop.f32.mrb[0].mxu0
    %v3171 = vpop.f32.mrb[0].mxu0
    %v3172 = vadd.f32 0.0, %v3171
    %v3173 = vpop.f32.mrb[0].mxu0
    %3174 = vmatprep.mubr.bf16.mxu0 0
    %3175 = vmatmul.mubr.bf16.gmra.mrb[0].mxu0 %v2981
    %v3176 = vpop.f32.mrb[0].mxu0
    %v3177 = vadd.f32 0.0, %v3176
    %v3178 = vpop.f32.mrb[0].mxu0
    %v3179 = vpop.f32.mrb[0].mxu0
    %v3180 = vadd.f32 0.0, %v3179
    %v3181 = vpop.f32.mrb[0].mxu0
    %3182 = vmatprep.mubr.bf16.mxu0 0
    %3183 = vmatmul.mubr.bf16.gmra.mrb[0].mxu0 %v2982
    %v3184 = vpop.f32.mrb[0].mxu0
    %v3185 = vadd.f32 0.0, %v3184
    %v3186 = vpop.f32.mrb[0].mxu0
    %v3187 = vpop.f32.mrb[0].mxu0
    %v3188 = vadd.f32 0.0, %v3187
    %v3189 = vpop.f32.mrb[0].mxu0
    %3190 = vmatprep.mubr.bf16.mxu0 0
    %3191 = vmatmul.mubr.bf16.gmra.mrb[0].mxu0 %v2983
    %v3192 = vpop.f32.mrb[0].mxu0
    %v3193 = vadd.f32 0.0, %v3192
    %v3194 = vpop.f32.mrb[0].mxu0
    %v3195 = vpop.f32.mrb[0].mxu0
    %v3196 = vadd.f32 0.0, %v3195
    %v3197 = vpop.f32.mrb[0].mxu0
    %3198 = vmatprep.mubr.bf16.mxu0 0
    %3199 = vmatmul.mubr.bf16.gmra.mrb[0].mxu0 %v2984
    %v3200 = vpop.f32.mrb[0].mxu0
    %v3201 = vadd.f32 0.0, %v3200
    %v3202 = vpop.f32.mrb[0].mxu0
    %v3203 = vpop.f32.mrb[0].mxu0
    %v3204 = vadd.f32 0.0, %v3203
    %v3205 = vpop.f32.mrb[0].mxu0
    %3206 = vmatprep.mubr.bf16.mxu0 0
    %3207 = vmatmul.mubr.bf16.gmra.mrb[0].mxu0 %v2985
    %v3208 = vpop.f32.mrb[0].mxu0
    %v3209 = vadd.f32 0.0, %v3208
    %v3210 = vpop.f32.mrb[0].mxu0
    %v3211 = vpop.f32.mrb[0].mxu0
    %v3212 = vadd.f32 0.0, %v3211
    %v3213 = vpop.f32.mrb[0].mxu0
    %3214 = vmatprep.mubr.bf16.mxu0 0
    %3215 = vmatmul.mubr.bf16.gmra.mrb[0].mxu0 %v2986
    %v3216 = vpop.f32.mrb[0].mxu0
    %v3217 = vadd.f32 0.0, %v3216
    %v3218 = vpop.f32.mrb[0].mxu0
    %v3219 = vpop.f32.mrb[0].mxu0
    %v3220 = vadd.f32 0.0, %v3219
    %v3221 = vpop.f32.mrb[0].mxu0
    %3222 = vmatprep.mubr.bf16.mxu0 0
    %3223 = vmatmul.mubr.bf16.gmra.mrb[0].mxu0 %v2987
    %v3224 = vpop.f32.mrb[0].mxu0
    %v3225 = vadd.f32 0.0, %v3224
    %v3226 = vpop.f32.mrb[0].mxu0
    %v3227 = vpop.f32.mrb[0].mxu0
    %v3228 = vadd.f32 0.0, %v3227
    %v3229 = vpop.f32.mrb[0].mxu0
    %3230 = vmatprep.mubr.bf16.mxu0 0
    %3231 = vmatmul.mubr.bf16.gmra.mrb[0].mxu0 %v2988
    %v3232 = vpop.f32.mrb[0].mxu0
    %v3233 = vadd.f32 0.0, %v3232
    %v3234 = vpop.f32.mrb[0].mxu0
    %v3235 = vpop.f32.mrb[0].mxu0
    %v3236 = vadd.f32 0.0, %v3235
    %v3237 = vpop.f32.mrb[0].mxu0
    %3238 = vmatprep.mubr.bf16.mxu0 0
    %3239 = vmatmul.mubr.bf16.gmra.mrb[0].mxu0 %v2989
    %v3240 = vpop.f32.mrb[0].mxu0
    %v3241 = vadd.f32 0.0, %v3240
    %v3242 = vpop.f32.mrb[0].mxu0
    %v3243 = vpop.f32.mrb[0].mxu0
    %v3244 = vadd.f32 0.0, %v3243
    %v3245 = vpop.f32.mrb[0].mxu0
    %3246 = vmatprep.mubr.bf16.mxu0 0
    %3247 = vmatmul.mubr.bf16.gmra.mrb[0].mxu0 %v2990
    %v3248 = vpop.f32.mrb[0].mxu0
    %v3249 = vadd.f32 0.0, %v3248
    %v3250 = vpop.f32.mrb[0].mxu0
    %v3251 = vpop.f32.mrb[0].mxu0
    %v3252 = vadd.f32 0.0, %v3251
    %v3253 = vpop.f32.mrb[0].mxu0
    %3254 = vmatprep.mubr.bf16.mxu0 0
    %3255 = vmatmul.mubr.bf16.gmra.mrb[0].mxu0 %v2991
    %v3256 = vpop.f32.mrb[0].mxu0
    %v3257 = vadd.f32 0.0, %v3256
    %v3258 = vpop.f32.mrb[0].mxu0
    %v3259 = vpop.f32.mrb[0].mxu0
    %v3260 = vadd.f32 0.0, %v3259
    %v3261 = vpop.f32.mrb[0].mxu0
    %3262 = vmatprep.mubr.bf16.mxu0 0
    %3263 = vmatmul.mubr.bf16.gmra.mrb[0].mxu0 %v2992
    %v3264 = vpop.f32.mrb[0].mxu0
    %v3265 = vadd.f32 0.0, %v3264
    %v3266 = vpop.f32.mrb[0].mxu0
    %v3267 = vpop.f32.mrb[0].mxu0
    %v3268 = vadd.f32 0.0, %v3267
    %v3269 = vpop.f32.mrb[0].mxu0
    %3270 = vmatprep.mubr.bf16.mxu0 0
    %3271 = vmatmul.mubr.bf16.gmra.mrb[0].mxu0 %v2993
    %v3272 = vpop.f32.mrb[0].mxu0
    %v3273 = vadd.f32 0.0, %v3272
    %v3274 = vpop.f32.mrb[0].mxu0
    %v3275 = vpop.f32.mrb[0].mxu0
    %v3276 = vadd.f32 0.0, %v3275
    %v3277 = vpop.f32.mrb[0].mxu0
    %3278 = vmatprep.mubr.bf16.mxu0 0
    %3279 = vmatmul.mubr.bf16.gmra.mrb[0].mxu0 %v2994
    %v3280 = vpop.f32.mrb[0].mxu0
    %v3281 = vadd.f32 0.0, %v3280
    %v3282 = vpop.f32.mrb[0].mxu0
    %v3283 = vpop.f32.mrb[0].mxu0
    %v3284 = vadd.f32 0.0, %v3283
    %v3285 = vpop.f32.mrb[0].mxu0
    %3286 = vmatprep.mubr.bf16.mxu0 0
    %3287 = vmatmul.mubr.bf16.gmra.mrb[0].mxu0 %v2995
    %v3288 = vpop.f32.mrb[0].mxu0
    %v3289 = vadd.f32 0.0, %v3288
    %v3290 = vpop.f32.mrb[0].mxu0
    %v3291 = vpop.f32.mrb[0].mxu0
    %v3292 = vadd.f32 0.0, %v3291
    %v3293 = vpop.f32.mrb[0].mxu0
    %3294 = vmatprep.mubr.bf16.mxu0 0
    %3295 = vmatmul.mubr.bf16.gmra.mrb[0].mxu0 %v2996
    %v3296 = vpop.f32.mrb[0].mxu0
    %v3297 = vadd.f32 0.0, %v3296
    %v3298 = vpop.f32.mrb[0].mxu0
    %v3299 = vpop.f32.mrb[0].mxu0
    %v3300 = vadd.f32 0.0, %v3299
    %v3301 = vpop.f32.mrb[0].mxu0
    %3302 = vmatprep.mubr.bf16.mxu0 0
    %3303 = vmatmul.mubr.bf16.gmra.mrb[0].mxu0 %v2997
    %v3304 = vpop.f32.mrb[0].mxu0
    %v3305 = vadd.f32 0.0, %v3304
    %v3306 = vpop.f32.mrb[0].mxu0
    %v3307 = vpop.f32.mrb[0].mxu0
    %v3308 = vadd.f32 0.0, %v3307
    %v3309 = vpop.f32.mrb[0].mxu0
    %3310 = vmatprep.mubr.bf16.mxu0 0
    %3311 = vmatmul.mubr.bf16.gmra.mrb[0].mxu0 %v2998
    %v3312 = vpop.f32.mrb[0].mxu0
    %v3313 = vadd.f32 0.0, %v3312
    %v3314 = vpop.f32.mrb[0].mxu0
    %v3315 = vpop.f32.mrb[0].mxu0
    %v3316 = vadd.f32 0.0, %v3315
    %v3317 = vpop.f32.mrb[0].mxu0
    %3318 = vmatprep.mubr.bf16.mxu0 0
    %3319 = vmatmul.mubr.bf16.gmra.mrb[0].mxu0 %v2999
    %v3320 = vpop.f32.mrb[0].mxu0
    %v3321 = vadd.f32 0.0, %v3320
    %v3322 = vpop.f32.mrb[0].mxu0
    %v3323 = vpop.f32.mrb[0].mxu0
    %v3324 = vadd.f32 0.0, %v3323
    %v3325 = vpop.f32.mrb[0].mxu0
    %3326 = vmatprep.mubr.bf16.mxu0 0
    %3327 = vmatmul.mubr.bf16.gmra.mrb[0].mxu0 %v3000
    %v3328 = vpop.f32.mrb[0].mxu0
    %v3329 = vadd.f32 0.0, %v3328
    %v3330 = vpop.f32.mrb[0].mxu0
    %v3331 = vpop.f32.mrb[0].mxu0
    %v3332 = vadd.f32 0.0, %v3331
    %v3333 = vpop.f32.mrb[0].mxu0
    %3334 = vmatprep.mubr.bf16.mxu0 0
    %3335 = vmatmul.mubr.bf16.gmra.mrb[0].mxu0 %v3001
    %v3336 = vpop.f32.mrb[0].mxu0
    %v3337 = vadd.f32 0.0, %v3336
    %v3338 = vpop.f32.mrb[0].mxu0
    %v3339 = vpop.f32.mrb[0].mxu0
    %v3340 = vadd.f32 0.0, %v3339
    %v3341 = vpop.f32.mrb[0].mxu0
    %3342 = vmatprep.mubr.bf16.mxu0 0
    %3343 = vmatmul.mubr.bf16.gmra.mrb[0].mxu0 %v3002
    %v3344 = vpop.f32.mrb[0].mxu0
    %v3345 = vadd.f32 0.0, %v3344
    %v3346 = vpop.f32.mrb[0].mxu0
    %v3347 = vpop.f32.mrb[0].mxu0
    %v3348 = vadd.f32 0.0, %v3347
    %v3349 = vpop.f32.mrb[0].mxu0
    %3350 = vmatprep.mubr.bf16.mxu0 0
    %3351 = vmatmul.mubr.bf16.gmra.mrb[0].mxu0 %v3003
    %v3352 = vpop.f32.mrb[0].mxu0
    %v3353 = vadd.f32 0.0, %v3352
    %v3354 = vpop.f32.mrb[0].mxu0
    %v3355 = vpop.f32.mrb[0].mxu0
    %v3356 = vadd.f32 0.0, %v3355
    %v3357 = vpop.f32.mrb[0].mxu0
    %3358 = vmatprep.mubr.bf16.mxu0 0
    %3359 = vmatmul.mubr.bf16.gmra.mrb[0].mxu0 %v3004
    %v3360 = vpop.f32.mrb[0].mxu0
    %v3361 = vadd.f32 0.0, %v3360
    %v3362 = vpop.f32.mrb[0].mxu0
    %v3363 = vpop.f32.mrb[0].mxu0
    %v3364 = vadd.f32 0.0, %v3363
    %v3365 = vpop.f32.mrb[0].mxu0
    %3366 = vmatprep.mubr.bf16.mxu0 0
    %3367 = vmatmul.mubr.bf16.gmra.mrb[0].mxu0 %v3005
    %v3368 = vpop.f32.mrb[0].mxu0
    %v3369 = vadd.f32 0.0, %v3368
    %v3370 = vpop.f32.mrb[0].mxu0
    %v3371 = vpop.f32.mrb[0].mxu0
    %v3372 = vadd.f32 0.0, %v3371
    %v3373 = vpop.f32.mrb[0].mxu0
    %3374 = vmatprep.mubr.bf16.mxu0 0
    %3375 = vmatmul.mubr.bf16.gmra.mrb[0].mxu0 %v3006
    %v3376 = vpop.f32.mrb[0].mxu0
    %v3377 = vadd.f32 0.0, %v3376
    %v3378 = vpop.f32.mrb[0].mxu0
    %v3379 = vpop.f32.mrb[0].mxu0
    %v3380 = vadd.f32 0.0, %v3379
    %v3381 = vpop.f32.mrb[0].mxu0
    %3382 = vmatprep.mubr.bf16.mxu0 0
    %3383 = vmatmul.mubr.bf16.gmra.mrb[0].mxu0 %v3007
    %v3384 = vpop.f32.mrb[0].mxu0
    %v3385 = vadd.f32 0.0, %v3384
    %v3386 = vpop.f32.mrb[0].mxu0
    %v3387 = vpop.f32.mrb[0].mxu0
    %v3388 = vadd.f32 0.0, %v3387
    %v3389 = vpop.f32.mrb[0].mxu0
    %3390 = vmatprep.mubr.bf16.mxu0 0
    %3391 = vmatmul.mubr.bf16.gmra.mrb[0].mxu0 %v3008
    %v3392 = vpop.f32.mrb[0].mxu0
    %v3393 = vadd.f32 0.0, %v3392
    %v3394 = vpop.f32.mrb[0].mxu0
    %v3395 = vpop.f32.mrb[0].mxu0
    %v3396 = vadd.f32 0.0, %v3395
    %v3397 = vpop.f32.mrb[0].mxu0
    %3398 = vmatprep.mubr.bf16.mxu0 0
    %3399 = vmatmul.mubr.bf16.gmra.mrb[0].mxu0 %v3009
    %v3400 = vpop.f32.mrb[0].mxu0
    %v3401 = vadd.f32 0.0, %v3400
    %v3402 = vpop.f32.mrb[0].mxu0
    %v3403 = vpop.f32.mrb[0].mxu0
    %v3404 = vadd.f32 0.0, %v3403
    %v3405 = vpop.f32.mrb[0].mxu0
    %3406 = vmatprep.mubr.bf16.mxu0 0
    %3407 = vmatmul.mubr.bf16.gmra.mrb[0].mxu0 %v3010
    %v3408 = vpop.f32.mrb[0].mxu0
    %v3409 = vadd.f32 0.0, %v3408
    %v3410 = vpop.f32.mrb[0].mxu0
    %v3411 = vpop.f32.mrb[0].mxu0
    %v3412 = vadd.f32 0.0, %v3411
    %v3413 = vpop.f32.mrb[0].mxu0
    %3414 = vmatprep.mubr.bf16.mxu0 0
    %3415 = vmatmul.mubr.bf16.gmra.mrb[0].mxu0 %v3011
    %v3416 = vpop.f32.mrb[0].mxu0
    %v3417 = vadd.f32 0.0, %v3416
    %v3418 = vpop.f32.mrb[0].mxu0
    %v3419 = vpop.f32.mrb[0].mxu0
    %v3420 = vadd.f32 0.0, %v3419
    %v3421 = vpop.f32.mrb[0].mxu0
    %3422 = vmatprep.mubr.bf16.mxu0 0
    %3423 = vmatmul.mubr.bf16.gmra.mrb[0].mxu0 %v3012
    %v3424 = vpop.f32.mrb[0].mxu0
    %v3425 = vadd.f32 0.0, %v3424
    %v3426 = vpop.f32.mrb[0].mxu0
    %v3427 = vpop.f32.mrb[0].mxu0
    %v3428 = vadd.f32 0.0, %v3427
    %v3429 = vpop.f32.mrb[0].mxu0
    %3430 = vmatprep.mubr.bf16.mxu0 0
    %3431 = vmatmul.mubr.bf16.gmra.mrb[0].mxu0 %v3013
    %v3432 = vpop.f32.mrb[0].mxu0
    %v3433 = vadd.f32 0.0, %v3432
    %v3434 = vpop.f32.mrb[0].mxu0
    %v3435 = vpop.f32.mrb[0].mxu0
    %v3436 = vadd.f32 0.0, %v3435
    %v3437 = vpop.f32.mrb[0].mxu0
    %3438 = vmatprep.mubr.bf16.mxu0 0
    %3439 = vmatmul.mubr.bf16.gmra.mrb[0].mxu0 %v3014
    %v3440 = vpop.f32.mrb[0].mxu0
    %v3441 = vadd.f32 0.0, %v3440
    %v3442 = vpop.f32.mrb[0].mxu0
    %v3443 = vpop.f32.mrb[0].mxu0
    %v3444 = vadd.f32 0.0, %v3443
    %v3445 = vpop.f32.mrb[0].mxu0
    %3446 = vmatprep.mubr.bf16.mxu0 0
    %3447 = vmatmul.mubr.bf16.gmra.mrb[0].mxu0 %v3015
    %v3448 = vpop.f32.mrb[0].mxu0
    %v3449 = vadd.f32 0.0, %v3448
    %v3450 = vpop.f32.mrb[0].mxu0
    %v3451 = vpop.f32.mrb[0].mxu0
    %v3452 = vadd.f32 0.0, %v3451
    %v3453 = vpop.f32.mrb[0].mxu0
    %3454 = vmatprep.mubr.bf16.mxu0 0
    %3455 = vmatmul.mubr.bf16.gmra.mrb[0].mxu0 %v3016
    %v3456 = vpop.f32.mrb[0].mxu0
    %v3457 = vadd.f32 0.0, %v3456
    %v3458 = vpop.f32.mrb[0].mxu0
    %v3459 = vpop.f32.mrb[0].mxu0
    %v3460 = vadd.f32 0.0, %v3459
    %v3461 = vpop.f32.mrb[0].mxu0
    %3462 = vmatprep.mubr.bf16.mxu0 0
    %3463 = vmatmul.mubr.bf16.gmra.mrb[0].mxu0 %v3017
    %v3464 = vpop.f32.mrb[0].mxu0
    %v3465 = vadd.f32 0.0, %v3464
    %v3466 = vpop.f32.mrb[0].mxu0
    %v3467 = vpop.f32.mrb[0].mxu0
    %v3468 = vadd.f32 0.0, %v3467
    %v3469 = vpop.f32.mrb[0].mxu0
    %3470 = vmatprep.mubr.bf16.mxu0 0
    %3471 = vmatmul.mubr.bf16.gmra.mrb[0].mxu0 %v3018
    %v3472 = vpop.f32.mrb[0].mxu0
    %v3473 = vadd.f32 0.0, %v3472
    %v3474 = vpop.f32.mrb[0].mxu0
    %v3475 = vpop.f32.mrb[0].mxu0
    %v3476 = vadd.f32 0.0, %v3475
    %v3477 = vpop.f32.mrb[0].mxu0
    %3478 = vmatprep.mubr.bf16.mxu0 0
    %3479 = vmatmul.mubr.bf16.gmra.mrb[0].mxu0 %v3019
    %v3480 = vpop.f32.mrb[0].mxu0
    %v3481 = vadd.f32 0.0, %v3480
    %v3482 = vpop.f32.mrb[0].mxu0
    %v3483 = vpop.f32.mrb[0].mxu0
    %v3484 = vadd.f32 0.0, %v3483
    %v3485 = vpop.f32.mrb[0].mxu0
    %3486 = vmatprep.mubr.bf16.mxu0 0
    %3487 = vmatmul.mubr.bf16.gmra.mrb[0].mxu0 %v3020
    %v3488 = vpop.f32.mrb[0].mxu0
    %v3489 = vadd.f32 0.0, %v3488
    %v3490 = vpop.f32.mrb[0].mxu0
    %v3491 = vpop.f32.mrb[0].mxu0
    %v3492 = vadd.f32 0.0, %v3491
    %v3493 = vpop.f32.mrb[0].mxu0
    %3494 = vmatprep.mubr.bf16.mxu0 0
    %3495 = vmatmul.mubr.bf16.gmra.mrb[0].mxu0 %v3021
    %v3496 = vpop.f32.mrb[0].mxu0
    %v3497 = vadd.f32 0.0, %v3496
    %v3498 = vpop.f32.mrb[0].mxu0
    %v3499 = vpop.f32.mrb[0].mxu0
    %v3500 = vadd.f32 0.0, %v3499
    %v3501 = vpop.f32.mrb[0].mxu0
    %3502 = vmatprep.mubr.bf16.mxu0 0
    %3503 = vmatmul.mubr.bf16.gmra.mrb[0].mxu0 %v3022
    %v3504 = vpop.f32.mrb[0].mxu0
    %v3505 = vadd.f32 0.0, %v3504
    %v3506 = vpop.f32.mrb[0].mxu0
    %v3507 = vpop.f32.mrb[0].mxu0
    %v3508 = vadd.f32 0.0, %v3507
    %v3509 = vpop.f32.mrb[0].mxu0
    %3510 = vmatprep.mubr.bf16.mxu0 0
    %3511 = vmatmul.mubr.bf16.gmra.mrb[0].mxu0 %v3023
    %v3512 = vpop.f32.mrb[0].mxu0
    %v3513 = vadd.f32 0.0, %v3512
    %v3514 = vpop.f32.mrb[0].mxu0
    %v3515 = vpop.f32.mrb[0].mxu0
    %v3516 = vadd.f32 0.0, %v3515
    %v3517 = vpop.f32.mrb[0].mxu0
    %3518 = vmatprep.mubr.bf16.mxu0 0
    %3519 = vmatmul.mubr.bf16.gmra.mrb[0].mxu0 %v3024
    %v3520 = vpop.f32.mrb[0].mxu0
    %v3521 = vadd.f32 0.0, %v3520
    %v3522 = vpop.f32.mrb[0].mxu0
    %v3523 = vpop.f32.mrb[0].mxu0
    %v3524 = vadd.f32 0.0, %v3523
    %v3525 = vpop.f32.mrb[0].mxu0
    %3526 = vmatprep.mubr.bf16.mxu0 0
    %3527 = vmatmul.mubr.bf16.gmra.mrb[0].mxu0 %v3025
    %v3528 = vpop.f32.mrb[0].mxu0
    %v3529 = vadd.f32 0.0, %v3528
    %v3530 = vpop.f32.mrb[0].mxu0
    %v3531 = vpop.f32.mrb[0].mxu0
    %v3532 = vadd.f32 0.0, %v3531
    %v3533 = vpop.f32.mrb[0].mxu0
    %3534 = vmatprep.mubr.bf16.mxu0 0
    %3535 = vmatmul.mubr.bf16.gmra.mrb[0].mxu0 %v3026
    %v3536 = vpop.f32.mrb[0].mxu0
    %v3537 = vadd.f32 0.0, %v3536
    %v3538 = vpop.f32.mrb[0].mxu0
    %v3539 = vpop.f32.mrb[0].mxu0
    %v3540 = vadd.f32 0.0, %v3539
    %v3541 = vpop.f32.mrb[0].mxu0
    %3542 = vmatprep.mubr.bf16.mxu0 0
    %3543 = vmatmul.mubr.bf16.gmra.mrb[0].mxu0 %v3027
    %v3544 = vpop.f32.mrb[0].mxu0
    %v3545 = vadd.f32 0.0, %v3544
    %v3546 = vpop.f32.mrb[0].mxu0
    %v3547 = vpop.f32.mrb[0].mxu0
    %v3548 = vadd.f32 0.0, %v3547
    %v3549 = vpop.f32.mrb[0].mxu0
    %3550 = vmatprep.mubr.bf16.mxu0 0
    %3551 = vmatmul.mubr.bf16.gmra.mrb[0].mxu0 %v3028
    %v3552 = vpop.f32.mrb[0].mxu0
    %v3553 = vadd.f32 0.0, %v3552
    %v3554 = vpop.f32.mrb[0].mxu0
    %v3555 = vpop.f32.mrb[0].mxu0
    %v3556 = vadd.f32 0.0, %v3555
    %v3557 = vpop.f32.mrb[0].mxu0
    %3558 = vdwg.mxu0
    %v3575 = vunpack.c.l.b16 %v2851
    %v3576 = vunpack.c.l.b16 %v2852
    %v3577 = vunpack.c.l.b16 %v2853
    %v3578 = vunpack.c.l.b16 %v2854
    %v3579 = vunpack.c.l.b16 %v2855
    %v3580 = vunpack.c.l.b16 %v2856
    %v3581 = vunpack.c.l.b16 %v2857
    %v3582 = vunpack.c.l.b16 %v2858
    %v3583 = vunpack.c.l.b16 %v2859
    %v3584 = vunpack.c.l.b16 %v2860
    %v3585 = vunpack.c.l.b16 %v2861
    %v3586 = vunpack.c.l.b16 %v2862
    %v3587 = vunpack.c.l.b16 %v2863
    %v3588 = vunpack.c.l.b16 %v2864
    %v3589 = vunpack.c.l.b16 %v2865
    %v3590 = vunpack.c.l.b16 %v2866
    %v3591 = vpack.c.b16 %v3576, %v3575
    %v3592 = vpack.c.b16 %v3578, %v3577
    %v3593 = vpack.c.b16 %v3580, %v3579
    %v3594 = vpack.c.b16 %v3582, %v3581
    %v3595 = vpack.c.b16 %v3584, %v3583
    %v3596 = vpack.c.b16 %v3586, %v3585
    %v3597 = vpack.c.b16 %v3588, %v3587
    %v3598 = vpack.c.b16 %v3590, %v3589
    %3607 = vmatprep.subr.bf16.mxu0 0
    %3608 = vmatpush1.bf16.msra.mxu0 %v3591
    %3609 = vmatprep.subr.bf16.mxu0 0
    %3610 = vmatpush1.bf16.msra.mxu0 %v3592
    %3611 = vmatprep.subr.bf16.mxu0 0
    %3612 = vmatpush1.bf16.msra.mxu0 %v3593
    %3613 = vmatprep.subr.bf16.mxu0 0
    %3614 = vmatpush1.bf16.msra.mxu0 %v3594
    %3615 = vmatprep.subr.bf16.mxu0 0
    %3616 = vmatpush1.bf16.msra.mxu0 %v3595
    %3617 = vmatprep.subr.bf16.mxu0 0
    %3618 = vmatpush1.bf16.msra.mxu0 %v3596
    %3619 = vmatprep.subr.bf16.mxu0 0
    %3620 = vmatpush1.bf16.msra.mxu0 %v3597
    %3621 = vmatprep.subr.bf16.mxu0 0
    %3622 = vmatpush1.bf16.msra.mxu0 %v3598
    %3623 = vmatprep.subr.bf16.mxu0 0
    %3624 = vmatpush1.bf16.msra.mxu0 0
    %3625 = vmatprep.subr.bf16.mxu0 0
    %3626 = vmatpush1.bf16.msra.mxu0 0
    %3627 = vmatprep.subr.bf16.mxu0 0
    %3628 = vmatpush1.bf16.msra.mxu0 0
    %3629 = vmatprep.subr.bf16.mxu0 0
    %3630 = vmatpush1.bf16.msra.mxu0 0
    %3631 = vmatprep.subr.bf16.mxu0 0
    %3632 = vmatpush1.bf16.msra.mxu0 0
    %3633 = vmatprep.subr.bf16.mxu0 0
    %3634 = vmatpush1.bf16.msra.mxu0 0
    %3635 = vmatprep.subr.bf16.mxu0 0
    %3636 = vmatpush1.bf16.msra.mxu0 0
    %3637 = vmatprep.subr.bf16.mxu0 0
    %3638 = vmatpush1.bf16.msra.mxu0 0
    %3639 = vmatprep.mubr.bf16.mxu0 0
    %3640 = vmatmul.mubr.bf16.gmra.mrb[0].mxu0 %v2797
    %v3641 = vpop.f32.mrb[0].mxu0
    %v3642 = vadd.f32 %v3129, %v3641
    %v3643 = vpop.f32.mrb[0].mxu0
    %v3644 = vpop.f32.mrb[0].mxu0
    %v3645 = vadd.f32 %v3132, %v3644
    %v3646 = vpop.f32.mrb[0].mxu0
    %3647 = vmatprep.mubr.bf16.mxu0 0
    %3648 = vmatmul.mubr.bf16.gmra.mrb[0].mxu0 %v2798
    %v3649 = vpop.f32.mrb[0].mxu0
    %v3650 = vadd.f32 %v3137, %v3649
    %v3651 = vpop.f32.mrb[0].mxu0
    %v3652 = vpop.f32.mrb[0].mxu0
    %v3653 = vadd.f32 %v3140, %v3652
    %v3654 = vpop.f32.mrb[0].mxu0
    %3655 = vmatprep.mubr.bf16.mxu0 0
    %3656 = vmatmul.mubr.bf16.gmra.mrb[0].mxu0 %v2799
    %v3657 = vpop.f32.mrb[0].mxu0
    %v3658 = vadd.f32 %v3145, %v3657
    %v3659 = vpop.f32.mrb[0].mxu0
    %v3660 = vpop.f32.mrb[0].mxu0
    %v3661 = vadd.f32 %v3148, %v3660
    %v3662 = vpop.f32.mrb[0].mxu0
    %3663 = vmatprep.mubr.bf16.mxu0 0
    %3664 = vmatmul.mubr.bf16.gmra.mrb[0].mxu0 %v2800
    %v3665 = vpop.f32.mrb[0].mxu0
    %v3666 = vadd.f32 %v3153, %v3665
    %v3667 = vpop.f32.mrb[0].mxu0
    %v3668 = vpop.f32.mrb[0].mxu0
    %v3669 = vadd.f32 %v3156, %v3668
    %v3670 = vpop.f32.mrb[0].mxu0
    %3671 = vmatprep.mubr.bf16.mxu0 0
    %3672 = vmatmul.mubr.bf16.gmra.mrb[0].mxu0 %v2801
    %v3673 = vpop.f32.mrb[0].mxu0
    %v3674 = vadd.f32 %v3161, %v3673
    %v3675 = vpop.f32.mrb[0].mxu0
    %v3676 = vpop.f32.mrb[0].mxu0
    %v3677 = vadd.f32 %v3164, %v3676
    %v3678 = vpop.f32.mrb[0].mxu0
    %3679 = vmatprep.mubr.bf16.mxu0 0
    %3680 = vmatmul.mubr.bf16.gmra.mrb[0].mxu0 %v2802
    %v3681 = vpop.f32.mrb[0].mxu0
    %v3682 = vadd.f32 %v3169, %v3681
    %v3683 = vpop.f32.mrb[0].mxu0
    %v3684 = vpop.f32.mrb[0].mxu0
    %v3685 = vadd.f32 %v3172, %v3684
    %v3686 = vpop.f32.mrb[0].mxu0
    %3687 = vmatprep.mubr.bf16.mxu0 0
    %3688 = vmatmul.mubr.bf16.gmra.mrb[0].mxu0 %v2803
    %v3689 = vpop.f32.mrb[0].mxu0
    %v3690 = vadd.f32 %v3177, %v3689
    %v3691 = vpop.f32.mrb[0].mxu0
    %v3692 = vpop.f32.mrb[0].mxu0
    %v3693 = vadd.f32 %v3180, %v3692
    %v3694 = vpop.f32.mrb[0].mxu0
    %3695 = vmatprep.mubr.bf16.mxu0 0
    %3696 = vmatmul.mubr.bf16.gmra.mrb[0].mxu0 %v2804
    %v3697 = vpop.f32.mrb[0].mxu0
    %v3698 = vadd.f32 %v3185, %v3697
    %v3699 = vpop.f32.mrb[0].mxu0
    %v3700 = vpop.f32.mrb[0].mxu0
    %v3701 = vadd.f32 %v3188, %v3700
    %v3702 = vpop.f32.mrb[0].mxu0
    %3703 = vmatprep.mubr.bf16.mxu0 0
    %3704 = vmatmul.mubr.bf16.gmra.mrb[0].mxu0 %v2805
    %v3705 = vpop.f32.mrb[0].mxu0
    %v3706 = vadd.f32 %v3193, %v3705
    %v3707 = vpop.f32.mrb[0].mxu0
    %v3708 = vpop.f32.mrb[0].mxu0
    %v3709 = vadd.f32 %v3196, %v3708
    %v3710 = vpop.f32.mrb[0].mxu0
    %3711 = vmatprep.mubr.bf16.mxu0 0
    %3712 = vmatmul.mubr.bf16.gmra.mrb[0].mxu0 %v2806
    %v3713 = vpop.f32.mrb[0].mxu0
    %v3714 = vadd.f32 %v3201, %v3713
    %v3715 = vpop.f32.mrb[0].mxu0
    %v3716 = vpop.f32.mrb[0].mxu0
    %v3717 = vadd.f32 %v3204, %v3716
    %v3718 = vpop.f32.mrb[0].mxu0
    %3719 = vmatprep.mubr.bf16.mxu0 0
    %3720 = vmatmul.mubr.bf16.gmra.mrb[0].mxu0 %v2807
    %v3721 = vpop.f32.mrb[0].mxu0
    %v3722 = vadd.f32 %v3209, %v3721
    %v3723 = vpop.f32.mrb[0].mxu0
    %v3724 = vpop.f32.mrb[0].mxu0
    %v3725 = vadd.f32 %v3212, %v3724
    %v3726 = vpop.f32.mrb[0].mxu0
    %3727 = vmatprep.mubr.bf16.mxu0 0
    %3728 = vmatmul.mubr.bf16.gmra.mrb[0].mxu0 %v2808
    %v3729 = vpop.f32.mrb[0].mxu0
    %v3730 = vadd.f32 %v3217, %v3729
    %v3731 = vpop.f32.mrb[0].mxu0
    %v3732 = vpop.f32.mrb[0].mxu0
    %v3733 = vadd.f32 %v3220, %v3732
    %v3734 = vpop.f32.mrb[0].mxu0
    %3735 = vmatprep.mubr.bf16.mxu0 0
    %3736 = vmatmul.mubr.bf16.gmra.mrb[0].mxu0 %v2809
    %v3737 = vpop.f32.mrb[0].mxu0
    %v3738 = vadd.f32 %v3225, %v3737
    %v3739 = vpop.f32.mrb[0].mxu0
    %v3740 = vpop.f32.mrb[0].mxu0
    %v3741 = vadd.f32 %v3228, %v3740
    %v3742 = vpop.f32.mrb[0].mxu0
    %3743 = vmatprep.mubr.bf16.mxu0 0
    %3744 = vmatmul.mubr.bf16.gmra.mrb[0].mxu0 %v2810
    %v3745 = vpop.f32.mrb[0].mxu0
    %v3746 = vadd.f32 %v3233, %v3745
    %v3747 = vpop.f32.mrb[0].mxu0
    %v3748 = vpop.f32.mrb[0].mxu0
    %v3749 = vadd.f32 %v3236, %v3748
    %v3750 = vpop.f32.mrb[0].mxu0
    %3751 = vmatprep.mubr.bf16.mxu0 0
    %3752 = vmatmul.mubr.bf16.gmra.mrb[0].mxu0 %v2811
    %v3753 = vpop.f32.mrb[0].mxu0
    %v3754 = vadd.f32 %v3241, %v3753
    %v3755 = vpop.f32.mrb[0].mxu0
    %v3756 = vpop.f32.mrb[0].mxu0
    %v3757 = vadd.f32 %v3244, %v3756
    %v3758 = vpop.f32.mrb[0].mxu0
    %3759 = vmatprep.mubr.bf16.mxu0 0
    %3760 = vmatmul.mubr.bf16.gmra.mrb[0].mxu0 %v2812
    %v3761 = vpop.f32.mrb[0].mxu0
    %v3762 = vadd.f32 %v3249, %v3761
    %v3763 = vpop.f32.mrb[0].mxu0
    %v3764 = vpop.f32.mrb[0].mxu0
    %v3765 = vadd.f32 %v3252, %v3764
    %v3766 = vpop.f32.mrb[0].mxu0
    %3767 = vmatprep.mubr.bf16.mxu0 0
    %3768 = vmatmul.mubr.bf16.gmra.mrb[0].mxu0 %v2813
    %v3769 = vpop.f32.mrb[0].mxu0
    %v3770 = vadd.f32 %v3257, %v3769
    %v3771 = vpop.f32.mrb[0].mxu0
    %v3772 = vpop.f32.mrb[0].mxu0
    %v3773 = vadd.f32 %v3260, %v3772
    %v3774 = vpop.f32.mrb[0].mxu0
    %3775 = vmatprep.mubr.bf16.mxu0 0
    %3776 = vmatmul.mubr.bf16.gmra.mrb[0].mxu0 %v2814
    %v3777 = vpop.f32.mrb[0].mxu0
    %v3778 = vadd.f32 %v3265, %v3777
    %v3779 = vpop.f32.mrb[0].mxu0
    %v3780 = vpop.f32.mrb[0].mxu0
    %v3781 = vadd.f32 %v3268, %v3780
    %v3782 = vpop.f32.mrb[0].mxu0
    %3783 = vmatprep.mubr.bf16.mxu0 0
    %3784 = vmatmul.mubr.bf16.gmra.mrb[0].mxu0 %v2815
    %v3785 = vpop.f32.mrb[0].mxu0
    %v3786 = vadd.f32 %v3273, %v3785
    %v3787 = vpop.f32.mrb[0].mxu0
    %v3788 = vpop.f32.mrb[0].mxu0
    %v3789 = vadd.f32 %v3276, %v3788
    %v3790 = vpop.f32.mrb[0].mxu0
    %3791 = vmatprep.mubr.bf16.mxu0 0
    %3792 = vmatmul.mubr.bf16.gmra.mrb[0].mxu0 %v2816
    %v3793 = vpop.f32.mrb[0].mxu0
    %v3794 = vadd.f32 %v3281, %v3793
    %v3795 = vpop.f32.mrb[0].mxu0
    %v3796 = vpop.f32.mrb[0].mxu0
    %v3797 = vadd.f32 %v3284, %v3796
    %v3798 = vpop.f32.mrb[0].mxu0
    %3799 = vmatprep.mubr.bf16.mxu0 0
    %3800 = vmatmul.mubr.bf16.gmra.mrb[0].mxu0 %v2817
    %v3801 = vpop.f32.mrb[0].mxu0
    %v3802 = vadd.f32 %v3289, %v3801
    %v3803 = vpop.f32.mrb[0].mxu0
    %v3804 = vpop.f32.mrb[0].mxu0
    %v3805 = vadd.f32 %v3292, %v3804
    %v3806 = vpop.f32.mrb[0].mxu0
    %3807 = vmatprep.mubr.bf16.mxu0 0
    %3808 = vmatmul.mubr.bf16.gmra.mrb[0].mxu0 %v2818
    %v3809 = vpop.f32.mrb[0].mxu0
    %v3810 = vadd.f32 %v3297, %v3809
    %v3811 = vpop.f32.mrb[0].mxu0
    %v3812 = vpop.f32.mrb[0].mxu0
    %v3813 = vadd.f32 %v3300, %v3812
    %v3814 = vpop.f32.mrb[0].mxu0
    %3815 = vmatprep.mubr.bf16.mxu0 0
    %3816 = vmatmul.mubr.bf16.gmra.mrb[0].mxu0 %v2819
    %v3817 = vpop.f32.mrb[0].mxu0
    %v3818 = vadd.f32 %v3305, %v3817
    %v3819 = vpop.f32.mrb[0].mxu0
    %v3820 = vpop.f32.mrb[0].mxu0
    %v3821 = vadd.f32 %v3308, %v3820
    %v3822 = vpop.f32.mrb[0].mxu0
    %3823 = vmatprep.mubr.bf16.mxu0 0
    %3824 = vmatmul.mubr.bf16.gmra.mrb[0].mxu0 %v2820
    %v3825 = vpop.f32.mrb[0].mxu0
    %v3826 = vadd.f32 %v3313, %v3825
    %v3827 = vpop.f32.mrb[0].mxu0
    %v3828 = vpop.f32.mrb[0].mxu0
    %v3829 = vadd.f32 %v3316, %v3828
    %v3830 = vpop.f32.mrb[0].mxu0
    %3831 = vmatprep.mubr.bf16.mxu0 0
    %3832 = vmatmul.mubr.bf16.gmra.mrb[0].mxu0 %v2821
    %v3833 = vpop.f32.mrb[0].mxu0
    %v3834 = vadd.f32 %v3321, %v3833
    %v3835 = vpop.f32.mrb[0].mxu0
    %v3836 = vpop.f32.mrb[0].mxu0
    %v3837 = vadd.f32 %v3324, %v3836
    %v3838 = vpop.f32.mrb[0].mxu0
    %3839 = vmatprep.mubr.bf16.mxu0 0
    %3840 = vmatmul.mubr.bf16.gmra.mrb[0].mxu0 %v2822
    %v3841 = vpop.f32.mrb[0].mxu0
    %v3842 = vadd.f32 %v3329, %v3841
    %v3843 = vpop.f32.mrb[0].mxu0
    %v3844 = vpop.f32.mrb[0].mxu0
    %v3845 = vadd.f32 %v3332, %v3844
    %v3846 = vpop.f32.mrb[0].mxu0
    %3847 = vmatprep.mubr.bf16.mxu0 0
    %3848 = vmatmul.mubr.bf16.gmra.mrb[0].mxu0 %v2823
    %v3849 = vpop.f32.mrb[0].mxu0
    %v3850 = vadd.f32 %v3337, %v3849
    %v3851 = vpop.f32.mrb[0].mxu0
    %v3852 = vpop.f32.mrb[0].mxu0
    %v3853 = vadd.f32 %v3340, %v3852
    %v3854 = vpop.f32.mrb[0].mxu0
    %3855 = vmatprep.mubr.bf16.mxu0 0
    %3856 = vmatmul.mubr.bf16.gmra.mrb[0].mxu0 %v2824
    %v3857 = vpop.f32.mrb[0].mxu0
    %v3858 = vadd.f32 %v3345, %v3857
    %v3859 = vpop.f32.mrb[0].mxu0
    %v3860 = vpop.f32.mrb[0].mxu0
    %v3861 = vadd.f32 %v3348, %v3860
    %v3862 = vpop.f32.mrb[0].mxu0
    %3863 = vmatprep.mubr.bf16.mxu0 0
    %3864 = vmatmul.mubr.bf16.gmra.mrb[0].mxu0 %v2825
    %v3865 = vpop.f32.mrb[0].mxu0
    %v3866 = vadd.f32 %v3353, %v3865
    %v3867 = vpop.f32.mrb[0].mxu0
    %v3868 = vpop.f32.mrb[0].mxu0
    %v3869 = vadd.f32 %v3356, %v3868
    %v3870 = vpop.f32.mrb[0].mxu0
    %3871 = vmatprep.mubr.bf16.mxu0 0
    %3872 = vmatmul.mubr.bf16.gmra.mrb[0].mxu0 %v2826
    %v3873 = vpop.f32.mrb[0].mxu0
    %v3874 = vadd.f32 %v3361, %v3873
    %v3875 = vpop.f32.mrb[0].mxu0
    %v3876 = vpop.f32.mrb[0].mxu0
    %v3877 = vadd.f32 %v3364, %v3876
    %v3878 = vpop.f32.mrb[0].mxu0
    %3879 = vmatprep.mubr.bf16.mxu0 0
    %3880 = vmatmul.mubr.bf16.gmra.mrb[0].mxu0 %v2827
    %v3881 = vpop.f32.mrb[0].mxu0
    %v3882 = vadd.f32 %v3369, %v3881
    %v3883 = vpop.f32.mrb[0].mxu0
    %v3884 = vpop.f32.mrb[0].mxu0
    %v3885 = vadd.f32 %v3372, %v3884
    %v3886 = vpop.f32.mrb[0].mxu0
    %3887 = vmatprep.mubr.bf16.mxu0 0
    %3888 = vmatmul.mubr.bf16.gmra.mrb[0].mxu0 %v2828
    %v3889 = vpop.f32.mrb[0].mxu0
    %v3890 = vadd.f32 %v3377, %v3889
    %v3891 = vpop.f32.mrb[0].mxu0
    %v3892 = vpop.f32.mrb[0].mxu0
    %v3893 = vadd.f32 %v3380, %v3892
    %v3894 = vpop.f32.mrb[0].mxu0
    %3895 = vmatprep.mubr.bf16.mxu0 0
    %3896 = vmatmul.mubr.bf16.gmra.mrb[0].mxu0 %v2829
    %v3897 = vpop.f32.mrb[0].mxu0
    %v3898 = vadd.f32 %v3385, %v3897
    %v3899 = vpop.f32.mrb[0].mxu0
    %v3900 = vpop.f32.mrb[0].mxu0
    %v3901 = vadd.f32 %v3388, %v3900
    %v3902 = vpop.f32.mrb[0].mxu0
    %3903 = vmatprep.mubr.bf16.mxu0 0
    %3904 = vmatmul.mubr.bf16.gmra.mrb[0].mxu0 %v2830
    %v3905 = vpop.f32.mrb[0].mxu0
    %v3906 = vadd.f32 %v3393, %v3905
    %v3907 = vpop.f32.mrb[0].mxu0
    %v3908 = vpop.f32.mrb[0].mxu0
    %v3909 = vadd.f32 %v3396, %v3908
    %v3910 = vpop.f32.mrb[0].mxu0
    %3911 = vmatprep.mubr.bf16.mxu0 0
    %3912 = vmatmul.mubr.bf16.gmra.mrb[0].mxu0 %v2831
    %v3913 = vpop.f32.mrb[0].mxu0
    %v3914 = vadd.f32 %v3401, %v3913
    %v3915 = vpop.f32.mrb[0].mxu0
    %v3916 = vpop.f32.mrb[0].mxu0
    %v3917 = vadd.f32 %v3404, %v3916
    %v3918 = vpop.f32.mrb[0].mxu0
    %3919 = vmatprep.mubr.bf16.mxu0 0
    %3920 = vmatmul.mubr.bf16.gmra.mrb[0].mxu0 %v2832
    %v3921 = vpop.f32.mrb[0].mxu0
    %v3922 = vadd.f32 %v3409, %v3921
    %v3923 = vpop.f32.mrb[0].mxu0
    %v3924 = vpop.f32.mrb[0].mxu0
    %v3925 = vadd.f32 %v3412, %v3924
    %v3926 = vpop.f32.mrb[0].mxu0
    %3927 = vmatprep.mubr.bf16.mxu0 0
    %3928 = vmatmul.mubr.bf16.gmra.mrb[0].mxu0 %v2833
    %v3929 = vpop.f32.mrb[0].mxu0
    %v3930 = vadd.f32 %v3417, %v3929
    %v3931 = vpop.f32.mrb[0].mxu0
    %v3932 = vpop.f32.mrb[0].mxu0
    %v3933 = vadd.f32 %v3420, %v3932
    %v3934 = vpop.f32.mrb[0].mxu0
    %3935 = vmatprep.mubr.bf16.mxu0 0
    %3936 = vmatmul.mubr.bf16.gmra.mrb[0].mxu0 %v2834
    %v3937 = vpop.f32.mrb[0].mxu0
    %v3938 = vadd.f32 %v3425, %v3937
    %v3939 = vpop.f32.mrb[0].mxu0
    %v3940 = vpop.f32.mrb[0].mxu0
    %v3941 = vadd.f32 %v3428, %v3940
    %v3942 = vpop.f32.mrb[0].mxu0
    %3943 = vmatprep.mubr.bf16.mxu0 0
    %3944 = vmatmul.mubr.bf16.gmra.mrb[0].mxu0 %v2835
    %v3945 = vpop.f32.mrb[0].mxu0
    %v3946 = vadd.f32 %v3433, %v3945
    %v3947 = vpop.f32.mrb[0].mxu0
    %v3948 = vpop.f32.mrb[0].mxu0
    %v3949 = vadd.f32 %v3436, %v3948
    %v3950 = vpop.f32.mrb[0].mxu0
    %3951 = vmatprep.mubr.bf16.mxu0 0
    %3952 = vmatmul.mubr.bf16.gmra.mrb[0].mxu0 %v2836
    %v3953 = vpop.f32.mrb[0].mxu0
    %v3954 = vadd.f32 %v3441, %v3953
    %v3955 = vpop.f32.mrb[0].mxu0
    %v3956 = vpop.f32.mrb[0].mxu0
    %v3957 = vadd.f32 %v3444, %v3956
    %v3958 = vpop.f32.mrb[0].mxu0
    %3959 = vmatprep.mubr.bf16.mxu0 0
    %3960 = vmatmul.mubr.bf16.gmra.mrb[0].mxu0 %v2837
    %v3961 = vpop.f32.mrb[0].mxu0
    %v3962 = vadd.f32 %v3449, %v3961
    %v3963 = vpop.f32.mrb[0].mxu0
    %v3964 = vpop.f32.mrb[0].mxu0
    %v3965 = vadd.f32 %v3452, %v3964
    %v3966 = vpop.f32.mrb[0].mxu0
    %3967 = vmatprep.mubr.bf16.mxu0 0
    %3968 = vmatmul.mubr.bf16.gmra.mrb[0].mxu0 %v2838
    %v3969 = vpop.f32.mrb[0].mxu0
    %v3970 = vadd.f32 %v3457, %v3969
    %v3971 = vpop.f32.mrb[0].mxu0
    %v3972 = vpop.f32.mrb[0].mxu0
    %v3973 = vadd.f32 %v3460, %v3972
    %v3974 = vpop.f32.mrb[0].mxu0
    %3975 = vmatprep.mubr.bf16.mxu0 0
    %3976 = vmatmul.mubr.bf16.gmra.mrb[0].mxu0 %v2839
    %v3977 = vpop.f32.mrb[0].mxu0
    %v3978 = vadd.f32 %v3465, %v3977
    %v3979 = vpop.f32.mrb[0].mxu0
    %v3980 = vpop.f32.mrb[0].mxu0
    %v3981 = vadd.f32 %v3468, %v3980
    %v3982 = vpop.f32.mrb[0].mxu0
    %3983 = vmatprep.mubr.bf16.mxu0 0
    %3984 = vmatmul.mubr.bf16.gmra.mrb[0].mxu0 %v2840
    %v3985 = vpop.f32.mrb[0].mxu0
    %v3986 = vadd.f32 %v3473, %v3985
    %v3987 = vpop.f32.mrb[0].mxu0
    %v3988 = vpop.f32.mrb[0].mxu0
    %v3989 = vadd.f32 %v3476, %v3988
    %v3990 = vpop.f32.mrb[0].mxu0
    %3991 = vmatprep.mubr.bf16.mxu0 0
    %3992 = vmatmul.mubr.bf16.gmra.mrb[0].mxu0 %v2841
    %v3993 = vpop.f32.mrb[0].mxu0
    %v3994 = vadd.f32 %v3481, %v3993
    %v3995 = vpop.f32.mrb[0].mxu0
    %v3996 = vpop.f32.mrb[0].mxu0
    %v3997 = vadd.f32 %v3484, %v3996
    %v3998 = vpop.f32.mrb[0].mxu0
    %3999 = vmatprep.mubr.bf16.mxu0 0
    %4000 = vmatmul.mubr.bf16.gmra.mrb[0].mxu0 %v2842
    %v4001 = vpop.f32.mrb[0].mxu0
    %v4002 = vadd.f32 %v3489, %v4001
    %v4003 = vpop.f32.mrb[0].mxu0
    %v4004 = vpop.f32.mrb[0].mxu0
    %v4005 = vadd.f32 %v3492, %v4004
    %v4006 = vpop.f32.mrb[0].mxu0
    %4007 = vmatprep.mubr.bf16.mxu0 0
    %4008 = vmatmul.mubr.bf16.gmra.mrb[0].mxu0 %v2843
    %v4009 = vpop.f32.mrb[0].mxu0
    %v4010 = vadd.f32 %v3497, %v4009
    %v4011 = vpop.f32.mrb[0].mxu0
    %v4012 = vpop.f32.mrb[0].mxu0
    %v4013 = vadd.f32 %v3500, %v4012
    %v4014 = vpop.f32.mrb[0].mxu0
    %4015 = vmatprep.mubr.bf16.mxu0 0
    %4016 = vmatmul.mubr.bf16.gmra.mrb[0].mxu0 %v2844
    %v4017 = vpop.f32.mrb[0].mxu0
    %v4018 = vadd.f32 %v3505, %v4017
    %v4019 = vpop.f32.mrb[0].mxu0
    %v4020 = vpop.f32.mrb[0].mxu0
    %v4021 = vadd.f32 %v3508, %v4020
    %v4022 = vpop.f32.mrb[0].mxu0
    %4023 = vmatprep.mubr.bf16.mxu0 0
    %4024 = vmatmul.mubr.bf16.gmra.mrb[0].mxu0 %v2845
    %v4025 = vpop.f32.mrb[0].mxu0
    %v4026 = vadd.f32 %v3513, %v4025
    %v4027 = vpop.f32.mrb[0].mxu0
    %v4028 = vpop.f32.mrb[0].mxu0
    %v4029 = vadd.f32 %v3516, %v4028
    %v4030 = vpop.f32.mrb[0].mxu0
    %4031 = vmatprep.mubr.bf16.mxu0 0
    %4032 = vmatmul.mubr.bf16.gmra.mrb[0].mxu0 %v2846
    %v4033 = vpop.f32.mrb[0].mxu0
    %v4034 = vadd.f32 %v3521, %v4033
    %v4035 = vpop.f32.mrb[0].mxu0
    %v4036 = vpop.f32.mrb[0].mxu0
    %v4037 = vadd.f32 %v3524, %v4036
    %v4038 = vpop.f32.mrb[0].mxu0
    %4039 = vmatprep.mubr.bf16.mxu0 0
    %4040 = vmatmul.mubr.bf16.gmra.mrb[0].mxu0 %v2847
    %v4041 = vpop.f32.mrb[0].mxu0
    %v4042 = vadd.f32 %v3529, %v4041
    %v4043 = vpop.f32.mrb[0].mxu0
    %v4044 = vpop.f32.mrb[0].mxu0
    %v4045 = vadd.f32 %v3532, %v4044
    %v4046 = vpop.f32.mrb[0].mxu0
    %4047 = vmatprep.mubr.bf16.mxu0 0
    %4048 = vmatmul.mubr.bf16.gmra.mrb[0].mxu0 %v2848
    %v4049 = vpop.f32.mrb[0].mxu0
    %v4050 = vadd.f32 %v3537, %v4049
    %v4051 = vpop.f32.mrb[0].mxu0
    %v4052 = vpop.f32.mrb[0].mxu0
    %v4053 = vadd.f32 %v3540, %v4052
    %v4054 = vpop.f32.mrb[0].mxu0
    %4055 = vmatprep.mubr.bf16.mxu0 0
    %4056 = vmatmul.mubr.bf16.gmra.mrb[0].mxu0 %v2849
    %v4057 = vpop.f32.mrb[0].mxu0
    %v4058 = vadd.f32 %v3545, %v4057
    %v4059 = vpop.f32.mrb[0].mxu0
    %v4060 = vpop.f32.mrb[0].mxu0
    %v4061 = vadd.f32 %v3548, %v4060
    %v4062 = vpop.f32.mrb[0].mxu0
    %4063 = vmatprep.mubr.bf16.mxu0 0
    %4064 = vmatmul.mubr.bf16.gmra.mrb[0].mxu0 %v2850
    %v4065 = vpop.f32.mrb[0].mxu0
    %v4066 = vadd.f32 %v3553, %v4065
    %v4067 = vpop.f32.mrb[0].mxu0
    %v4068 = vpop.f32.mrb[0].mxu0
    %v4069 = vadd.f32 %v3556, %v4068
    %v4070 = vpop.f32.mrb[0].mxu0
    %4071 = vdwg.mxu0
    %v4072 = vld [vmem:[#allocation2 + $0x9] sm:$0xff]
    %v4073 = vld [vmem:[#allocation2 + $0x11] sm:$0xff]
    %v4074 = vld [vmem:[#allocation2 + $0x19] sm:$0xff]
    %v4075 = vld [vmem:[#allocation2 + $0x21] sm:$0xff]
    %v4076 = vld [vmem:[#allocation2 + $0x29] sm:$0xff]
    %v4077 = vld [vmem:[#allocation2 + $0x31] sm:$0xff]
    %v4078 = vld [vmem:[#allocation2 + $0x39] sm:$0xff]
    %v4079 = vld [vmem:[#allocation2 + $0x41] sm:$0xff]
    %v4080 = vld [vmem:[#allocation2 + $0x49] sm:$0xff]
    %v4081 = vld [vmem:[#allocation2 + $0x51] sm:$0xff]
    %v4082 = vld [vmem:[#allocation2 + $0x59] sm:$0xff]
    %v4083 = vld [vmem:[#allocation2 + $0x61] sm:$0xff]
    %v4084 = vld [vmem:[#allocation2 + $0x69] sm:$0xff]
    %v4085 = vld [vmem:[#allocation2 + $0x71] sm:$0xff]
    %v4086 = vld [vmem:[#allocation2 + $0x79] sm:$0xff]
    %v4087 = vld [vmem:[#allocation2 + $0x81] sm:$0xff]
    %v4088 = vld [vmem:[#allocation2 + $0x89] sm:$0xff]
    %v4089 = vld [vmem:[#allocation2 + $0x91] sm:$0xff]
    %v4090 = vld [vmem:[#allocation2 + $0x99] sm:$0xff]
    %v4091 = vld [vmem:[#allocation2 + $0xa1] sm:$0xff]
    %v4092 = vld [vmem:[#allocation2 + $0xa9] sm:$0xff]
    %v4093 = vld [vmem:[#allocation2 + $0xb1] sm:$0xff]
    %v4094 = vld [vmem:[#allocation2 + $0xb9] sm:$0xff]
    %v4095 = vld [vmem:[#allocation2 + $0xc1] sm:$0xff]
    %v4096 = vld [vmem:[#allocation2 + $0xc9] sm:$0xff]
    %v4097 = vld [vmem:[#allocation2 + $0xd1] sm:$0xff]
    %v4098 = vld [vmem:[#allocation2 + $0xd9] sm:$0xff]
    %v4099 = vld [vmem:[#allocation2 + $0xe1] sm:$0xff]
    %v4100 = vld [vmem:[#allocation2 + $0xe9] sm:$0xff]
    %v4101 = vld [vmem:[#allocation2 + $0xf1] sm:$0xff]
    %v4102 = vld [vmem:[#allocation2 + $0xf9] sm:$0xff]
    %v4103 = vld [vmem:[#allocation2 + $0x101] sm:$0xff]
    %v4104 = vld [vmem:[#allocation2 + $0x109] sm:$0xff]
    %v4105 = vld [vmem:[#allocation2 + $0x111] sm:$0xff]
    %v4106 = vld [vmem:[#allocation2 + $0x119] sm:$0xff]
    %v4107 = vld [vmem:[#allocation2 + $0x121] sm:$0xff]
    %v4108 = vld [vmem:[#allocation2 + $0x129] sm:$0xff]
    %v4109 = vld [vmem:[#allocation2 + $0x131] sm:$0xff]
    %v4110 = vld [vmem:[#allocation2 + $0x139] sm:$0xff]
    %v4111 = vld [vmem:[#allocation2 + $0x141] sm:$0xff]
    %v4112 = vld [vmem:[#allocation2 + $0x149] sm:$0xff]
    %v4113 = vld [vmem:[#allocation2 + $0x151] sm:$0xff]
    %v4114 = vld [vmem:[#allocation2 + $0x159] sm:$0xff]
    %v4115 = vld [vmem:[#allocation2 + $0x161] sm:$0xff]
    %v4116 = vld [vmem:[#allocation2 + $0x169] sm:$0xff]
    %v4117 = vld [vmem:[#allocation2 + $0x171] sm:$0xff]
    %v4118 = vld [vmem:[#allocation2 + $0x179] sm:$0xff]
    %v4119 = vld [vmem:[#allocation2 + $0x181] sm:$0xff]
    %v4120 = vld [vmem:[#allocation2 + $0x189] sm:$0xff]
    %v4121 = vld [vmem:[#allocation2 + $0x191] sm:$0xff]
    %v4122 = vld [vmem:[#allocation2 + $0x199] sm:$0xff]
    %v4123 = vld [vmem:[#allocation2 + $0x1a1] sm:$0xff]
    %v4124 = vld [vmem:[#allocation2 + $0x1a9] sm:$0xff]
    %v4125 = vld [vmem:[#allocation2 + $0x1b1] sm:$0xff]
    %v4126 = vld [vmem:[#allocation2 + $0x1b9] sm:$0xff]
    %v4127 = vld [vmem:[#allocation2 + $0x1c1] sm:$0xff]
    %v4128 = vld [vmem:[#allocation2 + $0x1c9] sm:$0xff]
    %v4129 = vld [vmem:[#allocation2 + $0x1d1] sm:$0xff]
    %v4130 = vld [vmem:[#allocation2 + $0x1d9] sm:$0xff]
    %v4131 = vld [vmem:[#allocation2 + $0x1e1] sm:$0xff]
    %v4132 = vld [vmem:[#allocation2 + $0x1e9] sm:$0xff]
    %v4133 = vld [vmem:[#allocation2 + $0x1f1] sm:$0xff]
    %v4134 = vld [vmem:[#allocation2 + $0x1f9] sm:$0xff]
    %v4135 = vld [vmem:[#allocation2 + $0x201] sm:$0xff]
    %v4136 = vld [vmem:[#allocation2 + $0x209] sm:$0xff]
    %v4137 = vld [vmem:[#allocation2 + $0x211] sm:$0xff]
    %v4138 = vld [vmem:[#allocation2 + $0x219] sm:$0xff]
    %v4139 = vld [vmem:[#allocation2 + $0x221] sm:$0xff]
    %v4140 = vld [vmem:[#allocation2 + $0x229] sm:$0xff]
    %v4141 = vld [vmem:[#allocation2 + $0x231] sm:$0xff]
    %v4142 = vld [vmem:[#allocation2 + $0x239] sm:$0xff]
    %v4143 = vld [vmem:[#allocation2 + $0x241] sm:$0xff]
    %v4144 = vld [vmem:[#allocation2 + $0x249] sm:$0xff]
    %v4145 = vld [vmem:[#allocation2 + $0x251] sm:$0xff]
    %v4146 = vld [vmem:[#allocation2 + $0x259] sm:$0xff]
    %v4147 = vld [vmem:[#allocation2 + $0x261] sm:$0xff]
    %v4148 = vld [vmem:[#allocation2 + $0x269] sm:$0xff]
    %v4149 = vld [vmem:[#allocation2 + $0x271] sm:$0xff]
    %v4150 = vld [vmem:[#allocation2 + $0x279] sm:$0xff]
    %v4151 = vld [vmem:[#allocation2 + $0x281] sm:$0xff]
    %v4152 = vld [vmem:[#allocation2 + $0x289] sm:$0xff]
    %v4153 = vld [vmem:[#allocation2 + $0x291] sm:$0xff]
    %v4154 = vld [vmem:[#allocation2 + $0x299] sm:$0xff]
    %v4155 = vld [vmem:[#allocation2 + $0x2a1] sm:$0xff]
    %v4156 = vld [vmem:[#allocation2 + $0x2a9] sm:$0xff]
    %v4157 = vld [vmem:[#allocation2 + $0x2b1] sm:$0xff]
    %v4158 = vld [vmem:[#allocation2 + $0x2b9] sm:$0xff]
    %v4159 = vld [vmem:[#allocation2 + $0x2c1] sm:$0xff]
    %v4160 = vld [vmem:[#allocation2 + $0x2c9] sm:$0xff]
    %v4161 = vld [vmem:[#allocation2 + $0x2d1] sm:$0xff]
    %v4162 = vld [vmem:[#allocation2 + $0x2d9] sm:$0xff]
    %v4163 = vld [vmem:[#allocation2 + $0x2e1] sm:$0xff]
    %v4164 = vld [vmem:[#allocation2 + $0x2e9] sm:$0xff]
    %v4165 = vld [vmem:[#allocation2 + $0x2f1] sm:$0xff]
    %v4166 = vld [vmem:[#allocation2 + $0x2f9] sm:$0xff]
    %v4167 = vld [vmem:[#allocation2 + $0x301] sm:$0xff]
    %v4168 = vld [vmem:[#allocation2 + $0x309] sm:$0xff]
    %v4169 = vld [vmem:[#allocation2 + $0x311] sm:$0xff]
    %v4170 = vld [vmem:[#allocation2 + $0x319] sm:$0xff]
    %v4171 = vld [vmem:[#allocation2 + $0x321] sm:$0xff]
    %v4172 = vld [vmem:[#allocation2 + $0x329] sm:$0xff]
    %v4173 = vld [vmem:[#allocation2 + $0x331] sm:$0xff]
    %v4174 = vld [vmem:[#allocation2 + $0x339] sm:$0xff]
    %v4175 = vld [vmem:[#allocation2 + $0x341] sm:$0xff]
    %v4176 = vld [vmem:[#allocation2 + $0x349] sm:$0xff]
    %v4177 = vld [vmem:[#allocation2 + $0x351] sm:$0xff]
    %v4178 = vld [vmem:[#allocation2 + $0x359] sm:$0xff]
    %v4179 = vld [vmem:[#allocation2 + $0x361] sm:$0xff]
    %v4180 = vpack.c.bf16 %v4073, %v4072
    %v4181 = vpack.c.bf16 %v4075, %v4074
    %v4182 = vpack.c.bf16 %v4077, %v4076
    %v4183 = vpack.c.bf16 %v4079, %v4078
    %v4184 = vpack.c.bf16 %v4081, %v4080
    %v4185 = vpack.c.bf16 %v4083, %v4082
    %v4186 = vpack.c.bf16 %v4085, %v4084
    %v4187 = vpack.c.bf16 %v4087, %v4086
    %v4188 = vpack.c.bf16 %v4089, %v4088
    %v4189 = vpack.c.bf16 %v4091, %v4090
    %v4190 = vpack.c.bf16 %v4093, %v4092
    %v4191 = vpack.c.bf16 %v4095, %v4094
    %v4192 = vpack.c.bf16 %v4097, %v4096
    %v4193 = vpack.c.bf16 %v4099, %v4098
    %v4194 = vpack.c.bf16 %v4101, %v4100
    %v4195 = vpack.c.bf16 %v4103, %v4102
    %v4196 = vpack.c.bf16 %v4105, %v4104
    %v4197 = vpack.c.bf16 %v4107, %v4106
    %v4198 = vpack.c.bf16 %v4109, %v4108
    %v4199 = vpack.c.bf16 %v4111, %v4110
    %v4200 = vpack.c.bf16 %v4113, %v4112
    %v4201 = vpack.c.bf16 %v4115, %v4114
    %v4202 = vpack.c.bf16 %v4117, %v4116
    %v4203 = vpack.c.bf16 %v4119, %v4118
    %v4204 = vpack.c.bf16 %v4121, %v4120
    %v4205 = vpack.c.bf16 %v4123, %v4122
    %v4206 = vpack.c.bf16 %v4125, %v4124
    %v4207 = vpack.c.bf16 %v4127, %v4126
    %v4208 = vpack.c.bf16 %v4129, %v4128
    %v4209 = vpack.c.bf16 %v4131, %v4130
    %v4210 = vpack.c.bf16 %v4133, %v4132
    %v4211 = vpack.c.bf16 %v4135, %v4134
    %v4212 = vpack.c.bf16 %v4137, %v4136
    %v4213 = vpack.c.bf16 %v4139, %v4138
    %v4214 = vpack.c.bf16 %v4141, %v4140
    %v4215 = vpack.c.bf16 %v4143, %v4142
    %v4216 = vpack.c.bf16 %v4145, %v4144
    %v4217 = vpack.c.bf16 %v4147, %v4146
    %v4218 = vpack.c.bf16 %v4149, %v4148
    %v4219 = vpack.c.bf16 %v4151, %v4150
    %v4220 = vpack.c.bf16 %v4153, %v4152
    %v4221 = vpack.c.bf16 %v4155, %v4154
    %v4222 = vpack.c.bf16 %v4157, %v4156
    %v4223 = vpack.c.bf16 %v4159, %v4158
    %v4224 = vpack.c.bf16 %v4161, %v4160
    %v4225 = vpack.c.bf16 %v4163, %v4162
    %v4226 = vpack.c.bf16 %v4165, %v4164
    %v4227 = vpack.c.bf16 %v4167, %v4166
    %v4228 = vpack.c.bf16 %v4169, %v4168
    %v4229 = vpack.c.bf16 %v4171, %v4170
    %v4230 = vpack.c.bf16 %v4173, %v4172
    %v4231 = vpack.c.bf16 %v4175, %v4174
    %v4232 = vpack.c.bf16 %v4177, %v4176
    %v4233 = vpack.c.bf16 %v4179, %v4178
    %s4234 = scalar_lea.vmem %s3, 128
    %v4235 = vld [vmem:[%s4234] sm:$0xf]
    %v4236 = vld [vmem:[%s4234 + $0x4] sm:$0xf]
    %v4237 = vld [vmem:[%s4234 + $0x8] sm:$0xf]
    %v4238 = vld [vmem:[%s4234 + $0xc] sm:$0xf]
    %v4239 = vld [vmem:[%s4234 + $0x10] sm:$0xf]
    %v4240 = vld [vmem:[%s4234 + $0x14] sm:$0xf]
    %v4241 = vld [vmem:[%s4234 + $0x18] sm:$0xf]
    %v4242 = vld [vmem:[%s4234 + $0x1c] sm:$0xf]
    %v4243 = vld [vmem:[%s4234 + $0x20] sm:$0xf]
    %v4244 = vld [vmem:[%s4234 + $0x24] sm:$0xf]
    %v4245 = vld [vmem:[%s4234 + $0x28] sm:$0xf]
    %v4246 = vld [vmem:[%s4234 + $0x2c] sm:$0xf]
    %v4247 = vld [vmem:[%s4234 + $0x30] sm:$0xf]
    %v4248 = vld [vmem:[%s4234 + $0x34] sm:$0xf]
    %v4249 = vld [vmem:[%s4234 + $0x38] sm:$0xf]
    %v4250 = vld [vmem:[%s4234 + $0x3c] sm:$0xf]
    %v4267 = vunpack.c.l.b16 %v4235
    %v4268 = vunpack.c.l.b16 %v4236
    %v4269 = vunpack.c.l.b16 %v4237
    %v4270 = vunpack.c.l.b16 %v4238
    %v4271 = vunpack.c.l.b16 %v4239
    %v4272 = vunpack.c.l.b16 %v4240
    %v4273 = vunpack.c.l.b16 %v4241
    %v4274 = vunpack.c.l.b16 %v4242
    %v4275 = vunpack.c.l.b16 %v4243
    %v4276 = vunpack.c.l.b16 %v4244
    %v4277 = vunpack.c.l.b16 %v4245
    %v4278 = vunpack.c.l.b16 %v4246
    %v4279 = vunpack.c.l.b16 %v4247
    %v4280 = vunpack.c.l.b16 %v4248
    %v4281 = vunpack.c.l.b16 %v4249
    %v4282 = vunpack.c.l.b16 %v4250
    %v4283 = vpack.c.b16 %v4268, %v4267
    %v4284 = vpack.c.b16 %v4270, %v4269
    %v4285 = vpack.c.b16 %v4272, %v4271
    %v4286 = vpack.c.b16 %v4274, %v4273
    %v4287 = vpack.c.b16 %v4276, %v4275
    %v4288 = vpack.c.b16 %v4278, %v4277
    %v4289 = vpack.c.b16 %v4280, %v4279
    %v4290 = vpack.c.b16 %v4282, %v4281
    %4299 = vmatprep.subr.bf16.mxu0 0
    %4300 = vmatpush1.bf16.msra.mxu0 %v4283
    %4301 = vmatprep.subr.bf16.mxu0 0
    %4302 = vmatpush1.bf16.msra.mxu0 %v4284
    %4303 = vmatprep.subr.bf16.mxu0 0
    %4304 = vmatpush1.bf16.msra.mxu0 %v4285
    %4305 = vmatprep.subr.bf16.mxu0 0
    %4306 = vmatpush1.bf16.msra.mxu0 %v4286
    %4307 = vmatprep.subr.bf16.mxu0 0
    %4308 = vmatpush1.bf16.msra.mxu0 %v4287
    %4309 = vmatprep.subr.bf16.mxu0 0
    %4310 = vmatpush1.bf16.msra.mxu0 %v4288
    %4311 = vmatprep.subr.bf16.mxu0 0
    %4312 = vmatpush1.bf16.msra.mxu0 %v4289
    %4313 = vmatprep.subr.bf16.mxu0 0
    %4314 = vmatpush1.bf16.msra.mxu0 %v4290
    %4315 = vmatprep.subr.bf16.mxu0 0
    %4316 = vmatpush1.bf16.msra.mxu0 0
    %4317 = vmatprep.subr.bf16.mxu0 0
    %4318 = vmatpush1.bf16.msra.mxu0 0
    %4319 = vmatprep.subr.bf16.mxu0 0
    %4320 = vmatpush1.bf16.msra.mxu0 0
    %4321 = vmatprep.subr.bf16.mxu0 0
    %4322 = vmatpush1.bf16.msra.mxu0 0
    %4323 = vmatprep.subr.bf16.mxu0 0
    %4324 = vmatpush1.bf16.msra.mxu0 0
    %4325 = vmatprep.subr.bf16.mxu0 0
    %4326 = vmatpush1.bf16.msra.mxu0 0
    %4327 = vmatprep.subr.bf16.mxu0 0
    %4328 = vmatpush1.bf16.msra.mxu0 0
    %4329 = vmatprep.subr.bf16.mxu0 0
    %4330 = vmatpush1.bf16.msra.mxu0 0
    %4331 = vmatprep.mubr.bf16.mxu0 0
    %4332 = vmatmul.mubr.bf16.gmra.mrb[0].mxu0 %v4180
    %v4333 = vpop.f32.mrb[0].mxu0
    %v4334 = vadd.f32 0.0, %v4333
    %v4335 = vpop.f32.mrb[0].mxu0
    %v4336 = vpop.f32.mrb[0].mxu0
    %v4337 = vadd.f32 0.0, %v4336
    %v4338 = vpop.f32.mrb[0].mxu0
    %4339 = vmatprep.mubr.bf16.mxu0 0
    %4340 = vmatmul.mubr.bf16.gmra.mrb[0].mxu0 %v4181
    %v4341 = vpop.f32.mrb[0].mxu0
    %v4342 = vadd.f32 0.0, %v4341
    %v4343 = vpop.f32.mrb[0].mxu0
    %v4344 = vpop.f32.mrb[0].mxu0
    %v4345 = vadd.f32 0.0, %v4344
    %v4346 = vpop.f32.mrb[0].mxu0
    %4347 = vmatprep.mubr.bf16.mxu0 0
    %4348 = vmatmul.mubr.bf16.gmra.mrb[0].mxu0 %v4182
    %v4349 = vpop.f32.mrb[0].mxu0
    %v4350 = vadd.f32 0.0, %v4349
    %v4351 = vpop.f32.mrb[0].mxu0
    %v4352 = vpop.f32.mrb[0].mxu0
    %v4353 = vadd.f32 0.0, %v4352
    %v4354 = vpop.f32.mrb[0].mxu0
    %4355 = vmatprep.mubr.bf16.mxu0 0
    %4356 = vmatmul.mubr.bf16.gmra.mrb[0].mxu0 %v4183
    %v4357 = vpop.f32.mrb[0].mxu0
    %v4358 = vadd.f32 0.0, %v4357
    %v4359 = vpop.f32.mrb[0].mxu0
    %v4360 = vpop.f32.mrb[0].mxu0
    %v4361 = vadd.f32 0.0, %v4360
    %v4362 = vpop.f32.mrb[0].mxu0
    %4363 = vmatprep.mubr.bf16.mxu0 0
    %4364 = vmatmul.mubr.bf16.gmra.mrb[0].mxu0 %v4184
    %v4365 = vpop.f32.mrb[0].mxu0
    %v4366 = vadd.f32 0.0, %v4365
    %v4367 = vpop.f32.mrb[0].mxu0
    %v4368 = vpop.f32.mrb[0].mxu0
    %v4369 = vadd.f32 0.0, %v4368
    %v4370 = vpop.f32.mrb[0].mxu0
    %4371 = vmatprep.mubr.bf16.mxu0 0
    %4372 = vmatmul.mubr.bf16.gmra.mrb[0].mxu0 %v4185
    %v4373 = vpop.f32.mrb[0].mxu0
    %v4374 = vadd.f32 0.0, %v4373
    %v4375 = vpop.f32.mrb[0].mxu0
    %v4376 = vpop.f32.mrb[0].mxu0
    %v4377 = vadd.f32 0.0, %v4376
    %v4378 = vpop.f32.mrb[0].mxu0
    %4379 = vmatprep.mubr.bf16.mxu0 0
    %4380 = vmatmul.mubr.bf16.gmra.mrb[0].mxu0 %v4186
    %v4381 = vpop.f32.mrb[0].mxu0
    %v4382 = vadd.f32 0.0, %v4381
    %v4383 = vpop.f32.mrb[0].mxu0
    %v4384 = vpop.f32.mrb[0].mxu0
    %v4385 = vadd.f32 0.0, %v4384
    %v4386 = vpop.f32.mrb[0].mxu0
    %4387 = vmatprep.mubr.bf16.mxu0 0
    %4388 = vmatmul.mubr.bf16.gmra.mrb[0].mxu0 %v4187
    %v4389 = vpop.f32.mrb[0].mxu0
    %v4390 = vadd.f32 0.0, %v4389
    %v4391 = vpop.f32.mrb[0].mxu0
    %v4392 = vpop.f32.mrb[0].mxu0
    %v4393 = vadd.f32 0.0, %v4392
    %v4394 = vpop.f32.mrb[0].mxu0
    %4395 = vmatprep.mubr.bf16.mxu0 0
    %4396 = vmatmul.mubr.bf16.gmra.mrb[0].mxu0 %v4188
    %v4397 = vpop.f32.mrb[0].mxu0
    %v4398 = vadd.f32 0.0, %v4397
    %v4399 = vpop.f32.mrb[0].mxu0
    %v4400 = vpop.f32.mrb[0].mxu0
    %v4401 = vadd.f32 0.0, %v4400
    %v4402 = vpop.f32.mrb[0].mxu0
    %4403 = vmatprep.mubr.bf16.mxu0 0
    %4404 = vmatmul.mubr.bf16.gmra.mrb[0].mxu0 %v4189
    %v4405 = vpop.f32.mrb[0].mxu0
    %v4406 = vadd.f32 0.0, %v4405
    %v4407 = vpop.f32.mrb[0].mxu0
    %v4408 = vpop.f32.mrb[0].mxu0
    %v4409 = vadd.f32 0.0, %v4408
    %v4410 = vpop.f32.mrb[0].mxu0
    %4411 = vmatprep.mubr.bf16.mxu0 0
    %4412 = vmatmul.mubr.bf16.gmra.mrb[0].mxu0 %v4190
    %v4413 = vpop.f32.mrb[0].mxu0
    %v4414 = vadd.f32 0.0, %v4413
    %v4415 = vpop.f32.mrb[0].mxu0
    %v4416 = vpop.f32.mrb[0].mxu0
    %v4417 = vadd.f32 0.0, %v4416
    %v4418 = vpop.f32.mrb[0].mxu0
    %4419 = vmatprep.mubr.bf16.mxu0 0
    %4420 = vmatmul.mubr.bf16.gmra.mrb[0].mxu0 %v4191
    %v4421 = vpop.f32.mrb[0].mxu0
    %v4422 = vadd.f32 0.0, %v4421
    %v4423 = vpop.f32.mrb[0].mxu0
    %v4424 = vpop.f32.mrb[0].mxu0
    %v4425 = vadd.f32 0.0, %v4424
    %v4426 = vpop.f32.mrb[0].mxu0
    %4427 = vmatprep.mubr.bf16.mxu0 0
    %4428 = vmatmul.mubr.bf16.gmra.mrb[0].mxu0 %v4192
    %v4429 = vpop.f32.mrb[0].mxu0
    %v4430 = vadd.f32 0.0, %v4429
    %v4431 = vpop.f32.mrb[0].mxu0
    %v4432 = vpop.f32.mrb[0].mxu0
    %v4433 = vadd.f32 0.0, %v4432
    %v4434 = vpop.f32.mrb[0].mxu0
    %4435 = vmatprep.mubr.bf16.mxu0 0
    %4436 = vmatmul.mubr.bf16.gmra.mrb[0].mxu0 %v4193
    %v4437 = vpop.f32.mrb[0].mxu0
    %v4438 = vadd.f32 0.0, %v4437
    %v4439 = vpop.f32.mrb[0].mxu0
    %v4440 = vpop.f32.mrb[0].mxu0
    %v4441 = vadd.f32 0.0, %v4440
    %v4442 = vpop.f32.mrb[0].mxu0
    %4443 = vmatprep.mubr.bf16.mxu0 0
    %4444 = vmatmul.mubr.bf16.gmra.mrb[0].mxu0 %v4194
    %v4445 = vpop.f32.mrb[0].mxu0
    %v4446 = vadd.f32 0.0, %v4445
    %v4447 = vpop.f32.mrb[0].mxu0
    %v4448 = vpop.f32.mrb[0].mxu0
    %v4449 = vadd.f32 0.0, %v4448
    %v4450 = vpop.f32.mrb[0].mxu0
    %4451 = vmatprep.mubr.bf16.mxu0 0
    %4452 = vmatmul.mubr.bf16.gmra.mrb[0].mxu0 %v4195
    %v4453 = vpop.f32.mrb[0].mxu0
    %v4454 = vadd.f32 0.0, %v4453
    %v4455 = vpop.f32.mrb[0].mxu0
    %v4456 = vpop.f32.mrb[0].mxu0
    %v4457 = vadd.f32 0.0, %v4456
    %v4458 = vpop.f32.mrb[0].mxu0
    %4459 = vmatprep.mubr.bf16.mxu0 0
    %4460 = vmatmul.mubr.bf16.gmra.mrb[0].mxu0 %v4196
    %v4461 = vpop.f32.mrb[0].mxu0
    %v4462 = vadd.f32 0.0, %v4461
    %v4463 = vpop.f32.mrb[0].mxu0
    %v4464 = vpop.f32.mrb[0].mxu0
    %v4465 = vadd.f32 0.0, %v4464
    %v4466 = vpop.f32.mrb[0].mxu0
    %4467 = vmatprep.mubr.bf16.mxu0 0
    %4468 = vmatmul.mubr.bf16.gmra.mrb[0].mxu0 %v4197
    %v4469 = vpop.f32.mrb[0].mxu0
    %v4470 = vadd.f32 0.0, %v4469
    %v4471 = vpop.f32.mrb[0].mxu0
    %v4472 = vpop.f32.mrb[0].mxu0
    %v4473 = vadd.f32 0.0, %v4472
    %v4474 = vpop.f32.mrb[0].mxu0
    %4475 = vmatprep.mubr.bf16.mxu0 0
    %4476 = vmatmul.mubr.bf16.gmra.mrb[0].mxu0 %v4198
    %v4477 = vpop.f32.mrb[0].mxu0
    %v4478 = vadd.f32 0.0, %v4477
    %v4479 = vpop.f32.mrb[0].mxu0
    %v4480 = vpop.f32.mrb[0].mxu0
    %v4481 = vadd.f32 0.0, %v4480
    %v4482 = vpop.f32.mrb[0].mxu0
    %4483 = vmatprep.mubr.bf16.mxu0 0
    %4484 = vmatmul.mubr.bf16.gmra.mrb[0].mxu0 %v4199
    %v4485 = vpop.f32.mrb[0].mxu0
    %v4486 = vadd.f32 0.0, %v4485
    %v4487 = vpop.f32.mrb[0].mxu0
    %v4488 = vpop.f32.mrb[0].mxu0
    %v4489 = vadd.f32 0.0, %v4488
    %v4490 = vpop.f32.mrb[0].mxu0
    %4491 = vmatprep.mubr.bf16.mxu0 0
    %4492 = vmatmul.mubr.bf16.gmra.mrb[0].mxu0 %v4200
    %v4493 = vpop.f32.mrb[0].mxu0
    %v4494 = vadd.f32 0.0, %v4493
    %v4495 = vpop.f32.mrb[0].mxu0
    %v4496 = vpop.f32.mrb[0].mxu0
    %v4497 = vadd.f32 0.0, %v4496
    %v4498 = vpop.f32.mrb[0].mxu0
    %4499 = vmatprep.mubr.bf16.mxu0 0
    %4500 = vmatmul.mubr.bf16.gmra.mrb[0].mxu0 %v4201
    %v4501 = vpop.f32.mrb[0].mxu0
    %v4502 = vadd.f32 0.0, %v4501
    %v4503 = vpop.f32.mrb[0].mxu0
    %v4504 = vpop.f32.mrb[0].mxu0
    %v4505 = vadd.f32 0.0, %v4504
    %v4506 = vpop.f32.mrb[0].mxu0
    %4507 = vmatprep.mubr.bf16.mxu0 0
    %4508 = vmatmul.mubr.bf16.gmra.mrb[0].mxu0 %v4202
    %v4509 = vpop.f32.mrb[0].mxu0
    %v4510 = vadd.f32 0.0, %v4509
    %v4511 = vpop.f32.mrb[0].mxu0
    %v4512 = vpop.f32.mrb[0].mxu0
    %v4513 = vadd.f32 0.0, %v4512
    %v4514 = vpop.f32.mrb[0].mxu0
    %4515 = vmatprep.mubr.bf16.mxu0 0
    %4516 = vmatmul.mubr.bf16.gmra.mrb[0].mxu0 %v4203
    %v4517 = vpop.f32.mrb[0].mxu0
    %v4518 = vadd.f32 0.0, %v4517
    %v4519 = vpop.f32.mrb[0].mxu0
    %v4520 = vpop.f32.mrb[0].mxu0
    %v4521 = vadd.f32 0.0, %v4520
    %v4522 = vpop.f32.mrb[0].mxu0
    %4523 = vmatprep.mubr.bf16.mxu0 0
    %4524 = vmatmul.mubr.bf16.gmra.mrb[0].mxu0 %v4204
    %v4525 = vpop.f32.mrb[0].mxu0
    %v4526 = vadd.f32 0.0, %v4525
    %v4527 = vpop.f32.mrb[0].mxu0
    %v4528 = vpop.f32.mrb[0].mxu0
    %v4529 = vadd.f32 0.0, %v4528
    %v4530 = vpop.f32.mrb[0].mxu0
    %4531 = vmatprep.mubr.bf16.mxu0 0
    %4532 = vmatmul.mubr.bf16.gmra.mrb[0].mxu0 %v4205
    %v4533 = vpop.f32.mrb[0].mxu0
    %v4534 = vadd.f32 0.0, %v4533
    %v4535 = vpop.f32.mrb[0].mxu0
    %v4536 = vpop.f32.mrb[0].mxu0
    %v4537 = vadd.f32 0.0, %v4536
    %v4538 = vpop.f32.mrb[0].mxu0
    %4539 = vmatprep.mubr.bf16.mxu0 0
    %4540 = vmatmul.mubr.bf16.gmra.mrb[0].mxu0 %v4206
    %v4541 = vpop.f32.mrb[0].mxu0
    %v4542 = vadd.f32 0.0, %v4541
    %v4543 = vpop.f32.mrb[0].mxu0
    %v4544 = vpop.f32.mrb[0].mxu0
    %v4545 = vadd.f32 0.0, %v4544
    %v4546 = vpop.f32.mrb[0].mxu0
    %4547 = vmatprep.mubr.bf16.mxu0 0
    %4548 = vmatmul.mubr.bf16.gmra.mrb[0].mxu0 %v4207
    %v4549 = vpop.f32.mrb[0].mxu0
    %v4550 = vadd.f32 0.0, %v4549
    %v4551 = vpop.f32.mrb[0].mxu0
    %v4552 = vpop.f32.mrb[0].mxu0
    %v4553 = vadd.f32 0.0, %v4552
    %v4554 = vpop.f32.mrb[0].mxu0
    %4555 = vmatprep.mubr.bf16.mxu0 0
    %4556 = vmatmul.mubr.bf16.gmra.mrb[0].mxu0 %v4208
    %v4557 = vpop.f32.mrb[0].mxu0
    %v4558 = vadd.f32 0.0, %v4557
    %v4559 = vpop.f32.mrb[0].mxu0
    %v4560 = vpop.f32.mrb[0].mxu0
    %v4561 = vadd.f32 0.0, %v4560
    %v4562 = vpop.f32.mrb[0].mxu0
    %4563 = vmatprep.mubr.bf16.mxu0 0
    %4564 = vmatmul.mubr.bf16.gmra.mrb[0].mxu0 %v4209
    %v4565 = vpop.f32.mrb[0].mxu0
    %v4566 = vadd.f32 0.0, %v4565
    %v4567 = vpop.f32.mrb[0].mxu0
    %v4568 = vpop.f32.mrb[0].mxu0
    %v4569 = vadd.f32 0.0, %v4568
    %v4570 = vpop.f32.mrb[0].mxu0
    %4571 = vmatprep.mubr.bf16.mxu0 0
    %4572 = vmatmul.mubr.bf16.gmra.mrb[0].mxu0 %v4210
    %v4573 = vpop.f32.mrb[0].mxu0
    %v4574 = vadd.f32 0.0, %v4573
    %v4575 = vpop.f32.mrb[0].mxu0
    %v4576 = vpop.f32.mrb[0].mxu0
    %v4577 = vadd.f32 0.0, %v4576
    %v4578 = vpop.f32.mrb[0].mxu0
    %4579 = vmatprep.mubr.bf16.mxu0 0
    %4580 = vmatmul.mubr.bf16.gmra.mrb[0].mxu0 %v4211
    %v4581 = vpop.f32.mrb[0].mxu0
    %v4582 = vadd.f32 0.0, %v4581
    %v4583 = vpop.f32.mrb[0].mxu0
    %v4584 = vpop.f32.mrb[0].mxu0
    %v4585 = vadd.f32 0.0, %v4584
    %v4586 = vpop.f32.mrb[0].mxu0
    %4587 = vmatprep.mubr.bf16.mxu0 0
    %4588 = vmatmul.mubr.bf16.gmra.mrb[0].mxu0 %v4212
    %v4589 = vpop.f32.mrb[0].mxu0
    %v4590 = vadd.f32 0.0, %v4589
    %v4591 = vpop.f32.mrb[0].mxu0
    %v4592 = vpop.f32.mrb[0].mxu0
    %v4593 = vadd.f32 0.0, %v4592
    %v4594 = vpop.f32.mrb[0].mxu0
    %4595 = vmatprep.mubr.bf16.mxu0 0
    %4596 = vmatmul.mubr.bf16.gmra.mrb[0].mxu0 %v4213
    %v4597 = vpop.f32.mrb[0].mxu0
    %v4598 = vadd.f32 0.0, %v4597
    %v4599 = vpop.f32.mrb[0].mxu0
    %v4600 = vpop.f32.mrb[0].mxu0
    %v4601 = vadd.f32 0.0, %v4600
    %v4602 = vpop.f32.mrb[0].mxu0
    %4603 = vmatprep.mubr.bf16.mxu0 0
    %4604 = vmatmul.mubr.bf16.gmra.mrb[0].mxu0 %v4214
    %v4605 = vpop.f32.mrb[0].mxu0
    %v4606 = vadd.f32 0.0, %v4605
    %v4607 = vpop.f32.mrb[0].mxu0
    %v4608 = vpop.f32.mrb[0].mxu0
    %v4609 = vadd.f32 0.0, %v4608
    %v4610 = vpop.f32.mrb[0].mxu0
    %4611 = vmatprep.mubr.bf16.mxu0 0
    %4612 = vmatmul.mubr.bf16.gmra.mrb[0].mxu0 %v4215
    %v4613 = vpop.f32.mrb[0].mxu0
    %v4614 = vadd.f32 0.0, %v4613
    %v4615 = vpop.f32.mrb[0].mxu0
    %v4616 = vpop.f32.mrb[0].mxu0
    %v4617 = vadd.f32 0.0, %v4616
    %v4618 = vpop.f32.mrb[0].mxu0
    %4619 = vmatprep.mubr.bf16.mxu0 0
    %4620 = vmatmul.mubr.bf16.gmra.mrb[0].mxu0 %v4216
    %v4621 = vpop.f32.mrb[0].mxu0
    %v4622 = vadd.f32 0.0, %v4621
    %v4623 = vpop.f32.mrb[0].mxu0
    %v4624 = vpop.f32.mrb[0].mxu0
    %v4625 = vadd.f32 0.0, %v4624
    %v4626 = vpop.f32.mrb[0].mxu0
    %4627 = vmatprep.mubr.bf16.mxu0 0
    %4628 = vmatmul.mubr.bf16.gmra.mrb[0].mxu0 %v4217
    %v4629 = vpop.f32.mrb[0].mxu0
    %v4630 = vadd.f32 0.0, %v4629
    %v4631 = vpop.f32.mrb[0].mxu0
    %v4632 = vpop.f32.mrb[0].mxu0
    %v4633 = vadd.f32 0.0, %v4632
    %v4634 = vpop.f32.mrb[0].mxu0
    %4635 = vmatprep.mubr.bf16.mxu0 0
    %4636 = vmatmul.mubr.bf16.gmra.mrb[0].mxu0 %v4218
    %v4637 = vpop.f32.mrb[0].mxu0
    %v4638 = vadd.f32 0.0, %v4637
    %v4639 = vpop.f32.mrb[0].mxu0
    %v4640 = vpop.f32.mrb[0].mxu0
    %v4641 = vadd.f32 0.0, %v4640
    %v4642 = vpop.f32.mrb[0].mxu0
    %4643 = vmatprep.mubr.bf16.mxu0 0
    %4644 = vmatmul.mubr.bf16.gmra.mrb[0].mxu0 %v4219
    %v4645 = vpop.f32.mrb[0].mxu0
    %v4646 = vadd.f32 0.0, %v4645
    %v4647 = vpop.f32.mrb[0].mxu0
    %v4648 = vpop.f32.mrb[0].mxu0
    %v4649 = vadd.f32 0.0, %v4648
    %v4650 = vpop.f32.mrb[0].mxu0
    %4651 = vmatprep.mubr.bf16.mxu0 0
    %4652 = vmatmul.mubr.bf16.gmra.mrb[0].mxu0 %v4220
    %v4653 = vpop.f32.mrb[0].mxu0
    %v4654 = vadd.f32 0.0, %v4653
    %v4655 = vpop.f32.mrb[0].mxu0
    %v4656 = vpop.f32.mrb[0].mxu0
    %v4657 = vadd.f32 0.0, %v4656
    %v4658 = vpop.f32.mrb[0].mxu0
    %4659 = vmatprep.mubr.bf16.mxu0 0
    %4660 = vmatmul.mubr.bf16.gmra.mrb[0].mxu0 %v4221
    %v4661 = vpop.f32.mrb[0].mxu0
    %v4662 = vadd.f32 0.0, %v4661
    %v4663 = vpop.f32.mrb[0].mxu0
    %v4664 = vpop.f32.mrb[0].mxu0
    %v4665 = vadd.f32 0.0, %v4664
    %v4666 = vpop.f32.mrb[0].mxu0
    %4667 = vmatprep.mubr.bf16.mxu0 0
    %4668 = vmatmul.mubr.bf16.gmra.mrb[0].mxu0 %v4222
    %v4669 = vpop.f32.mrb[0].mxu0
    %v4670 = vadd.f32 0.0, %v4669
    %v4671 = vpop.f32.mrb[0].mxu0
    %v4672 = vpop.f32.mrb[0].mxu0
    %v4673 = vadd.f32 0.0, %v4672
    %v4674 = vpop.f32.mrb[0].mxu0
    %4675 = vmatprep.mubr.bf16.mxu0 0
    %4676 = vmatmul.mubr.bf16.gmra.mrb[0].mxu0 %v4223
    %v4677 = vpop.f32.mrb[0].mxu0
    %v4678 = vadd.f32 0.0, %v4677
    %v4679 = vpop.f32.mrb[0].mxu0
    %v4680 = vpop.f32.mrb[0].mxu0
    %v4681 = vadd.f32 0.0, %v4680
    %v4682 = vpop.f32.mrb[0].mxu0
    %4683 = vmatprep.mubr.bf16.mxu0 0
    %4684 = vmatmul.mubr.bf16.gmra.mrb[0].mxu0 %v4224
    %v4685 = vpop.f32.mrb[0].mxu0
    %v4686 = vadd.f32 0.0, %v4685
    %v4687 = vpop.f32.mrb[0].mxu0
    %v4688 = vpop.f32.mrb[0].mxu0
    %v4689 = vadd.f32 0.0, %v4688
    %v4690 = vpop.f32.mrb[0].mxu0
    %4691 = vmatprep.mubr.bf16.mxu0 0
    %4692 = vmatmul.mubr.bf16.gmra.mrb[0].mxu0 %v4225
    %v4693 = vpop.f32.mrb[0].mxu0
    %v4694 = vadd.f32 0.0, %v4693
    %v4695 = vpop.f32.mrb[0].mxu0
    %v4696 = vpop.f32.mrb[0].mxu0
    %v4697 = vadd.f32 0.0, %v4696
    %v4698 = vpop.f32.mrb[0].mxu0
    %4699 = vmatprep.mubr.bf16.mxu0 0
    %4700 = vmatmul.mubr.bf16.gmra.mrb[0].mxu0 %v4226
    %v4701 = vpop.f32.mrb[0].mxu0
    %v4702 = vadd.f32 0.0, %v4701
    %v4703 = vpop.f32.mrb[0].mxu0
    %v4704 = vpop.f32.mrb[0].mxu0
    %v4705 = vadd.f32 0.0, %v4704
    %v4706 = vpop.f32.mrb[0].mxu0
    %4707 = vmatprep.mubr.bf16.mxu0 0
    %4708 = vmatmul.mubr.bf16.gmra.mrb[0].mxu0 %v4227
    %v4709 = vpop.f32.mrb[0].mxu0
    %v4710 = vadd.f32 0.0, %v4709
    %v4711 = vpop.f32.mrb[0].mxu0
    %v4712 = vpop.f32.mrb[0].mxu0
    %v4713 = vadd.f32 0.0, %v4712
    %v4714 = vpop.f32.mrb[0].mxu0
    %4715 = vmatprep.mubr.bf16.mxu0 0
    %4716 = vmatmul.mubr.bf16.gmra.mrb[0].mxu0 %v4228
    %v4717 = vpop.f32.mrb[0].mxu0
    %v4718 = vadd.f32 0.0, %v4717
    %v4719 = vpop.f32.mrb[0].mxu0
    %v4720 = vpop.f32.mrb[0].mxu0
    %v4721 = vadd.f32 0.0, %v4720
    %v4722 = vpop.f32.mrb[0].mxu0
    %4723 = vmatprep.mubr.bf16.mxu0 0
    %4724 = vmatmul.mubr.bf16.gmra.mrb[0].mxu0 %v4229
    %v4725 = vpop.f32.mrb[0].mxu0
    %v4726 = vadd.f32 0.0, %v4725
    %v4727 = vpop.f32.mrb[0].mxu0
    %v4728 = vpop.f32.mrb[0].mxu0
    %v4729 = vadd.f32 0.0, %v4728
    %v4730 = vpop.f32.mrb[0].mxu0
    %4731 = vmatprep.mubr.bf16.mxu0 0
    %4732 = vmatmul.mubr.bf16.gmra.mrb[0].mxu0 %v4230
    %v4733 = vpop.f32.mrb[0].mxu0
    %v4734 = vadd.f32 0.0, %v4733
    %v4735 = vpop.f32.mrb[0].mxu0
    %v4736 = vpop.f32.mrb[0].mxu0
    %v4737 = vadd.f32 0.0, %v4736
    %v4738 = vpop.f32.mrb[0].mxu0
    %4739 = vmatprep.mubr.bf16.mxu0 0
    %4740 = vmatmul.mubr.bf16.gmra.mrb[0].mxu0 %v4231
    %v4741 = vpop.f32.mrb[0].mxu0
    %v4742 = vadd.f32 0.0, %v4741
    %v4743 = vpop.f32.mrb[0].mxu0
    %v4744 = vpop.f32.mrb[0].mxu0
    %v4745 = vadd.f32 0.0, %v4744
    %v4746 = vpop.f32.mrb[0].mxu0
    %4747 = vmatprep.mubr.bf16.mxu0 0
    %4748 = vmatmul.mubr.bf16.gmra.mrb[0].mxu0 %v4232
    %v4749 = vpop.f32.mrb[0].mxu0
    %v4750 = vadd.f32 0.0, %v4749
    %v4751 = vpop.f32.mrb[0].mxu0
    %v4752 = vpop.f32.mrb[0].mxu0
    %v4753 = vadd.f32 0.0, %v4752
    %v4754 = vpop.f32.mrb[0].mxu0
    %4755 = vmatprep.mubr.bf16.mxu0 0
    %4756 = vmatmul.mubr.bf16.gmra.mrb[0].mxu0 %v4233
    %v4757 = vpop.f32.mrb[0].mxu0
    %v4758 = vadd.f32 0.0, %v4757
    %v4759 = vpop.f32.mrb[0].mxu0
    %v4760 = vpop.f32.mrb[0].mxu0
    %v4761 = vadd.f32 0.0, %v4760
    %v4762 = vpop.f32.mrb[0].mxu0
    %4763 = vdwg.mxu0
    %v4764 = vadd.f32 %v3642, %v4334
    %v4765 = vadd.f32 %v3645, %v4337
    %v4766 = vadd.f32 %v3650, %v4342
    %v4767 = vadd.f32 %v3653, %v4345
    %v4768 = vadd.f32 %v3658, %v4350
    %v4769 = vadd.f32 %v3661, %v4353
    %v4770 = vadd.f32 %v3666, %v4358
    %v4771 = vadd.f32 %v3669, %v4361
    %v4772 = vadd.f32 %v3674, %v4366
    %v4773 = vadd.f32 %v3677, %v4369
    %v4774 = vadd.f32 %v3682, %v4374
    %v4775 = vadd.f32 %v3685, %v4377
    %v4776 = vadd.f32 %v3690, %v4382
    %v4777 = vadd.f32 %v3693, %v4385
    %v4778 = vadd.f32 %v3698, %v4390
    %v4779 = vadd.f32 %v3701, %v4393
    %v4780 = vadd.f32 %v3706, %v4398
    %v4781 = vadd.f32 %v3709, %v4401
    %v4782 = vadd.f32 %v3714, %v4406
    %v4783 = vadd.f32 %v3717, %v4409
    %v4784 = vadd.f32 %v3722, %v4414
    %v4785 = vadd.f32 %v3725, %v4417
    %v4786 = vadd.f32 %v3730, %v4422
    %v4787 = vadd.f32 %v3733, %v4425
    %v4788 = vadd.f32 %v3738, %v4430
    %v4789 = vadd.f32 %v3741, %v4433
    %v4790 = vadd.f32 %v3746, %v4438
    %v4791 = vadd.f32 %v3749, %v4441
    %v4792 = vadd.f32 %v3754, %v4446
    %v4793 = vadd.f32 %v3757, %v4449
    %v4794 = vadd.f32 %v3762, %v4454
    %v4795 = vadd.f32 %v3765, %v4457
    %v4796 = vadd.f32 %v3770, %v4462
    %v4797 = vadd.f32 %v3773, %v4465
    %v4798 = vadd.f32 %v3778, %v4470
    %v4799 = vadd.f32 %v3781, %v4473
    %v4800 = vadd.f32 %v3786, %v4478
    %v4801 = vadd.f32 %v3789, %v4481
    %v4802 = vadd.f32 %v3794, %v4486
    %v4803 = vadd.f32 %v3797, %v4489
    %v4804 = vadd.f32 %v3802, %v4494
    %v4805 = vadd.f32 %v3805, %v4497
    %v4806 = vadd.f32 %v3810, %v4502
    %v4807 = vadd.f32 %v3813, %v4505
    %v4808 = vadd.f32 %v3818, %v4510
    %v4809 = vadd.f32 %v3821, %v4513
    %v4810 = vadd.f32 %v3826, %v4518
    %v4811 = vadd.f32 %v3829, %v4521
    %v4812 = vadd.f32 %v3834, %v4526
    %v4813 = vadd.f32 %v3837, %v4529
    %v4814 = vadd.f32 %v3842, %v4534
    %v4815 = vadd.f32 %v3845, %v4537
    %v4816 = vadd.f32 %v3850, %v4542
    %v4817 = vadd.f32 %v3853, %v4545
    %v4818 = vadd.f32 %v3858, %v4550
    %v4819 = vadd.f32 %v3861, %v4553
    %v4820 = vadd.f32 %v3866, %v4558
    %v4821 = vadd.f32 %v3869, %v4561
    %v4822 = vadd.f32 %v3874, %v4566
    %v4823 = vadd.f32 %v3877, %v4569
    %v4824 = vadd.f32 %v3882, %v4574
    %v4825 = vadd.f32 %v3885, %v4577
    %v4826 = vadd.f32 %v3890, %v4582
    %v4827 = vadd.f32 %v3893, %v4585
    %v4828 = vadd.f32 %v3898, %v4590
    %v4829 = vadd.f32 %v3901, %v4593
    %v4830 = vadd.f32 %v3906, %v4598
    %v4831 = vadd.f32 %v3909, %v4601
    %v4832 = vadd.f32 %v3914, %v4606
    %v4833 = vadd.f32 %v3917, %v4609
    %v4834 = vadd.f32 %v3922, %v4614
    %v4835 = vadd.f32 %v3925, %v4617
    %v4836 = vadd.f32 %v3930, %v4622
    %v4837 = vadd.f32 %v3933, %v4625
    %v4838 = vadd.f32 %v3938, %v4630
    %v4839 = vadd.f32 %v3941, %v4633
    %v4840 = vadd.f32 %v3946, %v4638
    %v4841 = vadd.f32 %v3949, %v4641
    %v4842 = vadd.f32 %v3954, %v4646
    %v4843 = vadd.f32 %v3957, %v4649
    %v4844 = vadd.f32 %v3962, %v4654
    %v4845 = vadd.f32 %v3965, %v4657
    %v4846 = vadd.f32 %v3970, %v4662
    %v4847 = vadd.f32 %v3973, %v4665
    %v4848 = vadd.f32 %v3978, %v4670
    %v4849 = vadd.f32 %v3981, %v4673
    %v4850 = vadd.f32 %v3986, %v4678
    %v4851 = vadd.f32 %v3989, %v4681
    %v4852 = vadd.f32 %v3994, %v4686
    %v4853 = vadd.f32 %v3997, %v4689
    %v4854 = vadd.f32 %v4002, %v4694
    %v4855 = vadd.f32 %v4005, %v4697
    %v4856 = vadd.f32 %v4010, %v4702
    %v4857 = vadd.f32 %v4013, %v4705
    %v4858 = vadd.f32 %v4018, %v4710
    %v4859 = vadd.f32 %v4021, %v4713
    %v4860 = vadd.f32 %v4026, %v4718
    %v4861 = vadd.f32 %v4029, %v4721
    %v4862 = vadd.f32 %v4034, %v4726
    %v4863 = vadd.f32 %v4037, %v4729
    %v4864 = vadd.f32 %v4042, %v4734
    %v4865 = vadd.f32 %v4045, %v4737
    %v4866 = vadd.f32 %v4050, %v4742
    %v4867 = vadd.f32 %v4053, %v4745
    %v4868 = vadd.f32 %v4058, %v4750
    %v4869 = vadd.f32 %v4061, %v4753
    %v4870 = vadd.f32 %v4066, %v4758
    %v4871 = vadd.f32 %v4069, %v4761
    %v4872 = vld [vmem:[#allocation2 + $0x1f] sm:$0xff]
    %v4873 = vld [vmem:[#allocation2 + $0x27] sm:$0xff]
    %v4874 = vld [vmem:[#allocation2 + $0x2f] sm:$0xff]
    %v4875 = vld [vmem:[#allocation2 + $0x37] sm:$0xff]
    %v4876 = vld [vmem:[#allocation2 + $0x3f] sm:$0xff]
    %v4877 = vld [vmem:[#allocation2 + $0x47] sm:$0xff]
    %v4878 = vld [vmem:[#allocation2 + $0x4f] sm:$0xff]
    %v4879 = vld [vmem:[#allocation2 + $0x57] sm:$0xff]
    %v4880 = vld [vmem:[#allocation2 + $0x5f] sm:$0xff]
    %v4881 = vld [vmem:[#allocation2 + $0x67] sm:$0xff]
    %v4882 = vld [vmem:[#allocation2 + $0x6f] sm:$0xff]
    %v4883 = vld [vmem:[#allocation2 + $0x77] sm:$0xff]
    %v4884 = vld [vmem:[#allocation2 + $0x7f] sm:$0xff]
    %v4885 = vld [vmem:[#allocation2 + $0x87] sm:$0xff]
    %v4886 = vld [vmem:[#allocation2 + $0x8f] sm:$0xff]
    %v4887 = vld [vmem:[#allocation2 + $0x97] sm:$0xff]
    %v4888 = vld [vmem:[#allocation2 + $0x9f] sm:$0xff]
    %v4889 = vld [vmem:[#allocation2 + $0xa7] sm:$0xff]
    %v4890 = vld [vmem:[#allocation2 + $0xaf] sm:$0xff]
    %v4891 = vld [vmem:[#allocation2 + $0xb7] sm:$0xff]
    %v4892 = vld [vmem:[#allocation2 + $0xbf] sm:$0xff]
    %v4893 = vld [vmem:[#allocation2 + $0xc7] sm:$0xff]
    %v4894 = vld [vmem:[#allocation2 + $0xcf] sm:$0xff]
    %v4895 = vld [vmem:[#allocation2 + $0xd7] sm:$0xff]
    %v4896 = vld [vmem:[#allocation2 + $0xdf] sm:$0xff]
    %v4897 = vld [vmem:[#allocation2 + $0xe7] sm:$0xff]
    %v4898 = vld [vmem:[#allocation2 + $0xef] sm:$0xff]
    %v4899 = vld [vmem:[#allocation2 + $0xf7] sm:$0xff]
    %v4900 = vld [vmem:[#allocation2 + $0xff] sm:$0xff]
    %v4901 = vld [vmem:[#allocation2 + $0x107] sm:$0xff]
    %v4902 = vld [vmem:[#allocation2 + $0x10f] sm:$0xff]
    %v4903 = vld [vmem:[#allocation2 + $0x117] sm:$0xff]
    %v4904 = vld [vmem:[#allocation2 + $0x11f] sm:$0xff]
    %v4905 = vld [vmem:[#allocation2 + $0x127] sm:$0xff]
    %v4906 = vld [vmem:[#allocation2 + $0x12f] sm:$0xff]
    %v4907 = vld [vmem:[#allocation2 + $0x137] sm:$0xff]
    %v4908 = vld [vmem:[#allocation2 + $0x13f] sm:$0xff]
    %v4909 = vld [vmem:[#allocation2 + $0x147] sm:$0xff]
    %v4910 = vld [vmem:[#allocation2 + $0x14f] sm:$0xff]
    %v4911 = vld [vmem:[#allocation2 + $0x157] sm:$0xff]
    %v4912 = vld [vmem:[#allocation2 + $0x15f] sm:$0xff]
    %v4913 = vld [vmem:[#allocation2 + $0x167] sm:$0xff]
    %v4914 = vld [vmem:[#allocation2 + $0x16f] sm:$0xff]
    %v4915 = vld [vmem:[#allocation2 + $0x177] sm:$0xff]
    %v4916 = vld [vmem:[#allocation2 + $0x17f] sm:$0xff]
    %v4917 = vld [vmem:[#allocation2 + $0x187] sm:$0xff]
    %v4918 = vld [vmem:[#allocation2 + $0x18f] sm:$0xff]
    %v4919 = vld [vmem:[#allocation2 + $0x197] sm:$0xff]
    %v4920 = vld [vmem:[#allocation2 + $0x19f] sm:$0xff]
    %v4921 = vld [vmem:[#allocation2 + $0x1a7] sm:$0xff]
    %v4922 = vld [vmem:[#allocation2 + $0x1af] sm:$0xff]
    %v4923 = vld [vmem:[#allocation2 + $0x1b7] sm:$0xff]
    %v4924 = vld [vmem:[#allocation2 + $0x1bf] sm:$0xff]
    %v4925 = vld [vmem:[#allocation2 + $0x1c7] sm:$0xff]
    %v4926 = vld [vmem:[#allocation2 + $0x1cf] sm:$0xff]
    %v4927 = vld [vmem:[#allocation2 + $0x1d7] sm:$0xff]
    %v4928 = vld [vmem:[#allocation2 + $0x1df] sm:$0xff]
    %v4929 = vld [vmem:[#allocation2 + $0x1e7] sm:$0xff]
    %v4930 = vld [vmem:[#allocation2 + $0x1ef] sm:$0xff]
    %v4931 = vld [vmem:[#allocation2 + $0x1f7] sm:$0xff]
    %v4932 = vld [vmem:[#allocation2 + $0x1ff] sm:$0xff]
    %v4933 = vld [vmem:[#allocation2 + $0x207] sm:$0xff]
    %v4934 = vld [vmem:[#allocation2 + $0x20f] sm:$0xff]
    %v4935 = vld [vmem:[#allocation2 + $0x217] sm:$0xff]
    %v4936 = vld [vmem:[#allocation2 + $0x21f] sm:$0xff]
    %v4937 = vld [vmem:[#allocation2 + $0x227] sm:$0xff]
    %v4938 = vld [vmem:[#allocation2 + $0x22f] sm:$0xff]
    %v4939 = vld [vmem:[#allocation2 + $0x237] sm:$0xff]
    %v4940 = vld [vmem:[#allocation2 + $0x23f] sm:$0xff]
    %v4941 = vld [vmem:[#allocation2 + $0x247] sm:$0xff]
    %v4942 = vld [vmem:[#allocation2 + $0x24f] sm:$0xff]
    %v4943 = vld [vmem:[#allocation2 + $0x257] sm:$0xff]
    %v4944 = vld [vmem:[#allocation2 + $0x25f] sm:$0xff]
    %v4945 = vld [vmem:[#allocation2 + $0x267] sm:$0xff]
    %v4946 = vld [vmem:[#allocation2 + $0x26f] sm:$0xff]
    %v4947 = vld [vmem:[#allocation2 + $0x277] sm:$0xff]
    %v4948 = vld [vmem:[#allocation2 + $0x27f] sm:$0xff]
    %v4949 = vld [vmem:[#allocation2 + $0x287] sm:$0xff]
    %v4950 = vld [vmem:[#allocation2 + $0x28f] sm:$0xff]
    %v4951 = vld [vmem:[#allocation2 + $0x297] sm:$0xff]
    %v4952 = vld [vmem:[#allocation2 + $0x29f] sm:$0xff]
    %v4953 = vld [vmem:[#allocation2 + $0x2a7] sm:$0xff]
    %v4954 = vld [vmem:[#allocation2 + $0x2af] sm:$0xff]
    %v4955 = vld [vmem:[#allocation2 + $0x2b7] sm:$0xff]
    %v4956 = vld [vmem:[#allocation2 + $0x2bf] sm:$0xff]
    %v4957 = vld [vmem:[#allocation2 + $0x2c7] sm:$0xff]
    %v4958 = vld [vmem:[#allocation2 + $0x2cf] sm:$0xff]
    %v4959 = vld [vmem:[#allocation2 + $0x2d7] sm:$0xff]
    %v4960 = vld [vmem:[#allocation2 + $0x2df] sm:$0xff]
    %v4961 = vld [vmem:[#allocation2 + $0x2e7] sm:$0xff]
    %v4962 = vld [vmem:[#allocation2 + $0x2ef] sm:$0xff]
    %v4963 = vld [vmem:[#allocation2 + $0x2f7] sm:$0xff]
    %v4964 = vld [vmem:[#allocation2 + $0x2ff] sm:$0xff]
    %v4965 = vld [vmem:[#allocation2 + $0x307] sm:$0xff]
    %v4966 = vld [vmem:[#allocation2 + $0x30f] sm:$0xff]
    %v4967 = vld [vmem:[#allocation2 + $0x317] sm:$0xff]
    %v4968 = vld [vmem:[#allocation2 + $0x31f] sm:$0xff]
    %v4969 = vld [vmem:[#allocation2 + $0x327] sm:$0xff]
    %v4970 = vld [vmem:[#allocation2 + $0x32f] sm:$0xff]
    %v4971 = vld [vmem:[#allocation2 + $0x337] sm:$0xff]
    %v4972 = vld [vmem:[#allocation2 + $0x33f] sm:$0xff]
    %v4973 = vld [vmem:[#allocation2 + $0x347] sm:$0xff]
    %v4974 = vld [vmem:[#allocation2 + $0x34f] sm:$0xff]
    %v4975 = vld [vmem:[#allocation2 + $0x357] sm:$0xff]
    %v4976 = vld [vmem:[#allocation2 + $0x35f] sm:$0xff]
    %v4977 = vld [vmem:[#allocation2 + $0x367] sm:$0xff]
    %v4978 = vld [vmem:[#allocation2 + $0x36f] sm:$0xff]
    %v4979 = vld [vmem:[#allocation2 + $0x377] sm:$0xff]
    %v4980 = vpack.c.bf16 %v4873, %v4872
    %v4981 = vpack.c.bf16 %v4875, %v4874
    %v4982 = vpack.c.bf16 %v4877, %v4876
    %v4983 = vpack.c.bf16 %v4879, %v4878
    %v4984 = vpack.c.bf16 %v4881, %v4880
    %v4985 = vpack.c.bf16 %v4883, %v4882
    %v4986 = vpack.c.bf16 %v4885, %v4884
    %v4987 = vpack.c.bf16 %v4887, %v4886
    %v4988 = vpack.c.bf16 %v4889, %v4888
    %v4989 = vpack.c.bf16 %v4891, %v4890
    %v4990 = vpack.c.bf16 %v4893, %v4892
    %v4991 = vpack.c.bf16 %v4895, %v4894
    %v4992 = vpack.c.bf16 %v4897, %v4896
    %v4993 = vpack.c.bf16 %v4899, %v4898
    %v4994 = vpack.c.bf16 %v4901, %v4900
    %v4995 = vpack.c.bf16 %v4903, %v4902
    %v4996 = vpack.c.bf16 %v4905, %v4904
    %v4997 = vpack.c.bf16 %v4907, %v4906
    %v4998 = vpack.c.bf16 %v4909, %v4908
    %v4999 = vpack.c.bf16 %v4911, %v4910
    %v5000 = vpack.c.bf16 %v4913, %v4912
    %v5001 = vpack.c.bf16 %v4915, %v4914
    %v5002 = vpack.c.bf16 %v4917, %v4916
    %v5003 = vpack.c.bf16 %v4919, %v4918
    %v5004 = vpack.c.bf16 %v4921, %v4920
    %v5005 = vpack.c.bf16 %v4923, %v4922
    %v5006 = vpack.c.bf16 %v4925, %v4924
    %v5007 = vpack.c.bf16 %v4927, %v4926
    %v5008 = vpack.c.bf16 %v4929, %v4928
    %v5009 = vpack.c.bf16 %v4931, %v4930
    %v5010 = vpack.c.bf16 %v4933, %v4932
    %v5011 = vpack.c.bf16 %v4935, %v4934
    %v5012 = vpack.c.bf16 %v4937, %v4936
    %v5013 = vpack.c.bf16 %v4939, %v4938
    %v5014 = vpack.c.bf16 %v4941, %v4940
    %v5015 = vpack.c.bf16 %v4943, %v4942
    %v5016 = vpack.c.bf16 %v4945, %v4944
    %v5017 = vpack.c.bf16 %v4947, %v4946
    %v5018 = vpack.c.bf16 %v4949, %v4948
    %v5019 = vpack.c.bf16 %v4951, %v4950
    %v5020 = vpack.c.bf16 %v4953, %v4952
    %v5021 = vpack.c.bf16 %v4955, %v4954
    %v5022 = vpack.c.bf16 %v4957, %v4956
    %v5023 = vpack.c.bf16 %v4959, %v4958
    %v5024 = vpack.c.bf16 %v4961, %v4960
    %v5025 = vpack.c.bf16 %v4963, %v4962
    %v5026 = vpack.c.bf16 %v4965, %v4964
    %v5027 = vpack.c.bf16 %v4967, %v4966
    %v5028 = vpack.c.bf16 %v4969, %v4968
    %v5029 = vpack.c.bf16 %v4971, %v4970
    %v5030 = vpack.c.bf16 %v4973, %v4972
    %v5031 = vpack.c.bf16 %v4975, %v4974
    %v5032 = vpack.c.bf16 %v4977, %v4976
    %v5033 = vpack.c.bf16 %v4979, %v4978
    %s5034 = scalar_lea.vmem %s3, 192
    %v5035 = vld [vmem:[%s5034] sm:$0xf]
    %v5036 = vld [vmem:[%s5034 + $0x4] sm:$0xf]
    %v5037 = vld [vmem:[%s5034 + $0x8] sm:$0xf]
    %v5038 = vld [vmem:[%s5034 + $0xc] sm:$0xf]
    %v5039 = vld [vmem:[%s5034 + $0x10] sm:$0xf]
    %v5040 = vld [vmem:[%s5034 + $0x14] sm:$0xf]
    %v5041 = vld [vmem:[%s5034 + $0x18] sm:$0xf]
    %v5042 = vld [vmem:[%s5034 + $0x1c] sm:$0xf]
    %v5043 = vld [vmem:[%s5034 + $0x20] sm:$0xf]
    %v5044 = vld [vmem:[%s5034 + $0x24] sm:$0xf]
    %v5045 = vld [vmem:[%s5034 + $0x28] sm:$0xf]
    %v5046 = vld [vmem:[%s5034 + $0x2c] sm:$0xf]
    %v5047 = vld [vmem:[%s5034 + $0x30] sm:$0xf]
    %v5048 = vld [vmem:[%s5034 + $0x34] sm:$0xf]
    %v5049 = vld [vmem:[%s5034 + $0x38] sm:$0xf]
    %v5050 = vld [vmem:[%s5034 + $0x3c] sm:$0xf]
    %v5067 = vunpack.c.l.b16 %v5035
    %v5068 = vunpack.c.l.b16 %v5036
    %v5069 = vunpack.c.l.b16 %v5037
    %v5070 = vunpack.c.l.b16 %v5038
    %v5071 = vunpack.c.l.b16 %v5039
    %v5072 = vunpack.c.l.b16 %v5040
    %v5073 = vunpack.c.l.b16 %v5041
    %v5074 = vunpack.c.l.b16 %v5042
    %v5075 = vunpack.c.l.b16 %v5043
    %v5076 = vunpack.c.l.b16 %v5044
    %v5077 = vunpack.c.l.b16 %v5045
    %v5078 = vunpack.c.l.b16 %v5046
    %v5079 = vunpack.c.l.b16 %v5047
    %v5080 = vunpack.c.l.b16 %v5048
    %v5081 = vunpack.c.l.b16 %v5049
    %v5082 = vunpack.c.l.b16 %v5050
    %v5083 = vpack.c.b16 %v5068, %v5067
    %v5084 = vpack.c.b16 %v5070, %v5069
    %v5085 = vpack.c.b16 %v5072, %v5071
    %v5086 = vpack.c.b16 %v5074, %v5073
    %v5087 = vpack.c.b16 %v5076, %v5075
    %v5088 = vpack.c.b16 %v5078, %v5077
    %v5089 = vpack.c.b16 %v5080, %v5079
    %v5090 = vpack.c.b16 %v5082, %v5081
    %5099 = vmatprep.subr.bf16.mxu0 0
    %5100 = vmatpush1.bf16.msra.mxu0 %v5083
    %5101 = vmatprep.subr.bf16.mxu0 0
    %5102 = vmatpush1.bf16.msra.mxu0 %v5084
    %5103 = vmatprep.subr.bf16.mxu0 0
    %5104 = vmatpush1.bf16.msra.mxu0 %v5085
    %5105 = vmatprep.subr.bf16.mxu0 0
    %5106 = vmatpush1.bf16.msra.mxu0 %v5086
    %5107 = vmatprep.subr.bf16.mxu0 0
    %5108 = vmatpush1.bf16.msra.mxu0 %v5087
    %5109 = vmatprep.subr.bf16.mxu0 0
    %5110 = vmatpush1.bf16.msra.mxu0 %v5088
    %5111 = vmatprep.subr.bf16.mxu0 0
    %5112 = vmatpush1.bf16.msra.mxu0 %v5089
    %5113 = vmatprep.subr.bf16.mxu0 0
    %5114 = vmatpush1.bf16.msra.mxu0 %v5090
    %5115 = vmatprep.subr.bf16.mxu0 0
    %5116 = vmatpush1.bf16.msra.mxu0 0
    %5117 = vmatprep.subr.bf16.mxu0 0
    %5118 = vmatpush1.bf16.msra.mxu0 0
    %5119 = vmatprep.subr.bf16.mxu0 0
    %5120 = vmatpush1.bf16.msra.mxu0 0
    %5121 = vmatprep.subr.bf16.mxu0 0
    %5122 = vmatpush1.bf16.msra.mxu0 0
    %5123 = vmatprep.subr.bf16.mxu0 0
    %5124 = vmatpush1.bf16.msra.mxu0 0
    %5125 = vmatprep.subr.bf16.mxu0 0
    %5126 = vmatpush1.bf16.msra.mxu0 0
    %5127 = vmatprep.subr.bf16.mxu0 0
    %5128 = vmatpush1.bf16.msra.mxu0 0
    %5129 = vmatprep.subr.bf16.mxu0 0
    %5130 = vmatpush1.bf16.msra.mxu0 0
    %5131 = vmatprep.mubr.bf16.mxu0 0
    %5132 = vmatmul.mubr.bf16.gmra.mrb[0].mxu0 %v4980
    %v5133 = vpop.f32.mrb[0].mxu0
    %v5134 = vadd.f32 0.0, %v5133
    %v5135 = vpop.f32.mrb[0].mxu0
    %v5136 = vpop.f32.mrb[0].mxu0
    %v5137 = vadd.f32 0.0, %v5136
    %v5138 = vpop.f32.mrb[0].mxu0
    %5139 = vmatprep.mubr.bf16.mxu0 0
    %5140 = vmatmul.mubr.bf16.gmra.mrb[0].mxu0 %v4981
    %v5141 = vpop.f32.mrb[0].mxu0
    %v5142 = vadd.f32 0.0, %v5141
    %v5143 = vpop.f32.mrb[0].mxu0
    %v5144 = vpop.f32.mrb[0].mxu0
    %v5145 = vadd.f32 0.0, %v5144
    %v5146 = vpop.f32.mrb[0].mxu0
    %5147 = vmatprep.mubr.bf16.mxu0 0
    %5148 = vmatmul.mubr.bf16.gmra.mrb[0].mxu0 %v4982
    %v5149 = vpop.f32.mrb[0].mxu0
    %v5150 = vadd.f32 0.0, %v5149
    %v5151 = vpop.f32.mrb[0].mxu0
    %v5152 = vpop.f32.mrb[0].mxu0
    %v5153 = vadd.f32 0.0, %v5152
    %v5154 = vpop.f32.mrb[0].mxu0
    %5155 = vmatprep.mubr.bf16.mxu0 0
    %5156 = vmatmul.mubr.bf16.gmra.mrb[0].mxu0 %v4983
    %v5157 = vpop.f32.mrb[0].mxu0
    %v5158 = vadd.f32 0.0, %v5157
    %v5159 = vpop.f32.mrb[0].mxu0
    %v5160 = vpop.f32.mrb[0].mxu0
    %v5161 = vadd.f32 0.0, %v5160
    %v5162 = vpop.f32.mrb[0].mxu0
    %5163 = vmatprep.mubr.bf16.mxu0 0
    %5164 = vmatmul.mubr.bf16.gmra.mrb[0].mxu0 %v4984
    %v5165 = vpop.f32.mrb[0].mxu0
    %v5166 = vadd.f32 0.0, %v5165
    %v5167 = vpop.f32.mrb[0].mxu0
    %v5168 = vpop.f32.mrb[0].mxu0
    %v5169 = vadd.f32 0.0, %v5168
    %v5170 = vpop.f32.mrb[0].mxu0
    %5171 = vmatprep.mubr.bf16.mxu0 0
    %5172 = vmatmul.mubr.bf16.gmra.mrb[0].mxu0 %v4985
    %v5173 = vpop.f32.mrb[0].mxu0
    %v5174 = vadd.f32 0.0, %v5173
    %v5175 = vpop.f32.mrb[0].mxu0
    %v5176 = vpop.f32.mrb[0].mxu0
    %v5177 = vadd.f32 0.0, %v5176
    %v5178 = vpop.f32.mrb[0].mxu0
    %5179 = vmatprep.mubr.bf16.mxu0 0
    %5180 = vmatmul.mubr.bf16.gmra.mrb[0].mxu0 %v4986
    %v5181 = vpop.f32.mrb[0].mxu0
    %v5182 = vadd.f32 0.0, %v5181
    %v5183 = vpop.f32.mrb[0].mxu0
    %v5184 = vpop.f32.mrb[0].mxu0
    %v5185 = vadd.f32 0.0, %v5184
    %v5186 = vpop.f32.mrb[0].mxu0
    %5187 = vmatprep.mubr.bf16.mxu0 0
    %5188 = vmatmul.mubr.bf16.gmra.mrb[0].mxu0 %v4987
    %v5189 = vpop.f32.mrb[0].mxu0
    %v5190 = vadd.f32 0.0, %v5189
    %v5191 = vpop.f32.mrb[0].mxu0
    %v5192 = vpop.f32.mrb[0].mxu0
    %v5193 = vadd.f32 0.0, %v5192
    %v5194 = vpop.f32.mrb[0].mxu0
    %5195 = vmatprep.mubr.bf16.mxu0 0
    %5196 = vmatmul.mubr.bf16.gmra.mrb[0].mxu0 %v4988
    %v5197 = vpop.f32.mrb[0].mxu0
    %v5198 = vadd.f32 0.0, %v5197
    %v5199 = vpop.f32.mrb[0].mxu0
    %v5200 = vpop.f32.mrb[0].mxu0
    %v5201 = vadd.f32 0.0, %v5200
    %v5202 = vpop.f32.mrb[0].mxu0
    %5203 = vmatprep.mubr.bf16.mxu0 0
    %5204 = vmatmul.mubr.bf16.gmra.mrb[0].mxu0 %v4989
    %v5205 = vpop.f32.mrb[0].mxu0
    %v5206 = vadd.f32 0.0, %v5205
    %v5207 = vpop.f32.mrb[0].mxu0
    %v5208 = vpop.f32.mrb[0].mxu0
    %v5209 = vadd.f32 0.0, %v5208
    %v5210 = vpop.f32.mrb[0].mxu0
    %5211 = vmatprep.mubr.bf16.mxu0 0
    %5212 = vmatmul.mubr.bf16.gmra.mrb[0].mxu0 %v4990
    %v5213 = vpop.f32.mrb[0].mxu0
    %v5214 = vadd.f32 0.0, %v5213
    %v5215 = vpop.f32.mrb[0].mxu0
    %v5216 = vpop.f32.mrb[0].mxu0
    %v5217 = vadd.f32 0.0, %v5216
    %v5218 = vpop.f32.mrb[0].mxu0
    %5219 = vmatprep.mubr.bf16.mxu0 0
    %5220 = vmatmul.mubr.bf16.gmra.mrb[0].mxu0 %v4991
    %v5221 = vpop.f32.mrb[0].mxu0
    %v5222 = vadd.f32 0.0, %v5221
    %v5223 = vpop.f32.mrb[0].mxu0
    %v5224 = vpop.f32.mrb[0].mxu0
    %v5225 = vadd.f32 0.0, %v5224
    %v5226 = vpop.f32.mrb[0].mxu0
    %5227 = vmatprep.mubr.bf16.mxu0 0
    %5228 = vmatmul.mubr.bf16.gmra.mrb[0].mxu0 %v4992
    %v5229 = vpop.f32.mrb[0].mxu0
    %v5230 = vadd.f32 0.0, %v5229
    %v5231 = vpop.f32.mrb[0].mxu0
    %v5232 = vpop.f32.mrb[0].mxu0
    %v5233 = vadd.f32 0.0, %v5232
    %v5234 = vpop.f32.mrb[0].mxu0
    %5235 = vmatprep.mubr.bf16.mxu0 0
    %5236 = vmatmul.mubr.bf16.gmra.mrb[0].mxu0 %v4993
    %v5237 = vpop.f32.mrb[0].mxu0
    %v5238 = vadd.f32 0.0, %v5237
    %v5239 = vpop.f32.mrb[0].mxu0
    %v5240 = vpop.f32.mrb[0].mxu0
    %v5241 = vadd.f32 0.0, %v5240
    %v5242 = vpop.f32.mrb[0].mxu0
    %5243 = vmatprep.mubr.bf16.mxu0 0
    %5244 = vmatmul.mubr.bf16.gmra.mrb[0].mxu0 %v4994
    %v5245 = vpop.f32.mrb[0].mxu0
    %v5246 = vadd.f32 0.0, %v5245
    %v5247 = vpop.f32.mrb[0].mxu0
    %v5248 = vpop.f32.mrb[0].mxu0
    %v5249 = vadd.f32 0.0, %v5248
    %v5250 = vpop.f32.mrb[0].mxu0
    %5251 = vmatprep.mubr.bf16.mxu0 0
    %5252 = vmatmul.mubr.bf16.gmra.mrb[0].mxu0 %v4995
    %v5253 = vpop.f32.mrb[0].mxu0
    %v5254 = vadd.f32 0.0, %v5253
    %v5255 = vpop.f32.mrb[0].mxu0
    %v5256 = vpop.f32.mrb[0].mxu0
    %v5257 = vadd.f32 0.0, %v5256
    %v5258 = vpop.f32.mrb[0].mxu0
    %5259 = vmatprep.mubr.bf16.mxu0 0
    %5260 = vmatmul.mubr.bf16.gmra.mrb[0].mxu0 %v4996
    %v5261 = vpop.f32.mrb[0].mxu0
    %v5262 = vadd.f32 0.0, %v5261
    %v5263 = vpop.f32.mrb[0].mxu0
    %v5264 = vpop.f32.mrb[0].mxu0
    %v5265 = vadd.f32 0.0, %v5264
    %v5266 = vpop.f32.mrb[0].mxu0
    %5267 = vmatprep.mubr.bf16.mxu0 0
    %5268 = vmatmul.mubr.bf16.gmra.mrb[0].mxu0 %v4997
    %v5269 = vpop.f32.mrb[0].mxu0
    %v5270 = vadd.f32 0.0, %v5269
    %v5271 = vpop.f32.mrb[0].mxu0
    %v5272 = vpop.f32.mrb[0].mxu0
    %v5273 = vadd.f32 0.0, %v5272
    %v5274 = vpop.f32.mrb[0].mxu0
    %5275 = vmatprep.mubr.bf16.mxu0 0
    %5276 = vmatmul.mubr.bf16.gmra.mrb[0].mxu0 %v4998
    %v5277 = vpop.f32.mrb[0].mxu0
    %v5278 = vadd.f32 0.0, %v5277
    %v5279 = vpop.f32.mrb[0].mxu0
    %v5280 = vpop.f32.mrb[0].mxu0
    %v5281 = vadd.f32 0.0, %v5280
    %v5282 = vpop.f32.mrb[0].mxu0
    %5283 = vmatprep.mubr.bf16.mxu0 0
    %5284 = vmatmul.mubr.bf16.gmra.mrb[0].mxu0 %v4999
    %v5285 = vpop.f32.mrb[0].mxu0
    %v5286 = vadd.f32 0.0, %v5285
    %v5287 = vpop.f32.mrb[0].mxu0
    %v5288 = vpop.f32.mrb[0].mxu0
    %v5289 = vadd.f32 0.0, %v5288
    %v5290 = vpop.f32.mrb[0].mxu0
    %5291 = vmatprep.mubr.bf16.mxu0 0
    %5292 = vmatmul.mubr.bf16.gmra.mrb[0].mxu0 %v5000
    %v5293 = vpop.f32.mrb[0].mxu0
    %v5294 = vadd.f32 0.0, %v5293
    %v5295 = vpop.f32.mrb[0].mxu0
    %v5296 = vpop.f32.mrb[0].mxu0
    %v5297 = vadd.f32 0.0, %v5296
    %v5298 = vpop.f32.mrb[0].mxu0
    %5299 = vmatprep.mubr.bf16.mxu0 0
    %5300 = vmatmul.mubr.bf16.gmra.mrb[0].mxu0 %v5001
    %v5301 = vpop.f32.mrb[0].mxu0
    %v5302 = vadd.f32 0.0, %v5301
    %v5303 = vpop.f32.mrb[0].mxu0
    %v5304 = vpop.f32.mrb[0].mxu0
    %v5305 = vadd.f32 0.0, %v5304
    %v5306 = vpop.f32.mrb[0].mxu0
    %5307 = vmatprep.mubr.bf16.mxu0 0
    %5308 = vmatmul.mubr.bf16.gmra.mrb[0].mxu0 %v5002
    %v5309 = vpop.f32.mrb[0].mxu0
    %v5310 = vadd.f32 0.0, %v5309
    %v5311 = vpop.f32.mrb[0].mxu0
    %v5312 = vpop.f32.mrb[0].mxu0
    %v5313 = vadd.f32 0.0, %v5312
    %v5314 = vpop.f32.mrb[0].mxu0
    %5315 = vmatprep.mubr.bf16.mxu0 0
    %5316 = vmatmul.mubr.bf16.gmra.mrb[0].mxu0 %v5003
    %v5317 = vpop.f32.mrb[0].mxu0
    %v5318 = vadd.f32 0.0, %v5317
    %v5319 = vpop.f32.mrb[0].mxu0
    %v5320 = vpop.f32.mrb[0].mxu0
    %v5321 = vadd.f32 0.0, %v5320
    %v5322 = vpop.f32.mrb[0].mxu0
    %5323 = vmatprep.mubr.bf16.mxu0 0
    %5324 = vmatmul.mubr.bf16.gmra.mrb[0].mxu0 %v5004
    %v5325 = vpop.f32.mrb[0].mxu0
    %v5326 = vadd.f32 0.0, %v5325
    %v5327 = vpop.f32.mrb[0].mxu0
    %v5328 = vpop.f32.mrb[0].mxu0
    %v5329 = vadd.f32 0.0, %v5328
    %v5330 = vpop.f32.mrb[0].mxu0
    %5331 = vmatprep.mubr.bf16.mxu0 0
    %5332 = vmatmul.mubr.bf16.gmra.mrb[0].mxu0 %v5005
    %v5333 = vpop.f32.mrb[0].mxu0
    %v5334 = vadd.f32 0.0, %v5333
    %v5335 = vpop.f32.mrb[0].mxu0
    %v5336 = vpop.f32.mrb[0].mxu0
    %v5337 = vadd.f32 0.0, %v5336
    %v5338 = vpop.f32.mrb[0].mxu0
    %5339 = vmatprep.mubr.bf16.mxu0 0
    %5340 = vmatmul.mubr.bf16.gmra.mrb[0].mxu0 %v5006
    %v5341 = vpop.f32.mrb[0].mxu0
    %v5342 = vadd.f32 0.0, %v5341
    %v5343 = vpop.f32.mrb[0].mxu0
    %v5344 = vpop.f32.mrb[0].mxu0
    %v5345 = vadd.f32 0.0, %v5344
    %v5346 = vpop.f32.mrb[0].mxu0
    %5347 = vmatprep.mubr.bf16.mxu0 0
    %5348 = vmatmul.mubr.bf16.gmra.mrb[0].mxu0 %v5007
    %v5349 = vpop.f32.mrb[0].mxu0
    %v5350 = vadd.f32 0.0, %v5349
    %v5351 = vpop.f32.mrb[0].mxu0
    %v5352 = vpop.f32.mrb[0].mxu0
    %v5353 = vadd.f32 0.0, %v5352
    %v5354 = vpop.f32.mrb[0].mxu0
    %5355 = vmatprep.mubr.bf16.mxu0 0
    %5356 = vmatmul.mubr.bf16.gmra.mrb[0].mxu0 %v5008
    %v5357 = vpop.f32.mrb[0].mxu0
    %v5358 = vadd.f32 0.0, %v5357
    %v5359 = vpop.f32.mrb[0].mxu0
    %v5360 = vpop.f32.mrb[0].mxu0
    %v5361 = vadd.f32 0.0, %v5360
    %v5362 = vpop.f32.mrb[0].mxu0
    %5363 = vmatprep.mubr.bf16.mxu0 0
    %5364 = vmatmul.mubr.bf16.gmra.mrb[0].mxu0 %v5009
    %v5365 = vpop.f32.mrb[0].mxu0
    %v5366 = vadd.f32 0.0, %v5365
    %v5367 = vpop.f32.mrb[0].mxu0
    %v5368 = vpop.f32.mrb[0].mxu0
    %v5369 = vadd.f32 0.0, %v5368
    %v5370 = vpop.f32.mrb[0].mxu0
    %5371 = vmatprep.mubr.bf16.mxu0 0
    %5372 = vmatmul.mubr.bf16.gmra.mrb[0].mxu0 %v5010
    %v5373 = vpop.f32.mrb[0].mxu0
    %v5374 = vadd.f32 0.0, %v5373
    %v5375 = vpop.f32.mrb[0].mxu0
    %v5376 = vpop.f32.mrb[0].mxu0
    %v5377 = vadd.f32 0.0, %v5376
    %v5378 = vpop.f32.mrb[0].mxu0
    %5379 = vmatprep.mubr.bf16.mxu0 0
    %5380 = vmatmul.mubr.bf16.gmra.mrb[0].mxu0 %v5011
    %v5381 = vpop.f32.mrb[0].mxu0
    %v5382 = vadd.f32 0.0, %v5381
    %v5383 = vpop.f32.mrb[0].mxu0
    %v5384 = vpop.f32.mrb[0].mxu0
    %v5385 = vadd.f32 0.0, %v5384
    %v5386 = vpop.f32.mrb[0].mxu0
    %5387 = vmatprep.mubr.bf16.mxu0 0
    %5388 = vmatmul.mubr.bf16.gmra.mrb[0].mxu0 %v5012
    %v5389 = vpop.f32.mrb[0].mxu0
    %v5390 = vadd.f32 0.0, %v5389
    %v5391 = vpop.f32.mrb[0].mxu0
    %v5392 = vpop.f32.mrb[0].mxu0
    %v5393 = vadd.f32 0.0, %v5392
    %v5394 = vpop.f32.mrb[0].mxu0
    %5395 = vmatprep.mubr.bf16.mxu0 0
    %5396 = vmatmul.mubr.bf16.gmra.mrb[0].mxu0 %v5013
    %v5397 = vpop.f32.mrb[0].mxu0
    %v5398 = vadd.f32 0.0, %v5397
    %v5399 = vpop.f32.mrb[0].mxu0
    %v5400 = vpop.f32.mrb[0].mxu0
    %v5401 = vadd.f32 0.0, %v5400
    %v5402 = vpop.f32.mrb[0].mxu0
    %5403 = vmatprep.mubr.bf16.mxu0 0
    %5404 = vmatmul.mubr.bf16.gmra.mrb[0].mxu0 %v5014
    %v5405 = vpop.f32.mrb[0].mxu0
    %v5406 = vadd.f32 0.0, %v5405
    %v5407 = vpop.f32.mrb[0].mxu0
    %v5408 = vpop.f32.mrb[0].mxu0
    %v5409 = vadd.f32 0.0, %v5408
    %v5410 = vpop.f32.mrb[0].mxu0
    %5411 = vmatprep.mubr.bf16.mxu0 0
    %5412 = vmatmul.mubr.bf16.gmra.mrb[0].mxu0 %v5015
    %v5413 = vpop.f32.mrb[0].mxu0
    %v5414 = vadd.f32 0.0, %v5413
    %v5415 = vpop.f32.mrb[0].mxu0
    %v5416 = vpop.f32.mrb[0].mxu0
    %v5417 = vadd.f32 0.0, %v5416
    %v5418 = vpop.f32.mrb[0].mxu0
    %5419 = vmatprep.mubr.bf16.mxu0 0
    %5420 = vmatmul.mubr.bf16.gmra.mrb[0].mxu0 %v5016
    %v5421 = vpop.f32.mrb[0].mxu0
    %v5422 = vadd.f32 0.0, %v5421
    %v5423 = vpop.f32.mrb[0].mxu0
    %v5424 = vpop.f32.mrb[0].mxu0
    %v5425 = vadd.f32 0.0, %v5424
    %v5426 = vpop.f32.mrb[0].mxu0
    %5427 = vmatprep.mubr.bf16.mxu0 0
    %5428 = vmatmul.mubr.bf16.gmra.mrb[0].mxu0 %v5017
    %v5429 = vpop.f32.mrb[0].mxu0
    %v5430 = vadd.f32 0.0, %v5429
    %v5431 = vpop.f32.mrb[0].mxu0
    %v5432 = vpop.f32.mrb[0].mxu0
    %v5433 = vadd.f32 0.0, %v5432
    %v5434 = vpop.f32.mrb[0].mxu0
    %5435 = vmatprep.mubr.bf16.mxu0 0
    %5436 = vmatmul.mubr.bf16.gmra.mrb[0].mxu0 %v5018
    %v5437 = vpop.f32.mrb[0].mxu0
    %v5438 = vadd.f32 0.0, %v5437
    %v5439 = vpop.f32.mrb[0].mxu0
    %v5440 = vpop.f32.mrb[0].mxu0
    %v5441 = vadd.f32 0.0, %v5440
    %v5442 = vpop.f32.mrb[0].mxu0
    %5443 = vmatprep.mubr.bf16.mxu0 0
    %5444 = vmatmul.mubr.bf16.gmra.mrb[0].mxu0 %v5019
    %v5445 = vpop.f32.mrb[0].mxu0
    %v5446 = vadd.f32 0.0, %v5445
    %v5447 = vpop.f32.mrb[0].mxu0
    %v5448 = vpop.f32.mrb[0].mxu0
    %v5449 = vadd.f32 0.0, %v5448
    %v5450 = vpop.f32.mrb[0].mxu0
    %5451 = vmatprep.mubr.bf16.mxu0 0
    %5452 = vmatmul.mubr.bf16.gmra.mrb[0].mxu0 %v5020
    %v5453 = vpop.f32.mrb[0].mxu0
    %v5454 = vadd.f32 0.0, %v5453
    %v5455 = vpop.f32.mrb[0].mxu0
    %v5456 = vpop.f32.mrb[0].mxu0
    %v5457 = vadd.f32 0.0, %v5456
    %v5458 = vpop.f32.mrb[0].mxu0
    %5459 = vmatprep.mubr.bf16.mxu0 0
    %5460 = vmatmul.mubr.bf16.gmra.mrb[0].mxu0 %v5021
    %v5461 = vpop.f32.mrb[0].mxu0
    %v5462 = vadd.f32 0.0, %v5461
    %v5463 = vpop.f32.mrb[0].mxu0
    %v5464 = vpop.f32.mrb[0].mxu0
    %v5465 = vadd.f32 0.0, %v5464
    %v5466 = vpop.f32.mrb[0].mxu0
    %5467 = vmatprep.mubr.bf16.mxu0 0
    %5468 = vmatmul.mubr.bf16.gmra.mrb[0].mxu0 %v5022
    %v5469 = vpop.f32.mrb[0].mxu0
    %v5470 = vadd.f32 0.0, %v5469
    %v5471 = vpop.f32.mrb[0].mxu0
    %v5472 = vpop.f32.mrb[0].mxu0
    %v5473 = vadd.f32 0.0, %v5472
    %v5474 = vpop.f32.mrb[0].mxu0
    %5475 = vmatprep.mubr.bf16.mxu0 0
    %5476 = vmatmul.mubr.bf16.gmra.mrb[0].mxu0 %v5023
    %v5477 = vpop.f32.mrb[0].mxu0
    %v5478 = vadd.f32 0.0, %v5477
    %v5479 = vpop.f32.mrb[0].mxu0
    %v5480 = vpop.f32.mrb[0].mxu0
    %v5481 = vadd.f32 0.0, %v5480
    %v5482 = vpop.f32.mrb[0].mxu0
    %5483 = vmatprep.mubr.bf16.mxu0 0
    %5484 = vmatmul.mubr.bf16.gmra.mrb[0].mxu0 %v5024
    %v5485 = vpop.f32.mrb[0].mxu0
    %v5486 = vadd.f32 0.0, %v5485
    %v5487 = vpop.f32.mrb[0].mxu0
    %v5488 = vpop.f32.mrb[0].mxu0
    %v5489 = vadd.f32 0.0, %v5488
    %v5490 = vpop.f32.mrb[0].mxu0
    %5491 = vmatprep.mubr.bf16.mxu0 0
    %5492 = vmatmul.mubr.bf16.gmra.mrb[0].mxu0 %v5025
    %v5493 = vpop.f32.mrb[0].mxu0
    %v5494 = vadd.f32 0.0, %v5493
    %v5495 = vpop.f32.mrb[0].mxu0
    %v5496 = vpop.f32.mrb[0].mxu0
    %v5497 = vadd.f32 0.0, %v5496
    %v5498 = vpop.f32.mrb[0].mxu0
    %5499 = vmatprep.mubr.bf16.mxu0 0
    %5500 = vmatmul.mubr.bf16.gmra.mrb[0].mxu0 %v5026
    %v5501 = vpop.f32.mrb[0].mxu0
    %v5502 = vadd.f32 0.0, %v5501
    %v5503 = vpop.f32.mrb[0].mxu0
    %v5504 = vpop.f32.mrb[0].mxu0
    %v5505 = vadd.f32 0.0, %v5504
    %v5506 = vpop.f32.mrb[0].mxu0
    %5507 = vmatprep.mubr.bf16.mxu0 0
    %5508 = vmatmul.mubr.bf16.gmra.mrb[0].mxu0 %v5027
    %v5509 = vpop.f32.mrb[0].mxu0
    %v5510 = vadd.f32 0.0, %v5509
    %v5511 = vpop.f32.mrb[0].mxu0
    %v5512 = vpop.f32.mrb[0].mxu0
    %v5513 = vadd.f32 0.0, %v5512
    %v5514 = vpop.f32.mrb[0].mxu0
    %5515 = vmatprep.mubr.bf16.mxu0 0
    %5516 = vmatmul.mubr.bf16.gmra.mrb[0].mxu0 %v5028
    %v5517 = vpop.f32.mrb[0].mxu0
    %v5518 = vadd.f32 0.0, %v5517
    %v5519 = vpop.f32.mrb[0].mxu0
    %v5520 = vpop.f32.mrb[0].mxu0
    %v5521 = vadd.f32 0.0, %v5520
    %v5522 = vpop.f32.mrb[0].mxu0
    %5523 = vmatprep.mubr.bf16.mxu0 0
    %5524 = vmatmul.mubr.bf16.gmra.mrb[0].mxu0 %v5029
    %v5525 = vpop.f32.mrb[0].mxu0
    %v5526 = vadd.f32 0.0, %v5525
    %v5527 = vpop.f32.mrb[0].mxu0
    %v5528 = vpop.f32.mrb[0].mxu0
    %v5529 = vadd.f32 0.0, %v5528
    %v5530 = vpop.f32.mrb[0].mxu0
    %5531 = vmatprep.mubr.bf16.mxu0 0
    %5532 = vmatmul.mubr.bf16.gmra.mrb[0].mxu0 %v5030
    %v5533 = vpop.f32.mrb[0].mxu0
    %v5534 = vadd.f32 0.0, %v5533
    %v5535 = vpop.f32.mrb[0].mxu0
    %v5536 = vpop.f32.mrb[0].mxu0
    %v5537 = vadd.f32 0.0, %v5536
    %v5538 = vpop.f32.mrb[0].mxu0
    %5539 = vmatprep.mubr.bf16.mxu0 0
    %5540 = vmatmul.mubr.bf16.gmra.mrb[0].mxu0 %v5031
    %v5541 = vpop.f32.mrb[0].mxu0
    %v5542 = vadd.f32 0.0, %v5541
    %v5543 = vpop.f32.mrb[0].mxu0
    %v5544 = vpop.f32.mrb[0].mxu0
    %v5545 = vadd.f32 0.0, %v5544
    %v5546 = vpop.f32.mrb[0].mxu0
    %5547 = vmatprep.mubr.bf16.mxu0 0
    %5548 = vmatmul.mubr.bf16.gmra.mrb[0].mxu0 %v5032
    %v5549 = vpop.f32.mrb[0].mxu0
    %v5550 = vadd.f32 0.0, %v5549
    %v5551 = vpop.f32.mrb[0].mxu0
    %v5552 = vpop.f32.mrb[0].mxu0
    %v5553 = vadd.f32 0.0, %v5552
    %v5554 = vpop.f32.mrb[0].mxu0
    %5555 = vmatprep.mubr.bf16.mxu0 0
    %5556 = vmatmul.mubr.bf16.gmra.mrb[0].mxu0 %v5033
    %v5557 = vpop.f32.mrb[0].mxu0
    %v5558 = vadd.f32 0.0, %v5557
    %v5559 = vpop.f32.mrb[0].mxu0
    %v5560 = vpop.f32.mrb[0].mxu0
    %v5561 = vadd.f32 0.0, %v5560
    %v5562 = vpop.f32.mrb[0].mxu0
    %5563 = vdwg.mxu0
    %v5564 = vadd.f32 %v4764, %v5134
    %v5565 = vadd.f32 %v4765, %v5137
    %v5566 = vadd.f32 %v4766, %v5142
    %v5567 = vadd.f32 %v4767, %v5145
    %v5568 = vadd.f32 %v4768, %v5150
    %v5569 = vadd.f32 %v4769, %v5153
    %v5570 = vadd.f32 %v4770, %v5158
    %v5571 = vadd.f32 %v4771, %v5161
    %v5572 = vadd.f32 %v4772, %v5166
    %v5573 = vadd.f32 %v4773, %v5169
    %v5574 = vadd.f32 %v4774, %v5174
    %v5575 = vadd.f32 %v4775, %v5177
    %v5576 = vadd.f32 %v4776, %v5182
    %v5577 = vadd.f32 %v4777, %v5185
    %v5578 = vadd.f32 %v4778, %v5190
    %v5579 = vadd.f32 %v4779, %v5193
    %v5580 = vadd.f32 %v4780, %v5198
    %v5581 = vadd.f32 %v4781, %v5201
    %v5582 = vadd.f32 %v4782, %v5206
    %v5583 = vadd.f32 %v4783, %v5209
    %v5584 = vadd.f32 %v4784, %v5214
    %v5585 = vadd.f32 %v4785, %v5217
    %v5586 = vadd.f32 %v4786, %v5222
    %v5587 = vadd.f32 %v4787, %v5225
    %v5588 = vadd.f32 %v4788, %v5230
    %v5589 = vadd.f32 %v4789, %v5233
    %v5590 = vadd.f32 %v4790, %v5238
    %v5591 = vadd.f32 %v4791, %v5241
    %v5592 = vadd.f32 %v4792, %v5246
    %v5593 = vadd.f32 %v4793, %v5249
    %v5594 = vadd.f32 %v4794, %v5254
    %v5595 = vadd.f32 %v4795, %v5257
    %v5596 = vadd.f32 %v4796, %v5262
    %v5597 = vadd.f32 %v4797, %v5265
    %v5598 = vadd.f32 %v4798, %v5270
    %v5599 = vadd.f32 %v4799, %v5273
    %v5600 = vadd.f32 %v4800, %v5278
    %v5601 = vadd.f32 %v4801, %v5281
    %v5602 = vadd.f32 %v4802, %v5286
    %v5603 = vadd.f32 %v4803, %v5289
    %v5604 = vadd.f32 %v4804, %v5294
    %v5605 = vadd.f32 %v4805, %v5297
    %v5606 = vadd.f32 %v4806, %v5302
    %v5607 = vadd.f32 %v4807, %v5305
    %v5608 = vadd.f32 %v4808, %v5310
    %v5609 = vadd.f32 %v4809, %v5313
    %v5610 = vadd.f32 %v4810, %v5318
    %v5611 = vadd.f32 %v4811, %v5321
    %v5612 = vadd.f32 %v4812, %v5326
    %v5613 = vadd.f32 %v4813, %v5329
    %v5614 = vadd.f32 %v4814, %v5334
    %v5615 = vadd.f32 %v4815, %v5337
    %v5616 = vadd.f32 %v4816, %v5342
    %v5617 = vadd.f32 %v4817, %v5345
    %v5618 = vadd.f32 %v4818, %v5350
    %v5619 = vadd.f32 %v4819, %v5353
    %v5620 = vadd.f32 %v4820, %v5358
    %v5621 = vadd.f32 %v4821, %v5361
    %v5622 = vadd.f32 %v4822, %v5366
    %v5623 = vadd.f32 %v4823, %v5369
    %v5624 = vadd.f32 %v4824, %v5374
    %v5625 = vadd.f32 %v4825, %v5377
    %v5626 = vadd.f32 %v4826, %v5382
    %v5627 = vadd.f32 %v4827, %v5385
    %v5628 = vadd.f32 %v4828, %v5390
    %v5629 = vadd.f32 %v4829, %v5393
    %v5630 = vadd.f32 %v4830, %v5398
    %v5631 = vadd.f32 %v4831, %v5401
    %v5632 = vadd.f32 %v4832, %v5406
    %v5633 = vadd.f32 %v4833, %v5409
    %v5634 = vadd.f32 %v4834, %v5414
    %v5635 = vadd.f32 %v4835, %v5417
    %v5636 = vadd.f32 %v4836, %v5422
    %v5637 = vadd.f32 %v4837, %v5425
    %v5638 = vadd.f32 %v4838, %v5430
    %v5639 = vadd.f32 %v4839, %v5433
    %v5640 = vadd.f32 %v4840, %v5438
    %v5641 = vadd.f32 %v4841, %v5441
    %v5642 = vadd.f32 %v4842, %v5446
    %v5643 = vadd.f32 %v4843, %v5449
    %v5644 = vadd.f32 %v4844, %v5454
    %v5645 = vadd.f32 %v4845, %v5457
    %v5646 = vadd.f32 %v4846, %v5462
    %v5647 = vadd.f32 %v4847, %v5465
    %v5648 = vadd.f32 %v4848, %v5470
    %v5649 = vadd.f32 %v4849, %v5473
    %v5650 = vadd.f32 %v4850, %v5478
    %v5651 = vadd.f32 %v4851, %v5481
    %v5652 = vadd.f32 %v4852, %v5486
    %v5653 = vadd.f32 %v4853, %v5489
    %v5654 = vadd.f32 %v4854, %v5494
    %v5655 = vadd.f32 %v4855, %v5497
    %v5656 = vadd.f32 %v4856, %v5502
    %v5657 = vadd.f32 %v4857, %v5505
    %v5658 = vadd.f32 %v4858, %v5510
    %v5659 = vadd.f32 %v4859, %v5513
    %v5660 = vadd.f32 %v4860, %v5518
    %v5661 = vadd.f32 %v4861, %v5521
    %v5662 = vadd.f32 %v4862, %v5526
    %v5663 = vadd.f32 %v4863, %v5529
    %v5664 = vadd.f32 %v4864, %v5534
    %v5665 = vadd.f32 %v4865, %v5537
    %v5666 = vadd.f32 %v4866, %v5542
    %v5667 = vadd.f32 %v4867, %v5545
    %v5668 = vadd.f32 %v4868, %v5550
    %v5669 = vadd.f32 %v4869, %v5553
    %v5670 = vadd.f32 %v4870, %v5558
    %v5671 = vadd.f32 %v4871, %v5561
    %v5672 = vld [vmem:[#allocation2 + $0x20] sm:$0xff]
    %v5673 = vld [vmem:[#allocation2 + $0x28] sm:$0xff]
    %v5674 = vld [vmem:[#allocation2 + $0x30] sm:$0xff]
    %v5675 = vld [vmem:[#allocation2 + $0x38] sm:$0xff]
    %v5676 = vld [vmem:[#allocation2 + $0x40] sm:$0xff]
    %v5677 = vld [vmem:[#allocation2 + $0x48] sm:$0xff]
    %v5678 = vld [vmem:[#allocation2 + $0x50] sm:$0xff]
    %v5679 = vld [vmem:[#allocation2 + $0x58] sm:$0xff]
    %v5680 = vld [vmem:[#allocation2 + $0x60] sm:$0xff]
    %v5681 = vld [vmem:[#allocation2 + $0x68] sm:$0xff]
    %v5682 = vld [vmem:[#allocation2 + $0x70] sm:$0xff]
    %v5683 = vld [vmem:[#allocation2 + $0x78] sm:$0xff]
    %v5684 = vld [vmem:[#allocation2 + $0x80] sm:$0xff]
    %v5685 = vld [vmem:[#allocation2 + $0x88] sm:$0xff]
    %v5686 = vld [vmem:[#allocation2 + $0x90] sm:$0xff]
    %v5687 = vld [vmem:[#allocation2 + $0x98] sm:$0xff]
    %v5688 = vld [vmem:[#allocation2 + $0xa0] sm:$0xff]
    %v5689 = vld [vmem:[#allocation2 + $0xa8] sm:$0xff]
    %v5690 = vld [vmem:[#allocation2 + $0xb0] sm:$0xff]
    %v5691 = vld [vmem:[#allocation2 + $0xb8] sm:$0xff]
    %v5692 = vld [vmem:[#allocation2 + $0xc0] sm:$0xff]
    %v5693 = vld [vmem:[#allocation2 + $0xc8] sm:$0xff]
    %v5694 = vld [vmem:[#allocation2 + $0xd0] sm:$0xff]
    %v5695 = vld [vmem:[#allocation2 + $0xd8] sm:$0xff]
    %v5696 = vld [vmem:[#allocation2 + $0xe0] sm:$0xff]
    %v5697 = vld [vmem:[#allocation2 + $0xe8] sm:$0xff]
    %v5698 = vld [vmem:[#allocation2 + $0xf0] sm:$0xff]
    %v5699 = vld [vmem:[#allocation2 + $0xf8] sm:$0xff]
    %v5700 = vld [vmem:[#allocation2 + $0x100] sm:$0xff]
    %v5701 = vld [vmem:[#allocation2 + $0x108] sm:$0xff]
    %v5702 = vld [vmem:[#allocation2 + $0x110] sm:$0xff]
    %v5703 = vld [vmem:[#allocation2 + $0x118] sm:$0xff]
    %v5704 = vld [vmem:[#allocation2 + $0x120] sm:$0xff]
    %v5705 = vld [vmem:[#allocation2 + $0x128] sm:$0xff]
    %v5706 = vld [vmem:[#allocation2 + $0x130] sm:$0xff]
    %v5707 = vld [vmem:[#allocation2 + $0x138] sm:$0xff]
    %v5708 = vld [vmem:[#allocation2 + $0x140] sm:$0xff]
    %v5709 = vld [vmem:[#allocation2 + $0x148] sm:$0xff]
    %v5710 = vld [vmem:[#allocation2 + $0x150] sm:$0xff]
    %v5711 = vld [vmem:[#allocation2 + $0x158] sm:$0xff]
    %v5712 = vld [vmem:[#allocation2 + $0x160] sm:$0xff]
    %v5713 = vld [vmem:[#allocation2 + $0x168] sm:$0xff]
    %v5714 = vld [vmem:[#allocation2 + $0x170] sm:$0xff]
    %v5715 = vld [vmem:[#allocation2 + $0x178] sm:$0xff]
    %v5716 = vld [vmem:[#allocation2 + $0x180] sm:$0xff]
    %v5717 = vld [vmem:[#allocation2 + $0x188] sm:$0xff]
    %v5718 = vld [vmem:[#allocation2 + $0x190] sm:$0xff]
    %v5719 = vld [vmem:[#allocation2 + $0x198] sm:$0xff]
    %v5720 = vld [vmem:[#allocation2 + $0x1a0] sm:$0xff]
    %v5721 = vld [vmem:[#allocation2 + $0x1a8] sm:$0xff]
    %v5722 = vld [vmem:[#allocation2 + $0x1b0] sm:$0xff]
    %v5723 = vld [vmem:[#allocation2 + $0x1b8] sm:$0xff]
    %v5724 = vld [vmem:[#allocation2 + $0x1c0] sm:$0xff]
    %v5725 = vld [vmem:[#allocation2 + $0x1c8] sm:$0xff]
    %v5726 = vld [vmem:[#allocation2 + $0x1d0] sm:$0xff]
    %v5727 = vld [vmem:[#allocation2 + $0x1d8] sm:$0xff]
    %v5728 = vld [vmem:[#allocation2 + $0x1e0] sm:$0xff]
    %v5729 = vld [vmem:[#allocation2 + $0x1e8] sm:$0xff]
    %v5730 = vld [vmem:[#allocation2 + $0x1f0] sm:$0xff]
    %v5731 = vld [vmem:[#allocation2 + $0x1f8] sm:$0xff]
    %v5732 = vld [vmem:[#allocation2 + $0x200] sm:$0xff]
    %v5733 = vld [vmem:[#allocation2 + $0x208] sm:$0xff]
    %v5734 = vld [vmem:[#allocation2 + $0x210] sm:$0xff]
    %v5735 = vld [vmem:[#allocation2 + $0x218] sm:$0xff]
    %v5736 = vld [vmem:[#allocation2 + $0x220] sm:$0xff]
    %v5737 = vld [vmem:[#allocation2 + $0x228] sm:$0xff]
    %v5738 = vld [vmem:[#allocation2 + $0x230] sm:$0xff]
    %v5739 = vld [vmem:[#allocation2 + $0x238] sm:$0xff]
    %v5740 = vld [vmem:[#allocation2 + $0x240] sm:$0xff]
    %v5741 = vld [vmem:[#allocation2 + $0x248] sm:$0xff]
    %v5742 = vld [vmem:[#allocation2 + $0x250] sm:$0xff]
    %v5743 = vld [vmem:[#allocation2 + $0x258] sm:$0xff]
    %v5744 = vld [vmem:[#allocation2 + $0x260] sm:$0xff]
    %v5745 = vld [vmem:[#allocation2 + $0x268] sm:$0xff]
    %v5746 = vld [vmem:[#allocation2 + $0x270] sm:$0xff]
    %v5747 = vld [vmem:[#allocation2 + $0x278] sm:$0xff]
    %v5748 = vld [vmem:[#allocation2 + $0x280] sm:$0xff]
    %v5749 = vld [vmem:[#allocation2 + $0x288] sm:$0xff]
    %v5750 = vld [vmem:[#allocation2 + $0x290] sm:$0xff]
    %v5751 = vld [vmem:[#allocation2 + $0x298] sm:$0xff]
    %v5752 = vld [vmem:[#allocation2 + $0x2a0] sm:$0xff]
    %v5753 = vld [vmem:[#allocation2 + $0x2a8] sm:$0xff]
    %v5754 = vld [vmem:[#allocation2 + $0x2b0] sm:$0xff]
    %v5755 = vld [vmem:[#allocation2 + $0x2b8] sm:$0xff]
    %v5756 = vld [vmem:[#allocation2 + $0x2c0] sm:$0xff]
    %v5757 = vld [vmem:[#allocation2 + $0x2c8] sm:$0xff]
    %v5758 = vld [vmem:[#allocation2 + $0x2d0] sm:$0xff]
    %v5759 = vld [vmem:[#allocation2 + $0x2d8] sm:$0xff]
    %v5760 = vld [vmem:[#allocation2 + $0x2e0] sm:$0xff]
    %v5761 = vld [vmem:[#allocation2 + $0x2e8] sm:$0xff]
    %v5762 = vld [vmem:[#allocation2 + $0x2f0] sm:$0xff]
    %v5763 = vld [vmem:[#allocation2 + $0x2f8] sm:$0xff]
    %v5764 = vld [vmem:[#allocation2 + $0x300] sm:$0xff]
    %v5765 = vld [vmem:[#allocation2 + $0x308] sm:$0xff]
    %v5766 = vld [vmem:[#allocation2 + $0x310] sm:$0xff]
    %v5767 = vld [vmem:[#allocation2 + $0x318] sm:$0xff]
    %v5768 = vld [vmem:[#allocation2 + $0x320] sm:$0xff]
    %v5769 = vld [vmem:[#allocation2 + $0x328] sm:$0xff]
    %v5770 = vld [vmem:[#allocation2 + $0x330] sm:$0xff]
    %v5771 = vld [vmem:[#allocation2 + $0x338] sm:$0xff]
    %v5772 = vld [vmem:[#allocation2 + $0x340] sm:$0xff]
    %v5773 = vld [vmem:[#allocation2 + $0x348] sm:$0xff]
    %v5774 = vld [vmem:[#allocation2 + $0x350] sm:$0xff]
    %v5775 = vld [vmem:[#allocation2 + $0x358] sm:$0xff]
    %v5776 = vld [vmem:[#allocation2 + $0x360] sm:$0xff]
    %v5777 = vld [vmem:[#allocation2 + $0x368] sm:$0xff]
    %v5778 = vld [vmem:[#allocation2 + $0x370] sm:$0xff]
    %v5779 = vld [vmem:[#allocation2 + $0x378] sm:$0xff]
    %v5780 = vpack.c.bf16 %v5673, %v5672
    %v5781 = vpack.c.bf16 %v5675, %v5674
    %v5782 = vpack.c.bf16 %v5677, %v5676
    %v5783 = vpack.c.bf16 %v5679, %v5678
    %v5784 = vpack.c.bf16 %v5681, %v5680
    %v5785 = vpack.c.bf16 %v5683, %v5682
    %v5786 = vpack.c.bf16 %v5685, %v5684
    %v5787 = vpack.c.bf16 %v5687, %v5686
    %v5788 = vpack.c.bf16 %v5689, %v5688
    %v5789 = vpack.c.bf16 %v5691, %v5690
    %v5790 = vpack.c.bf16 %v5693, %v5692
    %v5791 = vpack.c.bf16 %v5695, %v5694
    %v5792 = vpack.c.bf16 %v5697, %v5696
    %v5793 = vpack.c.bf16 %v5699, %v5698
    %v5794 = vpack.c.bf16 %v5701, %v5700
    %v5795 = vpack.c.bf16 %v5703, %v5702
    %v5796 = vpack.c.bf16 %v5705, %v5704
    %v5797 = vpack.c.bf16 %v5707, %v5706
    %v5798 = vpack.c.bf16 %v5709, %v5708
    %v5799 = vpack.c.bf16 %v5711, %v5710
    %v5800 = vpack.c.bf16 %v5713, %v5712
    %v5801 = vpack.c.bf16 %v5715, %v5714
    %v5802 = vpack.c.bf16 %v5717, %v5716
    %v5803 = vpack.c.bf16 %v5719, %v5718
    %v5804 = vpack.c.bf16 %v5721, %v5720
    %v5805 = vpack.c.bf16 %v5723, %v5722
    %v5806 = vpack.c.bf16 %v5725, %v5724
    %v5807 = vpack.c.bf16 %v5727, %v5726
    %v5808 = vpack.c.bf16 %v5729, %v5728
    %v5809 = vpack.c.bf16 %v5731, %v5730
    %v5810 = vpack.c.bf16 %v5733, %v5732
    %v5811 = vpack.c.bf16 %v5735, %v5734
    %v5812 = vpack.c.bf16 %v5737, %v5736
    %v5813 = vpack.c.bf16 %v5739, %v5738
    %v5814 = vpack.c.bf16 %v5741, %v5740
    %v5815 = vpack.c.bf16 %v5743, %v5742
    %v5816 = vpack.c.bf16 %v5745, %v5744
    %v5817 = vpack.c.bf16 %v5747, %v5746
    %v5818 = vpack.c.bf16 %v5749, %v5748
    %v5819 = vpack.c.bf16 %v5751, %v5750
    %v5820 = vpack.c.bf16 %v5753, %v5752
    %v5821 = vpack.c.bf16 %v5755, %v5754
    %v5822 = vpack.c.bf16 %v5757, %v5756
    %v5823 = vpack.c.bf16 %v5759, %v5758
    %v5824 = vpack.c.bf16 %v5761, %v5760
    %v5825 = vpack.c.bf16 %v5763, %v5762
    %v5826 = vpack.c.bf16 %v5765, %v5764
    %v5827 = vpack.c.bf16 %v5767, %v5766
    %v5828 = vpack.c.bf16 %v5769, %v5768
    %v5829 = vpack.c.bf16 %v5771, %v5770
    %v5830 = vpack.c.bf16 %v5773, %v5772
    %v5831 = vpack.c.bf16 %v5775, %v5774
    %v5832 = vpack.c.bf16 %v5777, %v5776
    %v5833 = vpack.c.bf16 %v5779, %v5778
    %s5834 = scalar_lea.vmem %s3, 256
    %v5835 = vld [vmem:[%s5834] sm:$0xf]
    %v5836 = vld [vmem:[%s5834 + $0x4] sm:$0xf]
    %v5837 = vld [vmem:[%s5834 + $0x8] sm:$0xf]
    %v5838 = vld [vmem:[%s5834 + $0xc] sm:$0xf]
    %v5839 = vld [vmem:[%s5834 + $0x10] sm:$0xf]
    %v5840 = vld [vmem:[%s5834 + $0x14] sm:$0xf]
    %v5841 = vld [vmem:[%s5834 + $0x18] sm:$0xf]
    %v5842 = vld [vmem:[%s5834 + $0x1c] sm:$0xf]
    %v5843 = vld [vmem:[%s5834 + $0x20] sm:$0xf]
    %v5844 = vld [vmem:[%s5834 + $0x24] sm:$0xf]
    %v5845 = vld [vmem:[%s5834 + $0x28] sm:$0xf]
    %v5846 = vld [vmem:[%s5834 + $0x2c] sm:$0xf]
    %v5847 = vld [vmem:[%s5834 + $0x30] sm:$0xf]
    %v5848 = vld [vmem:[%s5834 + $0x34] sm:$0xf]
    %v5849 = vld [vmem:[%s5834 + $0x38] sm:$0xf]
    %v5850 = vld [vmem:[%s5834 + $0x3c] sm:$0xf]
    %v5867 = vunpack.c.l.b16 %v5835
    %v5868 = vunpack.c.l.b16 %v5836
    %v5869 = vunpack.c.l.b16 %v5837
    %v5870 = vunpack.c.l.b16 %v5838
    %v5871 = vunpack.c.l.b16 %v5839
    %v5872 = vunpack.c.l.b16 %v5840
    %v5873 = vunpack.c.l.b16 %v5841
    %v5874 = vunpack.c.l.b16 %v5842
    %v5875 = vunpack.c.l.b16 %v5843
    %v5876 = vunpack.c.l.b16 %v5844
    %v5877 = vunpack.c.l.b16 %v5845
    %v5878 = vunpack.c.l.b16 %v5846
    %v5879 = vunpack.c.l.b16 %v5847
    %v5880 = vunpack.c.l.b16 %v5848
    %v5881 = vunpack.c.l.b16 %v5849
    %v5882 = vunpack.c.l.b16 %v5850
    %v5883 = vpack.c.b16 %v5868, %v5867
    %v5884 = vpack.c.b16 %v5870, %v5869
    %v5885 = vpack.c.b16 %v5872, %v5871
    %v5886 = vpack.c.b16 %v5874, %v5873
    %v5887 = vpack.c.b16 %v5876, %v5875
    %v5888 = vpack.c.b16 %v5878, %v5877
    %v5889 = vpack.c.b16 %v5880, %v5879
    %v5890 = vpack.c.b16 %v5882, %v5881
    %5899 = vmatprep.subr.bf16.mxu0 0
    %5900 = vmatpush1.bf16.msra.mxu0 %v5883
    %5901 = vmatprep.subr.bf16.mxu0 0
    %5902 = vmatpush1.bf16.msra.mxu0 %v5884
    %5903 = vmatprep.subr.bf16.mxu0 0
    %5904 = vmatpush1.bf16.msra.mxu0 %v5885
    %5905 = vmatprep.subr.bf16.mxu0 0
    %5906 = vmatpush1.bf16.msra.mxu0 %v5886
    %5907 = vmatprep.subr.bf16.mxu0 0
    %5908 = vmatpush1.bf16.msra.mxu0 %v5887
    %5909 = vmatprep.subr.bf16.mxu0 0
    %5910 = vmatpush1.bf16.msra.mxu0 %v5888
    %5911 = vmatprep.subr.bf16.mxu0 0
    %5912 = vmatpush1.bf16.msra.mxu0 %v5889
    %5913 = vmatprep.subr.bf16.mxu0 0
    %5914 = vmatpush1.bf16.msra.mxu0 %v5890
    %5915 = vmatprep.subr.bf16.mxu0 0
    %5916 = vmatpush1.bf16.msra.mxu0 0
    %5917 = vmatprep.subr.bf16.mxu0 0
    %5918 = vmatpush1.bf16.msra.mxu0 0
    %5919 = vmatprep.subr.bf16.mxu0 0
    %5920 = vmatpush1.bf16.msra.mxu0 0
    %5921 = vmatprep.subr.bf16.mxu0 0
    %5922 = vmatpush1.bf16.msra.mxu0 0
    %5923 = vmatprep.subr.bf16.mxu0 0
    %5924 = vmatpush1.bf16.msra.mxu0 0
    %5925 = vmatprep.subr.bf16.mxu0 0
    %5926 = vmatpush1.bf16.msra.mxu0 0
    %5927 = vmatprep.subr.bf16.mxu0 0
    %5928 = vmatpush1.bf16.msra.mxu0 0
    %5929 = vmatprep.subr.bf16.mxu0 0
    %5930 = vmatpush1.bf16.msra.mxu0 0
    %5931 = vmatprep.mubr.bf16.mxu0 0
    %5932 = vmatmul.mubr.bf16.gmra.mrb[0].mxu0 %v5780
    %v5933 = vpop.f32.mrb[0].mxu0
    %v5934 = vadd.f32 0.0, %v5933
    %v5935 = vpop.f32.mrb[0].mxu0
    %v5936 = vpop.f32.mrb[0].mxu0
    %v5937 = vadd.f32 0.0, %v5936
    %v5938 = vpop.f32.mrb[0].mxu0
    %5939 = vmatprep.mubr.bf16.mxu0 0
    %5940 = vmatmul.mubr.bf16.gmra.mrb[0].mxu0 %v5781
    %v5941 = vpop.f32.mrb[0].mxu0
    %v5942 = vadd.f32 0.0, %v5941
    %v5943 = vpop.f32.mrb[0].mxu0
    %v5944 = vpop.f32.mrb[0].mxu0
    %v5945 = vadd.f32 0.0, %v5944
    %v5946 = vpop.f32.mrb[0].mxu0
    %5947 = vmatprep.mubr.bf16.mxu0 0
    %5948 = vmatmul.mubr.bf16.gmra.mrb[0].mxu0 %v5782
    %v5949 = vpop.f32.mrb[0].mxu0
    %v5950 = vadd.f32 0.0, %v5949
    %v5951 = vpop.f32.mrb[0].mxu0
    %v5952 = vpop.f32.mrb[0].mxu0
    %v5953 = vadd.f32 0.0, %v5952
    %v5954 = vpop.f32.mrb[0].mxu0
    %5955 = vmatprep.mubr.bf16.mxu0 0
    %5956 = vmatmul.mubr.bf16.gmra.mrb[0].mxu0 %v5783
    %v5957 = vpop.f32.mrb[0].mxu0
    %v5958 = vadd.f32 0.0, %v5957
    %v5959 = vpop.f32.mrb[0].mxu0
    %v5960 = vpop.f32.mrb[0].mxu0
    %v5961 = vadd.f32 0.0, %v5960
    %v5962 = vpop.f32.mrb[0].mxu0
    %5963 = vmatprep.mubr.bf16.mxu0 0
    %5964 = vmatmul.mubr.bf16.gmra.mrb[0].mxu0 %v5784
    %v5965 = vpop.f32.mrb[0].mxu0
    %v5966 = vadd.f32 0.0, %v5965
    %v5967 = vpop.f32.mrb[0].mxu0
    %v5968 = vpop.f32.mrb[0].mxu0
    %v5969 = vadd.f32 0.0, %v5968
    %v5970 = vpop.f32.mrb[0].mxu0
    %5971 = vmatprep.mubr.bf16.mxu0 0
    %5972 = vmatmul.mubr.bf16.gmra.mrb[0].mxu0 %v5785
    %v5973 = vpop.f32.mrb[0].mxu0
    %v5974 = vadd.f32 0.0, %v5973
    %v5975 = vpop.f32.mrb[0].mxu0
    %v5976 = vpop.f32.mrb[0].mxu0
    %v5977 = vadd.f32 0.0, %v5976
    %v5978 = vpop.f32.mrb[0].mxu0
    %5979 = vmatprep.mubr.bf16.mxu0 0
    %5980 = vmatmul.mubr.bf16.gmra.mrb[0].mxu0 %v5786
    %v5981 = vpop.f32.mrb[0].mxu0
    %v5982 = vadd.f32 0.0, %v5981
    %v5983 = vpop.f32.mrb[0].mxu0
    %v5984 = vpop.f32.mrb[0].mxu0
    %v5985 = vadd.f32 0.0, %v5984
    %v5986 = vpop.f32.mrb[0].mxu0
    %5987 = vmatprep.mubr.bf16.mxu0 0
    %5988 = vmatmul.mubr.bf16.gmra.mrb[0].mxu0 %v5787
    %v5989 = vpop.f32.mrb[0].mxu0
    %v5990 = vadd.f32 0.0, %v5989
    %v5991 = vpop.f32.mrb[0].mxu0
    %v5992 = vpop.f32.mrb[0].mxu0
    %v5993 = vadd.f32 0.0, %v5992
    %v5994 = vpop.f32.mrb[0].mxu0
    %5995 = vmatprep.mubr.bf16.mxu0 0
    %5996 = vmatmul.mubr.bf16.gmra.mrb[0].mxu0 %v5788
    %v5997 = vpop.f32.mrb[0].mxu0
    %v5998 = vadd.f32 0.0, %v5997
    %v5999 = vpop.f32.mrb[0].mxu0
    %v6000 = vpop.f32.mrb[0].mxu0
    %v6001 = vadd.f32 0.0, %v6000
    %v6002 = vpop.f32.mrb[0].mxu0
    %6003 = vmatprep.mubr.bf16.mxu0 0
    %6004 = vmatmul.mubr.bf16.gmra.mrb[0].mxu0 %v5789
    %v6005 = vpop.f32.mrb[0].mxu0
    %v6006 = vadd.f32 0.0, %v6005
    %v6007 = vpop.f32.mrb[0].mxu0
    %v6008 = vpop.f32.mrb[0].mxu0
    %v6009 = vadd.f32 0.0, %v6008
    %v6010 = vpop.f32.mrb[0].mxu0
    %6011 = vmatprep.mubr.bf16.mxu0 0
    %6012 = vmatmul.mubr.bf16.gmra.mrb[0].mxu0 %v5790
    %v6013 = vpop.f32.mrb[0].mxu0
    %v6014 = vadd.f32 0.0, %v6013
    %v6015 = vpop.f32.mrb[0].mxu0
    %v6016 = vpop.f32.mrb[0].mxu0
    %v6017 = vadd.f32 0.0, %v6016
    %v6018 = vpop.f32.mrb[0].mxu0
    %6019 = vmatprep.mubr.bf16.mxu0 0
    %6020 = vmatmul.mubr.bf16.gmra.mrb[0].mxu0 %v5791
    %v6021 = vpop.f32.mrb[0].mxu0
    %v6022 = vadd.f32 0.0, %v6021
    %v6023 = vpop.f32.mrb[0].mxu0
    %v6024 = vpop.f32.mrb[0].mxu0
    %v6025 = vadd.f32 0.0, %v6024
    %v6026 = vpop.f32.mrb[0].mxu0
    %6027 = vmatprep.mubr.bf16.mxu0 0
    %6028 = vmatmul.mubr.bf16.gmra.mrb[0].mxu0 %v5792
    %v6029 = vpop.f32.mrb[0].mxu0
    %v6030 = vadd.f32 0.0, %v6029
    %v6031 = vpop.f32.mrb[0].mxu0
    %v6032 = vpop.f32.mrb[0].mxu0
    %v6033 = vadd.f32 0.0, %v6032
    %v6034 = vpop.f32.mrb[0].mxu0
    %6035 = vmatprep.mubr.bf16.mxu0 0
    %6036 = vmatmul.mubr.bf16.gmra.mrb[0].mxu0 %v5793
    %v6037 = vpop.f32.mrb[0].mxu0
    %v6038 = vadd.f32 0.0, %v6037
    %v6039 = vpop.f32.mrb[0].mxu0
    %v6040 = vpop.f32.mrb[0].mxu0
    %v6041 = vadd.f32 0.0, %v6040
    %v6042 = vpop.f32.mrb[0].mxu0
    %6043 = vmatprep.mubr.bf16.mxu0 0
    %6044 = vmatmul.mubr.bf16.gmra.mrb[0].mxu0 %v5794
    %v6045 = vpop.f32.mrb[0].mxu0
    %v6046 = vadd.f32 0.0, %v6045
    %v6047 = vpop.f32.mrb[0].mxu0
    %v6048 = vpop.f32.mrb[0].mxu0
    %v6049 = vadd.f32 0.0, %v6048
    %v6050 = vpop.f32.mrb[0].mxu0
    %6051 = vmatprep.mubr.bf16.mxu0 0
    %6052 = vmatmul.mubr.bf16.gmra.mrb[0].mxu0 %v5795
    %v6053 = vpop.f32.mrb[0].mxu0
    %v6054 = vadd.f32 0.0, %v6053
    %v6055 = vpop.f32.mrb[0].mxu0
    %v6056 = vpop.f32.mrb[0].mxu0
    %v6057 = vadd.f32 0.0, %v6056
    %v6058 = vpop.f32.mrb[0].mxu0
    %6059 = vmatprep.mubr.bf16.mxu0 0
    %6060 = vmatmul.mubr.bf16.gmra.mrb[0].mxu0 %v5796
    %v6061 = vpop.f32.mrb[0].mxu0
    %v6062 = vadd.f32 0.0, %v6061
    %v6063 = vpop.f32.mrb[0].mxu0
    %v6064 = vpop.f32.mrb[0].mxu0
    %v6065 = vadd.f32 0.0, %v6064
    %v6066 = vpop.f32.mrb[0].mxu0
    %6067 = vmatprep.mubr.bf16.mxu0 0
    %6068 = vmatmul.mubr.bf16.gmra.mrb[0].mxu0 %v5797
    %v6069 = vpop.f32.mrb[0].mxu0
    %v6070 = vadd.f32 0.0, %v6069
    %v6071 = vpop.f32.mrb[0].mxu0
    %v6072 = vpop.f32.mrb[0].mxu0
    %v6073 = vadd.f32 0.0, %v6072
    %v6074 = vpop.f32.mrb[0].mxu0
    %6075 = vmatprep.mubr.bf16.mxu0 0
    %6076 = vmatmul.mubr.bf16.gmra.mrb[0].mxu0 %v5798
    %v6077 = vpop.f32.mrb[0].mxu0
    %v6078 = vadd.f32 0.0, %v6077
    %v6079 = vpop.f32.mrb[0].mxu0
    %v6080 = vpop.f32.mrb[0].mxu0
    %v6081 = vadd.f32 0.0, %v6080
    %v6082 = vpop.f32.mrb[0].mxu0
    %6083 = vmatprep.mubr.bf16.mxu0 0
    %6084 = vmatmul.mubr.bf16.gmra.mrb[0].mxu0 %v5799
    %v6085 = vpop.f32.mrb[0].mxu0
    %v6086 = vadd.f32 0.0, %v6085
    %v6087 = vpop.f32.mrb[0].mxu0
    %v6088 = vpop.f32.mrb[0].mxu0
    %v6089 = vadd.f32 0.0, %v6088
    %v6090 = vpop.f32.mrb[0].mxu0
    %6091 = vmatprep.mubr.bf16.mxu0 0
    %6092 = vmatmul.mubr.bf16.gmra.mrb[0].mxu0 %v5800
    %v6093 = vpop.f32.mrb[0].mxu0
    %v6094 = vadd.f32 0.0, %v6093
    %v6095 = vpop.f32.mrb[0].mxu0
    %v6096 = vpop.f32.mrb[0].mxu0
    %v6097 = vadd.f32 0.0, %v6096
    %v6098 = vpop.f32.mrb[0].mxu0
    %6099 = vmatprep.mubr.bf16.mxu0 0
    %6100 = vmatmul.mubr.bf16.gmra.mrb[0].mxu0 %v5801
    %v6101 = vpop.f32.mrb[0].mxu0
    %v6102 = vadd.f32 0.0, %v6101
    %v6103 = vpop.f32.mrb[0].mxu0
    %v6104 = vpop.f32.mrb[0].mxu0
    %v6105 = vadd.f32 0.0, %v6104
    %v6106 = vpop.f32.mrb[0].mxu0
    %6107 = vmatprep.mubr.bf16.mxu0 0
    %6108 = vmatmul.mubr.bf16.gmra.mrb[0].mxu0 %v5802
    %v6109 = vpop.f32.mrb[0].mxu0
    %v6110 = vadd.f32 0.0, %v6109
    %v6111 = vpop.f32.mrb[0].mxu0
    %v6112 = vpop.f32.mrb[0].mxu0
    %v6113 = vadd.f32 0.0, %v6112
    %v6114 = vpop.f32.mrb[0].mxu0
    %6115 = vmatprep.mubr.bf16.mxu0 0
    %6116 = vmatmul.mubr.bf16.gmra.mrb[0].mxu0 %v5803
    %v6117 = vpop.f32.mrb[0].mxu0
    %v6118 = vadd.f32 0.0, %v6117
    %v6119 = vpop.f32.mrb[0].mxu0
    %v6120 = vpop.f32.mrb[0].mxu0
    %v6121 = vadd.f32 0.0, %v6120
    %v6122 = vpop.f32.mrb[0].mxu0
    %6123 = vmatprep.mubr.bf16.mxu0 0
    %6124 = vmatmul.mubr.bf16.gmra.mrb[0].mxu0 %v5804
    %v6125 = vpop.f32.mrb[0].mxu0
    %v6126 = vadd.f32 0.0, %v6125
    %v6127 = vpop.f32.mrb[0].mxu0
    %v6128 = vpop.f32.mrb[0].mxu0
    %v6129 = vadd.f32 0.0, %v6128
    %v6130 = vpop.f32.mrb[0].mxu0
    %6131 = vmatprep.mubr.bf16.mxu0 0
    %6132 = vmatmul.mubr.bf16.gmra.mrb[0].mxu0 %v5805
    %v6133 = vpop.f32.mrb[0].mxu0
    %v6134 = vadd.f32 0.0, %v6133
    %v6135 = vpop.f32.mrb[0].mxu0
    %v6136 = vpop.f32.mrb[0].mxu0
    %v6137 = vadd.f32 0.0, %v6136
    %v6138 = vpop.f32.mrb[0].mxu0
    %6139 = vmatprep.mubr.bf16.mxu0 0
    %6140 = vmatmul.mubr.bf16.gmra.mrb[0].mxu0 %v5806
    %v6141 = vpop.f32.mrb[0].mxu0
    %v6142 = vadd.f32 0.0, %v6141
    %v6143 = vpop.f32.mrb[0].mxu0
    %v6144 = vpop.f32.mrb[0].mxu0
    %v6145 = vadd.f32 0.0, %v6144
    %v6146 = vpop.f32.mrb[0].mxu0
    %6147 = vmatprep.mubr.bf16.mxu0 0
    %6148 = vmatmul.mubr.bf16.gmra.mrb[0].mxu0 %v5807
    %v6149 = vpop.f32.mrb[0].mxu0
    %v6150 = vadd.f32 0.0, %v6149
    %v6151 = vpop.f32.mrb[0].mxu0
    %v6152 = vpop.f32.mrb[0].mxu0
    %v6153 = vadd.f32 0.0, %v6152
    %v6154 = vpop.f32.mrb[0].mxu0
    %6155 = vmatprep.mubr.bf16.mxu0 0
    %6156 = vmatmul.mubr.bf16.gmra.mrb[0].mxu0 %v5808
    %v6157 = vpop.f32.mrb[0].mxu0
    %v6158 = vadd.f32 0.0, %v6157
    %v6159 = vpop.f32.mrb[0].mxu0
    %v6160 = vpop.f32.mrb[0].mxu0
    %v6161 = vadd.f32 0.0, %v6160
    %v6162 = vpop.f32.mrb[0].mxu0
    %6163 = vmatprep.mubr.bf16.mxu0 0
    %6164 = vmatmul.mubr.bf16.gmra.mrb[0].mxu0 %v5809
    %v6165 = vpop.f32.mrb[0].mxu0
    %v6166 = vadd.f32 0.0, %v6165
    %v6167 = vpop.f32.mrb[0].mxu0
    %v6168 = vpop.f32.mrb[0].mxu0
    %v6169 = vadd.f32 0.0, %v6168
    %v6170 = vpop.f32.mrb[0].mxu0
    %6171 = vmatprep.mubr.bf16.mxu0 0
    %6172 = vmatmul.mubr.bf16.gmra.mrb[0].mxu0 %v5810
    %v6173 = vpop.f32.mrb[0].mxu0
    %v6174 = vadd.f32 0.0, %v6173
    %v6175 = vpop.f32.mrb[0].mxu0
    %v6176 = vpop.f32.mrb[0].mxu0
    %v6177 = vadd.f32 0.0, %v6176
    %v6178 = vpop.f32.mrb[0].mxu0
    %6179 = vmatprep.mubr.bf16.mxu0 0
    %6180 = vmatmul.mubr.bf16.gmra.mrb[0].mxu0 %v5811
    %v6181 = vpop.f32.mrb[0].mxu0
    %v6182 = vadd.f32 0.0, %v6181
    %v6183 = vpop.f32.mrb[0].mxu0
    %v6184 = vpop.f32.mrb[0].mxu0
    %v6185 = vadd.f32 0.0, %v6184
    %v6186 = vpop.f32.mrb[0].mxu0
    %6187 = vmatprep.mubr.bf16.mxu0 0
    %6188 = vmatmul.mubr.bf16.gmra.mrb[0].mxu0 %v5812
    %v6189 = vpop.f32.mrb[0].mxu0
    %v6190 = vadd.f32 0.0, %v6189
    %v6191 = vpop.f32.mrb[0].mxu0
    %v6192 = vpop.f32.mrb[0].mxu0
    %v6193 = vadd.f32 0.0, %v6192
    %v6194 = vpop.f32.mrb[0].mxu0
    %6195 = vmatprep.mubr.bf16.mxu0 0
    %6196 = vmatmul.mubr.bf16.gmra.mrb[0].mxu0 %v5813
    %v6197 = vpop.f32.mrb[0].mxu0
    %v6198 = vadd.f32 0.0, %v6197
    %v6199 = vpop.f32.mrb[0].mxu0
    %v6200 = vpop.f32.mrb[0].mxu0
    %v6201 = vadd.f32 0.0, %v6200
    %v6202 = vpop.f32.mrb[0].mxu0
    %6203 = vmatprep.mubr.bf16.mxu0 0
    %6204 = vmatmul.mubr.bf16.gmra.mrb[0].mxu0 %v5814
    %v6205 = vpop.f32.mrb[0].mxu0
    %v6206 = vadd.f32 0.0, %v6205
    %v6207 = vpop.f32.mrb[0].mxu0
    %v6208 = vpop.f32.mrb[0].mxu0
    %v6209 = vadd.f32 0.0, %v6208
    %v6210 = vpop.f32.mrb[0].mxu0
    %6211 = vmatprep.mubr.bf16.mxu0 0
    %6212 = vmatmul.mubr.bf16.gmra.mrb[0].mxu0 %v5815
    %v6213 = vpop.f32.mrb[0].mxu0
    %v6214 = vadd.f32 0.0, %v6213
    %v6215 = vpop.f32.mrb[0].mxu0
    %v6216 = vpop.f32.mrb[0].mxu0
    %v6217 = vadd.f32 0.0, %v6216
    %v6218 = vpop.f32.mrb[0].mxu0
    %6219 = vmatprep.mubr.bf16.mxu0 0
    %6220 = vmatmul.mubr.bf16.gmra.mrb[0].mxu0 %v5816
    %v6221 = vpop.f32.mrb[0].mxu0
    %v6222 = vadd.f32 0.0, %v6221
    %v6223 = vpop.f32.mrb[0].mxu0
    %v6224 = vpop.f32.mrb[0].mxu0
    %v6225 = vadd.f32 0.0, %v6224
    %v6226 = vpop.f32.mrb[0].mxu0
    %6227 = vmatprep.mubr.bf16.mxu0 0
    %6228 = vmatmul.mubr.bf16.gmra.mrb[0].mxu0 %v5817
    %v6229 = vpop.f32.mrb[0].mxu0
    %v6230 = vadd.f32 0.0, %v6229
    %v6231 = vpop.f32.mrb[0].mxu0
    %v6232 = vpop.f32.mrb[0].mxu0
    %v6233 = vadd.f32 0.0, %v6232
    %v6234 = vpop.f32.mrb[0].mxu0
    %6235 = vmatprep.mubr.bf16.mxu0 0
    %6236 = vmatmul.mubr.bf16.gmra.mrb[0].mxu0 %v5818
    %v6237 = vpop.f32.mrb[0].mxu0
    %v6238 = vadd.f32 0.0, %v6237
    %v6239 = vpop.f32.mrb[0].mxu0
    %v6240 = vpop.f32.mrb[0].mxu0
    %v6241 = vadd.f32 0.0, %v6240
    %v6242 = vpop.f32.mrb[0].mxu0
    %6243 = vmatprep.mubr.bf16.mxu0 0
    %6244 = vmatmul.mubr.bf16.gmra.mrb[0].mxu0 %v5819
    %v6245 = vpop.f32.mrb[0].mxu0
    %v6246 = vadd.f32 0.0, %v6245
    %v6247 = vpop.f32.mrb[0].mxu0
    %v6248 = vpop.f32.mrb[0].mxu0
    %v6249 = vadd.f32 0.0, %v6248
    %v6250 = vpop.f32.mrb[0].mxu0
    %6251 = vmatprep.mubr.bf16.mxu0 0
    %6252 = vmatmul.mubr.bf16.gmra.mrb[0].mxu0 %v5820
    %v6253 = vpop.f32.mrb[0].mxu0
    %v6254 = vadd.f32 0.0, %v6253
    %v6255 = vpop.f32.mrb[0].mxu0
    %v6256 = vpop.f32.mrb[0].mxu0
    %v6257 = vadd.f32 0.0, %v6256
    %v6258 = vpop.f32.mrb[0].mxu0
    %6259 = vmatprep.mubr.bf16.mxu0 0
    %6260 = vmatmul.mubr.bf16.gmra.mrb[0].mxu0 %v5821
    %v6261 = vpop.f32.mrb[0].mxu0
    %v6262 = vadd.f32 0.0, %v6261
    %v6263 = vpop.f32.mrb[0].mxu0
    %v6264 = vpop.f32.mrb[0].mxu0
    %v6265 = vadd.f32 0.0, %v6264
    %v6266 = vpop.f32.mrb[0].mxu0
    %6267 = vmatprep.mubr.bf16.mxu0 0
    %6268 = vmatmul.mubr.bf16.gmra.mrb[0].mxu0 %v5822
    %v6269 = vpop.f32.mrb[0].mxu0
    %v6270 = vadd.f32 0.0, %v6269
    %v6271 = vpop.f32.mrb[0].mxu0
    %v6272 = vpop.f32.mrb[0].mxu0
    %v6273 = vadd.f32 0.0, %v6272
    %v6274 = vpop.f32.mrb[0].mxu0
    %6275 = vmatprep.mubr.bf16.mxu0 0
    %6276 = vmatmul.mubr.bf16.gmra.mrb[0].mxu0 %v5823
    %v6277 = vpop.f32.mrb[0].mxu0
    %v6278 = vadd.f32 0.0, %v6277
    %v6279 = vpop.f32.mrb[0].mxu0
    %v6280 = vpop.f32.mrb[0].mxu0
    %v6281 = vadd.f32 0.0, %v6280
    %v6282 = vpop.f32.mrb[0].mxu0
    %6283 = vmatprep.mubr.bf16.mxu0 0
    %6284 = vmatmul.mubr.bf16.gmra.mrb[0].mxu0 %v5824
    %v6285 = vpop.f32.mrb[0].mxu0
    %v6286 = vadd.f32 0.0, %v6285
    %v6287 = vpop.f32.mrb[0].mxu0
    %v6288 = vpop.f32.mrb[0].mxu0
    %v6289 = vadd.f32 0.0, %v6288
    %v6290 = vpop.f32.mrb[0].mxu0
    %6291 = vmatprep.mubr.bf16.mxu0 0
    %6292 = vmatmul.mubr.bf16.gmra.mrb[0].mxu0 %v5825
    %v6293 = vpop.f32.mrb[0].mxu0
    %v6294 = vadd.f32 0.0, %v6293
    %v6295 = vpop.f32.mrb[0].mxu0
    %v6296 = vpop.f32.mrb[0].mxu0
    %v6297 = vadd.f32 0.0, %v6296
    %v6298 = vpop.f32.mrb[0].mxu0
    %6299 = vmatprep.mubr.bf16.mxu0 0
    %6300 = vmatmul.mubr.bf16.gmra.mrb[0].mxu0 %v5826
    %v6301 = vpop.f32.mrb[0].mxu0
    %v6302 = vadd.f32 0.0, %v6301
    %v6303 = vpop.f32.mrb[0].mxu0
    %v6304 = vpop.f32.mrb[0].mxu0
    %v6305 = vadd.f32 0.0, %v6304
    %v6306 = vpop.f32.mrb[0].mxu0
    %6307 = vmatprep.mubr.bf16.mxu0 0
    %6308 = vmatmul.mubr.bf16.gmra.mrb[0].mxu0 %v5827
    %v6309 = vpop.f32.mrb[0].mxu0
    %v6310 = vadd.f32 0.0, %v6309
    %v6311 = vpop.f32.mrb[0].mxu0
    %v6312 = vpop.f32.mrb[0].mxu0
    %v6313 = vadd.f32 0.0, %v6312
    %v6314 = vpop.f32.mrb[0].mxu0
    %6315 = vmatprep.mubr.bf16.mxu0 0
    %6316 = vmatmul.mubr.bf16.gmra.mrb[0].mxu0 %v5828
    %v6317 = vpop.f32.mrb[0].mxu0
    %v6318 = vadd.f32 0.0, %v6317
    %v6319 = vpop.f32.mrb[0].mxu0
    %v6320 = vpop.f32.mrb[0].mxu0
    %v6321 = vadd.f32 0.0, %v6320
    %v6322 = vpop.f32.mrb[0].mxu0
    %6323 = vmatprep.mubr.bf16.mxu0 0
    %6324 = vmatmul.mubr.bf16.gmra.mrb[0].mxu0 %v5829
    %v6325 = vpop.f32.mrb[0].mxu0
    %v6326 = vadd.f32 0.0, %v6325
    %v6327 = vpop.f32.mrb[0].mxu0
    %v6328 = vpop.f32.mrb[0].mxu0
    %v6329 = vadd.f32 0.0, %v6328
    %v6330 = vpop.f32.mrb[0].mxu0
    %6331 = vmatprep.mubr.bf16.mxu0 0
    %6332 = vmatmul.mubr.bf16.gmra.mrb[0].mxu0 %v5830
    %v6333 = vpop.f32.mrb[0].mxu0
    %v6334 = vadd.f32 0.0, %v6333
    %v6335 = vpop.f32.mrb[0].mxu0
    %v6336 = vpop.f32.mrb[0].mxu0
    %v6337 = vadd.f32 0.0, %v6336
    %v6338 = vpop.f32.mrb[0].mxu0
    %6339 = vmatprep.mubr.bf16.mxu0 0
    %6340 = vmatmul.mubr.bf16.gmra.mrb[0].mxu0 %v5831
    %v6341 = vpop.f32.mrb[0].mxu0
    %v6342 = vadd.f32 0.0, %v6341
    %v6343 = vpop.f32.mrb[0].mxu0
    %v6344 = vpop.f32.mrb[0].mxu0
    %v6345 = vadd.f32 0.0, %v6344
    %v6346 = vpop.f32.mrb[0].mxu0
    %6347 = vmatprep.mubr.bf16.mxu0 0
    %6348 = vmatmul.mubr.bf16.gmra.mrb[0].mxu0 %v5832
    %v6349 = vpop.f32.mrb[0].mxu0
    %v6350 = vadd.f32 0.0, %v6349
    %v6351 = vpop.f32.mrb[0].mxu0
    %v6352 = vpop.f32.mrb[0].mxu0
    %v6353 = vadd.f32 0.0, %v6352
    %v6354 = vpop.f32.mrb[0].mxu0
    %6355 = vmatprep.mubr.bf16.mxu0 0
    %6356 = vmatmul.mubr.bf16.gmra.mrb[0].mxu0 %v5833
    %v6357 = vpop.f32.mrb[0].mxu0
    %v6358 = vadd.f32 0.0, %v6357
    %v6359 = vpop.f32.mrb[0].mxu0
    %v6360 = vpop.f32.mrb[0].mxu0
    %v6361 = vadd.f32 0.0, %v6360
    %v6362 = vpop.f32.mrb[0].mxu0
    %6363 = vdwg.mxu0
    %v6364 = vadd.f32 %v5564, %v5934
    %v6365 = vadd.f32 %v5565, %v5937
    %v6366 = vadd.f32 %v5566, %v5942
    %v6367 = vadd.f32 %v5567, %v5945
    %v6368 = vadd.f32 %v5568, %v5950
    %v6369 = vadd.f32 %v5569, %v5953
    %v6370 = vadd.f32 %v5570, %v5958
    %v6371 = vadd.f32 %v5571, %v5961
    %v6372 = vadd.f32 %v5572, %v5966
    %v6373 = vadd.f32 %v5573, %v5969
    %v6374 = vadd.f32 %v5574, %v5974
    %v6375 = vadd.f32 %v5575, %v5977
    %v6376 = vadd.f32 %v5576, %v5982
    %v6377 = vadd.f32 %v5577, %v5985
    %v6378 = vadd.f32 %v5578, %v5990
    %v6379 = vadd.f32 %v5579, %v5993
    %v6380 = vadd.f32 %v5580, %v5998
    %v6381 = vadd.f32 %v5581, %v6001
    %v6382 = vadd.f32 %v5582, %v6006
    %v6383 = vadd.f32 %v5583, %v6009
    %v6384 = vadd.f32 %v5584, %v6014
    %v6385 = vadd.f32 %v5585, %v6017
    %v6386 = vadd.f32 %v5586, %v6022
    %v6387 = vadd.f32 %v5587, %v6025
    %v6388 = vadd.f32 %v5588, %v6030
    %v6389 = vadd.f32 %v5589, %v6033
    %v6390 = vadd.f32 %v5590, %v6038
    %v6391 = vadd.f32 %v5591, %v6041
    %v6392 = vadd.f32 %v5592, %v6046
    %v6393 = vadd.f32 %v5593, %v6049
    %v6394 = vadd.f32 %v5594, %v6054
    %v6395 = vadd.f32 %v5595, %v6057
    %v6396 = vadd.f32 %v5596, %v6062
    %v6397 = vadd.f32 %v5597, %v6065
    %v6398 = vadd.f32 %v5598, %v6070
    %v6399 = vadd.f32 %v5599, %v6073
    %v6400 = vadd.f32 %v5600, %v6078
    %v6401 = vadd.f32 %v5601, %v6081
    %v6402 = vadd.f32 %v5602, %v6086
    %v6403 = vadd.f32 %v5603, %v6089
    %v6404 = vadd.f32 %v5604, %v6094
    %v6405 = vadd.f32 %v5605, %v6097
    %v6406 = vadd.f32 %v5606, %v6102
    %v6407 = vadd.f32 %v5607, %v6105
    %v6408 = vadd.f32 %v5608, %v6110
    %v6409 = vadd.f32 %v5609, %v6113
    %v6410 = vadd.f32 %v5610, %v6118
    %v6411 = vadd.f32 %v5611, %v6121
    %v6412 = vadd.f32 %v5612, %v6126
    %v6413 = vadd.f32 %v5613, %v6129
    %v6414 = vadd.f32 %v5614, %v6134
    %v6415 = vadd.f32 %v5615, %v6137
    %v6416 = vadd.f32 %v5616, %v6142
    %v6417 = vadd.f32 %v5617, %v6145
    %v6418 = vadd.f32 %v5618, %v6150
    %v6419 = vadd.f32 %v5619, %v6153
    %v6420 = vadd.f32 %v5620, %v6158
    %v6421 = vadd.f32 %v5621, %v6161
    %v6422 = vadd.f32 %v5622, %v6166
    %v6423 = vadd.f32 %v5623, %v6169
    %v6424 = vadd.f32 %v5624, %v6174
    %v6425 = vadd.f32 %v5625, %v6177
    %v6426 = vadd.f32 %v5626, %v6182
    %v6427 = vadd.f32 %v5627, %v6185
    %v6428 = vadd.f32 %v5628, %v6190
    %v6429 = vadd.f32 %v5629, %v6193
    %v6430 = vadd.f32 %v5630, %v6198
    %v6431 = vadd.f32 %v5631, %v6201
    %v6432 = vadd.f32 %v5632, %v6206
    %v6433 = vadd.f32 %v5633, %v6209
    %v6434 = vadd.f32 %v5634, %v6214
    %v6435 = vadd.f32 %v5635, %v6217
    %v6436 = vadd.f32 %v5636, %v6222
    %v6437 = vadd.f32 %v5637, %v6225
    %v6438 = vadd.f32 %v5638, %v6230
    %v6439 = vadd.f32 %v5639, %v6233
    %v6440 = vadd.f32 %v5640, %v6238
    %v6441 = vadd.f32 %v5641, %v6241
    %v6442 = vadd.f32 %v5642, %v6246
    %v6443 = vadd.f32 %v5643, %v6249
    %v6444 = vadd.f32 %v5644, %v6254
    %v6445 = vadd.f32 %v5645, %v6257
    %v6446 = vadd.f32 %v5646, %v6262
    %v6447 = vadd.f32 %v5647, %v6265
    %v6448 = vadd.f32 %v5648, %v6270
    %v6449 = vadd.f32 %v5649, %v6273
    %v6450 = vadd.f32 %v5650, %v6278
    %v6451 = vadd.f32 %v5651, %v6281
    %v6452 = vadd.f32 %v5652, %v6286
    %v6453 = vadd.f32 %v5653, %v6289
    %v6454 = vadd.f32 %v5654, %v6294
    %v6455 = vadd.f32 %v5655, %v6297
    %v6456 = vadd.f32 %v5656, %v6302
    %v6457 = vadd.f32 %v5657, %v6305
    %v6458 = vadd.f32 %v5658, %v6310
    %v6459 = vadd.f32 %v5659, %v6313
    %v6460 = vadd.f32 %v5660, %v6318
    %v6461 = vadd.f32 %v5661, %v6321
    %v6462 = vadd.f32 %v5662, %v6326
    %v6463 = vadd.f32 %v5663, %v6329
    %v6464 = vadd.f32 %v5664, %v6334
    %v6465 = vadd.f32 %v5665, %v6337
    %v6466 = vadd.f32 %v5666, %v6342
    %v6467 = vadd.f32 %v5667, %v6345
    %v6468 = vadd.f32 %v5668, %v6350
    %v6469 = vadd.f32 %v5669, %v6353
    %v6470 = vadd.f32 %v5670, %v6358
    %v6471 = vadd.f32 %v5671, %v6361
    %v6472 = vld [vmem:[#allocation2 + $0x21] sm:$0xff]
    %v6473 = vld [vmem:[#allocation2 + $0x29] sm:$0xff]
    %v6474 = vld [vmem:[#allocation2 + $0x31] sm:$0xff]
    %v6475 = vld [vmem:[#allocation2 + $0x39] sm:$0xff]
    %v6476 = vld [vmem:[#allocation2 + $0x41] sm:$0xff]
    %v6477 = vld [vmem:[#allocation2 + $0x49] sm:$0xff]
    %v6478 = vld [vmem:[#allocation2 + $0x51] sm:$0xff]
    %v6479 = vld [vmem:[#allocation2 + $0x59] sm:$0xff]
    %v6480 = vld [vmem:[#allocation2 + $0x61] sm:$0xff]
    %v6481 = vld [vmem:[#allocation2 + $0x69] sm:$0xff]
    %v6482 = vld [vmem:[#allocation2 + $0x71] sm:$0xff]
    %v6483 = vld [vmem:[#allocation2 + $0x79] sm:$0xff]
    %v6484 = vld [vmem:[#allocation2 + $0x81] sm:$0xff]
    %v6485 = vld [vmem:[#allocation2 + $0x89] sm:$0xff]
    %v6486 = vld [vmem:[#allocation2 + $0x91] sm:$0xff]
    %v6487 = vld [vmem:[#allocation2 + $0x99] sm:$0xff]
    %v6488 = vld [vmem:[#allocation2 + $0xa1] sm:$0xff]
    %v6489 = vld [vmem:[#allocation2 + $0xa9] sm:$0xff]
    %v6490 = vld [vmem:[#allocation2 + $0xb1] sm:$0xff]
    %v6491 = vld [vmem:[#allocation2 + $0xb9] sm:$0xff]
    %v6492 = vld [vmem:[#allocation2 + $0xc1] sm:$0xff]
    %v6493 = vld [vmem:[#allocation2 + $0xc9] sm:$0xff]
    %v6494 = vld [vmem:[#allocation2 + $0xd1] sm:$0xff]
    %v6495 = vld [vmem:[#allocation2 + $0xd9] sm:$0xff]
    %v6496 = vld [vmem:[#allocation2 + $0xe1] sm:$0xff]
    %v6497 = vld [vmem:[#allocation2 + $0xe9] sm:$0xff]
    %v6498 = vld [vmem:[#allocation2 + $0xf1] sm:$0xff]
    %v6499 = vld [vmem:[#allocation2 + $0xf9] sm:$0xff]
    %v6500 = vld [vmem:[#allocation2 + $0x101] sm:$0xff]
    %v6501 = vld [vmem:[#allocation2 + $0x109] sm:$0xff]
    %v6502 = vld [vmem:[#allocation2 + $0x111] sm:$0xff]
    %v6503 = vld [vmem:[#allocation2 + $0x119] sm:$0xff]
    %v6504 = vld [vmem:[#allocation2 + $0x121] sm:$0xff]
    %v6505 = vld [vmem:[#allocation2 + $0x129] sm:$0xff]
    %v6506 = vld [vmem:[#allocation2 + $0x131] sm:$0xff]
    %v6507 = vld [vmem:[#allocation2 + $0x139] sm:$0xff]
    %v6508 = vld [vmem:[#allocation2 + $0x141] sm:$0xff]
    %v6509 = vld [vmem:[#allocation2 + $0x149] sm:$0xff]
    %v6510 = vld [vmem:[#allocation2 + $0x151] sm:$0xff]
    %v6511 = vld [vmem:[#allocation2 + $0x159] sm:$0xff]
    %v6512 = vld [vmem:[#allocation2 + $0x161] sm:$0xff]
    %v6513 = vld [vmem:[#allocation2 + $0x169] sm:$0xff]
    %v6514 = vld [vmem:[#allocation2 + $0x171] sm:$0xff]
    %v6515 = vld [vmem:[#allocation2 + $0x179] sm:$0xff]
    %v6516 = vld [vmem:[#allocation2 + $0x181] sm:$0xff]
    %v6517 = vld [vmem:[#allocation2 + $0x189] sm:$0xff]
    %v6518 = vld [vmem:[#allocation2 + $0x191] sm:$0xff]
    %v6519 = vld [vmem:[#allocation2 + $0x199] sm:$0xff]
    %v6520 = vld [vmem:[#allocation2 + $0x1a1] sm:$0xff]
    %v6521 = vld [vmem:[#allocation2 + $0x1a9] sm:$0xff]
    %v6522 = vld [vmem:[#allocation2 + $0x1b1] sm:$0xff]
    %v6523 = vld [vmem:[#allocation2 + $0x1b9] sm:$0xff]
    %v6524 = vld [vmem:[#allocation2 + $0x1c1] sm:$0xff]
    %v6525 = vld [vmem:[#allocation2 + $0x1c9] sm:$0xff]
    %v6526 = vld [vmem:[#allocation2 + $0x1d1] sm:$0xff]
    %v6527 = vld [vmem:[#allocation2 + $0x1d9] sm:$0xff]
    %v6528 = vld [vmem:[#allocation2 + $0x1e1] sm:$0xff]
    %v6529 = vld [vmem:[#allocation2 + $0x1e9] sm:$0xff]
    %v6530 = vld [vmem:[#allocation2 + $0x1f1] sm:$0xff]
    %v6531 = vld [vmem:[#allocation2 + $0x1f9] sm:$0xff]
    %v6532 = vld [vmem:[#allocation2 + $0x201] sm:$0xff]
    %v6533 = vld [vmem:[#allocation2 + $0x209] sm:$0xff]
    %v6534 = vld [vmem:[#allocation2 + $0x211] sm:$0xff]
    %v6535 = vld [vmem:[#allocation2 + $0x219] sm:$0xff]
    %v6536 = vld [vmem:[#allocation2 + $0x221] sm:$0xff]
    %v6537 = vld [vmem:[#allocation2 + $0x229] sm:$0xff]
    %v6538 = vld [vmem:[#allocation2 + $0x231] sm:$0xff]
    %v6539 = vld [vmem:[#allocation2 + $0x239] sm:$0xff]
    %v6540 = vld [vmem:[#allocation2 + $0x241] sm:$0xff]
    %v6541 = vld [vmem:[#allocation2 + $0x249] sm:$0xff]
    %v6542 = vld [vmem:[#allocation2 + $0x251] sm:$0xff]
    %v6543 = vld [vmem:[#allocation2 + $0x259] sm:$0xff]
    %v6544 = vld [vmem:[#allocation2 + $0x261] sm:$0xff]
    %v6545 = vld [vmem:[#allocation2 + $0x269] sm:$0xff]
    %v6546 = vld [vmem:[#allocation2 + $0x271] sm:$0xff]
    %v6547 = vld [vmem:[#allocation2 + $0x279] sm:$0xff]
    %v6548 = vld [vmem:[#allocation2 + $0x281] sm:$0xff]
    %v6549 = vld [vmem:[#allocation2 + $0x289] sm:$0xff]
    %v6550 = vld [vmem:[#allocation2 + $0x291] sm:$0xff]
    %v6551 = vld [vmem:[#allocation2 + $0x299] sm:$0xff]
    %v6552 = vld [vmem:[#allocation2 + $0x2a1] sm:$0xff]
    %v6553 = vld [vmem:[#allocation2 + $0x2a9] sm:$0xff]
    %v6554 = vld [vmem:[#allocation2 + $0x2b1] sm:$0xff]
    %v6555 = vld [vmem:[#allocation2 + $0x2b9] sm:$0xff]
    %v6556 = vld [vmem:[#allocation2 + $0x2c1] sm:$0xff]
    %v6557 = vld [vmem:[#allocation2 + $0x2c9] sm:$0xff]
    %v6558 = vld [vmem:[#allocation2 + $0x2d1] sm:$0xff]
    %v6559 = vld [vmem:[#allocation2 + $0x2d9] sm:$0xff]
    %v6560 = vld [vmem:[#allocation2 + $0x2e1] sm:$0xff]
    %v6561 = vld [vmem:[#allocation2 + $0x2e9] sm:$0xff]
    %v6562 = vld [vmem:[#allocation2 + $0x2f1] sm:$0xff]
    %v6563 = vld [vmem:[#allocation2 + $0x2f9] sm:$0xff]
    %v6564 = vld [vmem:[#allocation2 + $0x301] sm:$0xff]
    %v6565 = vld [vmem:[#allocation2 + $0x309] sm:$0xff]
    %v6566 = vld [vmem:[#allocation2 + $0x311] sm:$0xff]
    %v6567 = vld [vmem:[#allocation2 + $0x319] sm:$0xff]
    %v6568 = vld [vmem:[#allocation2 + $0x321] sm:$0xff]
    %v6569 = vld [vmem:[#allocation2 + $0x329] sm:$0xff]
    %v6570 = vld [vmem:[#allocation2 + $0x331] sm:$0xff]
    %v6571 = vld [vmem:[#allocation2 + $0x339] sm:$0xff]
    %v6572 = vld [vmem:[#allocation2 + $0x341] sm:$0xff]
    %v6573 = vld [vmem:[#allocation2 + $0x349] sm:$0xff]
    %v6574 = vld [vmem:[#allocation2 + $0x351] sm:$0xff]
    %v6575 = vld [vmem:[#allocation2 + $0x359] sm:$0xff]
    %v6576 = vld [vmem:[#allocation2 + $0x361] sm:$0xff]
    %v6577 = vld [vmem:[#allocation2 + $0x369] sm:$0xff]
    %v6578 = vld [vmem:[#allocation2 + $0x371] sm:$0xff]
    %v6579 = vld [vmem:[#allocation2 + $0x379] sm:$0xff]
    %v6580 = vpack.c.bf16 %v6473, %v6472
    %v6581 = vpack.c.bf16 %v6475, %v6474
    %v6582 = vpack.c.bf16 %v6477, %v6476
    %v6583 = vpack.c.bf16 %v6479, %v6478
    %v6584 = vpack.c.bf16 %v6481, %v6480
    %v6585 = vpack.c.bf16 %v6483, %v6482
    %v6586 = vpack.c.bf16 %v6485, %v6484
    %v6587 = vpack.c.bf16 %v6487, %v6486
    %v6588 = vpack.c.bf16 %v6489, %v6488
    %v6589 = vpack.c.bf16 %v6491, %v6490
    %v6590 = vpack.c.bf16 %v6493, %v6492
    %v6591 = vpack.c.bf16 %v6495, %v6494
    %v6592 = vpack.c.bf16 %v6497, %v6496
    %v6593 = vpack.c.bf16 %v6499, %v6498
    %v6594 = vpack.c.bf16 %v6501, %v6500
    %v6595 = vpack.c.bf16 %v6503, %v6502
    %v6596 = vpack.c.bf16 %v6505, %v6504
    %v6597 = vpack.c.bf16 %v6507, %v6506
    %v6598 = vpack.c.bf16 %v6509, %v6508
    %v6599 = vpack.c.bf16 %v6511, %v6510
    %v6600 = vpack.c.bf16 %v6513, %v6512
    %v6601 = vpack.c.bf16 %v6515, %v6514
    %v6602 = vpack.c.bf16 %v6517, %v6516
    %v6603 = vpack.c.bf16 %v6519, %v6518
    %v6604 = vpack.c.bf16 %v6521, %v6520
    %v6605 = vpack.c.bf16 %v6523, %v6522
    %v6606 = vpack.c.bf16 %v6525, %v6524
    %v6607 = vpack.c.bf16 %v6527, %v6526
    %v6608 = vpack.c.bf16 %v6529, %v6528
    %v6609 = vpack.c.bf16 %v6531, %v6530
    %v6610 = vpack.c.bf16 %v6533, %v6532
    %v6611 = vpack.c.bf16 %v6535, %v6534
    %v6612 = vpack.c.bf16 %v6537, %v6536
    %v6613 = vpack.c.bf16 %v6539, %v6538
    %v6614 = vpack.c.bf16 %v6541, %v6540
    %v6615 = vpack.c.bf16 %v6543, %v6542
    %v6616 = vpack.c.bf16 %v6545, %v6544
    %v6617 = vpack.c.bf16 %v6547, %v6546
    %v6618 = vpack.c.bf16 %v6549, %v6548
    %v6619 = vpack.c.bf16 %v6551, %v6550
    %v6620 = vpack.c.bf16 %v6553, %v6552
    %v6621 = vpack.c.bf16 %v6555, %v6554
    %v6622 = vpack.c.bf16 %v6557, %v6556
    %v6623 = vpack.c.bf16 %v6559, %v6558
    %v6624 = vpack.c.bf16 %v6561, %v6560
    %v6625 = vpack.c.bf16 %v6563, %v6562
    %v6626 = vpack.c.bf16 %v6565, %v6564
    %v6627 = vpack.c.bf16 %v6567, %v6566
    %v6628 = vpack.c.bf16 %v6569, %v6568
    %v6629 = vpack.c.bf16 %v6571, %v6570
    %v6630 = vpack.c.bf16 %v6573, %v6572
    %v6631 = vpack.c.bf16 %v6575, %v6574
    %v6632 = vpack.c.bf16 %v6577, %v6576
    %v6633 = vpack.c.bf16 %v6579, %v6578
    %s6634 = scalar_lea.vmem %s3, 320
    %v6635 = vld [vmem:[%s6634] sm:$0xf]
    %v6636 = vld [vmem:[%s6634 + $0x4] sm:$0xf]
    %v6637 = vld [vmem:[%s6634 + $0x8] sm:$0xf]
    %v6638 = vld [vmem:[%s6634 + $0xc] sm:$0xf]
    %v6639 = vld [vmem:[%s6634 + $0x10] sm:$0xf]
    %v6640 = vld [vmem:[%s6634 + $0x14] sm:$0xf]
    %v6641 = vld [vmem:[%s6634 + $0x18] sm:$0xf]
    %v6642 = vld [vmem:[%s6634 + $0x1c] sm:$0xf]
    %v6643 = vld [vmem:[%s6634 + $0x20] sm:$0xf]
    %v6644 = vld [vmem:[%s6634 + $0x24] sm:$0xf]
    %v6645 = vld [vmem:[%s6634 + $0x28] sm:$0xf]
    %v6646 = vld [vmem:[%s6634 + $0x2c] sm:$0xf]
    %v6647 = vld [vmem:[%s6634 + $0x30] sm:$0xf]
    %v6648 = vld [vmem:[%s6634 + $0x34] sm:$0xf]
    %v6649 = vld [vmem:[%s6634 + $0x38] sm:$0xf]
    %v6650 = vld [vmem:[%s6634 + $0x3c] sm:$0xf]
    %v6667 = vunpack.c.l.b16 %v6635
    %v6668 = vunpack.c.l.b16 %v6636
    %v6669 = vunpack.c.l.b16 %v6637
    %v6670 = vunpack.c.l.b16 %v6638
    %v6671 = vunpack.c.l.b16 %v6639
    %v6672 = vunpack.c.l.b16 %v6640
    %v6673 = vunpack.c.l.b16 %v6641
    %v6674 = vunpack.c.l.b16 %v6642
    %v6675 = vunpack.c.l.b16 %v6643
    %v6676 = vunpack.c.l.b16 %v6644
    %v6677 = vunpack.c.l.b16 %v6645
    %v6678 = vunpack.c.l.b16 %v6646
    %v6679 = vunpack.c.l.b16 %v6647
    %v6680 = vunpack.c.l.b16 %v6648
    %v6681 = vunpack.c.l.b16 %v6649
    %v6682 = vunpack.c.l.b16 %v6650
    %v6683 = vpack.c.b16 %v6668, %v6667
    %v6684 = vpack.c.b16 %v6670, %v6669
    %v6685 = vpack.c.b16 %v6672, %v6671
    %v6686 = vpack.c.b16 %v6674, %v6673
    %v6687 = vpack.c.b16 %v6676, %v6675
    %v6688 = vpack.c.b16 %v6678, %v6677
    %v6689 = vpack.c.b16 %v6680, %v6679
    %v6690 = vpack.c.b16 %v6682, %v6681
    %6699 = vmatprep.subr.bf16.mxu0 0
    %6700 = vmatpush1.bf16.msra.mxu0 %v6683
    %6701 = vmatprep.subr.bf16.mxu0 0
    %6702 = vmatpush1.bf16.msra.mxu0 %v6684
    %6703 = vmatprep.subr.bf16.mxu0 0
    %6704 = vmatpush1.bf16.msra.mxu0 %v6685
    %6705 = vmatprep.subr.bf16.mxu0 0
    %6706 = vmatpush1.bf16.msra.mxu0 %v6686
    %6707 = vmatprep.subr.bf16.mxu0 0
    %6708 = vmatpush1.bf16.msra.mxu0 %v6687
    %6709 = vmatprep.subr.bf16.mxu0 0
    %6710 = vmatpush1.bf16.msra.mxu0 %v6688
    %6711 = vmatprep.subr.bf16.mxu0 0
    %6712 = vmatpush1.bf16.msra.mxu0 %v6689
    %6713 = vmatprep.subr.bf16.mxu0 0
    %6714 = vmatpush1.bf16.msra.mxu0 %v6690
    %6715 = vmatprep.subr.bf16.mxu0 0
    %6716 = vmatpush1.bf16.msra.mxu0 0
    %6717 = vmatprep.subr.bf16.mxu0 0
    %6718 = vmatpush1.bf16.msra.mxu0 0
    %6719 = vmatprep.subr.bf16.mxu0 0
    %6720 = vmatpush1.bf16.msra.mxu0 0
    %6721 = vmatprep.subr.bf16.mxu0 0
    %6722 = vmatpush1.bf16.msra.mxu0 0
    %6723 = vmatprep.subr.bf16.mxu0 0
    %6724 = vmatpush1.bf16.msra.mxu0 0
    %6725 = vmatprep.subr.bf16.mxu0 0
    %6726 = vmatpush1.bf16.msra.mxu0 0
    %6727 = vmatprep.subr.bf16.mxu0 0
    %6728 = vmatpush1.bf16.msra.mxu0 0
    %6729 = vmatprep.subr.bf16.mxu0 0
    %6730 = vmatpush1.bf16.msra.mxu0 0
    %6731 = vmatprep.mubr.bf16.mxu0 0
    %6732 = vmatmul.mubr.bf16.gmra.mrb[0].mxu0 %v6580
    %v6733 = vpop.f32.mrb[0].mxu0
    %v6734 = vadd.f32 0.0, %v6733
    %v6735 = vpop.f32.mrb[0].mxu0
    %v6736 = vpop.f32.mrb[0].mxu0
    %v6737 = vadd.f32 0.0, %v6736
    %v6738 = vpop.f32.mrb[0].mxu0
    %6739 = vmatprep.mubr.bf16.mxu0 0
    %6740 = vmatmul.mubr.bf16.gmra.mrb[0].mxu0 %v6581
    %v6741 = vpop.f32.mrb[0].mxu0
    %v6742 = vadd.f32 0.0, %v6741
    %v6743 = vpop.f32.mrb[0].mxu0
    %v6744 = vpop.f32.mrb[0].mxu0
    %v6745 = vadd.f32 0.0, %v6744
    %v6746 = vpop.f32.mrb[0].mxu0
    %6747 = vmatprep.mubr.bf16.mxu0 0
    %6748 = vmatmul.mubr.bf16.gmra.mrb[0].mxu0 %v6582
    %v6749 = vpop.f32.mrb[0].mxu0
    %v6750 = vadd.f32 0.0, %v6749
    %v6751 = vpop.f32.mrb[0].mxu0
    %v6752 = vpop.f32.mrb[0].mxu0
    %v6753 = vadd.f32 0.0, %v6752
    %v6754 = vpop.f32.mrb[0].mxu0
    %6755 = vmatprep.mubr.bf16.mxu0 0
    %6756 = vmatmul.mubr.bf16.gmra.mrb[0].mxu0 %v6583
    %v6757 = vpop.f32.mrb[0].mxu0
    %v6758 = vadd.f32 0.0, %v6757
    %v6759 = vpop.f32.mrb[0].mxu0
    %v6760 = vpop.f32.mrb[0].mxu0
    %v6761 = vadd.f32 0.0, %v6760
    %v6762 = vpop.f32.mrb[0].mxu0
    %6763 = vmatprep.mubr.bf16.mxu0 0
    %6764 = vmatmul.mubr.bf16.gmra.mrb[0].mxu0 %v6584
    %v6765 = vpop.f32.mrb[0].mxu0
    %v6766 = vadd.f32 0.0, %v6765
    %v6767 = vpop.f32.mrb[0].mxu0
    %v6768 = vpop.f32.mrb[0].mxu0
    %v6769 = vadd.f32 0.0, %v6768
    %v6770 = vpop.f32.mrb[0].mxu0
    %6771 = vmatprep.mubr.bf16.mxu0 0
    %6772 = vmatmul.mubr.bf16.gmra.mrb[0].mxu0 %v6585
    %v6773 = vpop.f32.mrb[0].mxu0
    %v6774 = vadd.f32 0.0, %v6773
    %v6775 = vpop.f32.mrb[0].mxu0
    %v6776 = vpop.f32.mrb[0].mxu0
    %v6777 = vadd.f32 0.0, %v6776
    %v6778 = vpop.f32.mrb[0].mxu0
    %6779 = vmatprep.mubr.bf16.mxu0 0
    %6780 = vmatmul.mubr.bf16.gmra.mrb[0].mxu0 %v6586
    %v6781 = vpop.f32.mrb[0].mxu0
    %v6782 = vadd.f32 0.0, %v6781
    %v6783 = vpop.f32.mrb[0].mxu0
    %v6784 = vpop.f32.mrb[0].mxu0
    %v6785 = vadd.f32 0.0, %v6784
    %v6786 = vpop.f32.mrb[0].mxu0
    %6787 = vmatprep.mubr.bf16.mxu0 0
    %6788 = vmatmul.mubr.bf16.gmra.mrb[0].mxu0 %v6587
    %v6789 = vpop.f32.mrb[0].mxu0
    %v6790 = vadd.f32 0.0, %v6789
    %v6791 = vpop.f32.mrb[0].mxu0
    %v6792 = vpop.f32.mrb[0].mxu0
    %v6793 = vadd.f32 0.0, %v6792
    %v6794 = vpop.f32.mrb[0].mxu0
    %6795 = vmatprep.mubr.bf16.mxu0 0
    %6796 = vmatmul.mubr.bf16.gmra.mrb[0].mxu0 %v6588
    %v6797 = vpop.f32.mrb[0].mxu0
    %v6798 = vadd.f32 0.0, %v6797
    %v6799 = vpop.f32.mrb[0].mxu0
    %v6800 = vpop.f32.mrb[0].mxu0
    %v6801 = vadd.f32 0.0, %v6800
    %v6802 = vpop.f32.mrb[0].mxu0
    %6803 = vmatprep.mubr.bf16.mxu0 0
    %6804 = vmatmul.mubr.bf16.gmra.mrb[0].mxu0 %v6589
    %v6805 = vpop.f32.mrb[0].mxu0
    %v6806 = vadd.f32 0.0, %v6805
    %v6807 = vpop.f32.mrb[0].mxu0
    %v6808 = vpop.f32.mrb[0].mxu0
    %v6809 = vadd.f32 0.0, %v6808
    %v6810 = vpop.f32.mrb[0].mxu0
    %6811 = vmatprep.mubr.bf16.mxu0 0
    %6812 = vmatmul.mubr.bf16.gmra.mrb[0].mxu0 %v6590
    %v6813 = vpop.f32.mrb[0].mxu0
    %v6814 = vadd.f32 0.0, %v6813
    %v6815 = vpop.f32.mrb[0].mxu0
    %v6816 = vpop.f32.mrb[0].mxu0
    %v6817 = vadd.f32 0.0, %v6816
    %v6818 = vpop.f32.mrb[0].mxu0
    %6819 = vmatprep.mubr.bf16.mxu0 0
    %6820 = vmatmul.mubr.bf16.gmra.mrb[0].mxu0 %v6591
    %v6821 = vpop.f32.mrb[0].mxu0
    %v6822 = vadd.f32 0.0, %v6821
    %v6823 = vpop.f32.mrb[0].mxu0
    %v6824 = vpop.f32.mrb[0].mxu0
    %v6825 = vadd.f32 0.0, %v6824
    %v6826 = vpop.f32.mrb[0].mxu0
    %6827 = vmatprep.mubr.bf16.mxu0 0
    %6828 = vmatmul.mubr.bf16.gmra.mrb[0].mxu0 %v6592
    %v6829 = vpop.f32.mrb[0].mxu0
    %v6830 = vadd.f32 0.0, %v6829
    %v6831 = vpop.f32.mrb[0].mxu0
    %v6832 = vpop.f32.mrb[0].mxu0
    %v6833 = vadd.f32 0.0, %v6832
    %v6834 = vpop.f32.mrb[0].mxu0
    %6835 = vmatprep.mubr.bf16.mxu0 0
    %6836 = vmatmul.mubr.bf16.gmra.mrb[0].mxu0 %v6593
    %v6837 = vpop.f32.mrb[0].mxu0
    %v6838 = vadd.f32 0.0, %v6837
    %v6839 = vpop.f32.mrb[0].mxu0
    %v6840 = vpop.f32.mrb[0].mxu0
    %v6841 = vadd.f32 0.0, %v6840
    %v6842 = vpop.f32.mrb[0].mxu0
    %6843 = vmatprep.mubr.bf16.mxu0 0
    %6844 = vmatmul.mubr.bf16.gmra.mrb[0].mxu0 %v6594
    %v6845 = vpop.f32.mrb[0].mxu0
    %v6846 = vadd.f32 0.0, %v6845
    %v6847 = vpop.f32.mrb[0].mxu0
    %v6848 = vpop.f32.mrb[0].mxu0
    %v6849 = vadd.f32 0.0, %v6848
    %v6850 = vpop.f32.mrb[0].mxu0
    %6851 = vmatprep.mubr.bf16.mxu0 0
    %6852 = vmatmul.mubr.bf16.gmra.mrb[0].mxu0 %v6595
    %v6853 = vpop.f32.mrb[0].mxu0
    %v6854 = vadd.f32 0.0, %v6853
    %v6855 = vpop.f32.mrb[0].mxu0
    %v6856 = vpop.f32.mrb[0].mxu0
    %v6857 = vadd.f32 0.0, %v6856
    %v6858 = vpop.f32.mrb[0].mxu0
    %6859 = vmatprep.mubr.bf16.mxu0 0
    %6860 = vmatmul.mubr.bf16.gmra.mrb[0].mxu0 %v6596
    %v6861 = vpop.f32.mrb[0].mxu0
    %v6862 = vadd.f32 0.0, %v6861
    %v6863 = vpop.f32.mrb[0].mxu0
    %v6864 = vpop.f32.mrb[0].mxu0
    %v6865 = vadd.f32 0.0, %v6864
    %v6866 = vpop.f32.mrb[0].mxu0
    %6867 = vmatprep.mubr.bf16.mxu0 0
    %6868 = vmatmul.mubr.bf16.gmra.mrb[0].mxu0 %v6597
    %v6869 = vpop.f32.mrb[0].mxu0
    %v6870 = vadd.f32 0.0, %v6869
    %v6871 = vpop.f32.mrb[0].mxu0
    %v6872 = vpop.f32.mrb[0].mxu0
    %v6873 = vadd.f32 0.0, %v6872
    %v6874 = vpop.f32.mrb[0].mxu0
    %6875 = vmatprep.mubr.bf16.mxu0 0
    %6876 = vmatmul.mubr.bf16.gmra.mrb[0].mxu0 %v6598
    %v6877 = vpop.f32.mrb[0].mxu0
    %v6878 = vadd.f32 0.0, %v6877
    %v6879 = vpop.f32.mrb[0].mxu0
    %v6880 = vpop.f32.mrb[0].mxu0
    %v6881 = vadd.f32 0.0, %v6880
    %v6882 = vpop.f32.mrb[0].mxu0
    %6883 = vmatprep.mubr.bf16.mxu0 0
    %6884 = vmatmul.mubr.bf16.gmra.mrb[0].mxu0 %v6599
    %v6885 = vpop.f32.mrb[0].mxu0
    %v6886 = vadd.f32 0.0, %v6885
    %v6887 = vpop.f32.mrb[0].mxu0
    %v6888 = vpop.f32.mrb[0].mxu0
    %v6889 = vadd.f32 0.0, %v6888
    %v6890 = vpop.f32.mrb[0].mxu0
    %6891 = vmatprep.mubr.bf16.mxu0 0
    %6892 = vmatmul.mubr.bf16.gmra.mrb[0].mxu0 %v6600
    %v6893 = vpop.f32.mrb[0].mxu0
    %v6894 = vadd.f32 0.0, %v6893
    %v6895 = vpop.f32.mrb[0].mxu0
    %v6896 = vpop.f32.mrb[0].mxu0
    %v6897 = vadd.f32 0.0, %v6896
    %v6898 = vpop.f32.mrb[0].mxu0
    %6899 = vmatprep.mubr.bf16.mxu0 0
    %6900 = vmatmul.mubr.bf16.gmra.mrb[0].mxu0 %v6601
    %v6901 = vpop.f32.mrb[0].mxu0
    %v6902 = vadd.f32 0.0, %v6901
    %v6903 = vpop.f32.mrb[0].mxu0
    %v6904 = vpop.f32.mrb[0].mxu0
    %v6905 = vadd.f32 0.0, %v6904
    %v6906 = vpop.f32.mrb[0].mxu0
    %6907 = vmatprep.mubr.bf16.mxu0 0
    %6908 = vmatmul.mubr.bf16.gmra.mrb[0].mxu0 %v6602
    %v6909 = vpop.f32.mrb[0].mxu0
    %v6910 = vadd.f32 0.0, %v6909
    %v6911 = vpop.f32.mrb[0].mxu0
    %v6912 = vpop.f32.mrb[0].mxu0
    %v6913 = vadd.f32 0.0, %v6912
    %v6914 = vpop.f32.mrb[0].mxu0
    %6915 = vmatprep.mubr.bf16.mxu0 0
    %6916 = vmatmul.mubr.bf16.gmra.mrb[0].mxu0 %v6603
    %v6917 = vpop.f32.mrb[0].mxu0
    %v6918 = vadd.f32 0.0, %v6917
    %v6919 = vpop.f32.mrb[0].mxu0
    %v6920 = vpop.f32.mrb[0].mxu0
    %v6921 = vadd.f32 0.0, %v6920
    %v6922 = vpop.f32.mrb[0].mxu0
    %6923 = vmatprep.mubr.bf16.mxu0 0
    %6924 = vmatmul.mubr.bf16.gmra.mrb[0].mxu0 %v6604
    %v6925 = vpop.f32.mrb[0].mxu0
    %v6926 = vadd.f32 0.0, %v6925
    %v6927 = vpop.f32.mrb[0].mxu0
    %v6928 = vpop.f32.mrb[0].mxu0
    %v6929 = vadd.f32 0.0, %v6928
    %v6930 = vpop.f32.mrb[0].mxu0
    %6931 = vmatprep.mubr.bf16.mxu0 0
    %6932 = vmatmul.mubr.bf16.gmra.mrb[0].mxu0 %v6605
    %v6933 = vpop.f32.mrb[0].mxu0
    %v6934 = vadd.f32 0.0, %v6933
    %v6935 = vpop.f32.mrb[0].mxu0
    %v6936 = vpop.f32.mrb[0].mxu0
    %v6937 = vadd.f32 0.0, %v6936
    %v6938 = vpop.f32.mrb[0].mxu0
    %6939 = vmatprep.mubr.bf16.mxu0 0
    %6940 = vmatmul.mubr.bf16.gmra.mrb[0].mxu0 %v6606
    %v6941 = vpop.f32.mrb[0].mxu0
    %v6942 = vadd.f32 0.0, %v6941
    %v6943 = vpop.f32.mrb[0].mxu0
    %v6944 = vpop.f32.mrb[0].mxu0
    %v6945 = vadd.f32 0.0, %v6944
    %v6946 = vpop.f32.mrb[0].mxu0
    %6947 = vmatprep.mubr.bf16.mxu0 0
    %6948 = vmatmul.mubr.bf16.gmra.mrb[0].mxu0 %v6607
    %v6949 = vpop.f32.mrb[0].mxu0
    %v6950 = vadd.f32 0.0, %v6949
    %v6951 = vpop.f32.mrb[0].mxu0
    %v6952 = vpop.f32.mrb[0].mxu0
    %v6953 = vadd.f32 0.0, %v6952
    %v6954 = vpop.f32.mrb[0].mxu0
    %6955 = vmatprep.mubr.bf16.mxu0 0
    %6956 = vmatmul.mubr.bf16.gmra.mrb[0].mxu0 %v6608
    %v6957 = vpop.f32.mrb[0].mxu0
    %v6958 = vadd.f32 0.0, %v6957
    %v6959 = vpop.f32.mrb[0].mxu0
    %v6960 = vpop.f32.mrb[0].mxu0
    %v6961 = vadd.f32 0.0, %v6960
    %v6962 = vpop.f32.mrb[0].mxu0
    %6963 = vmatprep.mubr.bf16.mxu0 0
    %6964 = vmatmul.mubr.bf16.gmra.mrb[0].mxu0 %v6609
    %v6965 = vpop.f32.mrb[0].mxu0
    %v6966 = vadd.f32 0.0, %v6965
    %v6967 = vpop.f32.mrb[0].mxu0
    %v6968 = vpop.f32.mrb[0].mxu0
    %v6969 = vadd.f32 0.0, %v6968
    %v6970 = vpop.f32.mrb[0].mxu0
    %6971 = vmatprep.mubr.bf16.mxu0 0
    %6972 = vmatmul.mubr.bf16.gmra.mrb[0].mxu0 %v6610
    %v6973 = vpop.f32.mrb[0].mxu0
    %v6974 = vadd.f32 0.0, %v6973
    %v6975 = vpop.f32.mrb[0].mxu0
    %v6976 = vpop.f32.mrb[0].mxu0
    %v6977 = vadd.f32 0.0, %v6976
    %v6978 = vpop.f32.mrb[0].mxu0
    %6979 = vmatprep.mubr.bf16.mxu0 0
    %6980 = vmatmul.mubr.bf16.gmra.mrb[0].mxu0 %v6611
    %v6981 = vpop.f32.mrb[0].mxu0
    %v6982 = vadd.f32 0.0, %v6981
    %v6983 = vpop.f32.mrb[0].mxu0
    %v6984 = vpop.f32.mrb[0].mxu0
    %v6985 = vadd.f32 0.0, %v6984
    %v6986 = vpop.f32.mrb[0].mxu0
    %6987 = vmatprep.mubr.bf16.mxu0 0
    %6988 = vmatmul.mubr.bf16.gmra.mrb[0].mxu0 %v6612
    %v6989 = vpop.f32.mrb[0].mxu0
    %v6990 = vadd.f32 0.0, %v6989
    %v6991 = vpop.f32.mrb[0].mxu0
    %v6992 = vpop.f32.mrb[0].mxu0
    %v6993 = vadd.f32 0.0, %v6992
    %v6994 = vpop.f32.mrb[0].mxu0
    %6995 = vmatprep.mubr.bf16.mxu0 0
    %6996 = vmatmul.mubr.bf16.gmra.mrb[0].mxu0 %v6613
    %v6997 = vpop.f32.mrb[0].mxu0
    %v6998 = vadd.f32 0.0, %v6997
    %v6999 = vpop.f32.mrb[0].mxu0
    %v7000 = vpop.f32.mrb[0].mxu0
    %v7001 = vadd.f32 0.0, %v7000
    %v7002 = vpop.f32.mrb[0].mxu0
    %7003 = vmatprep.mubr.bf16.mxu0 0
    %7004 = vmatmul.mubr.bf16.gmra.mrb[0].mxu0 %v6614
    %v7005 = vpop.f32.mrb[0].mxu0
    %v7006 = vadd.f32 0.0, %v7005
    %v7007 = vpop.f32.mrb[0].mxu0
    %v7008 = vpop.f32.mrb[0].mxu0
    %v7009 = vadd.f32 0.0, %v7008
    %v7010 = vpop.f32.mrb[0].mxu0
    %7011 = vmatprep.mubr.bf16.mxu0 0
    %7012 = vmatmul.mubr.bf16.gmra.mrb[0].mxu0 %v6615
    %v7013 = vpop.f32.mrb[0].mxu0
    %v7014 = vadd.f32 0.0, %v7013
    %v7015 = vpop.f32.mrb[0].mxu0
    %v7016 = vpop.f32.mrb[0].mxu0
    %v7017 = vadd.f32 0.0, %v7016
    %v7018 = vpop.f32.mrb[0].mxu0
    %7019 = vmatprep.mubr.bf16.mxu0 0
    %7020 = vmatmul.mubr.bf16.gmra.mrb[0].mxu0 %v6616
    %v7021 = vpop.f32.mrb[0].mxu0
    %v7022 = vadd.f32 0.0, %v7021
    %v7023 = vpop.f32.mrb[0].mxu0
    %v7024 = vpop.f32.mrb[0].mxu0
    %v7025 = vadd.f32 0.0, %v7024
    %v7026 = vpop.f32.mrb[0].mxu0
    %7027 = vmatprep.mubr.bf16.mxu0 0
    %7028 = vmatmul.mubr.bf16.gmra.mrb[0].mxu0 %v6617
    %v7029 = vpop.f32.mrb[0].mxu0
    %v7030 = vadd.f32 0.0, %v7029
    %v7031 = vpop.f32.mrb[0].mxu0
    %v7032 = vpop.f32.mrb[0].mxu0
    %v7033 = vadd.f32 0.0, %v7032
    %v7034 = vpop.f32.mrb[0].mxu0
    %7035 = vmatprep.mubr.bf16.mxu0 0
    %7036 = vmatmul.mubr.bf16.gmra.mrb[0].mxu0 %v6618
    %v7037 = vpop.f32.mrb[0].mxu0
    %v7038 = vadd.f32 0.0, %v7037
    %v7039 = vpop.f32.mrb[0].mxu0
    %v7040 = vpop.f32.mrb[0].mxu0
    %v7041 = vadd.f32 0.0, %v7040
    %v7042 = vpop.f32.mrb[0].mxu0
    %7043 = vmatprep.mubr.bf16.mxu0 0
    %7044 = vmatmul.mubr.bf16.gmra.mrb[0].mxu0 %v6619
    %v7045 = vpop.f32.mrb[0].mxu0
    %v7046 = vadd.f32 0.0, %v7045
    %v7047 = vpop.f32.mrb[0].mxu0
    %v7048 = vpop.f32.mrb[0].mxu0
    %v7049 = vadd.f32 0.0, %v7048
    %v7050 = vpop.f32.mrb[0].mxu0
    %7051 = vmatprep.mubr.bf16.mxu0 0
    %7052 = vmatmul.mubr.bf16.gmra.mrb[0].mxu0 %v6620
    %v7053 = vpop.f32.mrb[0].mxu0
    %v7054 = vadd.f32 0.0, %v7053
    %v7055 = vpop.f32.mrb[0].mxu0
    %v7056 = vpop.f32.mrb[0].mxu0
    %v7057 = vadd.f32 0.0, %v7056
    %v7058 = vpop.f32.mrb[0].mxu0
    %7059 = vmatprep.mubr.bf16.mxu0 0
    %7060 = vmatmul.mubr.bf16.gmra.mrb[0].mxu0 %v6621
    %v7061 = vpop.f32.mrb[0].mxu0
    %v7062 = vadd.f32 0.0, %v7061
    %v7063 = vpop.f32.mrb[0].mxu0
    %v7064 = vpop.f32.mrb[0].mxu0
    %v7065 = vadd.f32 0.0, %v7064
    %v7066 = vpop.f32.mrb[0].mxu0
    %7067 = vmatprep.mubr.bf16.mxu0 0
    %7068 = vmatmul.mubr.bf16.gmra.mrb[0].mxu0 %v6622
    %v7069 = vpop.f32.mrb[0].mxu0
    %v7070 = vadd.f32 0.0, %v7069
    %v7071 = vpop.f32.mrb[0].mxu0
    %v7072 = vpop.f32.mrb[0].mxu0
    %v7073 = vadd.f32 0.0, %v7072
    %v7074 = vpop.f32.mrb[0].mxu0
    %7075 = vmatprep.mubr.bf16.mxu0 0
    %7076 = vmatmul.mubr.bf16.gmra.mrb[0].mxu0 %v6623
    %v7077 = vpop.f32.mrb[0].mxu0
    %v7078 = vadd.f32 0.0, %v7077
    %v7079 = vpop.f32.mrb[0].mxu0
    %v7080 = vpop.f32.mrb[0].mxu0
    %v7081 = vadd.f32 0.0, %v7080
    %v7082 = vpop.f32.mrb[0].mxu0
    %7083 = vmatprep.mubr.bf16.mxu0 0
    %7084 = vmatmul.mubr.bf16.gmra.mrb[0].mxu0 %v6624
    %v7085 = vpop.f32.mrb[0].mxu0
    %v7086 = vadd.f32 0.0, %v7085
    %v7087 = vpop.f32.mrb[0].mxu0
    %v7088 = vpop.f32.mrb[0].mxu0
    %v7089 = vadd.f32 0.0, %v7088
    %v7090 = vpop.f32.mrb[0].mxu0
    %7091 = vmatprep.mubr.bf16.mxu0 0
    %7092 = vmatmul.mubr.bf16.gmra.mrb[0].mxu0 %v6625
    %v7093 = vpop.f32.mrb[0].mxu0
    %v7094 = vadd.f32 0.0, %v7093
    %v7095 = vpop.f32.mrb[0].mxu0
    %v7096 = vpop.f32.mrb[0].mxu0
    %v7097 = vadd.f32 0.0, %v7096
    %v7098 = vpop.f32.mrb[0].mxu0
    %7099 = vmatprep.mubr.bf16.mxu0 0
    %7100 = vmatmul.mubr.bf16.gmra.mrb[0].mxu0 %v6626
    %v7101 = vpop.f32.mrb[0].mxu0
    %v7102 = vadd.f32 0.0, %v7101
    %v7103 = vpop.f32.mrb[0].mxu0
    %v7104 = vpop.f32.mrb[0].mxu0
    %v7105 = vadd.f32 0.0, %v7104
    %v7106 = vpop.f32.mrb[0].mxu0
    %7107 = vmatprep.mubr.bf16.mxu0 0
    %7108 = vmatmul.mubr.bf16.gmra.mrb[0].mxu0 %v6627
    %v7109 = vpop.f32.mrb[0].mxu0
    %v7110 = vadd.f32 0.0, %v7109
    %v7111 = vpop.f32.mrb[0].mxu0
    %v7112 = vpop.f32.mrb[0].mxu0
    %v7113 = vadd.f32 0.0, %v7112
    %v7114 = vpop.f32.mrb[0].mxu0
    %7115 = vmatprep.mubr.bf16.mxu0 0
    %7116 = vmatmul.mubr.bf16.gmra.mrb[0].mxu0 %v6628
    %v7117 = vpop.f32.mrb[0].mxu0
    %v7118 = vadd.f32 0.0, %v7117
    %v7119 = vpop.f32.mrb[0].mxu0
    %v7120 = vpop.f32.mrb[0].mxu0
    %v7121 = vadd.f32 0.0, %v7120
    %v7122 = vpop.f32.mrb[0].mxu0
    %7123 = vmatprep.mubr.bf16.mxu0 0
    %7124 = vmatmul.mubr.bf16.gmra.mrb[0].mxu0 %v6629
    %v7125 = vpop.f32.mrb[0].mxu0
    %v7126 = vadd.f32 0.0, %v7125
    %v7127 = vpop.f32.mrb[0].mxu0
    %v7128 = vpop.f32.mrb[0].mxu0
    %v7129 = vadd.f32 0.0, %v7128
    %v7130 = vpop.f32.mrb[0].mxu0
    %7131 = vmatprep.mubr.bf16.mxu0 0
    %7132 = vmatmul.mubr.bf16.gmra.mrb[0].mxu0 %v6630
    %v7133 = vpop.f32.mrb[0].mxu0
    %v7134 = vadd.f32 0.0, %v7133
    %v7135 = vpop.f32.mrb[0].mxu0
    %v7136 = vpop.f32.mrb[0].mxu0
    %v7137 = vadd.f32 0.0, %v7136
    %v7138 = vpop.f32.mrb[0].mxu0
    %7139 = vmatprep.mubr.bf16.mxu0 0
    %7140 = vmatmul.mubr.bf16.gmra.mrb[0].mxu0 %v6631
    %v7141 = vpop.f32.mrb[0].mxu0
    %v7142 = vadd.f32 0.0, %v7141
    %v7143 = vpop.f32.mrb[0].mxu0
    %v7144 = vpop.f32.mrb[0].mxu0
    %v7145 = vadd.f32 0.0, %v7144
    %v7146 = vpop.f32.mrb[0].mxu0
    %7147 = vmatprep.mubr.bf16.mxu0 0
    %7148 = vmatmul.mubr.bf16.gmra.mrb[0].mxu0 %v6632
    %v7149 = vpop.f32.mrb[0].mxu0
    %v7150 = vadd.f32 0.0, %v7149
    %v7151 = vpop.f32.mrb[0].mxu0
    %v7152 = vpop.f32.mrb[0].mxu0
    %v7153 = vadd.f32 0.0, %v7152
    %v7154 = vpop.f32.mrb[0].mxu0
    %7155 = vmatprep.mubr.bf16.mxu0 0
    %7156 = vmatmul.mubr.bf16.gmra.mrb[0].mxu0 %v6633
    %v7157 = vpop.f32.mrb[0].mxu0
    %v7158 = vadd.f32 0.0, %v7157
    %v7159 = vpop.f32.mrb[0].mxu0
    %v7160 = vpop.f32.mrb[0].mxu0
    %v7161 = vadd.f32 0.0, %v7160
    %v7162 = vpop.f32.mrb[0].mxu0
    %7163 = vdwg.mxu0
    %v7164 = vadd.f32 %v6364, %v6734
    %v7165 = vadd.f32 %v6365, %v6737
    %v7166 = vadd.f32 %v6366, %v6742
    %v7167 = vadd.f32 %v6367, %v6745
    %v7168 = vadd.f32 %v6368, %v6750
    %v7169 = vadd.f32 %v6369, %v6753
    %v7170 = vadd.f32 %v6370, %v6758
    %v7171 = vadd.f32 %v6371, %v6761
    %v7172 = vadd.f32 %v6372, %v6766
    %v7173 = vadd.f32 %v6373, %v6769
    %v7174 = vadd.f32 %v6374, %v6774
    %v7175 = vadd.f32 %v6375, %v6777
    %v7176 = vadd.f32 %v6376, %v6782
    %v7177 = vadd.f32 %v6377, %v6785
    %v7178 = vadd.f32 %v6378, %v6790
    %v7179 = vadd.f32 %v6379, %v6793
    %v7180 = vadd.f32 %v6380, %v6798
    %v7181 = vadd.f32 %v6381, %v6801
    %v7182 = vadd.f32 %v6382, %v6806
    %v7183 = vadd.f32 %v6383, %v6809
    %v7184 = vadd.f32 %v6384, %v6814
    %v7185 = vadd.f32 %v6385, %v6817
    %v7186 = vadd.f32 %v6386, %v6822
    %v7187 = vadd.f32 %v6387, %v6825
    %v7188 = vadd.f32 %v6388, %v6830
    %v7189 = vadd.f32 %v6389, %v6833
    %v7190 = vadd.f32 %v6390, %v6838
    %v7191 = vadd.f32 %v6391, %v6841
    %v7192 = vadd.f32 %v6392, %v6846
    %v7193 = vadd.f32 %v6393, %v6849
    %v7194 = vadd.f32 %v6394, %v6854
    %v7195 = vadd.f32 %v6395, %v6857
    %v7196 = vadd.f32 %v6396, %v6862
    %v7197 = vadd.f32 %v6397, %v6865
    %v7198 = vadd.f32 %v6398, %v6870
    %v7199 = vadd.f32 %v6399, %v6873
    %v7200 = vadd.f32 %v6400, %v6878
    %v7201 = vadd.f32 %v6401, %v6881
    %v7202 = vadd.f32 %v6402, %v6886
    %v7203 = vadd.f32 %v6403, %v6889
    %v7204 = vadd.f32 %v6404, %v6894
    %v7205 = vadd.f32 %v6405, %v6897
    %v7206 = vadd.f32 %v6406, %v6902
    %v7207 = vadd.f32 %v6407, %v6905
    %v7208 = vadd.f32 %v6408, %v6910
    %v7209 = vadd.f32 %v6409, %v6913
    %v7210 = vadd.f32 %v6410, %v6918
    %v7211 = vadd.f32 %v6411, %v6921
    %v7212 = vadd.f32 %v6412, %v6926
    %v7213 = vadd.f32 %v6413, %v6929
    %v7214 = vadd.f32 %v6414, %v6934
    %v7215 = vadd.f32 %v6415, %v6937
    %v7216 = vadd.f32 %v6416, %v6942
    %v7217 = vadd.f32 %v6417, %v6945
    %v7218 = vadd.f32 %v6418, %v6950
    %v7219 = vadd.f32 %v6419, %v6953
    %v7220 = vadd.f32 %v6420, %v6958
    %v7221 = vadd.f32 %v6421, %v6961
    %v7222 = vadd.f32 %v6422, %v6966
    %v7223 = vadd.f32 %v6423, %v6969
    %v7224 = vadd.f32 %v6424, %v6974
    %v7225 = vadd.f32 %v6425, %v6977
    %v7226 = vadd.f32 %v6426, %v6982
    %v7227 = vadd.f32 %v6427, %v6985
    %v7228 = vadd.f32 %v6428, %v6990
    %v7229 = vadd.f32 %v6429, %v6993
    %v7230 = vadd.f32 %v6430, %v6998
    %v7231 = vadd.f32 %v6431, %v7001
    %v7232 = vadd.f32 %v6432, %v7006
    %v7233 = vadd.f32 %v6433, %v7009
    %v7234 = vadd.f32 %v6434, %v7014
    %v7235 = vadd.f32 %v6435, %v7017
    %v7236 = vadd.f32 %v6436, %v7022
    %v7237 = vadd.f32 %v6437, %v7025
    %v7238 = vadd.f32 %v6438, %v7030
    %v7239 = vadd.f32 %v6439, %v7033
    %v7240 = vadd.f32 %v6440, %v7038
    %v7241 = vadd.f32 %v6441, %v7041
    %v7242 = vadd.f32 %v6442, %v7046
    %v7243 = vadd.f32 %v6443, %v7049
    %v7244 = vadd.f32 %v6444, %v7054
    %v7245 = vadd.f32 %v6445, %v7057
    %v7246 = vadd.f32 %v6446, %v7062
    %v7247 = vadd.f32 %v6447, %v7065
    %v7248 = vadd.f32 %v6448, %v7070
    %v7249 = vadd.f32 %v6449, %v7073
    %v7250 = vadd.f32 %v6450, %v7078
    %v7251 = vadd.f32 %v6451, %v7081
    %v7252 = vadd.f32 %v6452, %v7086
    %v7253 = vadd.f32 %v6453, %v7089
    %v7254 = vadd.f32 %v6454, %v7094
    %v7255 = vadd.f32 %v6455, %v7097
    %v7256 = vadd.f32 %v6456, %v7102
    %v7257 = vadd.f32 %v6457, %v7105
    %v7258 = vadd.f32 %v6458, %v7110
    %v7259 = vadd.f32 %v6459, %v7113
    %v7260 = vadd.f32 %v6460, %v7118
    %v7261 = vadd.f32 %v6461, %v7121
    %v7262 = vadd.f32 %v6462, %v7126
    %v7263 = vadd.f32 %v6463, %v7129
    %v7264 = vadd.f32 %v6464, %v7134
    %v7265 = vadd.f32 %v6465, %v7137
    %v7266 = vadd.f32 %v6466, %v7142
    %v7267 = vadd.f32 %v6467, %v7145
    %v7268 = vadd.f32 %v6468, %v7150
    %v7269 = vadd.f32 %v6469, %v7153
    %v7270 = vadd.f32 %v6470, %v7158
    %v7271 = vadd.f32 %v6471, %v7161
    %v7272 = vld [vmem:[#allocation2 + $0x37] sm:$0xff]
    %v7273 = vld [vmem:[#allocation2 + $0x3f] sm:$0xff]
    %v7274 = vld [vmem:[#allocation2 + $0x47] sm:$0xff]
    %v7275 = vld [vmem:[#allocation2 + $0x4f] sm:$0xff]
    %v7276 = vld [vmem:[#allocation2 + $0x57] sm:$0xff]
    %v7277 = vld [vmem:[#allocation2 + $0x5f] sm:$0xff]
    %v7278 = vld [vmem:[#allocation2 + $0x67] sm:$0xff]
    %v7279 = vld [vmem:[#allocation2 + $0x6f] sm:$0xff]
    %v7280 = vld [vmem:[#allocation2 + $0x77] sm:$0xff]
    %v7281 = vld [vmem:[#allocation2 + $0x7f] sm:$0xff]
    %v7282 = vld [vmem:[#allocation2 + $0x87] sm:$0xff]
    %v7283 = vld [vmem:[#allocation2 + $0x8f] sm:$0xff]
    %v7284 = vld [vmem:[#allocation2 + $0x97] sm:$0xff]
    %v7285 = vld [vmem:[#allocation2 + $0x9f] sm:$0xff]
    %v7286 = vld [vmem:[#allocation2 + $0xa7] sm:$0xff]
    %v7287 = vld [vmem:[#allocation2 + $0xaf] sm:$0xff]
    %v7288 = vld [vmem:[#allocation2 + $0xb7] sm:$0xff]
    %v7289 = vld [vmem:[#allocation2 + $0xbf] sm:$0xff]
    %v7290 = vld [vmem:[#allocation2 + $0xc7] sm:$0xff]
    %v7291 = vld [vmem:[#allocation2 + $0xcf] sm:$0xff]
    %v7292 = vld [vmem:[#allocation2 + $0xd7] sm:$0xff]
    %v7293 = vld [vmem:[#allocation2 + $0xdf] sm:$0xff]
    %v7294 = vld [vmem:[#allocation2 + $0xe7] sm:$0xff]
    %v7295 = vld [vmem:[#allocation2 + $0xef] sm:$0xff]
    %v7296 = vld [vmem:[#allocation2 + $0xf7] sm:$0xff]
    %v7297 = vld [vmem:[#allocation2 + $0xff] sm:$0xff]
    %v7298 = vld [vmem:[#allocation2 + $0x107] sm:$0xff]
    %v7299 = vld [vmem:[#allocation2 + $0x10f] sm:$0xff]
    %v7300 = vld [vmem:[#allocation2 + $0x117] sm:$0xff]
    %v7301 = vld [vmem:[#allocation2 + $0x11f] sm:$0xff]
    %v7302 = vld [vmem:[#allocation2 + $0x127] sm:$0xff]
    %v7303 = vld [vmem:[#allocation2 + $0x12f] sm:$0xff]
    %v7304 = vld [vmem:[#allocation2 + $0x137] sm:$0xff]
    %v7305 = vld [vmem:[#allocation2 + $0x13f] sm:$0xff]
    %v7306 = vld [vmem:[#allocation2 + $0x147] sm:$0xff]
    %v7307 = vld [vmem:[#allocation2 + $0x14f] sm:$0xff]
    %v7308 = vld [vmem:[#allocation2 + $0x157] sm:$0xff]
    %v7309 = vld [vmem:[#allocation2 + $0x15f] sm:$0xff]
    %v7310 = vld [vmem:[#allocation2 + $0x167] sm:$0xff]
    %v7311 = vld [vmem:[#allocation2 + $0x16f] sm:$0xff]
    %v7312 = vld [vmem:[#allocation2 + $0x177] sm:$0xff]
    %v7313 = vld [vmem:[#allocation2 + $0x17f] sm:$0xff]
    %v7314 = vld [vmem:[#allocation2 + $0x187] sm:$0xff]
    %v7315 = vld [vmem:[#allocation2 + $0x18f] sm:$0xff]
    %v7316 = vld [vmem:[#allocation2 + $0x197] sm:$0xff]
    %v7317 = vld [vmem:[#allocation2 + $0x19f] sm:$0xff]
    %v7318 = vld [vmem:[#allocation2 + $0x1a7] sm:$0xff]
    %v7319 = vld [vmem:[#allocation2 + $0x1af] sm:$0xff]
    %v7320 = vld [vmem:[#allocation2 + $0x1b7] sm:$0xff]
    %v7321 = vld [vmem:[#allocation2 + $0x1bf] sm:$0xff]
    %v7322 = vld [vmem:[#allocation2 + $0x1c7] sm:$0xff]
    %v7323 = vld [vmem:[#allocation2 + $0x1cf] sm:$0xff]
    %v7324 = vld [vmem:[#allocation2 + $0x1d7] sm:$0xff]
    %v7325 = vld [vmem:[#allocation2 + $0x1df] sm:$0xff]
    %v7326 = vld [vmem:[#allocation2 + $0x1e7] sm:$0xff]
    %v7327 = vld [vmem:[#allocation2 + $0x1ef] sm:$0xff]
    %v7328 = vld [vmem:[#allocation2 + $0x1f7] sm:$0xff]
    %v7329 = vld [vmem:[#allocation2 + $0x1ff] sm:$0xff]
    %v7330 = vld [vmem:[#allocation2 + $0x207] sm:$0xff]
    %v7331 = vld [vmem:[#allocation2 + $0x20f] sm:$0xff]
    %v7332 = vld [vmem:[#allocation2 + $0x217] sm:$0xff]
    %v7333 = vld [vmem:[#allocation2 + $0x21f] sm:$0xff]
    %v7334 = vld [vmem:[#allocation2 + $0x227] sm:$0xff]
    %v7335 = vld [vmem:[#allocation2 + $0x22f] sm:$0xff]
    %v7336 = vld [vmem:[#allocation2 + $0x237] sm:$0xff]
    %v7337 = vld [vmem:[#allocation2 + $0x23f] sm:$0xff]
    %v7338 = vld [vmem:[#allocation2 + $0x247] sm:$0xff]
    %v7339 = vld [vmem:[#allocation2 + $0x24f] sm:$0xff]
    %v7340 = vld [vmem:[#allocation2 + $0x257] sm:$0xff]
    %v7341 = vld [vmem:[#allocation2 + $0x25f] sm:$0xff]
    %v7342 = vld [vmem:[#allocation2 + $0x267] sm:$0xff]
    %v7343 = vld [vmem:[#allocation2 + $0x26f] sm:$0xff]
    %v7344 = vld [vmem:[#allocation2 + $0x277] sm:$0xff]
    %v7345 = vld [vmem:[#allocation2 + $0x27f] sm:$0xff]
    %v7346 = vld [vmem:[#allocation2 + $0x287] sm:$0xff]
    %v7347 = vld [vmem:[#allocation2 + $0x28f] sm:$0xff]
    %v7348 = vld [vmem:[#allocation2 + $0x297] sm:$0xff]
    %v7349 = vld [vmem:[#allocation2 + $0x29f] sm:$0xff]
    %v7350 = vld [vmem:[#allocation2 + $0x2a7] sm:$0xff]
    %v7351 = vld [vmem:[#allocation2 + $0x2af] sm:$0xff]
    %v7352 = vld [vmem:[#allocation2 + $0x2b7] sm:$0xff]
    %v7353 = vld [vmem:[#allocation2 + $0x2bf] sm:$0xff]
    %v7354 = vld [vmem:[#allocation2 + $0x2c7] sm:$0xff]
    %v7355 = vld [vmem:[#allocation2 + $0x2cf] sm:$0xff]
    %v7356 = vld [vmem:[#allocation2 + $0x2d7] sm:$0xff]
    %v7357 = vld [vmem:[#allocation2 + $0x2df] sm:$0xff]
    %v7358 = vld [vmem:[#allocation2 + $0x2e7] sm:$0xff]
    %v7359 = vld [vmem:[#allocation2 + $0x2ef] sm:$0xff]
    %v7360 = vld [vmem:[#allocation2 + $0x2f7] sm:$0xff]
    %v7361 = vld [vmem:[#allocation2 + $0x2ff] sm:$0xff]
    %v7362 = vld [vmem:[#allocation2 + $0x307] sm:$0xff]
    %v7363 = vld [vmem:[#allocation2 + $0x30f] sm:$0xff]
    %v7364 = vld [vmem:[#allocation2 + $0x317] sm:$0xff]
    %v7365 = vld [vmem:[#allocation2 + $0x31f] sm:$0xff]
    %v7366 = vld [vmem:[#allocation2 + $0x327] sm:$0xff]
    %v7367 = vld [vmem:[#allocation2 + $0x32f] sm:$0xff]
    %v7368 = vld [vmem:[#allocation2 + $0x337] sm:$0xff]
    %v7369 = vld [vmem:[#allocation2 + $0x33f] sm:$0xff]
    %v7370 = vld [vmem:[#allocation2 + $0x347] sm:$0xff]
    %v7371 = vld [vmem:[#allocation2 + $0x34f] sm:$0xff]
    %v7372 = vld [vmem:[#allocation2 + $0x357] sm:$0xff]
    %v7373 = vld [vmem:[#allocation2 + $0x35f] sm:$0xff]
    %v7374 = vld [vmem:[#allocation2 + $0x367] sm:$0xff]
    %v7375 = vld [vmem:[#allocation2 + $0x36f] sm:$0xff]
    %v7376 = vld [vmem:[#allocation2 + $0x377] sm:$0xff]
    %v7377 = vld [vmem:[#allocation2 + $0x37f] sm:$0xff]
    %v7378 = vld [vmem:[#allocation2 + $0x387] sm:$0xff]
    %v7379 = vld [vmem:[#allocation2 + $0x38f] sm:$0xff]
    %v7380 = vpack.c.bf16 %v7273, %v7272
    %v7381 = vpack.c.bf16 %v7275, %v7274
    %v7382 = vpack.c.bf16 %v7277, %v7276
    %v7383 = vpack.c.bf16 %v7279, %v7278
    %v7384 = vpack.c.bf16 %v7281, %v7280
    %v7385 = vpack.c.bf16 %v7283, %v7282
    %v7386 = vpack.c.bf16 %v7285, %v7284
    %v7387 = vpack.c.bf16 %v7287, %v7286
    %v7388 = vpack.c.bf16 %v7289, %v7288
    %v7389 = vpack.c.bf16 %v7291, %v7290
    %v7390 = vpack.c.bf16 %v7293, %v7292
    %v7391 = vpack.c.bf16 %v7295, %v7294
    %v7392 = vpack.c.bf16 %v7297, %v7296
    %v7393 = vpack.c.bf16 %v7299, %v7298
    %v7394 = vpack.c.bf16 %v7301, %v7300
    %v7395 = vpack.c.bf16 %v7303, %v7302
    %v7396 = vpack.c.bf16 %v7305, %v7304
    %v7397 = vpack.c.bf16 %v7307, %v7306
    %v7398 = vpack.c.bf16 %v7309, %v7308
    %v7399 = vpack.c.bf16 %v7311, %v7310
    %v7400 = vpack.c.bf16 %v7313, %v7312
    %v7401 = vpack.c.bf16 %v7315, %v7314
    %v7402 = vpack.c.bf16 %v7317, %v7316
    %v7403 = vpack.c.bf16 %v7319, %v7318
    %v7404 = vpack.c.bf16 %v7321, %v7320
    %v7405 = vpack.c.bf16 %v7323, %v7322
    %v7406 = vpack.c.bf16 %v7325, %v7324
    %v7407 = vpack.c.bf16 %v7327, %v7326
    %v7408 = vpack.c.bf16 %v7329, %v7328
    %v7409 = vpack.c.bf16 %v7331, %v7330
    %v7410 = vpack.c.bf16 %v7333, %v7332
    %v7411 = vpack.c.bf16 %v7335, %v7334
    %v7412 = vpack.c.bf16 %v7337, %v7336
    %v7413 = vpack.c.bf16 %v7339, %v7338
    %v7414 = vpack.c.bf16 %v7341, %v7340
    %v7415 = vpack.c.bf16 %v7343, %v7342
    %v7416 = vpack.c.bf16 %v7345, %v7344
    %v7417 = vpack.c.bf16 %v7347, %v7346
    %v7418 = vpack.c.bf16 %v7349, %v7348
    %v7419 = vpack.c.bf16 %v7351, %v7350
    %v7420 = vpack.c.bf16 %v7353, %v7352
    %v7421 = vpack.c.bf16 %v7355, %v7354
    %v7422 = vpack.c.bf16 %v7357, %v7356
    %v7423 = vpack.c.bf16 %v7359, %v7358
    %v7424 = vpack.c.bf16 %v7361, %v7360
    %v7425 = vpack.c.bf16 %v7363, %v7362
    %v7426 = vpack.c.bf16 %v7365, %v7364
    %v7427 = vpack.c.bf16 %v7367, %v7366
    %v7428 = vpack.c.bf16 %v7369, %v7368
    %v7429 = vpack.c.bf16 %v7371, %v7370
    %v7430 = vpack.c.bf16 %v7373, %v7372
    %v7431 = vpack.c.bf16 %v7375, %v7374
    %v7432 = vpack.c.bf16 %v7377, %v7376
    %v7433 = vpack.c.bf16 %v7379, %v7378
    %s7434 = scalar_lea.vmem %s3, 384
    %v7435 = vld [vmem:[%s7434] sm:$0xf]
    %v7436 = vld [vmem:[%s7434 + $0x4] sm:$0xf]
    %v7437 = vld [vmem:[%s7434 + $0x8] sm:$0xf]
    %v7438 = vld [vmem:[%s7434 + $0xc] sm:$0xf]
    %v7439 = vld [vmem:[%s7434 + $0x10] sm:$0xf]
    %v7440 = vld [vmem:[%s7434 + $0x14] sm:$0xf]
    %v7441 = vld [vmem:[%s7434 + $0x18] sm:$0xf]
    %v7442 = vld [vmem:[%s7434 + $0x1c] sm:$0xf]
    %v7443 = vld [vmem:[%s7434 + $0x20] sm:$0xf]
    %v7444 = vld [vmem:[%s7434 + $0x24] sm:$0xf]
    %v7445 = vld [vmem:[%s7434 + $0x28] sm:$0xf]
    %v7446 = vld [vmem:[%s7434 + $0x2c] sm:$0xf]
    %v7447 = vld [vmem:[%s7434 + $0x30] sm:$0xf]
    %v7448 = vld [vmem:[%s7434 + $0x34] sm:$0xf]
    %v7449 = vld [vmem:[%s7434 + $0x38] sm:$0xf]
    %v7450 = vld [vmem:[%s7434 + $0x3c] sm:$0xf]
    %v7467 = vunpack.c.l.b16 %v7435
    %v7468 = vunpack.c.l.b16 %v7436
    %v7469 = vunpack.c.l.b16 %v7437
    %v7470 = vunpack.c.l.b16 %v7438
    %v7471 = vunpack.c.l.b16 %v7439
    %v7472 = vunpack.c.l.b16 %v7440
    %v7473 = vunpack.c.l.b16 %v7441
    %v7474 = vunpack.c.l.b16 %v7442
    %v7475 = vunpack.c.l.b16 %v7443
    %v7476 = vunpack.c.l.b16 %v7444
    %v7477 = vunpack.c.l.b16 %v7445
    %v7478 = vunpack.c.l.b16 %v7446
    %v7479 = vunpack.c.l.b16 %v7447
    %v7480 = vunpack.c.l.b16 %v7448
    %v7481 = vunpack.c.l.b16 %v7449
    %v7482 = vunpack.c.l.b16 %v7450
    %v7483 = vpack.c.b16 %v7468, %v7467
    %v7484 = vpack.c.b16 %v7470, %v7469
    %v7485 = vpack.c.b16 %v7472, %v7471
    %v7486 = vpack.c.b16 %v7474, %v7473
    %v7487 = vpack.c.b16 %v7476, %v7475
    %v7488 = vpack.c.b16 %v7478, %v7477
    %v7489 = vpack.c.b16 %v7480, %v7479
    %v7490 = vpack.c.b16 %v7482, %v7481
    %7499 = vmatprep.subr.bf16.mxu0 0
    %7500 = vmatpush1.bf16.msra.mxu0 %v7483
    %7501 = vmatprep.subr.bf16.mxu0 0
    %7502 = vmatpush1.bf16.msra.mxu0 %v7484
    %7503 = vmatprep.subr.bf16.mxu0 0
    %7504 = vmatpush1.bf16.msra.mxu0 %v7485
    %7505 = vmatprep.subr.bf16.mxu0 0
    %7506 = vmatpush1.bf16.msra.mxu0 %v7486
    %7507 = vmatprep.subr.bf16.mxu0 0
    %7508 = vmatpush1.bf16.msra.mxu0 %v7487
    %7509 = vmatprep.subr.bf16.mxu0 0
    %7510 = vmatpush1.bf16.msra.mxu0 %v7488
    %7511 = vmatprep.subr.bf16.mxu0 0
    %7512 = vmatpush1.bf16.msra.mxu0 %v7489
    %7513 = vmatprep.subr.bf16.mxu0 0
    %7514 = vmatpush1.bf16.msra.mxu0 %v7490
    %7515 = vmatprep.subr.bf16.mxu0 0
    %7516 = vmatpush1.bf16.msra.mxu0 0
    %7517 = vmatprep.subr.bf16.mxu0 0
    %7518 = vmatpush1.bf16.msra.mxu0 0
    %7519 = vmatprep.subr.bf16.mxu0 0
    %7520 = vmatpush1.bf16.msra.mxu0 0
    %7521 = vmatprep.subr.bf16.mxu0 0
    %7522 = vmatpush1.bf16.msra.mxu0 0
    %7523 = vmatprep.subr.bf16.mxu0 0
    %7524 = vmatpush1.bf16.msra.mxu0 0
    %7525 = vmatprep.subr.bf16.mxu0 0
    %7526 = vmatpush1.bf16.msra.mxu0 0
    %7527 = vmatprep.subr.bf16.mxu0 0
    %7528 = vmatpush1.bf16.msra.mxu0 0
    %7529 = vmatprep.subr.bf16.mxu0 0
    %7530 = vmatpush1.bf16.msra.mxu0 0
    %7531 = vmatprep.mubr.bf16.mxu0 0
    %7532 = vmatmul.mubr.bf16.gmra.mrb[0].mxu0 %v7380
    %v7533 = vpop.f32.mrb[0].mxu0
    %v7534 = vadd.f32 0.0, %v7533
    %v7535 = vpop.f32.mrb[0].mxu0
    %v7536 = vpop.f32.mrb[0].mxu0
    %v7537 = vadd.f32 0.0, %v7536
    %v7538 = vpop.f32.mrb[0].mxu0
    %7539 = vmatprep.mubr.bf16.mxu0 0
    %7540 = vmatmul.mubr.bf16.gmra.mrb[0].mxu0 %v7381
    %v7541 = vpop.f32.mrb[0].mxu0
    %v7542 = vadd.f32 0.0, %v7541
    %v7543 = vpop.f32.mrb[0].mxu0
    %v7544 = vpop.f32.mrb[0].mxu0
    %v7545 = vadd.f32 0.0, %v7544
    %v7546 = vpop.f32.mrb[0].mxu0
    %7547 = vmatprep.mubr.bf16.mxu0 0
    %7548 = vmatmul.mubr.bf16.gmra.mrb[0].mxu0 %v7382
    %v7549 = vpop.f32.mrb[0].mxu0
    %v7550 = vadd.f32 0.0, %v7549
    %v7551 = vpop.f32.mrb[0].mxu0
    %v7552 = vpop.f32.mrb[0].mxu0
    %v7553 = vadd.f32 0.0, %v7552
    %v7554 = vpop.f32.mrb[0].mxu0
    %7555 = vmatprep.mubr.bf16.mxu0 0
    %7556 = vmatmul.mubr.bf16.gmra.mrb[0].mxu0 %v7383
    %v7557 = vpop.f32.mrb[0].mxu0
    %v7558 = vadd.f32 0.0, %v7557
    %v7559 = vpop.f32.mrb[0].mxu0
    %v7560 = vpop.f32.mrb[0].mxu0
    %v7561 = vadd.f32 0.0, %v7560
    %v7562 = vpop.f32.mrb[0].mxu0
    %7563 = vmatprep.mubr.bf16.mxu0 0
    %7564 = vmatmul.mubr.bf16.gmra.mrb[0].mxu0 %v7384
    %v7565 = vpop.f32.mrb[0].mxu0
    %v7566 = vadd.f32 0.0, %v7565
    %v7567 = vpop.f32.mrb[0].mxu0
    %v7568 = vpop.f32.mrb[0].mxu0
    %v7569 = vadd.f32 0.0, %v7568
    %v7570 = vpop.f32.mrb[0].mxu0
    %7571 = vmatprep.mubr.bf16.mxu0 0
    %7572 = vmatmul.mubr.bf16.gmra.mrb[0].mxu0 %v7385
    %v7573 = vpop.f32.mrb[0].mxu0
    %v7574 = vadd.f32 0.0, %v7573
    %v7575 = vpop.f32.mrb[0].mxu0
    %v7576 = vpop.f32.mrb[0].mxu0
    %v7577 = vadd.f32 0.0, %v7576
    %v7578 = vpop.f32.mrb[0].mxu0
    %7579 = vmatprep.mubr.bf16.mxu0 0
    %7580 = vmatmul.mubr.bf16.gmra.mrb[0].mxu0 %v7386
    %v7581 = vpop.f32.mrb[0].mxu0
    %v7582 = vadd.f32 0.0, %v7581
    %v7583 = vpop.f32.mrb[0].mxu0
    %v7584 = vpop.f32.mrb[0].mxu0
    %v7585 = vadd.f32 0.0, %v7584
    %v7586 = vpop.f32.mrb[0].mxu0
    %7587 = vmatprep.mubr.bf16.mxu0 0
    %7588 = vmatmul.mubr.bf16.gmra.mrb[0].mxu0 %v7387
    %v7589 = vpop.f32.mrb[0].mxu0
    %v7590 = vadd.f32 0.0, %v7589
    %v7591 = vpop.f32.mrb[0].mxu0
    %v7592 = vpop.f32.mrb[0].mxu0
    %v7593 = vadd.f32 0.0, %v7592
    %v7594 = vpop.f32.mrb[0].mxu0
    %7595 = vmatprep.mubr.bf16.mxu0 0
    %7596 = vmatmul.mubr.bf16.gmra.mrb[0].mxu0 %v7388
    %v7597 = vpop.f32.mrb[0].mxu0
    %v7598 = vadd.f32 0.0, %v7597
    %v7599 = vpop.f32.mrb[0].mxu0
    %v7600 = vpop.f32.mrb[0].mxu0
    %v7601 = vadd.f32 0.0, %v7600
    %v7602 = vpop.f32.mrb[0].mxu0
    %7603 = vmatprep.mubr.bf16.mxu0 0
    %7604 = vmatmul.mubr.bf16.gmra.mrb[0].mxu0 %v7389
    %v7605 = vpop.f32.mrb[0].mxu0
    %v7606 = vadd.f32 0.0, %v7605
    %v7607 = vpop.f32.mrb[0].mxu0
    %v7608 = vpop.f32.mrb[0].mxu0
    %v7609 = vadd.f32 0.0, %v7608
    %v7610 = vpop.f32.mrb[0].mxu0
    %7611 = vmatprep.mubr.bf16.mxu0 0
    %7612 = vmatmul.mubr.bf16.gmra.mrb[0].mxu0 %v7390
    %v7613 = vpop.f32.mrb[0].mxu0
    %v7614 = vadd.f32 0.0, %v7613
    %v7615 = vpop.f32.mrb[0].mxu0
    %v7616 = vpop.f32.mrb[0].mxu0
    %v7617 = vadd.f32 0.0, %v7616
    %v7618 = vpop.f32.mrb[0].mxu0
    %7619 = vmatprep.mubr.bf16.mxu0 0
    %7620 = vmatmul.mubr.bf16.gmra.mrb[0].mxu0 %v7391
    %v7621 = vpop.f32.mrb[0].mxu0
    %v7622 = vadd.f32 0.0, %v7621
    %v7623 = vpop.f32.mrb[0].mxu0
    %v7624 = vpop.f32.mrb[0].mxu0
    %v7625 = vadd.f32 0.0, %v7624
    %v7626 = vpop.f32.mrb[0].mxu0
    %7627 = vmatprep.mubr.bf16.mxu0 0
    %7628 = vmatmul.mubr.bf16.gmra.mrb[0].mxu0 %v7392
    %v7629 = vpop.f32.mrb[0].mxu0
    %v7630 = vadd.f32 0.0, %v7629
    %v7631 = vpop.f32.mrb[0].mxu0
    %v7632 = vpop.f32.mrb[0].mxu0
    %v7633 = vadd.f32 0.0, %v7632
    %v7634 = vpop.f32.mrb[0].mxu0
    %7635 = vmatprep.mubr.bf16.mxu0 0
    %7636 = vmatmul.mubr.bf16.gmra.mrb[0].mxu0 %v7393
    %v7637 = vpop.f32.mrb[0].mxu0
    %v7638 = vadd.f32 0.0, %v7637
    %v7639 = vpop.f32.mrb[0].mxu0
    %v7640 = vpop.f32.mrb[0].mxu0
    %v7641 = vadd.f32 0.0, %v7640
    %v7642 = vpop.f32.mrb[0].mxu0
    %7643 = vmatprep.mubr.bf16.mxu0 0
    %7644 = vmatmul.mubr.bf16.gmra.mrb[0].mxu0 %v7394
    %v7645 = vpop.f32.mrb[0].mxu0
    %v7646 = vadd.f32 0.0, %v7645
    %v7647 = vpop.f32.mrb[0].mxu0
    %v7648 = vpop.f32.mrb[0].mxu0
    %v7649 = vadd.f32 0.0, %v7648
    %v7650 = vpop.f32.mrb[0].mxu0
    %7651 = vmatprep.mubr.bf16.mxu0 0
    %7652 = vmatmul.mubr.bf16.gmra.mrb[0].mxu0 %v7395
    %v7653 = vpop.f32.mrb[0].mxu0
    %v7654 = vadd.f32 0.0, %v7653
    %v7655 = vpop.f32.mrb[0].mxu0
    %v7656 = vpop.f32.mrb[0].mxu0
    %v7657 = vadd.f32 0.0, %v7656
    %v7658 = vpop.f32.mrb[0].mxu0
    %7659 = vmatprep.mubr.bf16.mxu0 0
    %7660 = vmatmul.mubr.bf16.gmra.mrb[0].mxu0 %v7396
    %v7661 = vpop.f32.mrb[0].mxu0
    %v7662 = vadd.f32 0.0, %v7661
    %v7663 = vpop.f32.mrb[0].mxu0
    %v7664 = vpop.f32.mrb[0].mxu0
    %v7665 = vadd.f32 0.0, %v7664
    %v7666 = vpop.f32.mrb[0].mxu0
    %7667 = vmatprep.mubr.bf16.mxu0 0
    %7668 = vmatmul.mubr.bf16.gmra.mrb[0].mxu0 %v7397
    %v7669 = vpop.f32.mrb[0].mxu0
    %v7670 = vadd.f32 0.0, %v7669
    %v7671 = vpop.f32.mrb[0].mxu0
    %v7672 = vpop.f32.mrb[0].mxu0
    %v7673 = vadd.f32 0.0, %v7672
    %v7674 = vpop.f32.mrb[0].mxu0
    %7675 = vmatprep.mubr.bf16.mxu0 0
    %7676 = vmatmul.mubr.bf16.gmra.mrb[0].mxu0 %v7398
    %v7677 = vpop.f32.mrb[0].mxu0
    %v7678 = vadd.f32 0.0, %v7677
    %v7679 = vpop.f32.mrb[0].mxu0
    %v7680 = vpop.f32.mrb[0].mxu0
    %v7681 = vadd.f32 0.0, %v7680
    %v7682 = vpop.f32.mrb[0].mxu0
    %7683 = vmatprep.mubr.bf16.mxu0 0
    %7684 = vmatmul.mubr.bf16.gmra.mrb[0].mxu0 %v7399
    %v7685 = vpop.f32.mrb[0].mxu0
    %v7686 = vadd.f32 0.0, %v7685
    %v7687 = vpop.f32.mrb[0].mxu0
    %v7688 = vpop.f32.mrb[0].mxu0
    %v7689 = vadd.f32 0.0, %v7688
    %v7690 = vpop.f32.mrb[0].mxu0
    %7691 = vmatprep.mubr.bf16.mxu0 0
    %7692 = vmatmul.mubr.bf16.gmra.mrb[0].mxu0 %v7400
    %v7693 = vpop.f32.mrb[0].mxu0
    %v7694 = vadd.f32 0.0, %v7693
    %v7695 = vpop.f32.mrb[0].mxu0
    %v7696 = vpop.f32.mrb[0].mxu0
    %v7697 = vadd.f32 0.0, %v7696
    %v7698 = vpop.f32.mrb[0].mxu0
    %7699 = vmatprep.mubr.bf16.mxu0 0
    %7700 = vmatmul.mubr.bf16.gmra.mrb[0].mxu0 %v7401
    %v7701 = vpop.f32.mrb[0].mxu0
    %v7702 = vadd.f32 0.0, %v7701
    %v7703 = vpop.f32.mrb[0].mxu0
    %v7704 = vpop.f32.mrb[0].mxu0
    %v7705 = vadd.f32 0.0, %v7704
    %v7706 = vpop.f32.mrb[0].mxu0
    %7707 = vmatprep.mubr.bf16.mxu0 0
    %7708 = vmatmul.mubr.bf16.gmra.mrb[0].mxu0 %v7402
    %v7709 = vpop.f32.mrb[0].mxu0
    %v7710 = vadd.f32 0.0, %v7709
    %v7711 = vpop.f32.mrb[0].mxu0
    %v7712 = vpop.f32.mrb[0].mxu0
    %v7713 = vadd.f32 0.0, %v7712
    %v7714 = vpop.f32.mrb[0].mxu0
    %7715 = vmatprep.mubr.bf16.mxu0 0
    %7716 = vmatmul.mubr.bf16.gmra.mrb[0].mxu0 %v7403
    %v7717 = vpop.f32.mrb[0].mxu0
    %v7718 = vadd.f32 0.0, %v7717
    %v7719 = vpop.f32.mrb[0].mxu0
    %v7720 = vpop.f32.mrb[0].mxu0
    %v7721 = vadd.f32 0.0, %v7720
    %v7722 = vpop.f32.mrb[0].mxu0
    %7723 = vmatprep.mubr.bf16.mxu0 0
    %7724 = vmatmul.mubr.bf16.gmra.mrb[0].mxu0 %v7404
    %v7725 = vpop.f32.mrb[0].mxu0
    %v7726 = vadd.f32 0.0, %v7725
    %v7727 = vpop.f32.mrb[0].mxu0
    %v7728 = vpop.f32.mrb[0].mxu0
    %v7729 = vadd.f32 0.0, %v7728
    %v7730 = vpop.f32.mrb[0].mxu0
    %7731 = vmatprep.mubr.bf16.mxu0 0
    %7732 = vmatmul.mubr.bf16.gmra.mrb[0].mxu0 %v7405
    %v7733 = vpop.f32.mrb[0].mxu0
    %v7734 = vadd.f32 0.0, %v7733
    %v7735 = vpop.f32.mrb[0].mxu0
    %v7736 = vpop.f32.mrb[0].mxu0
    %v7737 = vadd.f32 0.0, %v7736
    %v7738 = vpop.f32.mrb[0].mxu0
    %7739 = vmatprep.mubr.bf16.mxu0 0
    %7740 = vmatmul.mubr.bf16.gmra.mrb[0].mxu0 %v7406
    %v7741 = vpop.f32.mrb[0].mxu0
    %v7742 = vadd.f32 0.0, %v7741
    %v7743 = vpop.f32.mrb[0].mxu0
    %v7744 = vpop.f32.mrb[0].mxu0
    %v7745 = vadd.f32 0.0, %v7744
    %v7746 = vpop.f32.mrb[0].mxu0
    %7747 = vmatprep.mubr.bf16.mxu0 0
    %7748 = vmatmul.mubr.bf16.gmra.mrb[0].mxu0 %v7407
    %v7749 = vpop.f32.mrb[0].mxu0
    %v7750 = vadd.f32 0.0, %v7749
    %v7751 = vpop.f32.mrb[0].mxu0
    %v7752 = vpop.f32.mrb[0].mxu0
    %v7753 = vadd.f32 0.0, %v7752
    %v7754 = vpop.f32.mrb[0].mxu0
    %7755 = vmatprep.mubr.bf16.mxu0 0
    %7756 = vmatmul.mubr.bf16.gmra.mrb[0].mxu0 %v7408
    %v7757 = vpop.f32.mrb[0].mxu0
    %v7758 = vadd.f32 0.0, %v7757
    %v7759 = vpop.f32.mrb[0].mxu0
    %v7760 = vpop.f32.mrb[0].mxu0
    %v7761 = vadd.f32 0.0, %v7760
    %v7762 = vpop.f32.mrb[0].mxu0
    %7763 = vmatprep.mubr.bf16.mxu0 0
    %7764 = vmatmul.mubr.bf16.gmra.mrb[0].mxu0 %v7409
    %v7765 = vpop.f32.mrb[0].mxu0
    %v7766 = vadd.f32 0.0, %v7765
    %v7767 = vpop.f32.mrb[0].mxu0
    %v7768 = vpop.f32.mrb[0].mxu0
    %v7769 = vadd.f32 0.0, %v7768
    %v7770 = vpop.f32.mrb[0].mxu0
    %7771 = vmatprep.mubr.bf16.mxu0 0
    %7772 = vmatmul.mubr.bf16.gmra.mrb[0].mxu0 %v7410
    %v7773 = vpop.f32.mrb[0].mxu0
    %v7774 = vadd.f32 0.0, %v7773
    %v7775 = vpop.f32.mrb[0].mxu0
    %v7776 = vpop.f32.mrb[0].mxu0
    %v7777 = vadd.f32 0.0, %v7776
    %v7778 = vpop.f32.mrb[0].mxu0
    %7779 = vmatprep.mubr.bf16.mxu0 0
    %7780 = vmatmul.mubr.bf16.gmra.mrb[0].mxu0 %v7411
    %v7781 = vpop.f32.mrb[0].mxu0
    %v7782 = vadd.f32 0.0, %v7781
    %v7783 = vpop.f32.mrb[0].mxu0
    %v7784 = vpop.f32.mrb[0].mxu0
    %v7785 = vadd.f32 0.0, %v7784
    %v7786 = vpop.f32.mrb[0].mxu0
    %7787 = vmatprep.mubr.bf16.mxu0 0
    %7788 = vmatmul.mubr.bf16.gmra.mrb[0].mxu0 %v7412
    %v7789 = vpop.f32.mrb[0].mxu0
    %v7790 = vadd.f32 0.0, %v7789
    %v7791 = vpop.f32.mrb[0].mxu0
    %v7792 = vpop.f32.mrb[0].mxu0
    %v7793 = vadd.f32 0.0, %v7792
    %v7794 = vpop.f32.mrb[0].mxu0
    %7795 = vmatprep.mubr.bf16.mxu0 0
    %7796 = vmatmul.mubr.bf16.gmra.mrb[0].mxu0 %v7413
    %v7797 = vpop.f32.mrb[0].mxu0
    %v7798 = vadd.f32 0.0, %v7797
    %v7799 = vpop.f32.mrb[0].mxu0
    %v7800 = vpop.f32.mrb[0].mxu0
    %v7801 = vadd.f32 0.0, %v7800
    %v7802 = vpop.f32.mrb[0].mxu0
    %7803 = vmatprep.mubr.bf16.mxu0 0
    %7804 = vmatmul.mubr.bf16.gmra.mrb[0].mxu0 %v7414
    %v7805 = vpop.f32.mrb[0].mxu0
    %v7806 = vadd.f32 0.0, %v7805
    %v7807 = vpop.f32.mrb[0].mxu0
    %v7808 = vpop.f32.mrb[0].mxu0
    %v7809 = vadd.f32 0.0, %v7808
    %v7810 = vpop.f32.mrb[0].mxu0
    %7811 = vmatprep.mubr.bf16.mxu0 0
    %7812 = vmatmul.mubr.bf16.gmra.mrb[0].mxu0 %v7415
    %v7813 = vpop.f32.mrb[0].mxu0
    %v7814 = vadd.f32 0.0, %v7813
    %v7815 = vpop.f32.mrb[0].mxu0
    %v7816 = vpop.f32.mrb[0].mxu0
    %v7817 = vadd.f32 0.0, %v7816
    %v7818 = vpop.f32.mrb[0].mxu0
    %7819 = vmatprep.mubr.bf16.mxu0 0
    %7820 = vmatmul.mubr.bf16.gmra.mrb[0].mxu0 %v7416
    %v7821 = vpop.f32.mrb[0].mxu0
    %v7822 = vadd.f32 0.0, %v7821
    %v7823 = vpop.f32.mrb[0].mxu0
    %v7824 = vpop.f32.mrb[0].mxu0
    %v7825 = vadd.f32 0.0, %v7824
    %v7826 = vpop.f32.mrb[0].mxu0
    %7827 = vmatprep.mubr.bf16.mxu0 0
    %7828 = vmatmul.mubr.bf16.gmra.mrb[0].mxu0 %v7417
    %v7829 = vpop.f32.mrb[0].mxu0
    %v7830 = vadd.f32 0.0, %v7829
    %v7831 = vpop.f32.mrb[0].mxu0
    %v7832 = vpop.f32.mrb[0].mxu0
    %v7833 = vadd.f32 0.0, %v7832
    %v7834 = vpop.f32.mrb[0].mxu0
    %7835 = vmatprep.mubr.bf16.mxu0 0
    %7836 = vmatmul.mubr.bf16.gmra.mrb[0].mxu0 %v7418
    %v7837 = vpop.f32.mrb[0].mxu0
    %v7838 = vadd.f32 0.0, %v7837
    %v7839 = vpop.f32.mrb[0].mxu0
    %v7840 = vpop.f32.mrb[0].mxu0
    %v7841 = vadd.f32 0.0, %v7840
    %v7842 = vpop.f32.mrb[0].mxu0
    %7843 = vmatprep.mubr.bf16.mxu0 0
    %7844 = vmatmul.mubr.bf16.gmra.mrb[0].mxu0 %v7419
    %v7845 = vpop.f32.mrb[0].mxu0
    %v7846 = vadd.f32 0.0, %v7845
    %v7847 = vpop.f32.mrb[0].mxu0
    %v7848 = vpop.f32.mrb[0].mxu0
    %v7849 = vadd.f32 0.0, %v7848
    %v7850 = vpop.f32.mrb[0].mxu0
    %7851 = vmatprep.mubr.bf16.mxu0 0
    %7852 = vmatmul.mubr.bf16.gmra.mrb[0].mxu0 %v7420
    %v7853 = vpop.f32.mrb[0].mxu0
    %v7854 = vadd.f32 0.0, %v7853
    %v7855 = vpop.f32.mrb[0].mxu0
    %v7856 = vpop.f32.mrb[0].mxu0
    %v7857 = vadd.f32 0.0, %v7856
    %v7858 = vpop.f32.mrb[0].mxu0
    %7859 = vmatprep.mubr.bf16.mxu0 0
    %7860 = vmatmul.mubr.bf16.gmra.mrb[0].mxu0 %v7421
    %v7861 = vpop.f32.mrb[0].mxu0
    %v7862 = vadd.f32 0.0, %v7861
    %v7863 = vpop.f32.mrb[0].mxu0
    %v7864 = vpop.f32.mrb[0].mxu0
    %v7865 = vadd.f32 0.0, %v7864
    %v7866 = vpop.f32.mrb[0].mxu0
    %7867 = vmatprep.mubr.bf16.mxu0 0
    %7868 = vmatmul.mubr.bf16.gmra.mrb[0].mxu0 %v7422
    %v7869 = vpop.f32.mrb[0].mxu0
    %v7870 = vadd.f32 0.0, %v7869
    %v7871 = vpop.f32.mrb[0].mxu0
    %v7872 = vpop.f32.mrb[0].mxu0
    %v7873 = vadd.f32 0.0, %v7872
    %v7874 = vpop.f32.mrb[0].mxu0
    %7875 = vmatprep.mubr.bf16.mxu0 0
    %7876 = vmatmul.mubr.bf16.gmra.mrb[0].mxu0 %v7423
    %v7877 = vpop.f32.mrb[0].mxu0
    %v7878 = vadd.f32 0.0, %v7877
    %v7879 = vpop.f32.mrb[0].mxu0
    %v7880 = vpop.f32.mrb[0].mxu0
    %v7881 = vadd.f32 0.0, %v7880
    %v7882 = vpop.f32.mrb[0].mxu0
    %7883 = vmatprep.mubr.bf16.mxu0 0
    %7884 = vmatmul.mubr.bf16.gmra.mrb[0].mxu0 %v7424
    %v7885 = vpop.f32.mrb[0].mxu0
    %v7886 = vadd.f32 0.0, %v7885
    %v7887 = vpop.f32.mrb[0].mxu0
    %v7888 = vpop.f32.mrb[0].mxu0
    %v7889 = vadd.f32 0.0, %v7888
    %v7890 = vpop.f32.mrb[0].mxu0
    %7891 = vmatprep.mubr.bf16.mxu0 0
    %7892 = vmatmul.mubr.bf16.gmra.mrb[0].mxu0 %v7425
    %v7893 = vpop.f32.mrb[0].mxu0
    %v7894 = vadd.f32 0.0, %v7893
    %v7895 = vpop.f32.mrb[0].mxu0
    %v7896 = vpop.f32.mrb[0].mxu0
    %v7897 = vadd.f32 0.0, %v7896
    %v7898 = vpop.f32.mrb[0].mxu0
    %7899 = vmatprep.mubr.bf16.mxu0 0
    %7900 = vmatmul.mubr.bf16.gmra.mrb[0].mxu0 %v7426
    %v7901 = vpop.f32.mrb[0].mxu0
    %v7902 = vadd.f32 0.0, %v7901
    %v7903 = vpop.f32.mrb[0].mxu0
    %v7904 = vpop.f32.mrb[0].mxu0
    %v7905 = vadd.f32 0.0, %v7904
    %v7906 = vpop.f32.mrb[0].mxu0
    %7907 = vmatprep.mubr.bf16.mxu0 0
    %7908 = vmatmul.mubr.bf16.gmra.mrb[0].mxu0 %v7427
    %v7909 = vpop.f32.mrb[0].mxu0
    %v7910 = vadd.f32 0.0, %v7909
    %v7911 = vpop.f32.mrb[0].mxu0
    %v7912 = vpop.f32.mrb[0].mxu0
    %v7913 = vadd.f32 0.0, %v7912
    %v7914 = vpop.f32.mrb[0].mxu0
    %7915 = vmatprep.mubr.bf16.mxu0 0
    %7916 = vmatmul.mubr.bf16.gmra.mrb[0].mxu0 %v7428
    %v7917 = vpop.f32.mrb[0].mxu0
    %v7918 = vadd.f32 0.0, %v7917
    %v7919 = vpop.f32.mrb[0].mxu0
    %v7920 = vpop.f32.mrb[0].mxu0
    %v7921 = vadd.f32 0.0, %v7920
    %v7922 = vpop.f32.mrb[0].mxu0
    %7923 = vmatprep.mubr.bf16.mxu0 0
    %7924 = vmatmul.mubr.bf16.gmra.mrb[0].mxu0 %v7429
    %v7925 = vpop.f32.mrb[0].mxu0
    %v7926 = vadd.f32 0.0, %v7925
    %v7927 = vpop.f32.mrb[0].mxu0
    %v7928 = vpop.f32.mrb[0].mxu0
    %v7929 = vadd.f32 0.0, %v7928
    %v7930 = vpop.f32.mrb[0].mxu0
    %7931 = vmatprep.mubr.bf16.mxu0 0
    %7932 = vmatmul.mubr.bf16.gmra.mrb[0].mxu0 %v7430
    %v7933 = vpop.f32.mrb[0].mxu0
    %v7934 = vadd.f32 0.0, %v7933
    %v7935 = vpop.f32.mrb[0].mxu0
    %v7936 = vpop.f32.mrb[0].mxu0
    %v7937 = vadd.f32 0.0, %v7936
    %v7938 = vpop.f32.mrb[0].mxu0
    %7939 = vmatprep.mubr.bf16.mxu0 0
    %7940 = vmatmul.mubr.bf16.gmra.mrb[0].mxu0 %v7431
    %v7941 = vpop.f32.mrb[0].mxu0
    %v7942 = vadd.f32 0.0, %v7941
    %v7943 = vpop.f32.mrb[0].mxu0
    %v7944 = vpop.f32.mrb[0].mxu0
    %v7945 = vadd.f32 0.0, %v7944
    %v7946 = vpop.f32.mrb[0].mxu0
    %7947 = vmatprep.mubr.bf16.mxu0 0
    %7948 = vmatmul.mubr.bf16.gmra.mrb[0].mxu0 %v7432
    %v7949 = vpop.f32.mrb[0].mxu0
    %v7950 = vadd.f32 0.0, %v7949
    %v7951 = vpop.f32.mrb[0].mxu0
    %v7952 = vpop.f32.mrb[0].mxu0
    %v7953 = vadd.f32 0.0, %v7952
    %v7954 = vpop.f32.mrb[0].mxu0
    %7955 = vmatprep.mubr.bf16.mxu0 0
    %7956 = vmatmul.mubr.bf16.gmra.mrb[0].mxu0 %v7433
    %v7957 = vpop.f32.mrb[0].mxu0
    %v7958 = vadd.f32 0.0, %v7957
    %v7959 = vpop.f32.mrb[0].mxu0
    %v7960 = vpop.f32.mrb[0].mxu0
    %v7961 = vadd.f32 0.0, %v7960
    %v7962 = vpop.f32.mrb[0].mxu0
    %7963 = vdwg.mxu0
    %v7964 = vadd.f32 %v7164, %v7534
    %v7965 = vadd.f32 %v7165, %v7537
    %v7966 = vadd.f32 %v7166, %v7542
    %v7967 = vadd.f32 %v7167, %v7545
    %v7968 = vadd.f32 %v7168, %v7550
    %v7969 = vadd.f32 %v7169, %v7553
    %v7970 = vadd.f32 %v7170, %v7558
    %v7971 = vadd.f32 %v7171, %v7561
    %v7972 = vadd.f32 %v7172, %v7566
    %v7973 = vadd.f32 %v7173, %v7569
    %v7974 = vadd.f32 %v7174, %v7574
    %v7975 = vadd.f32 %v7175, %v7577
    %v7976 = vadd.f32 %v7176, %v7582
    %v7977 = vadd.f32 %v7177, %v7585
    %v7978 = vadd.f32 %v7178, %v7590
    %v7979 = vadd.f32 %v7179, %v7593
    %v7980 = vadd.f32 %v7180, %v7598
    %v7981 = vadd.f32 %v7181, %v7601
    %v7982 = vadd.f32 %v7182, %v7606
    %v7983 = vadd.f32 %v7183, %v7609
    %v7984 = vadd.f32 %v7184, %v7614
    %v7985 = vadd.f32 %v7185, %v7617
    %v7986 = vadd.f32 %v7186, %v7622
    %v7987 = vadd.f32 %v7187, %v7625
    %v7988 = vadd.f32 %v7188, %v7630
    %v7989 = vadd.f32 %v7189, %v7633
    %v7990 = vadd.f32 %v7190, %v7638
    %v7991 = vadd.f32 %v7191, %v7641
    %v7992 = vadd.f32 %v7192, %v7646
    %v7993 = vadd.f32 %v7193, %v7649
    %v7994 = vadd.f32 %v7194, %v7654
    %v7995 = vadd.f32 %v7195, %v7657
    %v7996 = vadd.f32 %v7196, %v7662
    %v7997 = vadd.f32 %v7197, %v7665
    %v7998 = vadd.f32 %v7198, %v7670
    %v7999 = vadd.f32 %v7199, %v7673
    %v8000 = vadd.f32 %v7200, %v7678
    %v8001 = vadd.f32 %v7201, %v7681
    %v8002 = vadd.f32 %v7202, %v7686
    %v8003 = vadd.f32 %v7203, %v7689
    %v8004 = vadd.f32 %v7204, %v7694
    %v8005 = vadd.f32 %v7205, %v7697
    %v8006 = vadd.f32 %v7206, %v7702
    %v8007 = vadd.f32 %v7207, %v7705
    %v8008 = vadd.f32 %v7208, %v7710
    %v8009 = vadd.f32 %v7209, %v7713
    %v8010 = vadd.f32 %v7210, %v7718
    %v8011 = vadd.f32 %v7211, %v7721
    %v8012 = vadd.f32 %v7212, %v7726
    %v8013 = vadd.f32 %v7213, %v7729
    %v8014 = vadd.f32 %v7214, %v7734
    %v8015 = vadd.f32 %v7215, %v7737
    %v8016 = vadd.f32 %v7216, %v7742
    %v8017 = vadd.f32 %v7217, %v7745
    %v8018 = vadd.f32 %v7218, %v7750
    %v8019 = vadd.f32 %v7219, %v7753
    %v8020 = vadd.f32 %v7220, %v7758
    %v8021 = vadd.f32 %v7221, %v7761
    %v8022 = vadd.f32 %v7222, %v7766
    %v8023 = vadd.f32 %v7223, %v7769
    %v8024 = vadd.f32 %v7224, %v7774
    %v8025 = vadd.f32 %v7225, %v7777
    %v8026 = vadd.f32 %v7226, %v7782
    %v8027 = vadd.f32 %v7227, %v7785
    %v8028 = vadd.f32 %v7228, %v7790
    %v8029 = vadd.f32 %v7229, %v7793
    %v8030 = vadd.f32 %v7230, %v7798
    %v8031 = vadd.f32 %v7231, %v7801
    %v8032 = vadd.f32 %v7232, %v7806
    %v8033 = vadd.f32 %v7233, %v7809
    %v8034 = vadd.f32 %v7234, %v7814
    %v8035 = vadd.f32 %v7235, %v7817
    %v8036 = vadd.f32 %v7236, %v7822
    %v8037 = vadd.f32 %v7237, %v7825
    %v8038 = vadd.f32 %v7238, %v7830
    %v8039 = vadd.f32 %v7239, %v7833
    %v8040 = vadd.f32 %v7240, %v7838
    %v8041 = vadd.f32 %v7241, %v7841
    %v8042 = vadd.f32 %v7242, %v7846
    %v8043 = vadd.f32 %v7243, %v7849
    %v8044 = vadd.f32 %v7244, %v7854
    %v8045 = vadd.f32 %v7245, %v7857
    %v8046 = vadd.f32 %v7246, %v7862
    %v8047 = vadd.f32 %v7247, %v7865
    %v8048 = vadd.f32 %v7248, %v7870
    %v8049 = vadd.f32 %v7249, %v7873
    %v8050 = vadd.f32 %v7250, %v7878
    %v8051 = vadd.f32 %v7251, %v7881
    %v8052 = vadd.f32 %v7252, %v7886
    %v8053 = vadd.f32 %v7253, %v7889
    %v8054 = vadd.f32 %v7254, %v7894
    %v8055 = vadd.f32 %v7255, %v7897
    %v8056 = vadd.f32 %v7256, %v7902
    %v8057 = vadd.f32 %v7257, %v7905
    %v8058 = vadd.f32 %v7258, %v7910
    %v8059 = vadd.f32 %v7259, %v7913
    %v8060 = vadd.f32 %v7260, %v7918
    %v8061 = vadd.f32 %v7261, %v7921
    %v8062 = vadd.f32 %v7262, %v7926
    %v8063 = vadd.f32 %v7263, %v7929
    %v8064 = vadd.f32 %v7264, %v7934
    %v8065 = vadd.f32 %v7265, %v7937
    %v8066 = vadd.f32 %v7266, %v7942
    %v8067 = vadd.f32 %v7267, %v7945
    %v8068 = vadd.f32 %v7268, %v7950
    %v8069 = vadd.f32 %v7269, %v7953
    %v8070 = vadd.f32 %v7270, %v7958
    %v8071 = vadd.f32 %v7271, %v7961
    %v8072 = vld [vmem:[#allocation2 + $0x38] sm:$0xff]
    %v8073 = vld [vmem:[#allocation2 + $0x40] sm:$0xff]
    %v8074 = vld [vmem:[#allocation2 + $0x48] sm:$0xff]
    %v8075 = vld [vmem:[#allocation2 + $0x50] sm:$0xff]
    %v8076 = vld [vmem:[#allocation2 + $0x58] sm:$0xff]
    %v8077 = vld [vmem:[#allocation2 + $0x60] sm:$0xff]
    %v8078 = vld [vmem:[#allocation2 + $0x68] sm:$0xff]
    %v8079 = vld [vmem:[#allocation2 + $0x70] sm:$0xff]
    %v8080 = vld [vmem:[#allocation2 + $0x78] sm:$0xff]
    %v8081 = vld [vmem:[#allocation2 + $0x80] sm:$0xff]
    %v8082 = vld [vmem:[#allocation2 + $0x88] sm:$0xff]
    %v8083 = vld [vmem:[#allocation2 + $0x90] sm:$0xff]
    %v8084 = vld [vmem:[#allocation2 + $0x98] sm:$0xff]
    %v8085 = vld [vmem:[#allocation2 + $0xa0] sm:$0xff]
    %v8086 = vld [vmem:[#allocation2 + $0xa8] sm:$0xff]
    %v8087 = vld [vmem:[#allocation2 + $0xb0] sm:$0xff]
    %v8088 = vld [vmem:[#allocation2 + $0xb8] sm:$0xff]
    %v8089 = vld [vmem:[#allocation2 + $0xc0] sm:$0xff]
    %v8090 = vld [vmem:[#allocation2 + $0xc8] sm:$0xff]
    %v8091 = vld [vmem:[#allocation2 + $0xd0] sm:$0xff]
    %v8092 = vld [vmem:[#allocation2 + $0xd8] sm:$0xff]
    %v8093 = vld [vmem:[#allocation2 + $0xe0] sm:$0xff]
    %v8094 = vld [vmem:[#allocation2 + $0xe8] sm:$0xff]
    %v8095 = vld [vmem:[#allocation2 + $0xf0] sm:$0xff]
    %v8096 = vld [vmem:[#allocation2 + $0xf8] sm:$0xff]
    %v8097 = vld [vmem:[#allocation2 + $0x100] sm:$0xff]
    %v8098 = vld [vmem:[#allocation2 + $0x108] sm:$0xff]
    %v8099 = vld [vmem:[#allocation2 + $0x110] sm:$0xff]
    %v8100 = vld [vmem:[#allocation2 + $0x118] sm:$0xff]
    %v8101 = vld [vmem:[#allocation2 + $0x120] sm:$0xff]
    %v8102 = vld [vmem:[#allocation2 + $0x128] sm:$0xff]
    %v8103 = vld [vmem:[#allocation2 + $0x130] sm:$0xff]
    %v8104 = vld [vmem:[#allocation2 + $0x138] sm:$0xff]
    %v8105 = vld [vmem:[#allocation2 + $0x140] sm:$0xff]
    %v8106 = vld [vmem:[#allocation2 + $0x148] sm:$0xff]
    %v8107 = vld [vmem:[#allocation2 + $0x150] sm:$0xff]
    %v8108 = vld [vmem:[#allocation2 + $0x158] sm:$0xff]
    %v8109 = vld [vmem:[#allocation2 + $0x160] sm:$0xff]
    %v8110 = vld [vmem:[#allocation2 + $0x168] sm:$0xff]
    %v8111 = vld [vmem:[#allocation2 + $0x170] sm:$0xff]
    %v8112 = vld [vmem:[#allocation2 + $0x178] sm:$0xff]
    %v8113 = vld [vmem:[#allocation2 + $0x180] sm:$0xff]
    %v8114 = vld [vmem:[#allocation2 + $0x188] sm:$0xff]
    %v8115 = vld [vmem:[#allocation2 + $0x190] sm:$0xff]
    %v8116 = vld [vmem:[#allocation2 + $0x198] sm:$0xff]
    %v8117 = vld [vmem:[#allocation2 + $0x1a0] sm:$0xff]
    %v8118 = vld [vmem:[#allocation2 + $0x1a8] sm:$0xff]
    %v8119 = vld [vmem:[#allocation2 + $0x1b0] sm:$0xff]
    %v8120 = vld [vmem:[#allocation2 + $0x1b8] sm:$0xff]
    %v8121 = vld [vmem:[#allocation2 + $0x1c0] sm:$0xff]
    %v8122 = vld [vmem:[#allocation2 + $0x1c8] sm:$0xff]
    %v8123 = vld [vmem:[#allocation2 + $0x1d0] sm:$0xff]
    %v8124 = vld [vmem:[#allocation2 + $0x1d8] sm:$0xff]
    %v8125 = vld [vmem:[#allocation2 + $0x1e0] sm:$0xff]
    %v8126 = vld [vmem:[#allocation2 + $0x1e8] sm:$0xff]
    %v8127 = vld [vmem:[#allocation2 + $0x1f0] sm:$0xff]
    %v8128 = vld [vmem:[#allocation2 + $0x1f8] sm:$0xff]
    %v8129 = vld [vmem:[#allocation2 + $0x200] sm:$0xff]
    %v8130 = vld [vmem:[#allocation2 + $0x208] sm:$0xff]
    %v8131 = vld [vmem:[#allocation2 + $0x210] sm:$0xff]
    %v8132 = vld [vmem:[#allocation2 + $0x218] sm:$0xff]
    %v8133 = vld [vmem:[#allocation2 + $0x220] sm:$0xff]
    %v8134 = vld [vmem:[#allocation2 + $0x228] sm:$0xff]
    %v8135 = vld [vmem:[#allocation2 + $0x230] sm:$0xff]
    %v8136 = vld [vmem:[#allocation2 + $0x238] sm:$0xff]
    %v8137 = vld [vmem:[#allocation2 + $0x240] sm:$0xff]
    %v8138 = vld [vmem:[#allocation2 + $0x248] sm:$0xff]
    %v8139 = vld [vmem:[#allocation2 + $0x250] sm:$0xff]
    %v8140 = vld [vmem:[#allocation2 + $0x258] sm:$0xff]
    %v8141 = vld [vmem:[#allocation2 + $0x260] sm:$0xff]
    %v8142 = vld [vmem:[#allocation2 + $0x268] sm:$0xff]
    %v8143 = vld [vmem:[#allocation2 + $0x270] sm:$0xff]
    %v8144 = vld [vmem:[#allocation2 + $0x278] sm:$0xff]
    %v8145 = vld [vmem:[#allocation2 + $0x280] sm:$0xff]
    %v8146 = vld [vmem:[#allocation2 + $0x288] sm:$0xff]
    %v8147 = vld [vmem:[#allocation2 + $0x290] sm:$0xff]
    %v8148 = vld [vmem:[#allocation2 + $0x298] sm:$0xff]
    %v8149 = vld [vmem:[#allocation2 + $0x2a0] sm:$0xff]
    %v8150 = vld [vmem:[#allocation2 + $0x2a8] sm:$0xff]
    %v8151 = vld [vmem:[#allocation2 + $0x2b0] sm:$0xff]
    %v8152 = vld [vmem:[#allocation2 + $0x2b8] sm:$0xff]
    %v8153 = vld [vmem:[#allocation2 + $0x2c0] sm:$0xff]
    %v8154 = vld [vmem:[#allocation2 + $0x2c8] sm:$0xff]
    %v8155 = vld [vmem:[#allocation2 + $0x2d0] sm:$0xff]
    %v8156 = vld [vmem:[#allocation2 + $0x2d8] sm:$0xff]
    %v8157 = vld [vmem:[#allocation2 + $0x2e0] sm:$0xff]
    %v8158 = vld [vmem:[#allocation2 + $0x2e8] sm:$0xff]
    %v8159 = vld [vmem:[#allocation2 + $0x2f0] sm:$0xff]
    %v8160 = vld [vmem:[#allocation2 + $0x2f8] sm:$0xff]
    %v8161 = vld [vmem:[#allocation2 + $0x300] sm:$0xff]
    %v8162 = vld [vmem:[#allocation2 + $0x308] sm:$0xff]
    %v8163 = vld [vmem:[#allocation2 + $0x310] sm:$0xff]
    %v8164 = vld [vmem:[#allocation2 + $0x318] sm:$0xff]
    %v8165 = vld [vmem:[#allocation2 + $0x320] sm:$0xff]
    %v8166 = vld [vmem:[#allocation2 + $0x328] sm:$0xff]
    %v8167 = vld [vmem:[#allocation2 + $0x330] sm:$0xff]
    %v8168 = vld [vmem:[#allocation2 + $0x338] sm:$0xff]
    %v8169 = vld [vmem:[#allocation2 + $0x340] sm:$0xff]
    %v8170 = vld [vmem:[#allocation2 + $0x348] sm:$0xff]
    %v8171 = vld [vmem:[#allocation2 + $0x350] sm:$0xff]
    %v8172 = vld [vmem:[#allocation2 + $0x358] sm:$0xff]
    %v8173 = vld [vmem:[#allocation2 + $0x360] sm:$0xff]
    %v8174 = vld [vmem:[#allocation2 + $0x368] sm:$0xff]
    %v8175 = vld [vmem:[#allocation2 + $0x370] sm:$0xff]
    %v8176 = vld [vmem:[#allocation2 + $0x378] sm:$0xff]
    %v8177 = vld [vmem:[#allocation2 + $0x380] sm:$0xff]
    %v8178 = vld [vmem:[#allocation2 + $0x388] sm:$0xff]
    %v8179 = vld [vmem:[#allocation2 + $0x390] sm:$0xff]
    %v8180 = vpack.c.bf16 %v8073, %v8072
    %v8181 = vpack.c.bf16 %v8075, %v8074
    %v8182 = vpack.c.bf16 %v8077, %v8076
    %v8183 = vpack.c.bf16 %v8079, %v8078
    %v8184 = vpack.c.bf16 %v8081, %v8080
    %v8185 = vpack.c.bf16 %v8083, %v8082
    %v8186 = vpack.c.bf16 %v8085, %v8084
    %v8187 = vpack.c.bf16 %v8087, %v8086
    %v8188 = vpack.c.bf16 %v8089, %v8088
    %v8189 = vpack.c.bf16 %v8091, %v8090
    %v8190 = vpack.c.bf16 %v8093, %v8092
    %v8191 = vpack.c.bf16 %v8095, %v8094
    %v8192 = vpack.c.bf16 %v8097, %v8096
    %v8193 = vpack.c.bf16 %v8099, %v8098
    %v8194 = vpack.c.bf16 %v8101, %v8100
    %v8195 = vpack.c.bf16 %v8103, %v8102
    %v8196 = vpack.c.bf16 %v8105, %v8104
    %v8197 = vpack.c.bf16 %v8107, %v8106
    %v8198 = vpack.c.bf16 %v8109, %v8108
    %v8199 = vpack.c.bf16 %v8111, %v8110
    %v8200 = vpack.c.bf16 %v8113, %v8112
    %v8201 = vpack.c.bf16 %v8115, %v8114
    %v8202 = vpack.c.bf16 %v8117, %v8116
    %v8203 = vpack.c.bf16 %v8119, %v8118
    %v8204 = vpack.c.bf16 %v8121, %v8120
    %v8205 = vpack.c.bf16 %v8123, %v8122
    %v8206 = vpack.c.bf16 %v8125, %v8124
    %v8207 = vpack.c.bf16 %v8127, %v8126
    %v8208 = vpack.c.bf16 %v8129, %v8128
    %v8209 = vpack.c.bf16 %v8131, %v8130
    %v8210 = vpack.c.bf16 %v8133, %v8132
    %v8211 = vpack.c.bf16 %v8135, %v8134
    %v8212 = vpack.c.bf16 %v8137, %v8136
    %v8213 = vpack.c.bf16 %v8139, %v8138
    %v8214 = vpack.c.bf16 %v8141, %v8140
    %v8215 = vpack.c.bf16 %v8143, %v8142
    %v8216 = vpack.c.bf16 %v8145, %v8144
    %v8217 = vpack.c.bf16 %v8147, %v8146
    %v8218 = vpack.c.bf16 %v8149, %v8148
    %v8219 = vpack.c.bf16 %v8151, %v8150
    %v8220 = vpack.c.bf16 %v8153, %v8152
    %v8221 = vpack.c.bf16 %v8155, %v8154
    %v8222 = vpack.c.bf16 %v8157, %v8156
    %v8223 = vpack.c.bf16 %v8159, %v8158
    %v8224 = vpack.c.bf16 %v8161, %v8160
    %v8225 = vpack.c.bf16 %v8163, %v8162
    %v8226 = vpack.c.bf16 %v8165, %v8164
    %v8227 = vpack.c.bf16 %v8167, %v8166
    %v8228 = vpack.c.bf16 %v8169, %v8168
    %v8229 = vpack.c.bf16 %v8171, %v8170
    %v8230 = vpack.c.bf16 %v8173, %v8172
    %v8231 = vpack.c.bf16 %v8175, %v8174
    %v8232 = vpack.c.bf16 %v8177, %v8176
    %v8233 = vpack.c.bf16 %v8179, %v8178
    %s8234 = scalar_lea.vmem %s3, 448
    %v8235 = vld [vmem:[%s8234] sm:$0xf]
    %v8236 = vld [vmem:[%s8234 + $0x4] sm:$0xf]
    %v8237 = vld [vmem:[%s8234 + $0x8] sm:$0xf]
    %v8238 = vld [vmem:[%s8234 + $0xc] sm:$0xf]
    %v8239 = vld [vmem:[%s8234 + $0x10] sm:$0xf]
    %v8240 = vld [vmem:[%s8234 + $0x14] sm:$0xf]
    %v8241 = vld [vmem:[%s8234 + $0x18] sm:$0xf]
    %v8242 = vld [vmem:[%s8234 + $0x1c] sm:$0xf]
    %v8243 = vld [vmem:[%s8234 + $0x20] sm:$0xf]
    %v8244 = vld [vmem:[%s8234 + $0x24] sm:$0xf]
    %v8245 = vld [vmem:[%s8234 + $0x28] sm:$0xf]
    %v8246 = vld [vmem:[%s8234 + $0x2c] sm:$0xf]
    %v8247 = vld [vmem:[%s8234 + $0x30] sm:$0xf]
    %v8248 = vld [vmem:[%s8234 + $0x34] sm:$0xf]
    %v8249 = vld [vmem:[%s8234 + $0x38] sm:$0xf]
    %v8250 = vld [vmem:[%s8234 + $0x3c] sm:$0xf]
    %v8267 = vunpack.c.l.b16 %v8235
    %v8268 = vunpack.c.l.b16 %v8236
    %v8269 = vunpack.c.l.b16 %v8237
    %v8270 = vunpack.c.l.b16 %v8238
    %v8271 = vunpack.c.l.b16 %v8239
    %v8272 = vunpack.c.l.b16 %v8240
    %v8273 = vunpack.c.l.b16 %v8241
    %v8274 = vunpack.c.l.b16 %v8242
    %v8275 = vunpack.c.l.b16 %v8243
    %v8276 = vunpack.c.l.b16 %v8244
    %v8277 = vunpack.c.l.b16 %v8245
    %v8278 = vunpack.c.l.b16 %v8246
    %v8279 = vunpack.c.l.b16 %v8247
    %v8280 = vunpack.c.l.b16 %v8248
    %v8281 = vunpack.c.l.b16 %v8249
    %v8282 = vunpack.c.l.b16 %v8250
    %v8283 = vpack.c.b16 %v8268, %v8267
    %v8284 = vpack.c.b16 %v8270, %v8269
    %v8285 = vpack.c.b16 %v8272, %v8271
    %v8286 = vpack.c.b16 %v8274, %v8273
    %v8287 = vpack.c.b16 %v8276, %v8275
    %v8288 = vpack.c.b16 %v8278, %v8277
    %v8289 = vpack.c.b16 %v8280, %v8279
    %v8290 = vpack.c.b16 %v8282, %v8281
    %8299 = vmatprep.subr.bf16.mxu0 0
    %8300 = vmatpush1.bf16.msra.mxu0 %v8283
    %8301 = vmatprep.subr.bf16.mxu0 0
    %8302 = vmatpush1.bf16.msra.mxu0 %v8284
    %8303 = vmatprep.subr.bf16.mxu0 0
    %8304 = vmatpush1.bf16.msra.mxu0 %v8285
    %8305 = vmatprep.subr.bf16.mxu0 0
    %8306 = vmatpush1.bf16.msra.mxu0 %v8286
    %8307 = vmatprep.subr.bf16.mxu0 0
    %8308 = vmatpush1.bf16.msra.mxu0 %v8287
    %8309 = vmatprep.subr.bf16.mxu0 0
    %8310 = vmatpush1.bf16.msra.mxu0 %v8288
    %8311 = vmatprep.subr.bf16.mxu0 0
    %8312 = vmatpush1.bf16.msra.mxu0 %v8289
    %8313 = vmatprep.subr.bf16.mxu0 0
    %8314 = vmatpush1.bf16.msra.mxu0 %v8290
    %8315 = vmatprep.subr.bf16.mxu0 0
    %8316 = vmatpush1.bf16.msra.mxu0 0
    %8317 = vmatprep.subr.bf16.mxu0 0
    %8318 = vmatpush1.bf16.msra.mxu0 0
    %8319 = vmatprep.subr.bf16.mxu0 0
    %8320 = vmatpush1.bf16.msra.mxu0 0
    %8321 = vmatprep.subr.bf16.mxu0 0
    %8322 = vmatpush1.bf16.msra.mxu0 0
    %8323 = vmatprep.subr.bf16.mxu0 0
    %8324 = vmatpush1.bf16.msra.mxu0 0
    %8325 = vmatprep.subr.bf16.mxu0 0
    %8326 = vmatpush1.bf16.msra.mxu0 0
    %8327 = vmatprep.subr.bf16.mxu0 0
    %8328 = vmatpush1.bf16.msra.mxu0 0
    %8329 = vmatprep.subr.bf16.mxu0 0
    %8330 = vmatpush1.bf16.msra.mxu0 0
    %8331 = vmatprep.mubr.bf16.mxu0 0
    %8332 = vmatmul.mubr.bf16.gmra.mrb[0].mxu0 %v8180
    %v8333 = vpop.f32.mrb[0].mxu0
    %v8334 = vadd.f32 0.0, %v8333
    %v8335 = vpop.f32.mrb[0].mxu0
    %v8336 = vpop.f32.mrb[0].mxu0
    %v8337 = vadd.f32 0.0, %v8336
    %v8338 = vpop.f32.mrb[0].mxu0
    %8339 = vmatprep.mubr.bf16.mxu0 0
    %8340 = vmatmul.mubr.bf16.gmra.mrb[0].mxu0 %v8181
    %v8341 = vpop.f32.mrb[0].mxu0
    %v8342 = vadd.f32 0.0, %v8341
    %v8343 = vpop.f32.mrb[0].mxu0
    %v8344 = vpop.f32.mrb[0].mxu0
    %v8345 = vadd.f32 0.0, %v8344
    %v8346 = vpop.f32.mrb[0].mxu0
    %8347 = vmatprep.mubr.bf16.mxu0 0
    %8348 = vmatmul.mubr.bf16.gmra.mrb[0].mxu0 %v8182
    %v8349 = vpop.f32.mrb[0].mxu0
    %v8350 = vadd.f32 0.0, %v8349
    %v8351 = vpop.f32.mrb[0].mxu0
    %v8352 = vpop.f32.mrb[0].mxu0
    %v8353 = vadd.f32 0.0, %v8352
    %v8354 = vpop.f32.mrb[0].mxu0
    %8355 = vmatprep.mubr.bf16.mxu0 0
    %8356 = vmatmul.mubr.bf16.gmra.mrb[0].mxu0 %v8183
    %v8357 = vpop.f32.mrb[0].mxu0
    %v8358 = vadd.f32 0.0, %v8357
    %v8359 = vpop.f32.mrb[0].mxu0
    %v8360 = vpop.f32.mrb[0].mxu0
    %v8361 = vadd.f32 0.0, %v8360
    %v8362 = vpop.f32.mrb[0].mxu0
    %8363 = vmatprep.mubr.bf16.mxu0 0
    %8364 = vmatmul.mubr.bf16.gmra.mrb[0].mxu0 %v8184
    %v8365 = vpop.f32.mrb[0].mxu0
    %v8366 = vadd.f32 0.0, %v8365
    %v8367 = vpop.f32.mrb[0].mxu0
    %v8368 = vpop.f32.mrb[0].mxu0
    %v8369 = vadd.f32 0.0, %v8368
    %v8370 = vpop.f32.mrb[0].mxu0
    %8371 = vmatprep.mubr.bf16.mxu0 0
    %8372 = vmatmul.mubr.bf16.gmra.mrb[0].mxu0 %v8185
    %v8373 = vpop.f32.mrb[0].mxu0
    %v8374 = vadd.f32 0.0, %v8373
    %v8375 = vpop.f32.mrb[0].mxu0
    %v8376 = vpop.f32.mrb[0].mxu0
    %v8377 = vadd.f32 0.0, %v8376
    %v8378 = vpop.f32.mrb[0].mxu0
    %8379 = vmatprep.mubr.bf16.mxu0 0
    %8380 = vmatmul.mubr.bf16.gmra.mrb[0].mxu0 %v8186
    %v8381 = vpop.f32.mrb[0].mxu0
    %v8382 = vadd.f32 0.0, %v8381
    %v8383 = vpop.f32.mrb[0].mxu0
    %v8384 = vpop.f32.mrb[0].mxu0
    %v8385 = vadd.f32 0.0, %v8384
    %v8386 = vpop.f32.mrb[0].mxu0
    %8387 = vmatprep.mubr.bf16.mxu0 0
    %8388 = vmatmul.mubr.bf16.gmra.mrb[0].mxu0 %v8187
    %v8389 = vpop.f32.mrb[0].mxu0
    %v8390 = vadd.f32 0.0, %v8389
    %v8391 = vpop.f32.mrb[0].mxu0
    %v8392 = vpop.f32.mrb[0].mxu0
    %v8393 = vadd.f32 0.0, %v8392
    %v8394 = vpop.f32.mrb[0].mxu0
    %8395 = vmatprep.mubr.bf16.mxu0 0
    %8396 = vmatmul.mubr.bf16.gmra.mrb[0].mxu0 %v8188
    %v8397 = vpop.f32.mrb[0].mxu0
    %v8398 = vadd.f32 0.0, %v8397
    %v8399 = vpop.f32.mrb[0].mxu0
    %v8400 = vpop.f32.mrb[0].mxu0
    %v8401 = vadd.f32 0.0, %v8400
    %v8402 = vpop.f32.mrb[0].mxu0
    %8403 = vmatprep.mubr.bf16.mxu0 0
    %8404 = vmatmul.mubr.bf16.gmra.mrb[0].mxu0 %v8189
    %v8405 = vpop.f32.mrb[0].mxu0
    %v8406 = vadd.f32 0.0, %v8405
    %v8407 = vpop.f32.mrb[0].mxu0
    %v8408 = vpop.f32.mrb[0].mxu0
    %v8409 = vadd.f32 0.0, %v8408
    %v8410 = vpop.f32.mrb[0].mxu0
    %8411 = vmatprep.mubr.bf16.mxu0 0
    %8412 = vmatmul.mubr.bf16.gmra.mrb[0].mxu0 %v8190
    %v8413 = vpop.f32.mrb[0].mxu0
    %v8414 = vadd.f32 0.0, %v8413
    %v8415 = vpop.f32.mrb[0].mxu0
    %v8416 = vpop.f32.mrb[0].mxu0
    %v8417 = vadd.f32 0.0, %v8416
    %v8418 = vpop.f32.mrb[0].mxu0
    %8419 = vmatprep.mubr.bf16.mxu0 0
    %8420 = vmatmul.mubr.bf16.gmra.mrb[0].mxu0 %v8191
    %v8421 = vpop.f32.mrb[0].mxu0
    %v8422 = vadd.f32 0.0, %v8421
    %v8423 = vpop.f32.mrb[0].mxu0
    %v8424 = vpop.f32.mrb[0].mxu0
    %v8425 = vadd.f32 0.0, %v8424
    %v8426 = vpop.f32.mrb[0].mxu0
    %8427 = vmatprep.mubr.bf16.mxu0 0
    %8428 = vmatmul.mubr.bf16.gmra.mrb[0].mxu0 %v8192
    %v8429 = vpop.f32.mrb[0].mxu0
    %v8430 = vadd.f32 0.0, %v8429
    %v8431 = vpop.f32.mrb[0].mxu0
    %v8432 = vpop.f32.mrb[0].mxu0
    %v8433 = vadd.f32 0.0, %v8432
    %v8434 = vpop.f32.mrb[0].mxu0
    %8435 = vmatprep.mubr.bf16.mxu0 0
    %8436 = vmatmul.mubr.bf16.gmra.mrb[0].mxu0 %v8193
    %v8437 = vpop.f32.mrb[0].mxu0
    %v8438 = vadd.f32 0.0, %v8437
    %v8439 = vpop.f32.mrb[0].mxu0
    %v8440 = vpop.f32.mrb[0].mxu0
    %v8441 = vadd.f32 0.0, %v8440
    %v8442 = vpop.f32.mrb[0].mxu0
    %8443 = vmatprep.mubr.bf16.mxu0 0
    %8444 = vmatmul.mubr.bf16.gmra.mrb[0].mxu0 %v8194
    %v8445 = vpop.f32.mrb[0].mxu0
    %v8446 = vadd.f32 0.0, %v8445
    %v8447 = vpop.f32.mrb[0].mxu0
    %v8448 = vpop.f32.mrb[0].mxu0
    %v8449 = vadd.f32 0.0, %v8448
    %v8450 = vpop.f32.mrb[0].mxu0
    %8451 = vmatprep.mubr.bf16.mxu0 0
    %8452 = vmatmul.mubr.bf16.gmra.mrb[0].mxu0 %v8195
    %v8453 = vpop.f32.mrb[0].mxu0
    %v8454 = vadd.f32 0.0, %v8453
    %v8455 = vpop.f32.mrb[0].mxu0
    %v8456 = vpop.f32.mrb[0].mxu0
    %v8457 = vadd.f32 0.0, %v8456
    %v8458 = vpop.f32.mrb[0].mxu0
    %8459 = vmatprep.mubr.bf16.mxu0 0
    %8460 = vmatmul.mubr.bf16.gmra.mrb[0].mxu0 %v8196
    %v8461 = vpop.f32.mrb[0].mxu0
    %v8462 = vadd.f32 0.0, %v8461
    %v8463 = vpop.f32.mrb[0].mxu0
    %v8464 = vpop.f32.mrb[0].mxu0
    %v8465 = vadd.f32 0.0, %v8464
    %v8466 = vpop.f32.mrb[0].mxu0
    %8467 = vmatprep.mubr.bf16.mxu0 0
    %8468 = vmatmul.mubr.bf16.gmra.mrb[0].mxu0 %v8197
    %v8469 = vpop.f32.mrb[0].mxu0
    %v8470 = vadd.f32 0.0, %v8469
    %v8471 = vpop.f32.mrb[0].mxu0
    %v8472 = vpop.f32.mrb[0].mxu0
    %v8473 = vadd.f32 0.0, %v8472
    %v8474 = vpop.f32.mrb[0].mxu0
    %8475 = vmatprep.mubr.bf16.mxu0 0
    %8476 = vmatmul.mubr.bf16.gmra.mrb[0].mxu0 %v8198
    %v8477 = vpop.f32.mrb[0].mxu0
    %v8478 = vadd.f32 0.0, %v8477
    %v8479 = vpop.f32.mrb[0].mxu0
    %v8480 = vpop.f32.mrb[0].mxu0
    %v8481 = vadd.f32 0.0, %v8480
    %v8482 = vpop.f32.mrb[0].mxu0
    %8483 = vmatprep.mubr.bf16.mxu0 0
    %8484 = vmatmul.mubr.bf16.gmra.mrb[0].mxu0 %v8199
    %v8485 = vpop.f32.mrb[0].mxu0
    %v8486 = vadd.f32 0.0, %v8485
    %v8487 = vpop.f32.mrb[0].mxu0
    %v8488 = vpop.f32.mrb[0].mxu0
    %v8489 = vadd.f32 0.0, %v8488
    %v8490 = vpop.f32.mrb[0].mxu0
    %8491 = vmatprep.mubr.bf16.mxu0 0
    %8492 = vmatmul.mubr.bf16.gmra.mrb[0].mxu0 %v8200
    %v8493 = vpop.f32.mrb[0].mxu0
    %v8494 = vadd.f32 0.0, %v8493
    %v8495 = vpop.f32.mrb[0].mxu0
    %v8496 = vpop.f32.mrb[0].mxu0
    %v8497 = vadd.f32 0.0, %v8496
    %v8498 = vpop.f32.mrb[0].mxu0
    %8499 = vmatprep.mubr.bf16.mxu0 0
    %8500 = vmatmul.mubr.bf16.gmra.mrb[0].mxu0 %v8201
    %v8501 = vpop.f32.mrb[0].mxu0
    %v8502 = vadd.f32 0.0, %v8501
    %v8503 = vpop.f32.mrb[0].mxu0
    %v8504 = vpop.f32.mrb[0].mxu0
    %v8505 = vadd.f32 0.0, %v8504
    %v8506 = vpop.f32.mrb[0].mxu0
    %8507 = vmatprep.mubr.bf16.mxu0 0
    %8508 = vmatmul.mubr.bf16.gmra.mrb[0].mxu0 %v8202
    %v8509 = vpop.f32.mrb[0].mxu0
    %v8510 = vadd.f32 0.0, %v8509
    %v8511 = vpop.f32.mrb[0].mxu0
    %v8512 = vpop.f32.mrb[0].mxu0
    %v8513 = vadd.f32 0.0, %v8512
    %v8514 = vpop.f32.mrb[0].mxu0
    %8515 = vmatprep.mubr.bf16.mxu0 0
    %8516 = vmatmul.mubr.bf16.gmra.mrb[0].mxu0 %v8203
    %v8517 = vpop.f32.mrb[0].mxu0
    %v8518 = vadd.f32 0.0, %v8517
    %v8519 = vpop.f32.mrb[0].mxu0
    %v8520 = vpop.f32.mrb[0].mxu0
    %v8521 = vadd.f32 0.0, %v8520
    %v8522 = vpop.f32.mrb[0].mxu0
    %8523 = vmatprep.mubr.bf16.mxu0 0
    %8524 = vmatmul.mubr.bf16.gmra.mrb[0].mxu0 %v8204
    %v8525 = vpop.f32.mrb[0].mxu0
    %v8526 = vadd.f32 0.0, %v8525
    %v8527 = vpop.f32.mrb[0].mxu0
    %v8528 = vpop.f32.mrb[0].mxu0
    %v8529 = vadd.f32 0.0, %v8528
    %v8530 = vpop.f32.mrb[0].mxu0
    %8531 = vmatprep.mubr.bf16.mxu0 0
    %8532 = vmatmul.mubr.bf16.gmra.mrb[0].mxu0 %v8205
    %v8533 = vpop.f32.mrb[0].mxu0
    %v8534 = vadd.f32 0.0, %v8533
    %v8535 = vpop.f32.mrb[0].mxu0
    %v8536 = vpop.f32.mrb[0].mxu0
    %v8537 = vadd.f32 0.0, %v8536
    %v8538 = vpop.f32.mrb[0].mxu0
    %8539 = vmatprep.mubr.bf16.mxu0 0
    %8540 = vmatmul.mubr.bf16.gmra.mrb[0].mxu0 %v8206
    %v8541 = vpop.f32.mrb[0].mxu0
    %v8542 = vadd.f32 0.0, %v8541
    %v8543 = vpop.f32.mrb[0].mxu0
    %v8544 = vpop.f32.mrb[0].mxu0
    %v8545 = vadd.f32 0.0, %v8544
    %v8546 = vpop.f32.mrb[0].mxu0
    %8547 = vmatprep.mubr.bf16.mxu0 0
    %8548 = vmatmul.mubr.bf16.gmra.mrb[0].mxu0 %v8207
    %v8549 = vpop.f32.mrb[0].mxu0
    %v8550 = vadd.f32 0.0, %v8549
    %v8551 = vpop.f32.mrb[0].mxu0
    %v8552 = vpop.f32.mrb[0].mxu0
    %v8553 = vadd.f32 0.0, %v8552
    %v8554 = vpop.f32.mrb[0].mxu0
    %8555 = vmatprep.mubr.bf16.mxu0 0
    %8556 = vmatmul.mubr.bf16.gmra.mrb[0].mxu0 %v8208
    %v8557 = vpop.f32.mrb[0].mxu0
    %v8558 = vadd.f32 0.0, %v8557
    %v8559 = vpop.f32.mrb[0].mxu0
    %v8560 = vpop.f32.mrb[0].mxu0
    %v8561 = vadd.f32 0.0, %v8560
    %v8562 = vpop.f32.mrb[0].mxu0
    %8563 = vmatprep.mubr.bf16.mxu0 0
    %8564 = vmatmul.mubr.bf16.gmra.mrb[0].mxu0 %v8209
    %v8565 = vpop.f32.mrb[0].mxu0
    %v8566 = vadd.f32 0.0, %v8565
    %v8567 = vpop.f32.mrb[0].mxu0
    %v8568 = vpop.f32.mrb[0].mxu0
    %v8569 = vadd.f32 0.0, %v8568
    %v8570 = vpop.f32.mrb[0].mxu0
    %8571 = vmatprep.mubr.bf16.mxu0 0
    %8572 = vmatmul.mubr.bf16.gmra.mrb[0].mxu0 %v8210
    %v8573 = vpop.f32.mrb[0].mxu0
    %v8574 = vadd.f32 0.0, %v8573
    %v8575 = vpop.f32.mrb[0].mxu0
    %v8576 = vpop.f32.mrb[0].mxu0
    %v8577 = vadd.f32 0.0, %v8576
    %v8578 = vpop.f32.mrb[0].mxu0
    %8579 = vmatprep.mubr.bf16.mxu0 0
    %8580 = vmatmul.mubr.bf16.gmra.mrb[0].mxu0 %v8211
    %v8581 = vpop.f32.mrb[0].mxu0
    %v8582 = vadd.f32 0.0, %v8581
    %v8583 = vpop.f32.mrb[0].mxu0
    %v8584 = vpop.f32.mrb[0].mxu0
    %v8585 = vadd.f32 0.0, %v8584
    %v8586 = vpop.f32.mrb[0].mxu0
    %8587 = vmatprep.mubr.bf16.mxu0 0
    %8588 = vmatmul.mubr.bf16.gmra.mrb[0].mxu0 %v8212
    %v8589 = vpop.f32.mrb[0].mxu0
    %v8590 = vadd.f32 0.0, %v8589
    %v8591 = vpop.f32.mrb[0].mxu0
    %v8592 = vpop.f32.mrb[0].mxu0
    %v8593 = vadd.f32 0.0, %v8592
    %v8594 = vpop.f32.mrb[0].mxu0
    %8595 = vmatprep.mubr.bf16.mxu0 0
    %8596 = vmatmul.mubr.bf16.gmra.mrb[0].mxu0 %v8213
    %v8597 = vpop.f32.mrb[0].mxu0
    %v8598 = vadd.f32 0.0, %v8597
    %v8599 = vpop.f32.mrb[0].mxu0
    %v8600 = vpop.f32.mrb[0].mxu0
    %v8601 = vadd.f32 0.0, %v8600
    %v8602 = vpop.f32.mrb[0].mxu0
    %8603 = vmatprep.mubr.bf16.mxu0 0
    %8604 = vmatmul.mubr.bf16.gmra.mrb[0].mxu0 %v8214
    %v8605 = vpop.f32.mrb[0].mxu0
    %v8606 = vadd.f32 0.0, %v8605
    %v8607 = vpop.f32.mrb[0].mxu0
    %v8608 = vpop.f32.mrb[0].mxu0
    %v8609 = vadd.f32 0.0, %v8608
    %v8610 = vpop.f32.mrb[0].mxu0
    %8611 = vmatprep.mubr.bf16.mxu0 0
    %8612 = vmatmul.mubr.bf16.gmra.mrb[0].mxu0 %v8215
    %v8613 = vpop.f32.mrb[0].mxu0
    %v8614 = vadd.f32 0.0, %v8613
    %v8615 = vpop.f32.mrb[0].mxu0
    %v8616 = vpop.f32.mrb[0].mxu0
    %v8617 = vadd.f32 0.0, %v8616
    %v8618 = vpop.f32.mrb[0].mxu0
    %8619 = vmatprep.mubr.bf16.mxu0 0
    %8620 = vmatmul.mubr.bf16.gmra.mrb[0].mxu0 %v8216
    %v8621 = vpop.f32.mrb[0].mxu0
    %v8622 = vadd.f32 0.0, %v8621
    %v8623 = vpop.f32.mrb[0].mxu0
    %v8624 = vpop.f32.mrb[0].mxu0
    %v8625 = vadd.f32 0.0, %v8624
    %v8626 = vpop.f32.mrb[0].mxu0
    %8627 = vmatprep.mubr.bf16.mxu0 0
    %8628 = vmatmul.mubr.bf16.gmra.mrb[0].mxu0 %v8217
    %v8629 = vpop.f32.mrb[0].mxu0
    %v8630 = vadd.f32 0.0, %v8629
    %v8631 = vpop.f32.mrb[0].mxu0
    %v8632 = vpop.f32.mrb[0].mxu0
    %v8633 = vadd.f32 0.0, %v8632
    %v8634 = vpop.f32.mrb[0].mxu0
    %8635 = vmatprep.mubr.bf16.mxu0 0
    %8636 = vmatmul.mubr.bf16.gmra.mrb[0].mxu0 %v8218
    %v8637 = vpop.f32.mrb[0].mxu0
    %v8638 = vadd.f32 0.0, %v8637
    %v8639 = vpop.f32.mrb[0].mxu0
    %v8640 = vpop.f32.mrb[0].mxu0
    %v8641 = vadd.f32 0.0, %v8640
    %v8642 = vpop.f32.mrb[0].mxu0
    %8643 = vmatprep.mubr.bf16.mxu0 0
    %8644 = vmatmul.mubr.bf16.gmra.mrb[0].mxu0 %v8219
    %v8645 = vpop.f32.mrb[0].mxu0
    %v8646 = vadd.f32 0.0, %v8645
    %v8647 = vpop.f32.mrb[0].mxu0
    %v8648 = vpop.f32.mrb[0].mxu0
    %v8649 = vadd.f32 0.0, %v8648
    %v8650 = vpop.f32.mrb[0].mxu0
    %8651 = vmatprep.mubr.bf16.mxu0 0
    %8652 = vmatmul.mubr.bf16.gmra.mrb[0].mxu0 %v8220
    %v8653 = vpop.f32.mrb[0].mxu0
    %v8654 = vadd.f32 0.0, %v8653
    %v8655 = vpop.f32.mrb[0].mxu0
    %v8656 = vpop.f32.mrb[0].mxu0
    %v8657 = vadd.f32 0.0, %v8656
    %v8658 = vpop.f32.mrb[0].mxu0
    %8659 = vmatprep.mubr.bf16.mxu0 0
    %8660 = vmatmul.mubr.bf16.gmra.mrb[0].mxu0 %v8221
    %v8661 = vpop.f32.mrb[0].mxu0
    %v8662 = vadd.f32 0.0, %v8661
    %v8663 = vpop.f32.mrb[0].mxu0
    %v8664 = vpop.f32.mrb[0].mxu0
    %v8665 = vadd.f32 0.0, %v8664
    %v8666 = vpop.f32.mrb[0].mxu0
    %8667 = vmatprep.mubr.bf16.mxu0 0
    %8668 = vmatmul.mubr.bf16.gmra.mrb[0].mxu0 %v8222
    %v8669 = vpop.f32.mrb[0].mxu0
    %v8670 = vadd.f32 0.0, %v8669
    %v8671 = vpop.f32.mrb[0].mxu0
    %v8672 = vpop.f32.mrb[0].mxu0
    %v8673 = vadd.f32 0.0, %v8672
    %v8674 = vpop.f32.mrb[0].mxu0
    %8675 = vmatprep.mubr.bf16.mxu0 0
    %8676 = vmatmul.mubr.bf16.gmra.mrb[0].mxu0 %v8223
    %v8677 = vpop.f32.mrb[0].mxu0
    %v8678 = vadd.f32 0.0, %v8677
    %v8679 = vpop.f32.mrb[0].mxu0
    %v8680 = vpop.f32.mrb[0].mxu0
    %v8681 = vadd.f32 0.0, %v8680
    %v8682 = vpop.f32.mrb[0].mxu0
    %8683 = vmatprep.mubr.bf16.mxu0 0
    %8684 = vmatmul.mubr.bf16.gmra.mrb[0].mxu0 %v8224
    %v8685 = vpop.f32.mrb[0].mxu0
    %v8686 = vadd.f32 0.0, %v8685
    %v8687 = vpop.f32.mrb[0].mxu0
    %v8688 = vpop.f32.mrb[0].mxu0
    %v8689 = vadd.f32 0.0, %v8688
    %v8690 = vpop.f32.mrb[0].mxu0
    %8691 = vmatprep.mubr.bf16.mxu0 0
    %8692 = vmatmul.mubr.bf16.gmra.mrb[0].mxu0 %v8225
    %v8693 = vpop.f32.mrb[0].mxu0
    %v8694 = vadd.f32 0.0, %v8693
    %v8695 = vpop.f32.mrb[0].mxu0
    %v8696 = vpop.f32.mrb[0].mxu0
    %v8697 = vadd.f32 0.0, %v8696
    %v8698 = vpop.f32.mrb[0].mxu0
    %8699 = vmatprep.mubr.bf16.mxu0 0
    %8700 = vmatmul.mubr.bf16.gmra.mrb[0].mxu0 %v8226
    %v8701 = vpop.f32.mrb[0].mxu0
    %v8702 = vadd.f32 0.0, %v8701
    %v8703 = vpop.f32.mrb[0].mxu0
    %v8704 = vpop.f32.mrb[0].mxu0
    %v8705 = vadd.f32 0.0, %v8704
    %v8706 = vpop.f32.mrb[0].mxu0
    %8707 = vmatprep.mubr.bf16.mxu0 0
    %8708 = vmatmul.mubr.bf16.gmra.mrb[0].mxu0 %v8227
    %v8709 = vpop.f32.mrb[0].mxu0
    %v8710 = vadd.f32 0.0, %v8709
    %v8711 = vpop.f32.mrb[0].mxu0
    %v8712 = vpop.f32.mrb[0].mxu0
    %v8713 = vadd.f32 0.0, %v8712
    %v8714 = vpop.f32.mrb[0].mxu0
    %8715 = vmatprep.mubr.bf16.mxu0 0
    %8716 = vmatmul.mubr.bf16.gmra.mrb[0].mxu0 %v8228
    %v8717 = vpop.f32.mrb[0].mxu0
    %v8718 = vadd.f32 0.0, %v8717
    %v8719 = vpop.f32.mrb[0].mxu0
    %v8720 = vpop.f32.mrb[0].mxu0
    %v8721 = vadd.f32 0.0, %v8720
    %v8722 = vpop.f32.mrb[0].mxu0
    %8723 = vmatprep.mubr.bf16.mxu0 0
    %8724 = vmatmul.mubr.bf16.gmra.mrb[0].mxu0 %v8229
    %v8725 = vpop.f32.mrb[0].mxu0
    %v8726 = vadd.f32 0.0, %v8725
    %v8727 = vpop.f32.mrb[0].mxu0
    %v8728 = vpop.f32.mrb[0].mxu0
    %v8729 = vadd.f32 0.0, %v8728
    %v8730 = vpop.f32.mrb[0].mxu0
    %8731 = vmatprep.mubr.bf16.mxu0 0
    %8732 = vmatmul.mubr.bf16.gmra.mrb[0].mxu0 %v8230
    %v8733 = vpop.f32.mrb[0].mxu0
    %v8734 = vadd.f32 0.0, %v8733
    %v8735 = vpop.f32.mrb[0].mxu0
    %v8736 = vpop.f32.mrb[0].mxu0
    %v8737 = vadd.f32 0.0, %v8736
    %v8738 = vpop.f32.mrb[0].mxu0
    %8739 = vmatprep.mubr.bf16.mxu0 0
    %8740 = vmatmul.mubr.bf16.gmra.mrb[0].mxu0 %v8231
    %v8741 = vpop.f32.mrb[0].mxu0
    %v8742 = vadd.f32 0.0, %v8741
    %v8743 = vpop.f32.mrb[0].mxu0
    %v8744 = vpop.f32.mrb[0].mxu0
    %v8745 = vadd.f32 0.0, %v8744
    %v8746 = vpop.f32.mrb[0].mxu0
    %8747 = vmatprep.mubr.bf16.mxu0 0
    %8748 = vmatmul.mubr.bf16.gmra.mrb[0].mxu0 %v8232
    %v8749 = vpop.f32.mrb[0].mxu0
    %v8750 = vadd.f32 0.0, %v8749
    %v8751 = vpop.f32.mrb[0].mxu0
    %v8752 = vpop.f32.mrb[0].mxu0
    %v8753 = vadd.f32 0.0, %v8752
    %v8754 = vpop.f32.mrb[0].mxu0
    %8755 = vmatprep.mubr.bf16.mxu0 0
    %8756 = vmatmul.mubr.bf16.gmra.mrb[0].mxu0 %v8233
    %v8757 = vpop.f32.mrb[0].mxu0
    %v8758 = vadd.f32 0.0, %v8757
    %v8759 = vpop.f32.mrb[0].mxu0
    %v8760 = vpop.f32.mrb[0].mxu0
    %v8761 = vadd.f32 0.0, %v8760
    %v8762 = vpop.f32.mrb[0].mxu0
    %8763 = vdwg.mxu0
    %v8764 = vadd.f32 %v7964, %v8334
    %v8765 = vadd.f32 %v7965, %v8337
    %v8766 = vadd.f32 %v7966, %v8342
    %v8767 = vadd.f32 %v7967, %v8345
    %v8768 = vadd.f32 %v7968, %v8350
    %v8769 = vadd.f32 %v7969, %v8353
    %v8770 = vadd.f32 %v7970, %v8358
    %v8771 = vadd.f32 %v7971, %v8361
    %v8772 = vadd.f32 %v7972, %v8366
    %v8773 = vadd.f32 %v7973, %v8369
    %v8774 = vadd.f32 %v7974, %v8374
    %v8775 = vadd.f32 %v7975, %v8377
    %v8776 = vadd.f32 %v7976, %v8382
    %v8777 = vadd.f32 %v7977, %v8385
    %v8778 = vadd.f32 %v7978, %v8390
    %v8779 = vadd.f32 %v7979, %v8393
    %v8780 = vadd.f32 %v7980, %v8398
    %v8781 = vadd.f32 %v7981, %v8401
    %v8782 = vadd.f32 %v7982, %v8406
    %v8783 = vadd.f32 %v7983, %v8409
    %v8784 = vadd.f32 %v7984, %v8414
    %v8785 = vadd.f32 %v7985, %v8417
    %v8786 = vadd.f32 %v7986, %v8422
    %v8787 = vadd.f32 %v7987, %v8425
    %v8788 = vadd.f32 %v7988, %v8430
    %v8789 = vadd.f32 %v7989, %v8433
    %v8790 = vadd.f32 %v7990, %v8438
    %v8791 = vadd.f32 %v7991, %v8441
    %v8792 = vadd.f32 %v7992, %v8446
    %v8793 = vadd.f32 %v7993, %v8449
    %v8794 = vadd.f32 %v7994, %v8454
    %v8795 = vadd.f32 %v7995, %v8457
    %v8796 = vadd.f32 %v7996, %v8462
    %v8797 = vadd.f32 %v7997, %v8465
    %v8798 = vadd.f32 %v7998, %v8470
    %v8799 = vadd.f32 %v7999, %v8473
    %v8800 = vadd.f32 %v8000, %v8478
    %v8801 = vadd.f32 %v8001, %v8481
    %v8802 = vadd.f32 %v8002, %v8486
    %v8803 = vadd.f32 %v8003, %v8489
    %v8804 = vadd.f32 %v8004, %v8494
    %v8805 = vadd.f32 %v8005, %v8497
    %v8806 = vadd.f32 %v8006, %v8502
    %v8807 = vadd.f32 %v8007, %v8505
    %v8808 = vadd.f32 %v8008, %v8510
    %v8809 = vadd.f32 %v8009, %v8513
    %v8810 = vadd.f32 %v8010, %v8518
    %v8811 = vadd.f32 %v8011, %v8521
    %v8812 = vadd.f32 %v8012, %v8526
    %v8813 = vadd.f32 %v8013, %v8529
    %v8814 = vadd.f32 %v8014, %v8534
    %v8815 = vadd.f32 %v8015, %v8537
    %v8816 = vadd.f32 %v8016, %v8542
    %v8817 = vadd.f32 %v8017, %v8545
    %v8818 = vadd.f32 %v8018, %v8550
    %v8819 = vadd.f32 %v8019, %v8553
    %v8820 = vadd.f32 %v8020, %v8558
    %v8821 = vadd.f32 %v8021, %v8561
    %v8822 = vadd.f32 %v8022, %v8566
    %v8823 = vadd.f32 %v8023, %v8569
    %v8824 = vadd.f32 %v8024, %v8574
    %v8825 = vadd.f32 %v8025, %v8577
    %v8826 = vadd.f32 %v8026, %v8582
    %v8827 = vadd.f32 %v8027, %v8585
    %v8828 = vadd.f32 %v8028, %v8590
    %v8829 = vadd.f32 %v8029, %v8593
    %v8830 = vadd.f32 %v8030, %v8598
    %v8831 = vadd.f32 %v8031, %v8601
    %v8832 = vadd.f32 %v8032, %v8606
    %v8833 = vadd.f32 %v8033, %v8609
    %v8834 = vadd.f32 %v8034, %v8614
    %v8835 = vadd.f32 %v8035, %v8617
    %v8836 = vadd.f32 %v8036, %v8622
    %v8837 = vadd.f32 %v8037, %v8625
    %v8838 = vadd.f32 %v8038, %v8630
    %v8839 = vadd.f32 %v8039, %v8633
    %v8840 = vadd.f32 %v8040, %v8638
    %v8841 = vadd.f32 %v8041, %v8641
    %v8842 = vadd.f32 %v8042, %v8646
    %v8843 = vadd.f32 %v8043, %v8649
    %v8844 = vadd.f32 %v8044, %v8654
    %v8845 = vadd.f32 %v8045, %v8657
    %v8846 = vadd.f32 %v8046, %v8662
    %v8847 = vadd.f32 %v8047, %v8665
    %v8848 = vadd.f32 %v8048, %v8670
    %v8849 = vadd.f32 %v8049, %v8673
    %v8850 = vadd.f32 %v8050, %v8678
    %v8851 = vadd.f32 %v8051, %v8681
    %v8852 = vadd.f32 %v8052, %v8686
    %v8853 = vadd.f32 %v8053, %v8689
    %v8854 = vadd.f32 %v8054, %v8694
    %v8855 = vadd.f32 %v8055, %v8697
    %v8856 = vadd.f32 %v8056, %v8702
    %v8857 = vadd.f32 %v8057, %v8705
    %v8858 = vadd.f32 %v8058, %v8710
    %v8859 = vadd.f32 %v8059, %v8713
    %v8860 = vadd.f32 %v8060, %v8718
    %v8861 = vadd.f32 %v8061, %v8721
    %v8862 = vadd.f32 %v8062, %v8726
    %v8863 = vadd.f32 %v8063, %v8729
    %v8864 = vadd.f32 %v8064, %v8734
    %v8865 = vadd.f32 %v8065, %v8737
    %v8866 = vadd.f32 %v8066, %v8742
    %v8867 = vadd.f32 %v8067, %v8745
    %v8868 = vadd.f32 %v8068, %v8750
    %v8869 = vadd.f32 %v8069, %v8753
    %v8870 = vadd.f32 %v8070, %v8758
    %v8871 = vadd.f32 %v8071, %v8761
    %v8872 = vld [vmem:[#allocation2 + $0x39] sm:$0xff]
    %v8873 = vld [vmem:[#allocation2 + $0x41] sm:$0xff]
    %v8874 = vld [vmem:[#allocation2 + $0x49] sm:$0xff]
    %v8875 = vld [vmem:[#allocation2 + $0x51] sm:$0xff]
    %v8876 = vld [vmem:[#allocation2 + $0x59] sm:$0xff]
    %v8877 = vld [vmem:[#allocation2 + $0x61] sm:$0xff]
    %v8878 = vld [vmem:[#allocation2 + $0x69] sm:$0xff]
    %v8879 = vld [vmem:[#allocation2 + $0x71] sm:$0xff]
    %v8880 = vld [vmem:[#allocation2 + $0x79] sm:$0xff]
    %v8881 = vld [vmem:[#allocation2 + $0x81] sm:$0xff]
    %v8882 = vld [vmem:[#allocation2 + $0x89] sm:$0xff]
    %v8883 = vld [vmem:[#allocation2 + $0x91] sm:$0xff]
    %v8884 = vld [vmem:[#allocation2 + $0x99] sm:$0xff]
    %v8885 = vld [vmem:[#allocation2 + $0xa1] sm:$0xff]
    %v8886 = vld [vmem:[#allocation2 + $0xa9] sm:$0xff]
    %v8887 = vld [vmem:[#allocation2 + $0xb1] sm:$0xff]
    %v8888 = vld [vmem:[#allocation2 + $0xb9] sm:$0xff]
    %v8889 = vld [vmem:[#allocation2 + $0xc1] sm:$0xff]
    %v8890 = vld [vmem:[#allocation2 + $0xc9] sm:$0xff]
    %v8891 = vld [vmem:[#allocation2 + $0xd1] sm:$0xff]
    %v8892 = vld [vmem:[#allocation2 + $0xd9] sm:$0xff]
    %v8893 = vld [vmem:[#allocation2 + $0xe1] sm:$0xff]
    %v8894 = vld [vmem:[#allocation2 + $0xe9] sm:$0xff]
    %v8895 = vld [vmem:[#allocation2 + $0xf1] sm:$0xff]
    %v8896 = vld [vmem:[#allocation2 + $0xf9] sm:$0xff]
    %v8897 = vld [vmem:[#allocation2 + $0x101] sm:$0xff]
    %v8898 = vld [vmem:[#allocation2 + $0x109] sm:$0xff]
    %v8899 = vld [vmem:[#allocation2 + $0x111] sm:$0xff]
    %v8900 = vld [vmem:[#allocation2 + $0x119] sm:$0xff]
    %v8901 = vld [vmem:[#allocation2 + $0x121] sm:$0xff]
    %v8902 = vld [vmem:[#allocation2 + $0x129] sm:$0xff]
    %v8903 = vld [vmem:[#allocation2 + $0x131] sm:$0xff]
    %v8904 = vld [vmem:[#allocation2 + $0x139] sm:$0xff]
    %v8905 = vld [vmem:[#allocation2 + $0x141] sm:$0xff]
    %v8906 = vld [vmem:[#allocation2 + $0x149] sm:$0xff]
    %v8907 = vld [vmem:[#allocation2 + $0x151] sm:$0xff]
    %v8908 = vld [vmem:[#allocation2 + $0x159] sm:$0xff]
    %v8909 = vld [vmem:[#allocation2 + $0x161] sm:$0xff]
    %v8910 = vld [vmem:[#allocation2 + $0x169] sm:$0xff]
    %v8911 = vld [vmem:[#allocation2 + $0x171] sm:$0xff]
    %v8912 = vld [vmem:[#allocation2 + $0x179] sm:$0xff]
    %v8913 = vld [vmem:[#allocation2 + $0x181] sm:$0xff]
    %v8914 = vld [vmem:[#allocation2 + $0x189] sm:$0xff]
    %v8915 = vld [vmem:[#allocation2 + $0x191] sm:$0xff]
    %v8916 = vld [vmem:[#allocation2 + $0x199] sm:$0xff]
    %v8917 = vld [vmem:[#allocation2 + $0x1a1] sm:$0xff]
    %v8918 = vld [vmem:[#allocation2 + $0x1a9] sm:$0xff]
    %v8919 = vld [vmem:[#allocation2 + $0x1b1] sm:$0xff]
    %v8920 = vld [vmem:[#allocation2 + $0x1b9] sm:$0xff]
    %v8921 = vld [vmem:[#allocation2 + $0x1c1] sm:$0xff]
    %v8922 = vld [vmem:[#allocation2 + $0x1c9] sm:$0xff]
    %v8923 = vld [vmem:[#allocation2 + $0x1d1] sm:$0xff]
    %v8924 = vld [vmem:[#allocation2 + $0x1d9] sm:$0xff]
    %v8925 = vld [vmem:[#allocation2 + $0x1e1] sm:$0xff]
    %v8926 = vld [vmem:[#allocation2 + $0x1e9] sm:$0xff]
    %v8927 = vld [vmem:[#allocation2 + $0x1f1] sm:$0xff]
    %v8928 = vld [vmem:[#allocation2 + $0x1f9] sm:$0xff]
    %v8929 = vld [vmem:[#allocation2 + $0x201] sm:$0xff]
    %v8930 = vld [vmem:[#allocation2 + $0x209] sm:$0xff]
    %v8931 = vld [vmem:[#allocation2 + $0x211] sm:$0xff]
    %v8932 = vld [vmem:[#allocation2 + $0x219] sm:$0xff]
    %v8933 = vld [vmem:[#allocation2 + $0x221] sm:$0xff]
    %v8934 = vld [vmem:[#allocation2 + $0x229] sm:$0xff]
    %v8935 = vld [vmem:[#allocation2 + $0x231] sm:$0xff]
    %v8936 = vld [vmem:[#allocation2 + $0x239] sm:$0xff]
    %v8937 = vld [vmem:[#allocation2 + $0x241] sm:$0xff]
    %v8938 = vld [vmem:[#allocation2 + $0x249] sm:$0xff]
    %v8939 = vld [vmem:[#allocation2 + $0x251] sm:$0xff]
    %v8940 = vld [vmem:[#allocation2 + $0x259] sm:$0xff]
    %v8941 = vld [vmem:[#allocation2 + $0x261] sm:$0xff]
    %v8942 = vld [vmem:[#allocation2 + $0x269] sm:$0xff]
    %v8943 = vld [vmem:[#allocation2 + $0x271] sm:$0xff]
    %v8944 = vld [vmem:[#allocation2 + $0x279] sm:$0xff]
    %v8945 = vld [vmem:[#allocation2 + $0x281] sm:$0xff]
    %v8946 = vld [vmem:[#allocation2 + $0x289] sm:$0xff]
    %v8947 = vld [vmem:[#allocation2 + $0x291] sm:$0xff]
    %v8948 = vld [vmem:[#allocation2 + $0x299] sm:$0xff]
    %v8949 = vld [vmem:[#allocation2 + $0x2a1] sm:$0xff]
    %v8950 = vld [vmem:[#allocation2 + $0x2a9] sm:$0xff]
    %v8951 = vld [vmem:[#allocation2 + $0x2b1] sm:$0xff]
    %v8952 = vld [vmem:[#allocation2 + $0x2b9] sm:$0xff]
    %v8953 = vld [vmem:[#allocation2 + $0x2c1] sm:$0xff]
    %v8954 = vld [vmem:[#allocation2 + $0x2c9] sm:$0xff]
    %v8955 = vld [vmem:[#allocation2 + $0x2d1] sm:$0xff]
    %v8956 = vld [vmem:[#allocation2 + $0x2d9] sm:$0xff]
    %v8957 = vld [vmem:[#allocation2 + $0x2e1] sm:$0xff]
    %v8958 = vld [vmem:[#allocation2 + $0x2e9] sm:$0xff]
    %v8959 = vld [vmem:[#allocation2 + $0x2f1] sm:$0xff]
    %v8960 = vld [vmem:[#allocation2 + $0x2f9] sm:$0xff]
    %v8961 = vld [vmem:[#allocation2 + $0x301] sm:$0xff]
    %v8962 = vld [vmem:[#allocation2 + $0x309] sm:$0xff]
    %v8963 = vld [vmem:[#allocation2 + $0x311] sm:$0xff]
    %v8964 = vld [vmem:[#allocation2 + $0x319] sm:$0xff]
    %v8965 = vld [vmem:[#allocation2 + $0x321] sm:$0xff]
    %v8966 = vld [vmem:[#allocation2 + $0x329] sm:$0xff]
    %v8967 = vld [vmem:[#allocation2 + $0x331] sm:$0xff]
    %v8968 = vld [vmem:[#allocation2 + $0x339] sm:$0xff]
    %v8969 = vld [vmem:[#allocation2 + $0x341] sm:$0xff]
    %v8970 = vld [vmem:[#allocation2 + $0x349] sm:$0xff]
    %v8971 = vld [vmem:[#allocation2 + $0x351] sm:$0xff]
    %v8972 = vld [vmem:[#allocation2 + $0x359] sm:$0xff]
    %v8973 = vld [vmem:[#allocation2 + $0x361] sm:$0xff]
    %v8974 = vld [vmem:[#allocation2 + $0x369] sm:$0xff]
    %v8975 = vld [vmem:[#allocation2 + $0x371] sm:$0xff]
    %v8976 = vld [vmem:[#allocation2 + $0x379] sm:$0xff]
    %v8977 = vld [vmem:[#allocation2 + $0x381] sm:$0xff]
    %v8978 = vld [vmem:[#allocation2 + $0x389] sm:$0xff]
    %v8979 = vld [vmem:[#allocation2 + $0x391] sm:$0xff]
    %v8980 = vpack.c.bf16 %v8873, %v8872
    %v8981 = vpack.c.bf16 %v8875, %v8874
    %v8982 = vpack.c.bf16 %v8877, %v8876
    %v8983 = vpack.c.bf16 %v8879, %v8878
    %v8984 = vpack.c.bf16 %v8881, %v8880
    %v8985 = vpack.c.bf16 %v8883, %v8882
    %v8986 = vpack.c.bf16 %v8885, %v8884
    %v8987 = vpack.c.bf16 %v8887, %v8886
    %v8988 = vpack.c.bf16 %v8889, %v8888
    %v8989 = vpack.c.bf16 %v8891, %v8890
    %v8990 = vpack.c.bf16 %v8893, %v8892
    %v8991 = vpack.c.bf16 %v8895, %v8894
    %v8992 = vpack.c.bf16 %v8897, %v8896
    %v8993 = vpack.c.bf16 %v8899, %v8898
    %v8994 = vpack.c.bf16 %v8901, %v8900
    %v8995 = vpack.c.bf16 %v8903, %v8902
    %v8996 = vpack.c.bf16 %v8905, %v8904
    %v8997 = vpack.c.bf16 %v8907, %v8906
    %v8998 = vpack.c.bf16 %v8909, %v8908
    %v8999 = vpack.c.bf16 %v8911, %v8910
    %v9000 = vpack.c.bf16 %v8913, %v8912
    %v9001 = vpack.c.bf16 %v8915, %v8914
    %v9002 = vpack.c.bf16 %v8917, %v8916
    %v9003 = vpack.c.bf16 %v8919, %v8918
    %v9004 = vpack.c.bf16 %v8921, %v8920
    %v9005 = vpack.c.bf16 %v8923, %v8922
    %v9006 = vpack.c.bf16 %v8925, %v8924
    %v9007 = vpack.c.bf16 %v8927, %v8926
    %v9008 = vpack.c.bf16 %v8929, %v8928
    %v9009 = vpack.c.bf16 %v8931, %v8930
    %v9010 = vpack.c.bf16 %v8933, %v8932
    %v9011 = vpack.c.bf16 %v8935, %v8934
    %v9012 = vpack.c.bf16 %v8937, %v8936
    %v9013 = vpack.c.bf16 %v8939, %v8938
    %v9014 = vpack.c.bf16 %v8941, %v8940
    %v9015 = vpack.c.bf16 %v8943, %v8942
    %v9016 = vpack.c.bf16 %v8945, %v8944
    %v9017 = vpack.c.bf16 %v8947, %v8946
    %v9018 = vpack.c.bf16 %v8949, %v8948
    %v9019 = vpack.c.bf16 %v8951, %v8950
    %v9020 = vpack.c.bf16 %v8953, %v8952
    %v9021 = vpack.c.bf16 %v8955, %v8954
    %v9022 = vpack.c.bf16 %v8957, %v8956
    %v9023 = vpack.c.bf16 %v8959, %v8958
    %v9024 = vpack.c.bf16 %v8961, %v8960
    %v9025 = vpack.c.bf16 %v8963, %v8962
    %v9026 = vpack.c.bf16 %v8965, %v8964
    %v9027 = vpack.c.bf16 %v8967, %v8966
    %v9028 = vpack.c.bf16 %v8969, %v8968
    %v9029 = vpack.c.bf16 %v8971, %v8970
    %v9030 = vpack.c.bf16 %v8973, %v8972
    %v9031 = vpack.c.bf16 %v8975, %v8974
    %v9032 = vpack.c.bf16 %v8977, %v8976
    %v9033 = vpack.c.bf16 %v8979, %v8978
    %s9034 = scalar_lea.vmem %s3, 512
    %v9035 = vld [vmem:[%s9034] sm:$0xf]
    %v9036 = vld [vmem:[%s9034 + $0x4] sm:$0xf]
    %v9037 = vld [vmem:[%s9034 + $0x8] sm:$0xf]
    %v9038 = vld [vmem:[%s9034 + $0xc] sm:$0xf]
    %v9039 = vld [vmem:[%s9034 + $0x10] sm:$0xf]
    %v9040 = vld [vmem:[%s9034 + $0x14] sm:$0xf]
    %v9041 = vld [vmem:[%s9034 + $0x18] sm:$0xf]
    %v9042 = vld [vmem:[%s9034 + $0x1c] sm:$0xf]
    %v9043 = vld [vmem:[%s9034 + $0x20] sm:$0xf]
    %v9044 = vld [vmem:[%s9034 + $0x24] sm:$0xf]
    %v9045 = vld [vmem:[%s9034 + $0x28] sm:$0xf]
    %v9046 = vld [vmem:[%s9034 + $0x2c] sm:$0xf]
    %v9047 = vld [vmem:[%s9034 + $0x30] sm:$0xf]
    %v9048 = vld [vmem:[%s9034 + $0x34] sm:$0xf]
    %v9049 = vld [vmem:[%s9034 + $0x38] sm:$0xf]
    %v9050 = vld [vmem:[%s9034 + $0x3c] sm:$0xf]
    %v9067 = vunpack.c.l.b16 %v9035
    %v9068 = vunpack.c.l.b16 %v9036
    %v9069 = vunpack.c.l.b16 %v9037
    %v9070 = vunpack.c.l.b16 %v9038
    %v9071 = vunpack.c.l.b16 %v9039
    %v9072 = vunpack.c.l.b16 %v9040
    %v9073 = vunpack.c.l.b16 %v9041
    %v9074 = vunpack.c.l.b16 %v9042
    %v9075 = vunpack.c.l.b16 %v9043
    %v9076 = vunpack.c.l.b16 %v9044
    %v9077 = vunpack.c.l.b16 %v9045
    %v9078 = vunpack.c.l.b16 %v9046
    %v9079 = vunpack.c.l.b16 %v9047
    %v9080 = vunpack.c.l.b16 %v9048
    %v9081 = vunpack.c.l.b16 %v9049
    %v9082 = vunpack.c.l.b16 %v9050
    %v9083 = vpack.c.b16 %v9068, %v9067
    %v9084 = vpack.c.b16 %v9070, %v9069
    %v9085 = vpack.c.b16 %v9072, %v9071
    %v9086 = vpack.c.b16 %v9074, %v9073
    %v9087 = vpack.c.b16 %v9076, %v9075
    %v9088 = vpack.c.b16 %v9078, %v9077
    %v9089 = vpack.c.b16 %v9080, %v9079
    %v9090 = vpack.c.b16 %v9082, %v9081
    %9099 = vmatprep.subr.bf16.mxu0 0
    %9100 = vmatpush1.bf16.msra.mxu0 %v9083
    %9101 = vmatprep.subr.bf16.mxu0 0
    %9102 = vmatpush1.bf16.msra.mxu0 %v9084
    %9103 = vmatprep.subr.bf16.mxu0 0
    %9104 = vmatpush1.bf16.msra.mxu0 %v9085
    %9105 = vmatprep.subr.bf16.mxu0 0
    %9106 = vmatpush1.bf16.msra.mxu0 %v9086
    %9107 = vmatprep.subr.bf16.mxu0 0
    %9108 = vmatpush1.bf16.msra.mxu0 %v9087
    %9109 = vmatprep.subr.bf16.mxu0 0
    %9110 = vmatpush1.bf16.msra.mxu0 %v9088
    %9111 = vmatprep.subr.bf16.mxu0 0
    %9112 = vmatpush1.bf16.msra.mxu0 %v9089
    %9113 = vmatprep.subr.bf16.mxu0 0
    %9114 = vmatpush1.bf16.msra.mxu0 %v9090
    %9115 = vmatprep.subr.bf16.mxu0 0
    %9116 = vmatpush1.bf16.msra.mxu0 0
    %9117 = vmatprep.subr.bf16.mxu0 0
    %9118 = vmatpush1.bf16.msra.mxu0 0
    %9119 = vmatprep.subr.bf16.mxu0 0
    %9120 = vmatpush1.bf16.msra.mxu0 0
    %9121 = vmatprep.subr.bf16.mxu0 0
    %9122 = vmatpush1.bf16.msra.mxu0 0
    %9123 = vmatprep.subr.bf16.mxu0 0
    %9124 = vmatpush1.bf16.msra.mxu0 0
    %9125 = vmatprep.subr.bf16.mxu0 0
    %9126 = vmatpush1.bf16.msra.mxu0 0
    %9127 = vmatprep.subr.bf16.mxu0 0
    %9128 = vmatpush1.bf16.msra.mxu0 0
    %9129 = vmatprep.subr.bf16.mxu0 0
    %9130 = vmatpush1.bf16.msra.mxu0 0
    %9131 = vmatprep.mubr.bf16.mxu0 0
    %9132 = vmatmul.mubr.bf16.gmra.mrb[0].mxu0 %v8980
    %v9133 = vpop.f32.mrb[0].mxu0
    %v9134 = vadd.f32 0.0, %v9133
    %v9135 = vpop.f32.mrb[0].mxu0
    %v9136 = vpop.f32.mrb[0].mxu0
    %v9137 = vadd.f32 0.0, %v9136
    %v9138 = vpop.f32.mrb[0].mxu0
    %9139 = vmatprep.mubr.bf16.mxu0 0
    %9140 = vmatmul.mubr.bf16.gmra.mrb[0].mxu0 %v8981
    %v9141 = vpop.f32.mrb[0].mxu0
    %v9142 = vadd.f32 0.0, %v9141
    %v9143 = vpop.f32.mrb[0].mxu0
    %v9144 = vpop.f32.mrb[0].mxu0
    %v9145 = vadd.f32 0.0, %v9144
    %v9146 = vpop.f32.mrb[0].mxu0
    %9147 = vmatprep.mubr.bf16.mxu0 0
    %9148 = vmatmul.mubr.bf16.gmra.mrb[0].mxu0 %v8982
    %v9149 = vpop.f32.mrb[0].mxu0
    %v9150 = vadd.f32 0.0, %v9149
    %v9151 = vpop.f32.mrb[0].mxu0
    %v9152 = vpop.f32.mrb[0].mxu0
    %v9153 = vadd.f32 0.0, %v9152
    %v9154 = vpop.f32.mrb[0].mxu0
    %9155 = vmatprep.mubr.bf16.mxu0 0
    %9156 = vmatmul.mubr.bf16.gmra.mrb[0].mxu0 %v8983
    %v9157 = vpop.f32.mrb[0].mxu0
    %v9158 = vadd.f32 0.0, %v9157
    %v9159 = vpop.f32.mrb[0].mxu0
    %v9160 = vpop.f32.mrb[0].mxu0
    %v9161 = vadd.f32 0.0, %v9160
    %v9162 = vpop.f32.mrb[0].mxu0
    %9163 = vmatprep.mubr.bf16.mxu0 0
    %9164 = vmatmul.mubr.bf16.gmra.mrb[0].mxu0 %v8984
    %v9165 = vpop.f32.mrb[0].mxu0
    %v9166 = vadd.f32 0.0, %v9165
    %v9167 = vpop.f32.mrb[0].mxu0
    %v9168 = vpop.f32.mrb[0].mxu0
    %v9169 = vadd.f32 0.0, %v9168
    %v9170 = vpop.f32.mrb[0].mxu0
    %9171 = vmatprep.mubr.bf16.mxu0 0
    %9172 = vmatmul.mubr.bf16.gmra.mrb[0].mxu0 %v8985
    %v9173 = vpop.f32.mrb[0].mxu0
    %v9174 = vadd.f32 0.0, %v9173
    %v9175 = vpop.f32.mrb[0].mxu0
    %v9176 = vpop.f32.mrb[0].mxu0
    %v9177 = vadd.f32 0.0, %v9176
    %v9178 = vpop.f32.mrb[0].mxu0
    %9179 = vmatprep.mubr.bf16.mxu0 0
    %9180 = vmatmul.mubr.bf16.gmra.mrb[0].mxu0 %v8986
    %v9181 = vpop.f32.mrb[0].mxu0
    %v9182 = vadd.f32 0.0, %v9181
    %v9183 = vpop.f32.mrb[0].mxu0
    %v9184 = vpop.f32.mrb[0].mxu0
    %v9185 = vadd.f32 0.0, %v9184
    %v9186 = vpop.f32.mrb[0].mxu0
    %9187 = vmatprep.mubr.bf16.mxu0 0
    %9188 = vmatmul.mubr.bf16.gmra.mrb[0].mxu0 %v8987
    %v9189 = vpop.f32.mrb[0].mxu0
    %v9190 = vadd.f32 0.0, %v9189
    %v9191 = vpop.f32.mrb[0].mxu0
    %v9192 = vpop.f32.mrb[0].mxu0
    %v9193 = vadd.f32 0.0, %v9192
    %v9194 = vpop.f32.mrb[0].mxu0
    %9195 = vmatprep.mubr.bf16.mxu0 0
    %9196 = vmatmul.mubr.bf16.gmra.mrb[0].mxu0 %v8988
    %v9197 = vpop.f32.mrb[0].mxu0
    %v9198 = vadd.f32 0.0, %v9197
    %v9199 = vpop.f32.mrb[0].mxu0
    %v9200 = vpop.f32.mrb[0].mxu0
    %v9201 = vadd.f32 0.0, %v9200
    %v9202 = vpop.f32.mrb[0].mxu0
    %9203 = vmatprep.mubr.bf16.mxu0 0
    %9204 = vmatmul.mubr.bf16.gmra.mrb[0].mxu0 %v8989
    %v9205 = vpop.f32.mrb[0].mxu0
    %v9206 = vadd.f32 0.0, %v9205
    %v9207 = vpop.f32.mrb[0].mxu0
    %v9208 = vpop.f32.mrb[0].mxu0
    %v9209 = vadd.f32 0.0, %v9208
    %v9210 = vpop.f32.mrb[0].mxu0
    %9211 = vmatprep.mubr.bf16.mxu0 0
    %9212 = vmatmul.mubr.bf16.gmra.mrb[0].mxu0 %v8990
    %v9213 = vpop.f32.mrb[0].mxu0
    %v9214 = vadd.f32 0.0, %v9213
    %v9215 = vpop.f32.mrb[0].mxu0
    %v9216 = vpop.f32.mrb[0].mxu0
    %v9217 = vadd.f32 0.0, %v9216
    %v9218 = vpop.f32.mrb[0].mxu0
    %9219 = vmatprep.mubr.bf16.mxu0 0
    %9220 = vmatmul.mubr.bf16.gmra.mrb[0].mxu0 %v8991
    %v9221 = vpop.f32.mrb[0].mxu0
    %v9222 = vadd.f32 0.0, %v9221
    %v9223 = vpop.f32.mrb[0].mxu0
    %v9224 = vpop.f32.mrb[0].mxu0
    %v9225 = vadd.f32 0.0, %v9224
    %v9226 = vpop.f32.mrb[0].mxu0
    %9227 = vmatprep.mubr.bf16.mxu0 0
    %9228 = vmatmul.mubr.bf16.gmra.mrb[0].mxu0 %v8992
    %v9229 = vpop.f32.mrb[0].mxu0
    %v9230 = vadd.f32 0.0, %v9229
    %v9231 = vpop.f32.mrb[0].mxu0
    %v9232 = vpop.f32.mrb[0].mxu0
    %v9233 = vadd.f32 0.0, %v9232
    %v9234 = vpop.f32.mrb[0].mxu0
    %9235 = vmatprep.mubr.bf16.mxu0 0
    %9236 = vmatmul.mubr.bf16.gmra.mrb[0].mxu0 %v8993
    %v9237 = vpop.f32.mrb[0].mxu0
    %v9238 = vadd.f32 0.0, %v9237
    %v9239 = vpop.f32.mrb[0].mxu0
    %v9240 = vpop.f32.mrb[0].mxu0
    %v9241 = vadd.f32 0.0, %v9240
    %v9242 = vpop.f32.mrb[0].mxu0
    %9243 = vmatprep.mubr.bf16.mxu0 0
    %9244 = vmatmul.mubr.bf16.gmra.mrb[0].mxu0 %v8994
    %v9245 = vpop.f32.mrb[0].mxu0
    %v9246 = vadd.f32 0.0, %v9245
    %v9247 = vpop.f32.mrb[0].mxu0
    %v9248 = vpop.f32.mrb[0].mxu0
    %v9249 = vadd.f32 0.0, %v9248
    %v9250 = vpop.f32.mrb[0].mxu0
    %9251 = vmatprep.mubr.bf16.mxu0 0
    %9252 = vmatmul.mubr.bf16.gmra.mrb[0].mxu0 %v8995
    %v9253 = vpop.f32.mrb[0].mxu0
    %v9254 = vadd.f32 0.0, %v9253
    %v9255 = vpop.f32.mrb[0].mxu0
    %v9256 = vpop.f32.mrb[0].mxu0
    %v9257 = vadd.f32 0.0, %v9256
    %v9258 = vpop.f32.mrb[0].mxu0
    %9259 = vmatprep.mubr.bf16.mxu0 0
    %9260 = vmatmul.mubr.bf16.gmra.mrb[0].mxu0 %v8996
    %v9261 = vpop.f32.mrb[0].mxu0
    %v9262 = vadd.f32 0.0, %v9261
    %v9263 = vpop.f32.mrb[0].mxu0
    %v9264 = vpop.f32.mrb[0].mxu0
    %v9265 = vadd.f32 0.0, %v9264
    %v9266 = vpop.f32.mrb[0].mxu0
    %9267 = vmatprep.mubr.bf16.mxu0 0
    %9268 = vmatmul.mubr.bf16.gmra.mrb[0].mxu0 %v8997
    %v9269 = vpop.f32.mrb[0].mxu0
    %v9270 = vadd.f32 0.0, %v9269
    %v9271 = vpop.f32.mrb[0].mxu0
    %v9272 = vpop.f32.mrb[0].mxu0
    %v9273 = vadd.f32 0.0, %v9272
    %v9274 = vpop.f32.mrb[0].mxu0
    %9275 = vmatprep.mubr.bf16.mxu0 0
    %9276 = vmatmul.mubr.bf16.gmra.mrb[0].mxu0 %v8998
    %v9277 = vpop.f32.mrb[0].mxu0
    %v9278 = vadd.f32 0.0, %v9277
    %v9279 = vpop.f32.mrb[0].mxu0
    %v9280 = vpop.f32.mrb[0].mxu0
    %v9281 = vadd.f32 0.0, %v9280
    %v9282 = vpop.f32.mrb[0].mxu0
    %9283 = vmatprep.mubr.bf16.mxu0 0
    %9284 = vmatmul.mubr.bf16.gmra.mrb[0].mxu0 %v8999
    %v9285 = vpop.f32.mrb[0].mxu0
    %v9286 = vadd.f32 0.0, %v9285
    %v9287 = vpop.f32.mrb[0].mxu0
    %v9288 = vpop.f32.mrb[0].mxu0
    %v9289 = vadd.f32 0.0, %v9288
    %v9290 = vpop.f32.mrb[0].mxu0
    %9291 = vmatprep.mubr.bf16.mxu0 0
    %9292 = vmatmul.mubr.bf16.gmra.mrb[0].mxu0 %v9000
    %v9293 = vpop.f32.mrb[0].mxu0
    %v9294 = vadd.f32 0.0, %v9293
    %v9295 = vpop.f32.mrb[0].mxu0
    %v9296 = vpop.f32.mrb[0].mxu0
    %v9297 = vadd.f32 0.0, %v9296
    %v9298 = vpop.f32.mrb[0].mxu0
    %9299 = vmatprep.mubr.bf16.mxu0 0
    %9300 = vmatmul.mubr.bf16.gmra.mrb[0].mxu0 %v9001
    %v9301 = vpop.f32.mrb[0].mxu0
    %v9302 = vadd.f32 0.0, %v9301
    %v9303 = vpop.f32.mrb[0].mxu0
    %v9304 = vpop.f32.mrb[0].mxu0
    %v9305 = vadd.f32 0.0, %v9304
    %v9306 = vpop.f32.mrb[0].mxu0
    %9307 = vmatprep.mubr.bf16.mxu0 0
    %9308 = vmatmul.mubr.bf16.gmra.mrb[0].mxu0 %v9002
    %v9309 = vpop.f32.mrb[0].mxu0
    %v9310 = vadd.f32 0.0, %v9309
    %v9311 = vpop.f32.mrb[0].mxu0
    %v9312 = vpop.f32.mrb[0].mxu0
    %v9313 = vadd.f32 0.0, %v9312
    %v9314 = vpop.f32.mrb[0].mxu0
    %9315 = vmatprep.mubr.bf16.mxu0 0
    %9316 = vmatmul.mubr.bf16.gmra.mrb[0].mxu0 %v9003
    %v9317 = vpop.f32.mrb[0].mxu0
    %v9318 = vadd.f32 0.0, %v9317
    %v9319 = vpop.f32.mrb[0].mxu0
    %v9320 = vpop.f32.mrb[0].mxu0
    %v9321 = vadd.f32 0.0, %v9320
    %v9322 = vpop.f32.mrb[0].mxu0
    %9323 = vmatprep.mubr.bf16.mxu0 0
    %9324 = vmatmul.mubr.bf16.gmra.mrb[0].mxu0 %v9004
    %v9325 = vpop.f32.mrb[0].mxu0
    %v9326 = vadd.f32 0.0, %v9325
    %v9327 = vpop.f32.mrb[0].mxu0
    %v9328 = vpop.f32.mrb[0].mxu0
    %v9329 = vadd.f32 0.0, %v9328
    %v9330 = vpop.f32.mrb[0].mxu0
    %9331 = vmatprep.mubr.bf16.mxu0 0
    %9332 = vmatmul.mubr.bf16.gmra.mrb[0].mxu0 %v9005
    %v9333 = vpop.f32.mrb[0].mxu0
    %v9334 = vadd.f32 0.0, %v9333
    %v9335 = vpop.f32.mrb[0].mxu0
    %v9336 = vpop.f32.mrb[0].mxu0
    %v9337 = vadd.f32 0.0, %v9336
    %v9338 = vpop.f32.mrb[0].mxu0
    %9339 = vmatprep.mubr.bf16.mxu0 0
    %9340 = vmatmul.mubr.bf16.gmra.mrb[0].mxu0 %v9006
    %v9341 = vpop.f32.mrb[0].mxu0
    %v9342 = vadd.f32 0.0, %v9341
    %v9343 = vpop.f32.mrb[0].mxu0
    %v9344 = vpop.f32.mrb[0].mxu0
    %v9345 = vadd.f32 0.0, %v9344
    %v9346 = vpop.f32.mrb[0].mxu0
    %9347 = vmatprep.mubr.bf16.mxu0 0
    %9348 = vmatmul.mubr.bf16.gmra.mrb[0].mxu0 %v9007
    %v9349 = vpop.f32.mrb[0].mxu0
    %v9350 = vadd.f32 0.0, %v9349
    %v9351 = vpop.f32.mrb[0].mxu0
    %v9352 = vpop.f32.mrb[0].mxu0
    %v9353 = vadd.f32 0.0, %v9352
    %v9354 = vpop.f32.mrb[0].mxu0
    %9355 = vmatprep.mubr.bf16.mxu0 0
    %9356 = vmatmul.mubr.bf16.gmra.mrb[0].mxu0 %v9008
    %v9357 = vpop.f32.mrb[0].mxu0
    %v9358 = vadd.f32 0.0, %v9357
    %v9359 = vpop.f32.mrb[0].mxu0
    %v9360 = vpop.f32.mrb[0].mxu0
    %v9361 = vadd.f32 0.0, %v9360
    %v9362 = vpop.f32.mrb[0].mxu0
    %9363 = vmatprep.mubr.bf16.mxu0 0
    %9364 = vmatmul.mubr.bf16.gmra.mrb[0].mxu0 %v9009
    %v9365 = vpop.f32.mrb[0].mxu0
    %v9366 = vadd.f32 0.0, %v9365
    %v9367 = vpop.f32.mrb[0].mxu0
    %v9368 = vpop.f32.mrb[0].mxu0
    %v9369 = vadd.f32 0.0, %v9368
    %v9370 = vpop.f32.mrb[0].mxu0
    %9371 = vmatprep.mubr.bf16.mxu0 0
    %9372 = vmatmul.mubr.bf16.gmra.mrb[0].mxu0 %v9010
    %v9373 = vpop.f32.mrb[0].mxu0
    %v9374 = vadd.f32 0.0, %v9373
    %v9375 = vpop.f32.mrb[0].mxu0
    %v9376 = vpop.f32.mrb[0].mxu0
    %v9377 = vadd.f32 0.0, %v9376
    %v9378 = vpop.f32.mrb[0].mxu0
    %9379 = vmatprep.mubr.bf16.mxu0 0
    %9380 = vmatmul.mubr.bf16.gmra.mrb[0].mxu0 %v9011
    %v9381 = vpop.f32.mrb[0].mxu0
    %v9382 = vadd.f32 0.0, %v9381
    %v9383 = vpop.f32.mrb[0].mxu0
    %v9384 = vpop.f32.mrb[0].mxu0
    %v9385 = vadd.f32 0.0, %v9384
    %v9386 = vpop.f32.mrb[0].mxu0
    %9387 = vmatprep.mubr.bf16.mxu0 0
    %9388 = vmatmul.mubr.bf16.gmra.mrb[0].mxu0 %v9012
    %v9389 = vpop.f32.mrb[0].mxu0
    %v9390 = vadd.f32 0.0, %v9389
    %v9391 = vpop.f32.mrb[0].mxu0
    %v9392 = vpop.f32.mrb[0].mxu0
    %v9393 = vadd.f32 0.0, %v9392
    %v9394 = vpop.f32.mrb[0].mxu0
    %9395 = vmatprep.mubr.bf16.mxu0 0
    %9396 = vmatmul.mubr.bf16.gmra.mrb[0].mxu0 %v9013
    %v9397 = vpop.f32.mrb[0].mxu0
    %v9398 = vadd.f32 0.0, %v9397
    %v9399 = vpop.f32.mrb[0].mxu0
    %v9400 = vpop.f32.mrb[0].mxu0
    %v9401 = vadd.f32 0.0, %v9400
    %v9402 = vpop.f32.mrb[0].mxu0
    %9403 = vmatprep.mubr.bf16.mxu0 0
    %9404 = vmatmul.mubr.bf16.gmra.mrb[0].mxu0 %v9014
    %v9405 = vpop.f32.mrb[0].mxu0
    %v9406 = vadd.f32 0.0, %v9405
    %v9407 = vpop.f32.mrb[0].mxu0
    %v9408 = vpop.f32.mrb[0].mxu0
    %v9409 = vadd.f32 0.0, %v9408
    %v9410 = vpop.f32.mrb[0].mxu0
    %9411 = vmatprep.mubr.bf16.mxu0 0
    %9412 = vmatmul.mubr.bf16.gmra.mrb[0].mxu0 %v9015
    %v9413 = vpop.f32.mrb[0].mxu0
    %v9414 = vadd.f32 0.0, %v9413
    %v9415 = vpop.f32.mrb[0].mxu0
    %v9416 = vpop.f32.mrb[0].mxu0
    %v9417 = vadd.f32 0.0, %v9416
    %v9418 = vpop.f32.mrb[0].mxu0
    %9419 = vmatprep.mubr.bf16.mxu0 0
    %9420 = vmatmul.mubr.bf16.gmra.mrb[0].mxu0 %v9016
    %v9421 = vpop.f32.mrb[0].mxu0
    %v9422 = vadd.f32 0.0, %v9421
    %v9423 = vpop.f32.mrb[0].mxu0
    %v9424 = vpop.f32.mrb[0].mxu0
    %v9425 = vadd.f32 0.0, %v9424
    %v9426 = vpop.f32.mrb[0].mxu0
    %9427 = vmatprep.mubr.bf16.mxu0 0
    %9428 = vmatmul.mubr.bf16.gmra.mrb[0].mxu0 %v9017
    %v9429 = vpop.f32.mrb[0].mxu0
    %v9430 = vadd.f32 0.0, %v9429
    %v9431 = vpop.f32.mrb[0].mxu0
    %v9432 = vpop.f32.mrb[0].mxu0
    %v9433 = vadd.f32 0.0, %v9432
    %v9434 = vpop.f32.mrb[0].mxu0
    %9435 = vmatprep.mubr.bf16.mxu0 0
    %9436 = vmatmul.mubr.bf16.gmra.mrb[0].mxu0 %v9018
    %v9437 = vpop.f32.mrb[0].mxu0
    %v9438 = vadd.f32 0.0, %v9437
    %v9439 = vpop.f32.mrb[0].mxu0
    %v9440 = vpop.f32.mrb[0].mxu0
    %v9441 = vadd.f32 0.0, %v9440
    %v9442 = vpop.f32.mrb[0].mxu0
    %9443 = vmatprep.mubr.bf16.mxu0 0
    %9444 = vmatmul.mubr.bf16.gmra.mrb[0].mxu0 %v9019
    %v9445 = vpop.f32.mrb[0].mxu0
    %v9446 = vadd.f32 0.0, %v9445
    %v9447 = vpop.f32.mrb[0].mxu0
    %v9448 = vpop.f32.mrb[0].mxu0
    %v9449 = vadd.f32 0.0, %v9448
    %v9450 = vpop.f32.mrb[0].mxu0
    %9451 = vmatprep.mubr.bf16.mxu0 0
    %9452 = vmatmul.mubr.bf16.gmra.mrb[0].mxu0 %v9020
    %v9453 = vpop.f32.mrb[0].mxu0
    %v9454 = vadd.f32 0.0, %v9453
    %v9455 = vpop.f32.mrb[0].mxu0
    %v9456 = vpop.f32.mrb[0].mxu0
    %v9457 = vadd.f32 0.0, %v9456
    %v9458 = vpop.f32.mrb[0].mxu0
    %9459 = vmatprep.mubr.bf16.mxu0 0
    %9460 = vmatmul.mubr.bf16.gmra.mrb[0].mxu0 %v9021
    %v9461 = vpop.f32.mrb[0].mxu0
    %v9462 = vadd.f32 0.0, %v9461
    %v9463 = vpop.f32.mrb[0].mxu0
    %v9464 = vpop.f32.mrb[0].mxu0
    %v9465 = vadd.f32 0.0, %v9464
    %v9466 = vpop.f32.mrb[0].mxu0
    %9467 = vmatprep.mubr.bf16.mxu0 0
    %9468 = vmatmul.mubr.bf16.gmra.mrb[0].mxu0 %v9022
    %v9469 = vpop.f32.mrb[0].mxu0
    %v9470 = vadd.f32 0.0, %v9469
    %v9471 = vpop.f32.mrb[0].mxu0
    %v9472 = vpop.f32.mrb[0].mxu0
    %v9473 = vadd.f32 0.0, %v9472
    %v9474 = vpop.f32.mrb[0].mxu0
    %9475 = vmatprep.mubr.bf16.mxu0 0
    %9476 = vmatmul.mubr.bf16.gmra.mrb[0].mxu0 %v9023
    %v9477 = vpop.f32.mrb[0].mxu0
    %v9478 = vadd.f32 0.0, %v9477
    %v9479 = vpop.f32.mrb[0].mxu0
    %v9480 = vpop.f32.mrb[0].mxu0
    %v9481 = vadd.f32 0.0, %v9480
    %v9482 = vpop.f32.mrb[0].mxu0
    %9483 = vmatprep.mubr.bf16.mxu0 0
    %9484 = vmatmul.mubr.bf16.gmra.mrb[0].mxu0 %v9024
    %v9485 = vpop.f32.mrb[0].mxu0
    %v9486 = vadd.f32 0.0, %v9485
    %v9487 = vpop.f32.mrb[0].mxu0
    %v9488 = vpop.f32.mrb[0].mxu0
    %v9489 = vadd.f32 0.0, %v9488
    %v9490 = vpop.f32.mrb[0].mxu0
    %9491 = vmatprep.mubr.bf16.mxu0 0
    %9492 = vmatmul.mubr.bf16.gmra.mrb[0].mxu0 %v9025
    %v9493 = vpop.f32.mrb[0].mxu0
    %v9494 = vadd.f32 0.0, %v9493
    %v9495 = vpop.f32.mrb[0].mxu0
    %v9496 = vpop.f32.mrb[0].mxu0
    %v9497 = vadd.f32 0.0, %v9496
    %v9498 = vpop.f32.mrb[0].mxu0
    %9499 = vmatprep.mubr.bf16.mxu0 0
    %9500 = vmatmul.mubr.bf16.gmra.mrb[0].mxu0 %v9026
    %v9501 = vpop.f32.mrb[0].mxu0
    %v9502 = vadd.f32 0.0, %v9501
    %v9503 = vpop.f32.mrb[0].mxu0
    %v9504 = vpop.f32.mrb[0].mxu0
    %v9505 = vadd.f32 0.0, %v9504
    %v9506 = vpop.f32.mrb[0].mxu0
    %9507 = vmatprep.mubr.bf16.mxu0 0
    %9508 = vmatmul.mubr.bf16.gmra.mrb[0].mxu0 %v9027
    %v9509 = vpop.f32.mrb[0].mxu0
    %v9510 = vadd.f32 0.0, %v9509
    %v9511 = vpop.f32.mrb[0].mxu0
    %v9512 = vpop.f32.mrb[0].mxu0
    %v9513 = vadd.f32 0.0, %v9512
    %v9514 = vpop.f32.mrb[0].mxu0
    %9515 = vmatprep.mubr.bf16.mxu0 0
    %9516 = vmatmul.mubr.bf16.gmra.mrb[0].mxu0 %v9028
    %v9517 = vpop.f32.mrb[0].mxu0
    %v9518 = vadd.f32 0.0, %v9517
    %v9519 = vpop.f32.mrb[0].mxu0
    %v9520 = vpop.f32.mrb[0].mxu0
    %v9521 = vadd.f32 0.0, %v9520
    %v9522 = vpop.f32.mrb[0].mxu0
    %9523 = vmatprep.mubr.bf16.mxu0 0
    %9524 = vmatmul.mubr.bf16.gmra.mrb[0].mxu0 %v9029
    %v9525 = vpop.f32.mrb[0].mxu0
    %v9526 = vadd.f32 0.0, %v9525
    %v9527 = vpop.f32.mrb[0].mxu0
    %v9528 = vpop.f32.mrb[0].mxu0
    %v9529 = vadd.f32 0.0, %v9528
    %v9530 = vpop.f32.mrb[0].mxu0
    %9531 = vmatprep.mubr.bf16.mxu0 0
    %9532 = vmatmul.mubr.bf16.gmra.mrb[0].mxu0 %v9030
    %v9533 = vpop.f32.mrb[0].mxu0
    %v9534 = vadd.f32 0.0, %v9533
    %v9535 = vpop.f32.mrb[0].mxu0
    %v9536 = vpop.f32.mrb[0].mxu0
    %v9537 = vadd.f32 0.0, %v9536
    %v9538 = vpop.f32.mrb[0].mxu0
    %9539 = vmatprep.mubr.bf16.mxu0 0
    %9540 = vmatmul.mubr.bf16.gmra.mrb[0].mxu0 %v9031
    %v9541 = vpop.f32.mrb[0].mxu0
    %v9542 = vadd.f32 0.0, %v9541
    %v9543 = vpop.f32.mrb[0].mxu0
    %v9544 = vpop.f32.mrb[0].mxu0
    %v9545 = vadd.f32 0.0, %v9544
    %v9546 = vpop.f32.mrb[0].mxu0
    %9547 = vmatprep.mubr.bf16.mxu0 0
    %9548 = vmatmul.mubr.bf16.gmra.mrb[0].mxu0 %v9032
    %v9549 = vpop.f32.mrb[0].mxu0
    %v9550 = vadd.f32 0.0, %v9549
    %v9551 = vpop.f32.mrb[0].mxu0
    %v9552 = vpop.f32.mrb[0].mxu0
    %v9553 = vadd.f32 0.0, %v9552
    %v9554 = vpop.f32.mrb[0].mxu0
    %9555 = vmatprep.mubr.bf16.mxu0 0
    %9556 = vmatmul.mubr.bf16.gmra.mrb[0].mxu0 %v9033
    %v9557 = vpop.f32.mrb[0].mxu0
    %v9558 = vadd.f32 0.0, %v9557
    %v9559 = vpop.f32.mrb[0].mxu0
    %v9560 = vpop.f32.mrb[0].mxu0
    %v9561 = vadd.f32 0.0, %v9560
    %v9562 = vpop.f32.mrb[0].mxu0
    %9563 = vdwg.mxu0
    %v9564 = vadd.f32 %v8764, %v9134
    %v9565 = vadd.f32 %v8765, %v9137
    %v9566 = vadd.f32 %v8766, %v9142
    %v9567 = vadd.f32 %v8767, %v9145
    %v9568 = vadd.f32 %v8768, %v9150
    %v9569 = vadd.f32 %v8769, %v9153
    %v9570 = vadd.f32 %v8770, %v9158
    %v9571 = vadd.f32 %v8771, %v9161
    %v9572 = vadd.f32 %v8772, %v9166
    %v9573 = vadd.f32 %v8773, %v9169
    %v9574 = vadd.f32 %v8774, %v9174
    %v9575 = vadd.f32 %v8775, %v9177
    %v9576 = vadd.f32 %v8776, %v9182
    %v9577 = vadd.f32 %v8777, %v9185
    %v9578 = vadd.f32 %v8778, %v9190
    %v9579 = vadd.f32 %v8779, %v9193
    %v9580 = vadd.f32 %v8780, %v9198
    %v9581 = vadd.f32 %v8781, %v9201
    %v9582 = vadd.f32 %v8782, %v9206
    %v9583 = vadd.f32 %v8783, %v9209
    %v9584 = vadd.f32 %v8784, %v9214
    %v9585 = vadd.f32 %v8785, %v9217
    %v9586 = vadd.f32 %v8786, %v9222
    %v9587 = vadd.f32 %v8787, %v9225
    %v9588 = vadd.f32 %v8788, %v9230
    %v9589 = vadd.f32 %v8789, %v9233
    %v9590 = vadd.f32 %v8790, %v9238
    %v9591 = vadd.f32 %v8791, %v9241
    %v9592 = vadd.f32 %v8792, %v9246
    %v9593 = vadd.f32 %v8793, %v9249
    %v9594 = vadd.f32 %v8794, %v9254
    %v9595 = vadd.f32 %v8795, %v9257
    %v9596 = vadd.f32 %v8796, %v9262
    %v9597 = vadd.f32 %v8797, %v9265
    %v9598 = vadd.f32 %v8798, %v9270
    %v9599 = vadd.f32 %v8799, %v9273
    %v9600 = vadd.f32 %v8800, %v9278
    %v9601 = vadd.f32 %v8801, %v9281
    %v9602 = vadd.f32 %v8802, %v9286
    %v9603 = vadd.f32 %v8803, %v9289
    %v9604 = vadd.f32 %v8804, %v9294
    %v9605 = vadd.f32 %v8805, %v9297
    %v9606 = vadd.f32 %v8806, %v9302
    %v9607 = vadd.f32 %v8807, %v9305
    %v9608 = vadd.f32 %v8808, %v9310
    %v9609 = vadd.f32 %v8809, %v9313
    %v9610 = vadd.f32 %v8810, %v9318
    %v9611 = vadd.f32 %v8811, %v9321
    %v9612 = vadd.f32 %v8812, %v9326
    %v9613 = vadd.f32 %v8813, %v9329
    %v9614 = vadd.f32 %v8814, %v9334
    %v9615 = vadd.f32 %v8815, %v9337
    %v9616 = vadd.f32 %v8816, %v9342
    %v9617 = vadd.f32 %v8817, %v9345
    %v9618 = vadd.f32 %v8818, %v9350
    %v9619 = vadd.f32 %v8819, %v9353
    %v9620 = vadd.f32 %v8820, %v9358
    %v9621 = vadd.f32 %v8821, %v9361
    %v9622 = vadd.f32 %v8822, %v9366
    %v9623 = vadd.f32 %v8823, %v9369
    %v9624 = vadd.f32 %v8824, %v9374
    %v9625 = vadd.f32 %v8825, %v9377
    %v9626 = vadd.f32 %v8826, %v9382
    %v9627 = vadd.f32 %v8827, %v9385
    %v9628 = vadd.f32 %v8828, %v9390
    %v9629 = vadd.f32 %v8829, %v9393
    %v9630 = vadd.f32 %v8830, %v9398
    %v9631 = vadd.f32 %v8831, %v9401
    %v9632 = vadd.f32 %v8832, %v9406
    %v9633 = vadd.f32 %v8833, %v9409
    %v9634 = vadd.f32 %v8834, %v9414
    %v9635 = vadd.f32 %v8835, %v9417
    %v9636 = vadd.f32 %v8836, %v9422
    %v9637 = vadd.f32 %v8837, %v9425
    %v9638 = vadd.f32 %v8838, %v9430
    %v9639 = vadd.f32 %v8839, %v9433
    %v9640 = vadd.f32 %v8840, %v9438
    %v9641 = vadd.f32 %v8841, %v9441
    %v9642 = vadd.f32 %v8842, %v9446
    %v9643 = vadd.f32 %v8843, %v9449
    %v9644 = vadd.f32 %v8844, %v9454
    %v9645 = vadd.f32 %v8845, %v9457
    %v9646 = vadd.f32 %v8846, %v9462
    %v9647 = vadd.f32 %v8847, %v9465
    %v9648 = vadd.f32 %v8848, %v9470
    %v9649 = vadd.f32 %v8849, %v9473
    %v9650 = vadd.f32 %v8850, %v9478
    %v9651 = vadd.f32 %v8851, %v9481
    %v9652 = vadd.f32 %v8852, %v9486
    %v9653 = vadd.f32 %v8853, %v9489
    %v9654 = vadd.f32 %v8854, %v9494
    %v9655 = vadd.f32 %v8855, %v9497
    %v9656 = vadd.f32 %v8856, %v9502
    %v9657 = vadd.f32 %v8857, %v9505
    %v9658 = vadd.f32 %v8858, %v9510
    %v9659 = vadd.f32 %v8859, %v9513
    %v9660 = vadd.f32 %v8860, %v9518
    %v9661 = vadd.f32 %v8861, %v9521
    %v9662 = vadd.f32 %v8862, %v9526
    %v9663 = vadd.f32 %v8863, %v9529
    %v9664 = vadd.f32 %v8864, %v9534
    %v9665 = vadd.f32 %v8865, %v9537
    %v9666 = vadd.f32 %v8866, %v9542
    %v9667 = vadd.f32 %v8867, %v9545
    %v9668 = vadd.f32 %v8868, %v9550
    %v9669 = vadd.f32 %v8869, %v9553
    %v9670 = vadd.f32 %v8870, %v9558
    %v9671 = vadd.f32 %v8871, %v9561
    %v9672 = vld [vmem:[%s4] sm:$0x1]
    %v9674 = vlaneseq
    %v9675 = vshrl.u32 %v9674, 7
    %v9676 = vsub.s32 0, %v9675
    %v9677 = vrot.slane %v9672, %v9676
    %v9679 = vadd.f32 %v9564, %v9677
    %v9680 = vadd.f32 %v9565, %v9677
    %v9681 = vadd.f32 %v9566, %v9677
    %v9682 = vadd.f32 %v9567, %v9677
    %v9683 = vadd.f32 %v9568, %v9677
    %v9684 = vadd.f32 %v9569, %v9677
    %v9685 = vadd.f32 %v9570, %v9677
    %v9686 = vadd.f32 %v9571, %v9677
    %v9687 = vadd.f32 %v9572, %v9677
    %v9688 = vadd.f32 %v9573, %v9677
    %v9689 = vadd.f32 %v9574, %v9677
    %v9690 = vadd.f32 %v9575, %v9677
    %v9691 = vadd.f32 %v9576, %v9677
    %v9692 = vadd.f32 %v9577, %v9677
    %v9693 = vadd.f32 %v9578, %v9677
    %v9694 = vadd.f32 %v9579, %v9677
    %v9695 = vadd.f32 %v9580, %v9677
    %v9696 = vadd.f32 %v9581, %v9677
    %v9697 = vadd.f32 %v9582, %v9677
    %v9698 = vadd.f32 %v9583, %v9677
    %v9699 = vadd.f32 %v9584, %v9677
    %v9700 = vadd.f32 %v9585, %v9677
    %v9701 = vadd.f32 %v9586, %v9677
    %v9702 = vadd.f32 %v9587, %v9677
    %v9703 = vadd.f32 %v9588, %v9677
    %v9704 = vadd.f32 %v9589, %v9677
    %v9705 = vadd.f32 %v9590, %v9677
    %v9706 = vadd.f32 %v9591, %v9677
    %v9707 = vadd.f32 %v9592, %v9677
    %v9708 = vadd.f32 %v9593, %v9677
    %v9709 = vadd.f32 %v9594, %v9677
    %v9710 = vadd.f32 %v9595, %v9677
    %v9711 = vadd.f32 %v9596, %v9677
    %v9712 = vadd.f32 %v9597, %v9677
    %v9713 = vadd.f32 %v9598, %v9677
    %v9714 = vadd.f32 %v9599, %v9677
    %v9715 = vadd.f32 %v9600, %v9677
    %v9716 = vadd.f32 %v9601, %v9677
    %v9717 = vadd.f32 %v9602, %v9677
    %v9718 = vadd.f32 %v9603, %v9677
    %v9719 = vadd.f32 %v9604, %v9677
    %v9720 = vadd.f32 %v9605, %v9677
    %v9721 = vadd.f32 %v9606, %v9677
    %v9722 = vadd.f32 %v9607, %v9677
    %v9723 = vadd.f32 %v9608, %v9677
    %v9724 = vadd.f32 %v9609, %v9677
    %v9725 = vadd.f32 %v9610, %v9677
    %v9726 = vadd.f32 %v9611, %v9677
    %v9727 = vadd.f32 %v9612, %v9677
    %v9728 = vadd.f32 %v9613, %v9677
    %v9729 = vadd.f32 %v9614, %v9677
    %v9730 = vadd.f32 %v9615, %v9677
    %v9731 = vadd.f32 %v9616, %v9677
    %v9732 = vadd.f32 %v9617, %v9677
    %v9733 = vadd.f32 %v9618, %v9677
    %v9734 = vadd.f32 %v9619, %v9677
    %v9735 = vadd.f32 %v9620, %v9677
    %v9736 = vadd.f32 %v9621, %v9677
    %v9737 = vadd.f32 %v9622, %v9677
    %v9738 = vadd.f32 %v9623, %v9677
    %v9739 = vadd.f32 %v9624, %v9677
    %v9740 = vadd.f32 %v9625, %v9677
    %v9741 = vadd.f32 %v9626, %v9677
    %v9742 = vadd.f32 %v9627, %v9677
    %v9743 = vadd.f32 %v9628, %v9677
    %v9744 = vadd.f32 %v9629, %v9677
    %v9745 = vadd.f32 %v9630, %v9677
    %v9746 = vadd.f32 %v9631, %v9677
    %v9747 = vadd.f32 %v9632, %v9677
    %v9748 = vadd.f32 %v9633, %v9677
    %v9749 = vadd.f32 %v9634, %v9677
    %v9750 = vadd.f32 %v9635, %v9677
    %v9751 = vadd.f32 %v9636, %v9677
    %v9752 = vadd.f32 %v9637, %v9677
    %v9753 = vadd.f32 %v9638, %v9677
    %v9754 = vadd.f32 %v9639, %v9677
    %v9755 = vadd.f32 %v9640, %v9677
    %v9756 = vadd.f32 %v9641, %v9677
    %v9757 = vadd.f32 %v9642, %v9677
    %v9758 = vadd.f32 %v9643, %v9677
    %v9759 = vadd.f32 %v9644, %v9677
    %v9760 = vadd.f32 %v9645, %v9677
    %v9761 = vadd.f32 %v9646, %v9677
    %v9762 = vadd.f32 %v9647, %v9677
    %v9763 = vadd.f32 %v9648, %v9677
    %v9764 = vadd.f32 %v9649, %v9677
    %v9765 = vadd.f32 %v9650, %v9677
    %v9766 = vadd.f32 %v9651, %v9677
    %v9767 = vadd.f32 %v9652, %v9677
    %v9768 = vadd.f32 %v9653, %v9677
    %v9769 = vadd.f32 %v9654, %v9677
    %v9770 = vadd.f32 %v9655, %v9677
    %v9771 = vadd.f32 %v9656, %v9677
    %v9772 = vadd.f32 %v9657, %v9677
    %v9773 = vadd.f32 %v9658, %v9677
    %v9774 = vadd.f32 %v9659, %v9677
    %v9775 = vadd.f32 %v9660, %v9677
    %v9776 = vadd.f32 %v9661, %v9677
    %v9777 = vadd.f32 %v9662, %v9677
    %v9778 = vadd.f32 %v9663, %v9677
    %v9779 = vadd.f32 %v9664, %v9677
    %v9780 = vadd.f32 %v9665, %v9677
    %v9781 = vadd.f32 %v9666, %v9677
    %v9782 = vadd.f32 %v9667, %v9677
    %v9783 = vadd.f32 %v9668, %v9677
    %v9784 = vadd.f32 %v9669, %v9677
    %v9785 = vadd.f32 %v9670, %v9677
    %v9786 = vadd.f32 %v9671, %v9677
    %v9787 = vmax.f32 %v9679, 0.0
    %v9788 = vmax.f32 %v9680, 0.0
    %v9789 = vmax.f32 %v9681, 0.0
    %v9790 = vmax.f32 %v9682, 0.0
    %v9791 = vmax.f32 %v9683, 0.0
    %v9792 = vmax.f32 %v9684, 0.0
    %v9793 = vmax.f32 %v9685, 0.0
    %v9794 = vmax.f32 %v9686, 0.0
    %v9795 = vmax.f32 %v9687, 0.0
    %v9796 = vmax.f32 %v9688, 0.0
    %v9797 = vmax.f32 %v9689, 0.0
    %v9798 = vmax.f32 %v9690, 0.0
    %v9799 = vmax.f32 %v9691, 0.0
    %v9800 = vmax.f32 %v9692, 0.0
    %v9801 = vmax.f32 %v9693, 0.0
    %v9802 = vmax.f32 %v9694, 0.0
    %v9803 = vmax.f32 %v9695, 0.0
    %v9804 = vmax.f32 %v9696, 0.0
    %v9805 = vmax.f32 %v9697, 0.0
    %v9806 = vmax.f32 %v9698, 0.0
    %v9807 = vmax.f32 %v9699, 0.0
    %v9808 = vmax.f32 %v9700, 0.0
    %v9809 = vmax.f32 %v9701, 0.0
    %v9810 = vmax.f32 %v9702, 0.0
    %v9811 = vmax.f32 %v9703, 0.0
    %v9812 = vmax.f32 %v9704, 0.0
    %v9813 = vmax.f32 %v9705, 0.0
    %v9814 = vmax.f32 %v9706, 0.0
    %v9815 = vmax.f32 %v9707, 0.0
    %v9816 = vmax.f32 %v9708, 0.0
    %v9817 = vmax.f32 %v9709, 0.0
    %v9818 = vmax.f32 %v9710, 0.0
    %v9819 = vmax.f32 %v9711, 0.0
    %v9820 = vmax.f32 %v9712, 0.0
    %v9821 = vmax.f32 %v9713, 0.0
    %v9822 = vmax.f32 %v9714, 0.0
    %v9823 = vmax.f32 %v9715, 0.0
    %v9824 = vmax.f32 %v9716, 0.0
    %v9825 = vmax.f32 %v9717, 0.0
    %v9826 = vmax.f32 %v9718, 0.0
    %v9827 = vmax.f32 %v9719, 0.0
    %v9828 = vmax.f32 %v9720, 0.0
    %v9829 = vmax.f32 %v9721, 0.0
    %v9830 = vmax.f32 %v9722, 0.0
    %v9831 = vmax.f32 %v9723, 0.0
    %v9832 = vmax.f32 %v9724, 0.0
    %v9833 = vmax.f32 %v9725, 0.0
    %v9834 = vmax.f32 %v9726, 0.0
    %v9835 = vmax.f32 %v9727, 0.0
    %v9836 = vmax.f32 %v9728, 0.0
    %v9837 = vmax.f32 %v9729, 0.0
    %v9838 = vmax.f32 %v9730, 0.0
    %v9839 = vmax.f32 %v9731, 0.0
    %v9840 = vmax.f32 %v9732, 0.0
    %v9841 = vmax.f32 %v9733, 0.0
    %v9842 = vmax.f32 %v9734, 0.0
    %v9843 = vmax.f32 %v9735, 0.0
    %v9844 = vmax.f32 %v9736, 0.0
    %v9845 = vmax.f32 %v9737, 0.0
    %v9846 = vmax.f32 %v9738, 0.0
    %v9847 = vmax.f32 %v9739, 0.0
    %v9848 = vmax.f32 %v9740, 0.0
    %v9849 = vmax.f32 %v9741, 0.0
    %v9850 = vmax.f32 %v9742, 0.0
    %v9851 = vmax.f32 %v9743, 0.0
    %v9852 = vmax.f32 %v9744, 0.0
    %v9853 = vmax.f32 %v9745, 0.0
    %v9854 = vmax.f32 %v9746, 0.0
    %v9855 = vmax.f32 %v9747, 0.0
    %v9856 = vmax.f32 %v9748, 0.0
    %v9857 = vmax.f32 %v9749, 0.0
    %v9858 = vmax.f32 %v9750, 0.0
    %v9859 = vmax.f32 %v9751, 0.0
    %v9860 = vmax.f32 %v9752, 0.0
    %v9861 = vmax.f32 %v9753, 0.0
    %v9862 = vmax.f32 %v9754, 0.0
    %v9863 = vmax.f32 %v9755, 0.0
    %v9864 = vmax.f32 %v9756, 0.0
    %v9865 = vmax.f32 %v9757, 0.0
    %v9866 = vmax.f32 %v9758, 0.0
    %v9867 = vmax.f32 %v9759, 0.0
    %v9868 = vmax.f32 %v9760, 0.0
    %v9869 = vmax.f32 %v9761, 0.0
    %v9870 = vmax.f32 %v9762, 0.0
    %v9871 = vmax.f32 %v9763, 0.0
    %v9872 = vmax.f32 %v9764, 0.0
    %v9873 = vmax.f32 %v9765, 0.0
    %v9874 = vmax.f32 %v9766, 0.0
    %v9875 = vmax.f32 %v9767, 0.0
    %v9876 = vmax.f32 %v9768, 0.0
    %v9877 = vmax.f32 %v9769, 0.0
    %v9878 = vmax.f32 %v9770, 0.0
    %v9879 = vmax.f32 %v9771, 0.0
    %v9880 = vmax.f32 %v9772, 0.0
    %v9881 = vmax.f32 %v9773, 0.0
    %v9882 = vmax.f32 %v9774, 0.0
    %v9883 = vmax.f32 %v9775, 0.0
    %v9884 = vmax.f32 %v9776, 0.0
    %v9885 = vmax.f32 %v9777, 0.0
    %v9886 = vmax.f32 %v9778, 0.0
    %v9887 = vmax.f32 %v9779, 0.0
    %v9888 = vmax.f32 %v9780, 0.0
    %v9889 = vmax.f32 %v9781, 0.0
    %v9890 = vmax.f32 %v9782, 0.0
    %v9891 = vmax.f32 %v9783, 0.0
    %v9892 = vmax.f32 %v9784, 0.0
    %v9893 = vmax.f32 %v9785, 0.0
    %v9894 = vmax.f32 %v9786, 0.0
    %v9895 = vpack.c.bf16 %v9788, %v9787
    %v9896 = vpack.c.bf16 %v9790, %v9789
    %v9897 = vpack.c.bf16 %v9792, %v9791
    %v9898 = vpack.c.bf16 %v9794, %v9793
    %v9899 = vpack.c.bf16 %v9796, %v9795
    %v9900 = vpack.c.bf16 %v9798, %v9797
    %v9901 = vpack.c.bf16 %v9800, %v9799
    %v9902 = vpack.c.bf16 %v9802, %v9801
    %v9903 = vpack.c.bf16 %v9804, %v9803
    %v9904 = vpack.c.bf16 %v9806, %v9805
    %v9905 = vpack.c.bf16 %v9808, %v9807
    %v9906 = vpack.c.bf16 %v9810, %v9809
    %v9907 = vpack.c.bf16 %v9812, %v9811
    %v9908 = vpack.c.bf16 %v9814, %v9813
    %v9909 = vpack.c.bf16 %v9816, %v9815
    %v9910 = vpack.c.bf16 %v9818, %v9817
    %v9911 = vpack.c.bf16 %v9820, %v9819
    %v9912 = vpack.c.bf16 %v9822, %v9821
    %v9913 = vpack.c.bf16 %v9824, %v9823
    %v9914 = vpack.c.bf16 %v9826, %v9825
    %v9915 = vpack.c.bf16 %v9828, %v9827
    %v9916 = vpack.c.bf16 %v9830, %v9829
    %v9917 = vpack.c.bf16 %v9832, %v9831
    %v9918 = vpack.c.bf16 %v9834, %v9833
    %v9919 = vpack.c.bf16 %v9836, %v9835
    %v9920 = vpack.c.bf16 %v9838, %v9837
    %v9921 = vpack.c.bf16 %v9840, %v9839
    %v9922 = vpack.c.bf16 %v9842, %v9841
    %v9923 = vpack.c.bf16 %v9844, %v9843
    %v9924 = vpack.c.bf16 %v9846, %v9845
    %v9925 = vpack.c.bf16 %v9848, %v9847
    %v9926 = vpack.c.bf16 %v9850, %v9849
    %v9927 = vpack.c.bf16 %v9852, %v9851
    %v9928 = vpack.c.bf16 %v9854, %v9853
    %v9929 = vpack.c.bf16 %v9856, %v9855
    %v9930 = vpack.c.bf16 %v9858, %v9857
    %v9931 = vpack.c.bf16 %v9860, %v9859
    %v9932 = vpack.c.bf16 %v9862, %v9861
    %v9933 = vpack.c.bf16 %v9864, %v9863
    %v9934 = vpack.c.bf16 %v9866, %v9865
    %v9935 = vpack.c.bf16 %v9868, %v9867
    %v9936 = vpack.c.bf16 %v9870, %v9869
    %v9937 = vpack.c.bf16 %v9872, %v9871
    %v9938 = vpack.c.bf16 %v9874, %v9873
    %v9939 = vpack.c.bf16 %v9876, %v9875
    %v9940 = vpack.c.bf16 %v9878, %v9877
    %v9941 = vpack.c.bf16 %v9880, %v9879
    %v9942 = vpack.c.bf16 %v9882, %v9881
    %v9943 = vpack.c.bf16 %v9884, %v9883
    %v9944 = vpack.c.bf16 %v9886, %v9885
    %v9945 = vpack.c.bf16 %v9888, %v9887
    %v9946 = vpack.c.bf16 %v9890, %v9889
    %v9947 = vpack.c.bf16 %v9892, %v9891
    %v9948 = vpack.c.bf16 %v9894, %v9893
    %v9949 = vld [vmem:[%s5] sm:$0xf]
    %v9950 = vld [vmem:[%s5 + $0x4] sm:$0xf]
    %v9951 = vld [vmem:[%s5 + $0x8] sm:$0xf]
    %v9952 = vld [vmem:[%s5 + $0xc] sm:$0xf]
    %v9953 = vld [vmem:[%s5 + $0x10] sm:$0xf]
    %v9954 = vld [vmem:[%s5 + $0x14] sm:$0xf]
    %v9955 = vld [vmem:[%s5 + $0x18] sm:$0xf]
    %v9956 = vld [vmem:[%s5 + $0x1c] sm:$0xf]
    %v9957 = vld [vmem:[%s5 + $0x20] sm:$0xf]
    %v9958 = vld [vmem:[%s5 + $0x24] sm:$0xf]
    %v9959 = vld [vmem:[%s5 + $0x28] sm:$0xf]
    %v9960 = vld [vmem:[%s5 + $0x2c] sm:$0xf]
    %v9961 = vld [vmem:[%s5 + $0x30] sm:$0xf]
    %v9962 = vld [vmem:[%s5 + $0x34] sm:$0xf]
    %v9963 = vld [vmem:[%s5 + $0x38] sm:$0xf]
    %v9964 = vld [vmem:[%s5 + $0x3c] sm:$0xf]
    %v9981 = vunpack.c.l.b16 %v9949
    %v9982 = vunpack.c.l.b16 %v9950
    %v9983 = vunpack.c.l.b16 %v9951
    %v9984 = vunpack.c.l.b16 %v9952
    %v9985 = vunpack.c.l.b16 %v9953
    %v9986 = vunpack.c.l.b16 %v9954
    %v9987 = vunpack.c.l.b16 %v9955
    %v9988 = vunpack.c.l.b16 %v9956
    %v9989 = vunpack.c.l.b16 %v9957
    %v9990 = vunpack.c.l.b16 %v9958
    %v9991 = vunpack.c.l.b16 %v9959
    %v9992 = vunpack.c.l.b16 %v9960
    %v9993 = vunpack.c.l.b16 %v9961
    %v9994 = vunpack.c.l.b16 %v9962
    %v9995 = vunpack.c.l.b16 %v9963
    %v9996 = vunpack.c.l.b16 %v9964
    %v9997 = vpack.c.b16 %v9982, %v9981
    %v9998 = vpack.c.b16 %v9984, %v9983
    %v9999 = vpack.c.b16 %v9986, %v9985
    %v10000 = vpack.c.b16 %v9988, %v9987
    %v10001 = vpack.c.b16 %v9990, %v9989
    %v10002 = vpack.c.b16 %v9992, %v9991
    %v10003 = vpack.c.b16 %v9994, %v9993
    %v10004 = vpack.c.b16 %v9996, %v9995
    %10013 = vmatprep.subr.bf16.mxu0 0
    %10014 = vmatpush1.bf16.msra.mxu0 %v9997
    %10015 = vmatprep.subr.bf16.mxu0 0
    %10016 = vmatpush1.bf16.msra.mxu0 %v9998
    %10017 = vmatprep.subr.bf16.mxu0 0
    %10018 = vmatpush1.bf16.msra.mxu0 %v9999
    %10019 = vmatprep.subr.bf16.mxu0 0
    %10020 = vmatpush1.bf16.msra.mxu0 %v10000
    %10021 = vmatprep.subr.bf16.mxu0 0
    %10022 = vmatpush1.bf16.msra.mxu0 %v10001
    %10023 = vmatprep.subr.bf16.mxu0 0
    %10024 = vmatpush1.bf16.msra.mxu0 %v10002
    %10025 = vmatprep.subr.bf16.mxu0 0
    %10026 = vmatpush1.bf16.msra.mxu0 %v10003
    %10027 = vmatprep.subr.bf16.mxu0 0
    %10028 = vmatpush1.bf16.msra.mxu0 %v10004
    %10029 = vmatprep.subr.bf16.mxu0 0
    %10030 = vmatpush1.bf16.msra.mxu0 0
    %10031 = vmatprep.subr.bf16.mxu0 0
    %10032 = vmatpush1.bf16.msra.mxu0 0
    %10033 = vmatprep.subr.bf16.mxu0 0
    %10034 = vmatpush1.bf16.msra.mxu0 0
    %10035 = vmatprep.subr.bf16.mxu0 0
    %10036 = vmatpush1.bf16.msra.mxu0 0
    %10037 = vmatprep.subr.bf16.mxu0 0
    %10038 = vmatpush1.bf16.msra.mxu0 0
    %10039 = vmatprep.subr.bf16.mxu0 0
    %10040 = vmatpush1.bf16.msra.mxu0 0
    %10041 = vmatprep.subr.bf16.mxu0 0
    %10042 = vmatpush1.bf16.msra.mxu0 0
    %10043 = vmatprep.subr.bf16.mxu0 0
    %10044 = vmatpush1.bf16.msra.mxu0 0
    %10045 = vmatprep.mubr.bf16.mxu0 0
    %10046 = vmatmul.mubr.bf16.gmra.mrb[0].mxu0 %v9895
    %v10047 = vpop.f32.mrb[0].mxu0
    %v10048 = vadd.f32 %v1064, %v10047
    %v10049 = vpop.f32.mrb[0].mxu0
    %v10050 = vpop.f32.mrb[0].mxu0
    %v10051 = vadd.f32 %v1068, %v10050
    %v10052 = vpop.f32.mrb[0].mxu0
    %10053 = vmatprep.mubr.bf16.mxu0 0
    %10054 = vmatmul.mubr.bf16.gmra.mrb[0].mxu0 %v9896
    %v10055 = vpop.f32.mrb[0].mxu0
    %v10056 = vadd.f32 %v1074, %v10055
    %v10057 = vpop.f32.mrb[0].mxu0
    %v10058 = vpop.f32.mrb[0].mxu0
    %v10059 = vadd.f32 %v1078, %v10058
    %v10060 = vpop.f32.mrb[0].mxu0
    %10061 = vmatprep.mubr.bf16.mxu0 0
    %10062 = vmatmul.mubr.bf16.gmra.mrb[0].mxu0 %v9897
    %v10063 = vpop.f32.mrb[0].mxu0
    %v10064 = vadd.f32 %v1084, %v10063
    %v10065 = vpop.f32.mrb[0].mxu0
    %v10066 = vpop.f32.mrb[0].mxu0
    %v10067 = vadd.f32 %v1088, %v10066
    %v10068 = vpop.f32.mrb[0].mxu0
    %10069 = vmatprep.mubr.bf16.mxu0 0
    %10070 = vmatmul.mubr.bf16.gmra.mrb[0].mxu0 %v9898
    %v10071 = vpop.f32.mrb[0].mxu0
    %v10072 = vadd.f32 %v1094, %v10071
    %v10073 = vpop.f32.mrb[0].mxu0
    %v10074 = vpop.f32.mrb[0].mxu0
    %v10075 = vadd.f32 %v1098, %v10074
    %v10076 = vpop.f32.mrb[0].mxu0
    %10077 = vmatprep.mubr.bf16.mxu0 0
    %10078 = vmatmul.mubr.bf16.gmra.mrb[0].mxu0 %v9899
    %v10079 = vpop.f32.mrb[0].mxu0
    %v10080 = vadd.f32 %v1104, %v10079
    %v10081 = vpop.f32.mrb[0].mxu0
    %v10082 = vpop.f32.mrb[0].mxu0
    %v10083 = vadd.f32 %v1108, %v10082
    %v10084 = vpop.f32.mrb[0].mxu0
    %10085 = vmatprep.mubr.bf16.mxu0 0
    %10086 = vmatmul.mubr.bf16.gmra.mrb[0].mxu0 %v9900
    %v10087 = vpop.f32.mrb[0].mxu0
    %v10088 = vadd.f32 %v1114, %v10087
    %v10089 = vpop.f32.mrb[0].mxu0
    %v10090 = vpop.f32.mrb[0].mxu0
    %v10091 = vadd.f32 %v1118, %v10090
    %v10092 = vpop.f32.mrb[0].mxu0
    %10093 = vmatprep.mubr.bf16.mxu0 0
    %10094 = vmatmul.mubr.bf16.gmra.mrb[0].mxu0 %v9901
    %v10095 = vpop.f32.mrb[0].mxu0
    %v10096 = vadd.f32 %v1124, %v10095
    %v10097 = vpop.f32.mrb[0].mxu0
    %v10098 = vpop.f32.mrb[0].mxu0
    %v10099 = vadd.f32 %v1128, %v10098
    %v10100 = vpop.f32.mrb[0].mxu0
    %10101 = vmatprep.mubr.bf16.mxu0 0
    %10102 = vmatmul.mubr.bf16.gmra.mrb[0].mxu0 %v9902
    %v10103 = vpop.f32.mrb[0].mxu0
    %v10104 = vadd.f32 %v1134, %v10103
    %v10105 = vpop.f32.mrb[0].mxu0
    %v10106 = vpop.f32.mrb[0].mxu0
    %v10107 = vadd.f32 %v1138, %v10106
    %v10108 = vpop.f32.mrb[0].mxu0
    %10109 = vmatprep.mubr.bf16.mxu0 0
    %10110 = vmatmul.mubr.bf16.gmra.mrb[0].mxu0 %v9903
    %v10111 = vpop.f32.mrb[0].mxu0
    %v10112 = vadd.f32 %v1144, %v10111
    %v10113 = vpop.f32.mrb[0].mxu0
    %v10114 = vpop.f32.mrb[0].mxu0
    %v10115 = vadd.f32 %v1148, %v10114
    %v10116 = vpop.f32.mrb[0].mxu0
    %10117 = vmatprep.mubr.bf16.mxu0 0
    %10118 = vmatmul.mubr.bf16.gmra.mrb[0].mxu0 %v9904
    %v10119 = vpop.f32.mrb[0].mxu0
    %v10120 = vadd.f32 %v1154, %v10119
    %v10121 = vpop.f32.mrb[0].mxu0
    %v10122 = vpop.f32.mrb[0].mxu0
    %v10123 = vadd.f32 %v1158, %v10122
    %v10124 = vpop.f32.mrb[0].mxu0
    %10125 = vmatprep.mubr.bf16.mxu0 0
    %10126 = vmatmul.mubr.bf16.gmra.mrb[0].mxu0 %v9905
    %v10127 = vpop.f32.mrb[0].mxu0
    %v10128 = vadd.f32 %v1164, %v10127
    %v10129 = vpop.f32.mrb[0].mxu0
    %v10130 = vpop.f32.mrb[0].mxu0
    %v10131 = vadd.f32 %v1168, %v10130
    %v10132 = vpop.f32.mrb[0].mxu0
    %10133 = vmatprep.mubr.bf16.mxu0 0
    %10134 = vmatmul.mubr.bf16.gmra.mrb[0].mxu0 %v9906
    %v10135 = vpop.f32.mrb[0].mxu0
    %v10136 = vadd.f32 %v1174, %v10135
    %v10137 = vpop.f32.mrb[0].mxu0
    %v10138 = vpop.f32.mrb[0].mxu0
    %v10139 = vadd.f32 %v1178, %v10138
    %v10140 = vpop.f32.mrb[0].mxu0
    %10141 = vmatprep.mubr.bf16.mxu0 0
    %10142 = vmatmul.mubr.bf16.gmra.mrb[0].mxu0 %v9907
    %v10143 = vpop.f32.mrb[0].mxu0
    %v10144 = vadd.f32 %v1184, %v10143
    %v10145 = vpop.f32.mrb[0].mxu0
    %v10146 = vpop.f32.mrb[0].mxu0
    %v10147 = vadd.f32 %v1188, %v10146
    %v10148 = vpop.f32.mrb[0].mxu0
    %10149 = vmatprep.mubr.bf16.mxu0 0
    %10150 = vmatmul.mubr.bf16.gmra.mrb[0].mxu0 %v9908
    %v10151 = vpop.f32.mrb[0].mxu0
    %v10152 = vadd.f32 %v1194, %v10151
    %v10153 = vpop.f32.mrb[0].mxu0
    %v10154 = vpop.f32.mrb[0].mxu0
    %v10155 = vadd.f32 %v1198, %v10154
    %v10156 = vpop.f32.mrb[0].mxu0
    %10157 = vmatprep.mubr.bf16.mxu0 0
    %10158 = vmatmul.mubr.bf16.gmra.mrb[0].mxu0 %v9909
    %v10159 = vpop.f32.mrb[0].mxu0
    %v10160 = vadd.f32 %v1204, %v10159
    %v10161 = vpop.f32.mrb[0].mxu0
    %v10162 = vpop.f32.mrb[0].mxu0
    %v10163 = vadd.f32 %v1208, %v10162
    %v10164 = vpop.f32.mrb[0].mxu0
    %10165 = vmatprep.mubr.bf16.mxu0 0
    %10166 = vmatmul.mubr.bf16.gmra.mrb[0].mxu0 %v9910
    %v10167 = vpop.f32.mrb[0].mxu0
    %v10168 = vadd.f32 %v1214, %v10167
    %v10169 = vpop.f32.mrb[0].mxu0
    %v10170 = vpop.f32.mrb[0].mxu0
    %v10171 = vadd.f32 %v1218, %v10170
    %v10172 = vpop.f32.mrb[0].mxu0
    %10173 = vmatprep.mubr.bf16.mxu0 0
    %10174 = vmatmul.mubr.bf16.gmra.mrb[0].mxu0 %v9911
    %v10175 = vpop.f32.mrb[0].mxu0
    %v10176 = vadd.f32 %v1224, %v10175
    %v10177 = vpop.f32.mrb[0].mxu0
    %v10178 = vpop.f32.mrb[0].mxu0
    %v10179 = vadd.f32 %v1228, %v10178
    %v10180 = vpop.f32.mrb[0].mxu0
    %10181 = vmatprep.mubr.bf16.mxu0 0
    %10182 = vmatmul.mubr.bf16.gmra.mrb[0].mxu0 %v9912
    %v10183 = vpop.f32.mrb[0].mxu0
    %v10184 = vadd.f32 %v1234, %v10183
    %v10185 = vpop.f32.mrb[0].mxu0
    %v10186 = vpop.f32.mrb[0].mxu0
    %v10187 = vadd.f32 %v1238, %v10186
    %v10188 = vpop.f32.mrb[0].mxu0
    %10189 = vmatprep.mubr.bf16.mxu0 0
    %10190 = vmatmul.mubr.bf16.gmra.mrb[0].mxu0 %v9913
    %v10191 = vpop.f32.mrb[0].mxu0
    %v10192 = vadd.f32 %v1244, %v10191
    %v10193 = vpop.f32.mrb[0].mxu0
    %v10194 = vpop.f32.mrb[0].mxu0
    %v10195 = vadd.f32 %v1248, %v10194
    %v10196 = vpop.f32.mrb[0].mxu0
    %10197 = vmatprep.mubr.bf16.mxu0 0
    %10198 = vmatmul.mubr.bf16.gmra.mrb[0].mxu0 %v9914
    %v10199 = vpop.f32.mrb[0].mxu0
    %v10200 = vadd.f32 %v1254, %v10199
    %v10201 = vpop.f32.mrb[0].mxu0
    %v10202 = vpop.f32.mrb[0].mxu0
    %v10203 = vadd.f32 %v1258, %v10202
    %v10204 = vpop.f32.mrb[0].mxu0
    %10205 = vmatprep.mubr.bf16.mxu0 0
    %10206 = vmatmul.mubr.bf16.gmra.mrb[0].mxu0 %v9915
    %v10207 = vpop.f32.mrb[0].mxu0
    %v10208 = vadd.f32 %v1264, %v10207
    %v10209 = vpop.f32.mrb[0].mxu0
    %v10210 = vpop.f32.mrb[0].mxu0
    %v10211 = vadd.f32 %v1268, %v10210
    %v10212 = vpop.f32.mrb[0].mxu0
    %10213 = vmatprep.mubr.bf16.mxu0 0
    %10214 = vmatmul.mubr.bf16.gmra.mrb[0].mxu0 %v9916
    %v10215 = vpop.f32.mrb[0].mxu0
    %v10216 = vadd.f32 %v1274, %v10215
    %v10217 = vpop.f32.mrb[0].mxu0
    %v10218 = vpop.f32.mrb[0].mxu0
    %v10219 = vadd.f32 %v1278, %v10218
    %v10220 = vpop.f32.mrb[0].mxu0
    %10221 = vmatprep.mubr.bf16.mxu0 0
    %10222 = vmatmul.mubr.bf16.gmra.mrb[0].mxu0 %v9917
    %v10223 = vpop.f32.mrb[0].mxu0
    %v10224 = vadd.f32 %v1284, %v10223
    %v10225 = vpop.f32.mrb[0].mxu0
    %v10226 = vpop.f32.mrb[0].mxu0
    %v10227 = vadd.f32 %v1288, %v10226
    %v10228 = vpop.f32.mrb[0].mxu0
    %10229 = vmatprep.mubr.bf16.mxu0 0
    %10230 = vmatmul.mubr.bf16.gmra.mrb[0].mxu0 %v9918
    %v10231 = vpop.f32.mrb[0].mxu0
    %v10232 = vadd.f32 %v1294, %v10231
    %v10233 = vpop.f32.mrb[0].mxu0
    %v10234 = vpop.f32.mrb[0].mxu0
    %v10235 = vadd.f32 %v1298, %v10234
    %v10236 = vpop.f32.mrb[0].mxu0
    %10237 = vmatprep.mubr.bf16.mxu0 0
    %10238 = vmatmul.mubr.bf16.gmra.mrb[0].mxu0 %v9919
    %v10239 = vpop.f32.mrb[0].mxu0
    %v10240 = vadd.f32 %v1304, %v10239
    %v10241 = vpop.f32.mrb[0].mxu0
    %v10242 = vpop.f32.mrb[0].mxu0
    %v10243 = vadd.f32 %v1308, %v10242
    %v10244 = vpop.f32.mrb[0].mxu0
    %10245 = vmatprep.mubr.bf16.mxu0 0
    %10246 = vmatmul.mubr.bf16.gmra.mrb[0].mxu0 %v9920
    %v10247 = vpop.f32.mrb[0].mxu0
    %v10248 = vadd.f32 %v1314, %v10247
    %v10249 = vpop.f32.mrb[0].mxu0
    %v10250 = vpop.f32.mrb[0].mxu0
    %v10251 = vadd.f32 %v1318, %v10250
    %v10252 = vpop.f32.mrb[0].mxu0
    %10253 = vmatprep.mubr.bf16.mxu0 0
    %10254 = vmatmul.mubr.bf16.gmra.mrb[0].mxu0 %v9921
    %v10255 = vpop.f32.mrb[0].mxu0
    %v10256 = vadd.f32 %v1324, %v10255
    %v10257 = vpop.f32.mrb[0].mxu0
    %v10258 = vpop.f32.mrb[0].mxu0
    %v10259 = vadd.f32 %v1328, %v10258
    %v10260 = vpop.f32.mrb[0].mxu0
    %10261 = vmatprep.mubr.bf16.mxu0 0
    %10262 = vmatmul.mubr.bf16.gmra.mrb[0].mxu0 %v9922
    %v10263 = vpop.f32.mrb[0].mxu0
    %v10264 = vadd.f32 %v1334, %v10263
    %v10265 = vpop.f32.mrb[0].mxu0
    %v10266 = vpop.f32.mrb[0].mxu0
    %v10267 = vadd.f32 %v1338, %v10266
    %v10268 = vpop.f32.mrb[0].mxu0
    %10269 = vmatprep.mubr.bf16.mxu0 0
    %10270 = vmatmul.mubr.bf16.gmra.mrb[0].mxu0 %v9923
    %v10271 = vpop.f32.mrb[0].mxu0
    %v10272 = vadd.f32 %v1344, %v10271
    %v10273 = vpop.f32.mrb[0].mxu0
    %v10274 = vpop.f32.mrb[0].mxu0
    %v10275 = vadd.f32 %v1348, %v10274
    %v10276 = vpop.f32.mrb[0].mxu0
    %10277 = vmatprep.mubr.bf16.mxu0 0
    %10278 = vmatmul.mubr.bf16.gmra.mrb[0].mxu0 %v9924
    %v10279 = vpop.f32.mrb[0].mxu0
    %v10280 = vadd.f32 %v1354, %v10279
    %v10281 = vpop.f32.mrb[0].mxu0
    %v10282 = vpop.f32.mrb[0].mxu0
    %v10283 = vadd.f32 %v1358, %v10282
    %v10284 = vpop.f32.mrb[0].mxu0
    %10285 = vmatprep.mubr.bf16.mxu0 0
    %10286 = vmatmul.mubr.bf16.gmra.mrb[0].mxu0 %v9925
    %v10287 = vpop.f32.mrb[0].mxu0
    %v10288 = vadd.f32 %v1364, %v10287
    %v10289 = vpop.f32.mrb[0].mxu0
    %v10290 = vpop.f32.mrb[0].mxu0
    %v10291 = vadd.f32 %v1368, %v10290
    %v10292 = vpop.f32.mrb[0].mxu0
    %10293 = vmatprep.mubr.bf16.mxu0 0
    %10294 = vmatmul.mubr.bf16.gmra.mrb[0].mxu0 %v9926
    %v10295 = vpop.f32.mrb[0].mxu0
    %v10296 = vadd.f32 %v1374, %v10295
    %v10297 = vpop.f32.mrb[0].mxu0
    %v10298 = vpop.f32.mrb[0].mxu0
    %v10299 = vadd.f32 %v1378, %v10298
    %v10300 = vpop.f32.mrb[0].mxu0
    %10301 = vmatprep.mubr.bf16.mxu0 0
    %10302 = vmatmul.mubr.bf16.gmra.mrb[0].mxu0 %v9927
    %v10303 = vpop.f32.mrb[0].mxu0
    %v10304 = vadd.f32 %v1384, %v10303
    %v10305 = vpop.f32.mrb[0].mxu0
    %v10306 = vpop.f32.mrb[0].mxu0
    %v10307 = vadd.f32 %v1388, %v10306
    %v10308 = vpop.f32.mrb[0].mxu0
    %10309 = vmatprep.mubr.bf16.mxu0 0
    %10310 = vmatmul.mubr.bf16.gmra.mrb[0].mxu0 %v9928
    %v10311 = vpop.f32.mrb[0].mxu0
    %v10312 = vadd.f32 %v1394, %v10311
    %v10313 = vpop.f32.mrb[0].mxu0
    %v10314 = vpop.f32.mrb[0].mxu0
    %v10315 = vadd.f32 %v1398, %v10314
    %v10316 = vpop.f32.mrb[0].mxu0
    %10317 = vmatprep.mubr.bf16.mxu0 0
    %10318 = vmatmul.mubr.bf16.gmra.mrb[0].mxu0 %v9929
    %v10319 = vpop.f32.mrb[0].mxu0
    %v10320 = vadd.f32 %v1404, %v10319
    %v10321 = vpop.f32.mrb[0].mxu0
    %v10322 = vpop.f32.mrb[0].mxu0
    %v10323 = vadd.f32 %v1408, %v10322
    %v10324 = vpop.f32.mrb[0].mxu0
    %10325 = vmatprep.mubr.bf16.mxu0 0
    %10326 = vmatmul.mubr.bf16.gmra.mrb[0].mxu0 %v9930
    %v10327 = vpop.f32.mrb[0].mxu0
    %v10328 = vadd.f32 %v1414, %v10327
    %v10329 = vpop.f32.mrb[0].mxu0
    %v10330 = vpop.f32.mrb[0].mxu0
    %v10331 = vadd.f32 %v1418, %v10330
    %v10332 = vpop.f32.mrb[0].mxu0
    %10333 = vmatprep.mubr.bf16.mxu0 0
    %10334 = vmatmul.mubr.bf16.gmra.mrb[0].mxu0 %v9931
    %v10335 = vpop.f32.mrb[0].mxu0
    %v10336 = vadd.f32 %v1424, %v10335
    %v10337 = vpop.f32.mrb[0].mxu0
    %v10338 = vpop.f32.mrb[0].mxu0
    %v10339 = vadd.f32 %v1428, %v10338
    %v10340 = vpop.f32.mrb[0].mxu0
    %10341 = vmatprep.mubr.bf16.mxu0 0
    %10342 = vmatmul.mubr.bf16.gmra.mrb[0].mxu0 %v9932
    %v10343 = vpop.f32.mrb[0].mxu0
    %v10344 = vadd.f32 %v1434, %v10343
    %v10345 = vpop.f32.mrb[0].mxu0
    %v10346 = vpop.f32.mrb[0].mxu0
    %v10347 = vadd.f32 %v1438, %v10346
    %v10348 = vpop.f32.mrb[0].mxu0
    %10349 = vmatprep.mubr.bf16.mxu0 0
    %10350 = vmatmul.mubr.bf16.gmra.mrb[0].mxu0 %v9933
    %v10351 = vpop.f32.mrb[0].mxu0
    %v10352 = vadd.f32 %v1444, %v10351
    %v10353 = vpop.f32.mrb[0].mxu0
    %v10354 = vpop.f32.mrb[0].mxu0
    %v10355 = vadd.f32 %v1448, %v10354
    %v10356 = vpop.f32.mrb[0].mxu0
    %10357 = vmatprep.mubr.bf16.mxu0 0
    %10358 = vmatmul.mubr.bf16.gmra.mrb[0].mxu0 %v9934
    %v10359 = vpop.f32.mrb[0].mxu0
    %v10360 = vadd.f32 %v1454, %v10359
    %v10361 = vpop.f32.mrb[0].mxu0
    %v10362 = vpop.f32.mrb[0].mxu0
    %v10363 = vadd.f32 %v1458, %v10362
    %v10364 = vpop.f32.mrb[0].mxu0
    %10365 = vmatprep.mubr.bf16.mxu0 0
    %10366 = vmatmul.mubr.bf16.gmra.mrb[0].mxu0 %v9935
    %v10367 = vpop.f32.mrb[0].mxu0
    %v10368 = vadd.f32 %v1464, %v10367
    %v10369 = vpop.f32.mrb[0].mxu0
    %v10370 = vpop.f32.mrb[0].mxu0
    %v10371 = vadd.f32 %v1468, %v10370
    %v10372 = vpop.f32.mrb[0].mxu0
    %10373 = vmatprep.mubr.bf16.mxu0 0
    %10374 = vmatmul.mubr.bf16.gmra.mrb[0].mxu0 %v9936
    %v10375 = vpop.f32.mrb[0].mxu0
    %v10376 = vadd.f32 %v1474, %v10375
    %v10377 = vpop.f32.mrb[0].mxu0
    %v10378 = vpop.f32.mrb[0].mxu0
    %v10379 = vadd.f32 %v1478, %v10378
    %v10380 = vpop.f32.mrb[0].mxu0
    %10381 = vmatprep.mubr.bf16.mxu0 0
    %10382 = vmatmul.mubr.bf16.gmra.mrb[0].mxu0 %v9937
    %v10383 = vpop.f32.mrb[0].mxu0
    %v10384 = vadd.f32 %v1484, %v10383
    %v10385 = vpop.f32.mrb[0].mxu0
    %v10386 = vpop.f32.mrb[0].mxu0
    %v10387 = vadd.f32 %v1488, %v10386
    %v10388 = vpop.f32.mrb[0].mxu0
    %10389 = vmatprep.mubr.bf16.mxu0 0
    %10390 = vmatmul.mubr.bf16.gmra.mrb[0].mxu0 %v9938
    %v10391 = vpop.f32.mrb[0].mxu0
    %v10392 = vadd.f32 %v1494, %v10391
    %v10393 = vpop.f32.mrb[0].mxu0
    %v10394 = vpop.f32.mrb[0].mxu0
    %v10395 = vadd.f32 %v1498, %v10394
    %v10396 = vpop.f32.mrb[0].mxu0
    %10397 = vmatprep.mubr.bf16.mxu0 0
    %10398 = vmatmul.mubr.bf16.gmra.mrb[0].mxu0 %v9939
    %v10399 = vpop.f32.mrb[0].mxu0
    %v10400 = vadd.f32 %v1504, %v10399
    %v10401 = vpop.f32.mrb[0].mxu0
    %v10402 = vpop.f32.mrb[0].mxu0
    %v10403 = vadd.f32 %v1508, %v10402
    %v10404 = vpop.f32.mrb[0].mxu0
    %10405 = vmatprep.mubr.bf16.mxu0 0
    %10406 = vmatmul.mubr.bf16.gmra.mrb[0].mxu0 %v9940
    %v10407 = vpop.f32.mrb[0].mxu0
    %v10408 = vadd.f32 %v1514, %v10407
    %v10409 = vpop.f32.mrb[0].mxu0
    %v10410 = vpop.f32.mrb[0].mxu0
    %v10411 = vadd.f32 %v1518, %v10410
    %v10412 = vpop.f32.mrb[0].mxu0
    %10413 = vmatprep.mubr.bf16.mxu0 0
    %10414 = vmatmul.mubr.bf16.gmra.mrb[0].mxu0 %v9941
    %v10415 = vpop.f32.mrb[0].mxu0
    %v10416 = vadd.f32 %v1524, %v10415
    %v10417 = vpop.f32.mrb[0].mxu0
    %v10418 = vpop.f32.mrb[0].mxu0
    %v10419 = vadd.f32 %v1528, %v10418
    %v10420 = vpop.f32.mrb[0].mxu0
    %10421 = vmatprep.mubr.bf16.mxu0 0
    %10422 = vmatmul.mubr.bf16.gmra.mrb[0].mxu0 %v9942
    %v10423 = vpop.f32.mrb[0].mxu0
    %v10424 = vadd.f32 %v1534, %v10423
    %v10425 = vpop.f32.mrb[0].mxu0
    %v10426 = vpop.f32.mrb[0].mxu0
    %v10427 = vadd.f32 %v1538, %v10426
    %v10428 = vpop.f32.mrb[0].mxu0
    %10429 = vmatprep.mubr.bf16.mxu0 0
    %10430 = vmatmul.mubr.bf16.gmra.mrb[0].mxu0 %v9943
    %v10431 = vpop.f32.mrb[0].mxu0
    %v10432 = vadd.f32 %v1544, %v10431
    %v10433 = vpop.f32.mrb[0].mxu0
    %v10434 = vpop.f32.mrb[0].mxu0
    %v10435 = vadd.f32 %v1548, %v10434
    %v10436 = vpop.f32.mrb[0].mxu0
    %10437 = vmatprep.mubr.bf16.mxu0 0
    %10438 = vmatmul.mubr.bf16.gmra.mrb[0].mxu0 %v9944
    %v10439 = vpop.f32.mrb[0].mxu0
    %v10440 = vadd.f32 %v1554, %v10439
    %v10441 = vpop.f32.mrb[0].mxu0
    %v10442 = vpop.f32.mrb[0].mxu0
    %v10443 = vadd.f32 %v1558, %v10442
    %v10444 = vpop.f32.mrb[0].mxu0
    %10445 = vmatprep.mubr.bf16.mxu0 0
    %10446 = vmatmul.mubr.bf16.gmra.mrb[0].mxu0 %v9945
    %v10447 = vpop.f32.mrb[0].mxu0
    %v10448 = vadd.f32 %v1564, %v10447
    %v10449 = vpop.f32.mrb[0].mxu0
    %v10450 = vpop.f32.mrb[0].mxu0
    %v10451 = vadd.f32 %v1568, %v10450
    %v10452 = vpop.f32.mrb[0].mxu0
    %10453 = vmatprep.mubr.bf16.mxu0 0
    %10454 = vmatmul.mubr.bf16.gmra.mrb[0].mxu0 %v9946
    %v10455 = vpop.f32.mrb[0].mxu0
    %v10456 = vadd.f32 %v1574, %v10455
    %v10457 = vpop.f32.mrb[0].mxu0
    %v10458 = vpop.f32.mrb[0].mxu0
    %v10459 = vadd.f32 %v1578, %v10458
    %v10460 = vpop.f32.mrb[0].mxu0
    %10461 = vmatprep.mubr.bf16.mxu0 0
    %10462 = vmatmul.mubr.bf16.gmra.mrb[0].mxu0 %v9947
    %v10463 = vpop.f32.mrb[0].mxu0
    %v10464 = vadd.f32 %v1584, %v10463
    %v10465 = vpop.f32.mrb[0].mxu0
    %v10466 = vpop.f32.mrb[0].mxu0
    %v10467 = vadd.f32 %v1588, %v10466
    %v10468 = vpop.f32.mrb[0].mxu0
    %10469 = vmatprep.mubr.bf16.mxu0 0
    %10470 = vmatmul.mubr.bf16.gmra.mrb[0].mxu0 %v9948
    %v10471 = vpop.f32.mrb[0].mxu0
    %v10472 = vadd.f32 %v1594, %v10471
    %v10473 = vpop.f32.mrb[0].mxu0
    %v10474 = vpop.f32.mrb[0].mxu0
    %v10475 = vadd.f32 %v1598, %v10474
    %v10476 = vpop.f32.mrb[0].mxu0
    %10477 = vdwg.mxu0
    %v10478 = vld [vmem:[%s6] sm:$0x1]
    %v10480 = vlaneseq
    %v10481 = vshrl.u32 %v10480, 7
    %v10482 = vsub.s32 0, %v10481
    %v10483 = vrot.slane %v10478, %v10482
    %v10485 = vadd.f32 %v10048, %v10483
    %v10486 = vadd.f32 %v10051, %v10483
    %v10487 = vadd.f32 %v10056, %v10483
    %v10488 = vadd.f32 %v10059, %v10483
    %v10489 = vadd.f32 %v10064, %v10483
    %v10490 = vadd.f32 %v10067, %v10483
    %v10491 = vadd.f32 %v10072, %v10483
    %v10492 = vadd.f32 %v10075, %v10483
    %v10493 = vadd.f32 %v10080, %v10483
    %v10494 = vadd.f32 %v10083, %v10483
    %v10495 = vadd.f32 %v10088, %v10483
    %v10496 = vadd.f32 %v10091, %v10483
    %v10497 = vadd.f32 %v10096, %v10483
    %v10498 = vadd.f32 %v10099, %v10483
    %v10499 = vadd.f32 %v10104, %v10483
    %v10500 = vadd.f32 %v10107, %v10483
    %v10501 = vadd.f32 %v10112, %v10483
    %v10502 = vadd.f32 %v10115, %v10483
    %v10503 = vadd.f32 %v10120, %v10483
    %v10504 = vadd.f32 %v10123, %v10483
    %v10505 = vadd.f32 %v10128, %v10483
    %v10506 = vadd.f32 %v10131, %v10483
    %v10507 = vadd.f32 %v10136, %v10483
    %v10508 = vadd.f32 %v10139, %v10483
    %v10509 = vadd.f32 %v10144, %v10483
    %v10510 = vadd.f32 %v10147, %v10483
    %v10511 = vadd.f32 %v10152, %v10483
    %v10512 = vadd.f32 %v10155, %v10483
    %v10513 = vadd.f32 %v10160, %v10483
    %v10514 = vadd.f32 %v10163, %v10483
    %v10515 = vadd.f32 %v10168, %v10483
    %v10516 = vadd.f32 %v10171, %v10483
    %v10517 = vadd.f32 %v10176, %v10483
    %v10518 = vadd.f32 %v10179, %v10483
    %v10519 = vadd.f32 %v10184, %v10483
    %v10520 = vadd.f32 %v10187, %v10483
    %v10521 = vadd.f32 %v10192, %v10483
    %v10522 = vadd.f32 %v10195, %v10483
    %v10523 = vadd.f32 %v10200, %v10483
    %v10524 = vadd.f32 %v10203, %v10483
    %v10525 = vadd.f32 %v10208, %v10483
    %v10526 = vadd.f32 %v10211, %v10483
    %v10527 = vadd.f32 %v10216, %v10483
    %v10528 = vadd.f32 %v10219, %v10483
    %v10529 = vadd.f32 %v10224, %v10483
    %v10530 = vadd.f32 %v10227, %v10483
    %v10531 = vadd.f32 %v10232, %v10483
    %v10532 = vadd.f32 %v10235, %v10483
    %v10533 = vadd.f32 %v10240, %v10483
    %v10534 = vadd.f32 %v10243, %v10483
    %v10535 = vadd.f32 %v10248, %v10483
    %v10536 = vadd.f32 %v10251, %v10483
    %v10537 = vadd.f32 %v10256, %v10483
    %v10538 = vadd.f32 %v10259, %v10483
    %v10539 = vadd.f32 %v10264, %v10483
    %v10540 = vadd.f32 %v10267, %v10483
    %v10541 = vadd.f32 %v10272, %v10483
    %v10542 = vadd.f32 %v10275, %v10483
    %v10543 = vadd.f32 %v10280, %v10483
    %v10544 = vadd.f32 %v10283, %v10483
    %v10545 = vadd.f32 %v10288, %v10483
    %v10546 = vadd.f32 %v10291, %v10483
    %v10547 = vadd.f32 %v10296, %v10483
    %v10548 = vadd.f32 %v10299, %v10483
    %v10549 = vadd.f32 %v10304, %v10483
    %v10550 = vadd.f32 %v10307, %v10483
    %v10551 = vadd.f32 %v10312, %v10483
    %v10552 = vadd.f32 %v10315, %v10483
    %v10553 = vadd.f32 %v10320, %v10483
    %v10554 = vadd.f32 %v10323, %v10483
    %v10555 = vadd.f32 %v10328, %v10483
    %v10556 = vadd.f32 %v10331, %v10483
    %v10557 = vadd.f32 %v10336, %v10483
    %v10558 = vadd.f32 %v10339, %v10483
    %v10559 = vadd.f32 %v10344, %v10483
    %v10560 = vadd.f32 %v10347, %v10483
    %v10561 = vadd.f32 %v10352, %v10483
    %v10562 = vadd.f32 %v10355, %v10483
    %v10563 = vadd.f32 %v10360, %v10483
    %v10564 = vadd.f32 %v10363, %v10483
    %v10565 = vadd.f32 %v10368, %v10483
    %v10566 = vadd.f32 %v10371, %v10483
    %v10567 = vadd.f32 %v10376, %v10483
    %v10568 = vadd.f32 %v10379, %v10483
    %v10569 = vadd.f32 %v10384, %v10483
    %v10570 = vadd.f32 %v10387, %v10483
    %v10571 = vadd.f32 %v10392, %v10483
    %v10572 = vadd.f32 %v10395, %v10483
    %v10573 = vadd.f32 %v10400, %v10483
    %v10574 = vadd.f32 %v10403, %v10483
    %v10575 = vadd.f32 %v10408, %v10483
    %v10576 = vadd.f32 %v10411, %v10483
    %v10577 = vadd.f32 %v10416, %v10483
    %v10578 = vadd.f32 %v10419, %v10483
    %v10579 = vadd.f32 %v10424, %v10483
    %v10580 = vadd.f32 %v10427, %v10483
    %v10581 = vadd.f32 %v10432, %v10483
    %v10582 = vadd.f32 %v10435, %v10483
    %v10583 = vadd.f32 %v10440, %v10483
    %v10584 = vadd.f32 %v10443, %v10483
    %v10585 = vadd.f32 %v10448, %v10483
    %v10586 = vadd.f32 %v10451, %v10483
    %v10587 = vadd.f32 %v10456, %v10483
    %v10588 = vadd.f32 %v10459, %v10483
    %v10589 = vadd.f32 %v10464, %v10483
    %v10590 = vadd.f32 %v10467, %v10483
    %v10591 = vadd.f32 %v10472, %v10483
    %v10592 = vadd.f32 %v10475, %v10483
    %10593 = vst [vmem:[#allocation3] sm:$0xff] %v10485
    %10594 = vst [vmem:[#allocation3 + $0x8] sm:$0xff] %v10486
    %10595 = vst [vmem:[#allocation3 + $0x10] sm:$0xff] %v10487
    %10596 = vst [vmem:[#allocation3 + $0x18] sm:$0xff] %v10488
    %10597 = vst [vmem:[#allocation3 + $0x20] sm:$0xff] %v10489
    %10598 = vst [vmem:[#allocation3 + $0x28] sm:$0xff] %v10490
    %10599 = vst [vmem:[#allocation3 + $0x30] sm:$0xff] %v10491
    %10600 = vst [vmem:[#allocation3 + $0x38] sm:$0xff] %v10492
    %10601 = vst [vmem:[#allocation3 + $0x40] sm:$0xff] %v10493
    %10602 = vst [vmem:[#allocation3 + $0x48] sm:$0xff] %v10494
    %10603 = vst [vmem:[#allocation3 + $0x50] sm:$0xff] %v10495
    %10604 = vst [vmem:[#allocation3 + $0x58] sm:$0xff] %v10496
    %10605 = vst [vmem:[#allocation3 + $0x60] sm:$0xff] %v10497
    %10606 = vst [vmem:[#allocation3 + $0x68] sm:$0xff] %v10498
    %10607 = vst [vmem:[#allocation3 + $0x70] sm:$0xff] %v10499
    %10608 = vst [vmem:[#allocation3 + $0x78] sm:$0xff] %v10500
    %10609 = vst [vmem:[#allocation3 + $0x80] sm:$0xff] %v10501
    %10610 = vst [vmem:[#allocation3 + $0x88] sm:$0xff] %v10502
    %10611 = vst [vmem:[#allocation3 + $0x90] sm:$0xff] %v10503
    %10612 = vst [vmem:[#allocation3 + $0x98] sm:$0xff] %v10504
    %10613 = vst [vmem:[#allocation3 + $0xa0] sm:$0xff] %v10505
    %10614 = vst [vmem:[#allocation3 + $0xa8] sm:$0xff] %v10506
    %10615 = vst [vmem:[#allocation3 + $0xb0] sm:$0xff] %v10507
    %10616 = vst [vmem:[#allocation3 + $0xb8] sm:$0xff] %v10508
    %10617 = vst [vmem:[#allocation3 + $0xc0] sm:$0xff] %v10509
    %10618 = vst [vmem:[#allocation3 + $0xc8] sm:$0xff] %v10510
    %10619 = vst [vmem:[#allocation3 + $0xd0] sm:$0xff] %v10511
    %10620 = vst [vmem:[#allocation3 + $0xd8] sm:$0xff] %v10512
    %10621 = vst [vmem:[#allocation3 + $0xe0] sm:$0xff] %v10513
    %10622 = vst [vmem:[#allocation3 + $0xe8] sm:$0xff] %v10514
    %10623 = vst [vmem:[#allocation3 + $0xf0] sm:$0xff] %v10515
    %10624 = vst [vmem:[#allocation3 + $0xf8] sm:$0xff] %v10516
    %10625 = vst [vmem:[#allocation3 + $0x100] sm:$0xff] %v10517
    %10626 = vst [vmem:[#allocation3 + $0x108] sm:$0xff] %v10518
    %10627 = vst [vmem:[#allocation3 + $0x110] sm:$0xff] %v10519
    %10628 = vst [vmem:[#allocation3 + $0x118] sm:$0xff] %v10520
    %10629 = vst [vmem:[#allocation3 + $0x120] sm:$0xff] %v10521
    %10630 = vst [vmem:[#allocation3 + $0x128] sm:$0xff] %v10522
    %10631 = vst [vmem:[#allocation3 + $0x130] sm:$0xff] %v10523
    %10632 = vst [vmem:[#allocation3 + $0x138] sm:$0xff] %v10524
    %10633 = vst [vmem:[#allocation3 + $0x140] sm:$0xff] %v10525
    %10634 = vst [vmem:[#allocation3 + $0x148] sm:$0xff] %v10526
    %10635 = vst [vmem:[#allocation3 + $0x150] sm:$0xff] %v10527
    %10636 = vst [vmem:[#allocation3 + $0x158] sm:$0xff] %v10528
    %10637 = vst [vmem:[#allocation3 + $0x160] sm:$0xff] %v10529
    %10638 = vst [vmem:[#allocation3 + $0x168] sm:$0xff] %v10530
    %10639 = vst [vmem:[#allocation3 + $0x170] sm:$0xff] %v10531
    %10640 = vst [vmem:[#allocation3 + $0x178] sm:$0xff] %v10532
    %10641 = vst [vmem:[#allocation3 + $0x180] sm:$0xff] %v10533
    %10642 = vst [vmem:[#allocation3 + $0x188] sm:$0xff] %v10534
    %10643 = vst [vmem:[#allocation3 + $0x190] sm:$0xff] %v10535
    %10644 = vst [vmem:[#allocation3 + $0x198] sm:$0xff] %v10536
    %10645 = vst [vmem:[#allocation3 + $0x1a0] sm:$0xff] %v10537
    %10646 = vst [vmem:[#allocation3 + $0x1a8] sm:$0xff] %v10538
    %10647 = vst [vmem:[#allocation3 + $0x1b0] sm:$0xff] %v10539
    %10648 = vst [vmem:[#allocation3 + $0x1b8] sm:$0xff] %v10540
    %10649 = vst [vmem:[#allocation3 + $0x1c0] sm:$0xff] %v10541
    %10650 = vst [vmem:[#allocation3 + $0x1c8] sm:$0xff] %v10542
    %10651 = vst [vmem:[#allocation3 + $0x1d0] sm:$0xff] %v10543
    %10652 = vst [vmem:[#allocation3 + $0x1d8] sm:$0xff] %v10544
    %10653 = vst [vmem:[#allocation3 + $0x1e0] sm:$0xff] %v10545
    %10654 = vst [vmem:[#allocation3 + $0x1e8] sm:$0xff] %v10546
    %10655 = vst [vmem:[#allocation3 + $0x1f0] sm:$0xff] %v10547
    %10656 = vst [vmem:[#allocation3 + $0x1f8] sm:$0xff] %v10548
    %10657 = vst [vmem:[#allocation3 + $0x200] sm:$0xff] %v10549
    %10658 = vst [vmem:[#allocation3 + $0x208] sm:$0xff] %v10550
    %10659 = vst [vmem:[#allocation3 + $0x210] sm:$0xff] %v10551
    %10660 = vst [vmem:[#allocation3 + $0x218] sm:$0xff] %v10552
    %10661 = vst [vmem:[#allocation3 + $0x220] sm:$0xff] %v10553
    %10662 = vst [vmem:[#allocation3 + $0x228] sm:$0xff] %v10554
    %10663 = vst [vmem:[#allocation3 + $0x230] sm:$0xff] %v10555
    %10664 = vst [vmem:[#allocation3 + $0x238] sm:$0xff] %v10556
    %10665 = vst [vmem:[#allocation3 + $0x240] sm:$0xff] %v10557
    %10666 = vst [vmem:[#allocation3 + $0x248] sm:$0xff] %v10558
    %10667 = vst [vmem:[#allocation3 + $0x250] sm:$0xff] %v10559
    %10668 = vst [vmem:[#allocation3 + $0x258] sm:$0xff] %v10560
    %10669 = vst [vmem:[#allocation3 + $0x260] sm:$0xff] %v10561
    %10670 = vst [vmem:[#allocation3 + $0x268] sm:$0xff] %v10562
    %10671 = vst [vmem:[#allocation3 + $0x270] sm:$0xff] %v10563
    %10672 = vst [vmem:[#allocation3 + $0x278] sm:$0xff] %v10564
    %10673 = vst [vmem:[#allocation3 + $0x280] sm:$0xff] %v10565
    %10674 = vst [vmem:[#allocation3 + $0x288] sm:$0xff] %v10566
    %10675 = vst [vmem:[#allocation3 + $0x290] sm:$0xff] %v10567
    %10676 = vst [vmem:[#allocation3 + $0x298] sm:$0xff] %v10568
    %10677 = vst [vmem:[#allocation3 + $0x2a0] sm:$0xff] %v10569
    %10678 = vst [vmem:[#allocation3 + $0x2a8] sm:$0xff] %v10570
    %10679 = vst [vmem:[#allocation3 + $0x2b0] sm:$0xff] %v10571
    %10680 = vst [vmem:[#allocation3 + $0x2b8] sm:$0xff] %v10572
    %10681 = vst [vmem:[#allocation3 + $0x2c0] sm:$0xff] %v10573
    %10682 = vst [vmem:[#allocation3 + $0x2c8] sm:$0xff] %v10574
    %10683 = vst [vmem:[#allocation3 + $0x2d0] sm:$0xff] %v10575
    %10684 = vst [vmem:[#allocation3 + $0x2d8] sm:$0xff] %v10576
    %10685 = vst [vmem:[#allocation3 + $0x2e0] sm:$0xff] %v10577
    %10686 = vst [vmem:[#allocation3 + $0x2e8] sm:$0xff] %v10578
    %10687 = vst [vmem:[#allocation3 + $0x2f0] sm:$0xff] %v10579
    %10688 = vst [vmem:[#allocation3 + $0x2f8] sm:$0xff] %v10580
    %10689 = vst [vmem:[#allocation3 + $0x300] sm:$0xff] %v10581
    %10690 = vst [vmem:[#allocation3 + $0x308] sm:$0xff] %v10582
    %10691 = vst [vmem:[#allocation3 + $0x310] sm:$0xff] %v10583
    %10692 = vst [vmem:[#allocation3 + $0x318] sm:$0xff] %v10584
    %10693 = vst [vmem:[#allocation3 + $0x320] sm:$0xff] %v10585
    %10694 = vst [vmem:[#allocation3 + $0x328] sm:$0xff] %v10586
    %10695 = vst [vmem:[#allocation3 + $0x330] sm:$0xff] %v10587
    %10696 = vst [vmem:[#allocation3 + $0x338] sm:$0xff] %v10588
    %10697 = vst [vmem:[#allocation3 + $0x340] sm:$0xff] %v10589
    %10698 = vst [vmem:[#allocation3 + $0x348] sm:$0xff] %v10590
    %10699 = vst [vmem:[#allocation3 + $0x350] sm:$0xff] %v10591
    %10700 = vst [vmem:[#allocation3 + $0x358] sm:$0xff] %v10592
    // Predicated region
    $region38: #{tpu_custom_call.1} parent=1 // pred_check
      _
    $region39: #{tpu_custom_call.1} parent=1 // pred_check_branch
      %10702 = sbr.rel (0) target = $region41
    $region40: #{tpu_custom_call.1} parent=1 // pred_region
      %s10704 = ssub.s32 13824, 13824
      %10705 = vsyncadd [#allocation4], %s10704
      %s10706 = sshll.u32 [#allocation3], 4
      %s10707 = int_to_ptr.vmem [resolvable:$true] %s10706
      %10712 = dma.vmem_to_hbm [thread:$0]  %s10707, 13824, %s8, [#allocation4], 128, 128, 8
    $region41: #{tpu_custom_call.1} parent=1 // pred_fallthru
      _
    // Predicated region
    $region42: #{tpu_custom_call.1} parent=1 // pred_check
      _
    $region43: #{tpu_custom_call.1} parent=1 // pred_check_branch
      %10714 = sbr.rel (0) target = $region45
    $region44: #{tpu_custom_call.1} parent=1 // pred_region
      %10715 = dma.done [#allocation4], 13824
    $region45: #{tpu_custom_call.1} parent=1 // pred_fallthru
      _
    %10716 = vsyncpa [#allocation4], 1

</llo_original>
